<compile_context>
chip_gen: v7x
topology: tpu7x:2x2x1
jax: 0.10.0
libtpu: 0.0.40
codegen_flags: <defaults>
</compile_context>

<pallas_src>
import jax
import jax.numpy as jnp
from jax.experimental import pallas as pl
from jax.experimental.pallas import tpu as pltpu


def _rnnfc_tile_kernel(x_ref, h0_ref, w_ih_ref, w_hh_ref, b_rec_ref,
                       w_fc_ref, b_fc_ref, out_ref, h_final_ref,
                       xw_ref, h_all_ref):
    """One population-tile grid point; the whole T-step rollout happens here.

    x_ref:       (T, BP, I)  inputs for this population tile, all timesteps
    h0_ref:      (BP, H)     initial hidden state for this tile
    w_*_ref:     weights / folded biases, VMEM-resident (constant index_map)
    out_ref:     (T, BP, O)  per-step FC outputs (unpadded O)
    h_final_ref: (BP, H)     final hidden state for this tile
    xw_ref:      (T, BP, H)  VMEM scratch: hoisted input projection
    h_all_ref:   (T, BP, H)  VMEM scratch: all hidden states (for hoisted FC)
    """
    T, bp, I = x_ref.shape
    H = h0_ref.shape[1]
    O = out_ref.shape[-1]
    mxu_dtype = w_hh_ref.dtype

    # 1) Input projection for ALL timesteps in one well-shaped MXU matmul
    #    (M = T*bp), folded recurrent bias added once (off the serial path).
    x_flat = x_ref[...].reshape(T * bp, I)            # merge leading dims: free
    xw = jnp.dot(x_flat, w_ih_ref[...], preferred_element_type=jnp.float32)
    xw_ref[...] = (xw + b_rec_ref[...]).reshape(T, bp, H)

    # 2) Sequential recurrence: only one small matmul + add + tanh per step.
    w_hh = w_hh_ref[...]

    def step(t, h):
        pre = jnp.dot(h.astype(mxu_dtype), w_hh,
                      preferred_element_type=jnp.float32) + xw_ref[t]
        h_new = jnp.tanh(pre)                          # EUP; f32 carry
        h_all_ref[t] = h_new
        return h_new

    h_last = jax.lax.fori_loop(0, T, step, h0_ref[...].astype(jnp.float32),
                               unroll=True)
    h_final_ref[...] = h_last

    # 3) FC head for ALL timesteps in one MXU matmul (M = T*bp, N = O).
    h_flat = h_all_ref[...].reshape(T * bp, H).astype(mxu_dtype)
    out = jnp.dot(h_flat, w_fc_ref[...], preferred_element_type=jnp.float32)
    out_ref[...] = (out + b_fc_ref[...]).reshape(T, bp, O)


def make_params(key, input_size, hidden_size, output_size):
    """Deterministic synthetic parameters in PyTorch shapes, pre-transposed."""
    ks = jax.random.split(key, 6)
    scale = 0.1
    # PyTorch shapes: W_ih (H, I), W_hh (H, H), W_fc (O, H); stored transposed.
    w_ih_t = scale * jax.random.normal(ks[0], (input_size, hidden_size), jnp.float32)
    w_hh_t = scale * jax.random.normal(ks[1], (hidden_size, hidden_size), jnp.float32)
    b_ih = scale * jax.random.normal(ks[2], (1, hidden_size), jnp.float32)
    b_hh = scale * jax.random.normal(ks[3], (1, hidden_size), jnp.float32)
    w_fc_t = scale * jax.random.normal(ks[4], (hidden_size, output_size), jnp.float32)
    b_fc = scale * jax.random.normal(ks[5], (1, output_size), jnp.float32)
    return dict(w_ih_t=w_ih_t, w_hh_t=w_hh_t, b_ih=b_ih, b_hh=b_hh,
                w_fc_t=w_fc_t, b_fc=b_fc)


def make_kernel_params(raw, *, operand_dtype=jnp.float32):
    """Fold biases once.  operand_dtype=jnp.bfloat16 enables the bf16-MXU path
    on v6e/v7x (accumulation, biases, tanh and the hidden carry stay f32)."""
    return dict(
        w_ih_t=raw["w_ih_t"].astype(operand_dtype),
        w_hh_t=raw["w_hh_t"].astype(operand_dtype),
        b_rec=(raw["b_ih"] + raw["b_hh"]).astype(jnp.float32),   # fused bias
        w_fc_t=raw["w_fc_t"].astype(operand_dtype),
        b_fc=raw["b_fc"].astype(jnp.float32),
        operand_dtype=operand_dtype,
    )


def _pick_block_b(B):
    """Population rows per tile.

    Keep >=2 tiles when possible so the 'parallel' grid axis can be sharded
    across v7x's 2 TensorCores; single-TC v5e/v6e only pay one extra ~0.35us
    grid step for this.  128 rows is sublane-aligned and fills an MXU pass.
    """
    if B <= 128:
        return B
    for cand in (128, 64, 32, 16, 8):
        if B % cand == 0:
            return cand
    return B


def rnnfc_rollout(kparams, x_seq, h0, *, block_b=None):
    """Roll the RNN+FC over a full sequence for a population batch.

    x_seq: (T, B, input_size), h0: (B, hidden_size)  [both float32].
    Returns (out_seq (T, B, output_size) f32, h_final (B, hidden_size) f32).
    """
    T, B, I = x_seq.shape
    H = h0.shape[1]
    O = kparams["w_fc_t"].shape[1]
    bp = _pick_block_b(B) if block_b is None else block_b
    if B % bp:
        raise ValueError(f"population B={B} must be divisible by block_b={bp}")
    grid = (B // bp,)

    const2 = lambda b: (0, 0)  # weights/biases resident across the grid
    x_in = x_seq.astype(kparams["operand_dtype"])

    out_seq, h_final = pl.pallas_call(
        _rnnfc_tile_kernel,
        grid=grid,
        in_specs=[
            pl.BlockSpec((T, bp, I), lambda b: (0, b, 0)),   # x: whole sequence per tile
            pl.BlockSpec((bp, H), lambda b: (b, 0)),         # h0
            pl.BlockSpec((I, H), const2),                    # W_ih^T
            pl.BlockSpec((H, H), const2),                    # W_hh^T
            pl.BlockSpec((1, H), const2),                    # b_ih + b_hh
            pl.BlockSpec((H, O), const2),                    # W_fc^T
            pl.BlockSpec((1, O), const2),                    # b_fc
        ],
        out_specs=(
            pl.BlockSpec((T, bp, O), lambda b: (0, b, 0)),   # out_seq (unpadded O)
            pl.BlockSpec((bp, H), lambda b: (b, 0)),         # h_final
        ),
        out_shape=(
            jax.ShapeDtypeStruct((T, B, O), jnp.float32),
            jax.ShapeDtypeStruct((B, H), jnp.float32),
        ),
        scratch_shapes=[
            pltpu.VMEM((T, bp, H), jnp.float32),             # hoisted x @ W_ih^T + b
            pltpu.VMEM((T, bp, H), jnp.float32),             # all hidden states
        ],
        compiler_params=pltpu.CompilerParams(
            dimension_semantics=("parallel",)),
    )(
        x_in, h0,
        kparams["w_ih_t"], kparams["w_hh_t"], kparams["b_rec"],
        kparams["w_fc_t"], kparams["b_fc"],
    )
    return out_seq, h_final


def rnnfc_rollout_ref(raw, x_seq, h0):
    """Pure-JAX reference (scan over timesteps) for correctness checking."""
    def step(h, x):
        pre = (x @ raw["w_ih_t"] + raw["b_ih"]
               + h @ raw["w_hh_t"] + raw["b_hh"])
        h_new = jnp.tanh(pre)
        out = h_new @ raw["w_fc_t"] + raw["b_fc"]
        return h_new, out
    h_final, outs = jax.lax.scan(step, h0, x_seq)
    return outs, h_final


if __name__ == "__main__":
    input_size, hidden_size, output_size = 16, 32, 8
    population, seq_len = 256, 8

    key = jax.random.PRNGKey(0)
    pkey, xkey = jax.random.split(key)
    raw = make_params(pkey, input_size, hidden_size, output_size)
    kparams = make_kernel_params(raw)  # f32 operands: exact parity with module

    x_seq = jax.random.normal(xkey, (seq_len, population, input_size), jnp.float32)
    h0 = jnp.zeros((population, hidden_size), jnp.float32)  # self.h init / reset()

    out_seq, h_final = rnnfc_rollout(kparams, x_seq, h0)
    jax.block_until_ready((out_seq, h_final))

    out_ref, h_final_ref = rnnfc_rollout_ref(raw, x_seq, h0)
    assert out_seq.shape == (seq_len, population, output_size)
    assert h_final.shape == (population, hidden_size)
    assert jnp.allclose(out_seq, out_ref, atol=1e-4, rtol=1e-4), "output mismatch"
    assert jnp.allclose(h_final, h_final_ref, atol=1e-4, rtol=1e-4), "hidden state mismatch"

    print("KERNEL_OK")
</pallas_src>

<mosaic_0001>
module attributes {stable_mosaic.version = 11 : i64} {
  func.func @_rnnfc_tile_kernel(%arg0: i32, %arg1: memref<8x128x16xf32, #tpu.memory_space<vmem>>, %arg2: memref<128x32xf32, #tpu.memory_space<vmem>>, %arg3: memref<16x32xf32, #tpu.memory_space<vmem>>, %arg4: memref<32x32xf32, #tpu.memory_space<vmem>>, %arg5: memref<1x32xf32, #tpu.memory_space<vmem>>, %arg6: memref<32x8xf32, #tpu.memory_space<vmem>>, %arg7: memref<1x8xf32, #tpu.memory_space<vmem>>, %arg8: memref<8x128x8xf32, #tpu.memory_space<vmem>>, %arg9: memref<128x32xf32, #tpu.memory_space<vmem>>, %arg10: memref<8x128x32xf32, #tpu.memory_space<vmem>>, %arg11: memref<8x128x32xf32, #tpu.memory_space<vmem>>) attributes {dimension_semantics = [#tpu.dimension_semantics<parallel>], iteration_bounds = array<i64: 2>, scalar_prefetch = 0 : i64, scratch_operands = 2 : i64, tpu.core_type = #tpu.core_type<tc>, window_params = [{transform_indices = @transform_0, window_bounds = array<i64: 8, 128, 16>}, {transform_indices = @transform_1, window_bounds = array<i64: 128, 32>}, {pipeline_mode = #tpu.pipeline_mode<synchronous>, transform_indices = @transform_2, window_bounds = array<i64: 16, 32>}, {pipeline_mode = #tpu.pipeline_mode<synchronous>, transform_indices = @transform_3, window_bounds = array<i64: 32, 32>}, {pipeline_mode = #tpu.pipeline_mode<synchronous>, transform_indices = @transform_4, window_bounds = array<i64: 1, 32>}, {pipeline_mode = #tpu.pipeline_mode<synchronous>, transform_indices = @transform_5, window_bounds = array<i64: 32, 8>}, {pipeline_mode = #tpu.pipeline_mode<synchronous>, transform_indices = @transform_6, window_bounds = array<i64: 1, 8>}, {transform_indices = @transform_7, window_bounds = array<i64: 8, 128, 8>}, {transform_indices = @transform_8, window_bounds = array<i64: 128, 32>}]} {
    %c0 = arith.constant 0 : index
    %c0_0 = arith.constant 0 : index
    %c0_1 = arith.constant 0 : index
    %0 = vector.load %arg1[%c0, %c0_0, %c0_1] : memref<8x128x16xf32, #tpu.memory_space<vmem>>, vector<8x128x16xf32>
    %1 = vector.shape_cast %0 : vector<8x128x16xf32> to vector<1024x16xf32>
    %c0_2 = arith.constant 0 : index
    %c0_3 = arith.constant 0 : index
    %2 = vector.load %arg3[%c0_2, %c0_3] : memref<16x32xf32, #tpu.memory_space<vmem>>, vector<16x32xf32>
    %cst = arith.constant dense<0.000000e+00> : vector<1024x32xf32>
    %3 = tpu.matmul %1, %2, %cst {dimension_numbers = #tpu.dot_dimension_numbers<[1], [0], [0], [1], [0, 0, 1, 1], [], []>} : vector<1024x16xf32>, vector<16x32xf32>, vector<1024x32xf32> -> vector<1024x32xf32>
    %c0_4 = arith.constant 0 : index
    %c0_5 = arith.constant 0 : index
    %4 = vector.load %arg5[%c0_4, %c0_5] : memref<1x32xf32, #tpu.memory_space<vmem>>, vector<1x32xf32>
    %5 = vector.broadcast %4 : vector<1x32xf32> to vector<1024x32xf32>
    %6 = arith.addf %3, %5 : vector<1024x32xf32>
    %7 = vector.shape_cast %6 : vector<1024x32xf32> to vector<8x128x32xf32>
    %c0_6 = arith.constant 0 : index
    %c0_7 = arith.constant 0 : index
    %c0_8 = arith.constant 0 : index
    %8 = vector.load %arg10[%c0_6, %c0_7, %c0_8] : memref<8x128x32xf32, #tpu.memory_space<vmem>>, vector<8x128x32xf32>
    tpu.vector_store %arg10[%c0_6, %c0_7, %c0_8], %7 {strides = array<i32>} : memref<8x128x32xf32, #tpu.memory_space<vmem>>, vector<8x128x32xf32>,
    %c0_9 = arith.constant 0 : index
    %c0_10 = arith.constant 0 : index
    %9 = vector.load %arg4[%c0_9, %c0_10] : memref<32x32xf32, #tpu.memory_space<vmem>>, vector<32x32xf32>
    %c0_11 = arith.constant 0 : index
    %c0_12 = arith.constant 0 : index
    %10 = vector.load %arg2[%c0_11, %c0_12] : memref<128x32xf32, #tpu.memory_space<vmem>>, vector<128x32xf32>
    %c0_i32 = arith.constant 0 : i32
    %cst_13 = arith.constant dense<0.000000e+00> : vector<128x32xf32>
    %11 = tpu.matmul %10, %9, %cst_13 {dimension_numbers = #tpu.dot_dimension_numbers<[1], [0], [0], [1], [0, 0, 1, 1], [], []>} : vector<128x32xf32>, vector<32x32xf32>, vector<128x32xf32> -> vector<128x32xf32>
    %12 = arith.index_cast %c0_i32 : i32 to index
    %c0_14 = arith.constant 0 : index
    %c0_15 = arith.constant 0 : index
    %13 = vector.load %arg10[%12, %c0_14, %c0_15] : memref<8x128x32xf32, #tpu.memory_space<vmem>>, vector<1x128x32xf32>
    %14 = vector.shape_cast %13 : vector<1x128x32xf32> to vector<128x32xf32>
    %15 = arith.addf %11, %14 : vector<128x32xf32>
    %16 = math.tanh %15 : vector<128x32xf32>
    %17 = arith.index_cast %c0_i32 : i32 to index
    %c0_16 = arith.constant 0 : index
    %c0_17 = arith.constant 0 : index
    %18 = vector.load %arg11[%17, %c0_16, %c0_17] : memref<8x128x32xf32, #tpu.memory_space<vmem>>, vector<1x128x32xf32>
    %19 = vector.shape_cast %18 : vector<1x128x32xf32> to vector<128x32xf32>
    %20 = vector.shape_cast %16 : vector<128x32xf32> to vector<1x128x32xf32>
    tpu.vector_store %arg11[%17, %c0_16, %c0_17], %20 {strides = array<i32>} : memref<8x128x32xf32, #tpu.memory_space<vmem>>, vector<1x128x32xf32>,
    %c1_i32 = arith.constant 1 : i32
    %cst_18 = arith.constant dense<0.000000e+00> : vector<128x32xf32>
    %21 = tpu.matmul %16, %9, %cst_18 {dimension_numbers = #tpu.dot_dimension_numbers<[1], [0], [0], [1], [0, 0, 1, 1], [], []>} : vector<128x32xf32>, vector<32x32xf32>, vector<128x32xf32> -> vector<128x32xf32>
    %22 = arith.index_cast %c1_i32 : i32 to index
    %c0_19 = arith.constant 0 : index
    %c0_20 = arith.constant 0 : index
    %23 = vector.load %arg10[%22, %c0_19, %c0_20] : memref<8x128x32xf32, #tpu.memory_space<vmem>>, vector<1x128x32xf32>
    %24 = vector.shape_cast %23 : vector<1x128x32xf32> to vector<128x32xf32>
    %25 = arith.addf %21, %24 : vector<128x32xf32>
    %26 = math.tanh %25 : vector<128x32xf32>
    %27 = arith.index_cast %c1_i32 : i32 to index
    %c0_21 = arith.constant 0 : index
    %c0_22 = arith.constant 0 : index
    %28 = vector.load %arg11[%27, %c0_21, %c0_22] : memref<8x128x32xf32, #tpu.memory_space<vmem>>, vector<1x128x32xf32>
    %29 = vector.shape_cast %28 : vector<1x128x32xf32> to vector<128x32xf32>
    %30 = vector.shape_cast %26 : vector<128x32xf32> to vector<1x128x32xf32>
    tpu.vector_store %arg11[%27, %c0_21, %c0_22], %30 {strides = array<i32>} : memref<8x128x32xf32, #tpu.memory_space<vmem>>, vector<1x128x32xf32>,
    %c2_i32 = arith.constant 2 : i32
    %cst_23 = arith.constant dense<0.000000e+00> : vector<128x32xf32>
    %31 = tpu.matmul %26, %9, %cst_23 {dimension_numbers = #tpu.dot_dimension_numbers<[1], [0], [0], [1], [0, 0, 1, 1], [], []>} : vector<128x32xf32>, vector<32x32xf32>, vector<128x32xf32> -> vector<128x32xf32>
    %32 = arith.index_cast %c2_i32 : i32 to index
    %c0_24 = arith.constant 0 : index
    %c0_25 = arith.constant 0 : index
    %33 = vector.load %arg10[%32, %c0_24, %c0_25] : memref<8x128x32xf32, #tpu.memory_space<vmem>>, vector<1x128x32xf32>
    %34 = vector.shape_cast %33 : vector<1x128x32xf32> to vector<128x32xf32>
    %35 = arith.addf %31, %34 : vector<128x32xf32>
    %36 = math.tanh %35 : vector<128x32xf32>
    %37 = arith.index_cast %c2_i32 : i32 to index
    %c0_26 = arith.constant 0 : index
    %c0_27 = arith.constant 0 : index
    %38 = vector.load %arg11[%37, %c0_26, %c0_27] : memref<8x128x32xf32, #tpu.memory_space<vmem>>, vector<1x128x32xf32>
    %39 = vector.shape_cast %38 : vector<1x128x32xf32> to vector<128x32xf32>
    %40 = vector.shape_cast %36 : vector<128x32xf32> to vector<1x128x32xf32>
    tpu.vector_store %arg11[%37, %c0_26, %c0_27], %40 {strides = array<i32>} : memref<8x128x32xf32, #tpu.memory_space<vmem>>, vector<1x128x32xf32>,
    %c3_i32 = arith.constant 3 : i32
    %cst_28 = arith.constant dense<0.000000e+00> : vector<128x32xf32>
    %41 = tpu.matmul %36, %9, %cst_28 {dimension_numbers = #tpu.dot_dimension_numbers<[1], [0], [0], [1], [0, 0, 1, 1], [], []>} : vector<128x32xf32>, vector<32x32xf32>, vector<128x32xf32> -> vector<128x32xf32>
    %42 = arith.index_cast %c3_i32 : i32 to index
    %c0_29 = arith.constant 0 : index
    %c0_30 = arith.constant 0 : index
    %43 = vector.load %arg10[%42, %c0_29, %c0_30] : memref<8x128x32xf32, #tpu.memory_space<vmem>>, vector<1x128x32xf32>
    %44 = vector.shape_cast %43 : vector<1x128x32xf32> to vector<128x32xf32>
    %45 = arith.addf %41, %44 : vector<128x32xf32>
    %46 = math.tanh %45 : vector<128x32xf32>
    %47 = arith.index_cast %c3_i32 : i32 to index
    %c0_31 = arith.constant 0 : index
    %c0_32 = arith.constant 0 : index
    %48 = vector.load %arg11[%47, %c0_31, %c0_32] : memref<8x128x32xf32, #tpu.memory_space<vmem>>, vector<1x128x32xf32>
    %49 = vector.shape_cast %48 : vector<1x128x32xf32> to vector<128x32xf32>
    %50 = vector.shape_cast %46 : vector<128x32xf32> to vector<1x128x32xf32>
    tpu.vector_store %arg11[%47, %c0_31, %c0_32], %50 {strides = array<i32>} : memref<8x128x32xf32, #tpu.memory_space<vmem>>, vector<1x128x32xf32>,
    %c4_i32 = arith.constant 4 : i32
    %cst_33 = arith.constant dense<0.000000e+00> : vector<128x32xf32>
    %51 = tpu.matmul %46, %9, %cst_33 {dimension_numbers = #tpu.dot_dimension_numbers<[1], [0], [0], [1], [0, 0, 1, 1], [], []>} : vector<128x32xf32>, vector<32x32xf32>, vector<128x32xf32> -> vector<128x32xf32>
    %52 = arith.index_cast %c4_i32 : i32 to index
    %c0_34 = arith.constant 0 : index
    %c0_35 = arith.constant 0 : index
    %53 = vector.load %arg10[%52, %c0_34, %c0_35] : memref<8x128x32xf32, #tpu.memory_space<vmem>>, vector<1x128x32xf32>
    %54 = vector.shape_cast %53 : vector<1x128x32xf32> to vector<128x32xf32>
    %55 = arith.addf %51, %54 : vector<128x32xf32>
    %56 = math.tanh %55 : vector<128x32xf32>
    %57 = arith.index_cast %c4_i32 : i32 to index
    %c0_36 = arith.constant 0 : index
    %c0_37 = arith.constant 0 : index
    %58 = vector.load %arg11[%57, %c0_36, %c0_37] : memref<8x128x32xf32, #tpu.memory_space<vmem>>, vector<1x128x32xf32>
    %59 = vector.shape_cast %58 : vector<1x128x32xf32> to vector<128x32xf32>
    %60 = vector.shape_cast %56 : vector<128x32xf32> to vector<1x128x32xf32>
    tpu.vector_store %arg11[%57, %c0_36, %c0_37], %60 {strides = array<i32>} : memref<8x128x32xf32, #tpu.memory_space<vmem>>, vector<1x128x32xf32>,
    %c5_i32 = arith.constant 5 : i32
    %cst_38 = arith.constant dense<0.000000e+00> : vector<128x32xf32>
    %61 = tpu.matmul %56, %9, %cst_38 {dimension_numbers = #tpu.dot_dimension_numbers<[1], [0], [0], [1], [0, 0, 1, 1], [], []>} : vector<128x32xf32>, vector<32x32xf32>, vector<128x32xf32> -> vector<128x32xf32>
    %62 = arith.index_cast %c5_i32 : i32 to index
    %c0_39 = arith.constant 0 : index
    %c0_40 = arith.constant 0 : index
    %63 = vector.load %arg10[%62, %c0_39, %c0_40] : memref<8x128x32xf32, #tpu.memory_space<vmem>>, vector<1x128x32xf32>
    %64 = vector.shape_cast %63 : vector<1x128x32xf32> to vector<128x32xf32>
    %65 = arith.addf %61, %64 : vector<128x32xf32>
    %66 = math.tanh %65 : vector<128x32xf32>
    %67 = arith.index_cast %c5_i32 : i32 to index
    %c0_41 = arith.constant 0 : index
    %c0_42 = arith.constant 0 : index
    %68 = vector.load %arg11[%67, %c0_41, %c0_42] : memref<8x128x32xf32, #tpu.memory_space<vmem>>, vector<1x128x32xf32>
    %69 = vector.shape_cast %68 : vector<1x128x32xf32> to vector<128x32xf32>
    %70 = vector.shape_cast %66 : vector<128x32xf32> to vector<1x128x32xf32>
    tpu.vector_store %arg11[%67, %c0_41, %c0_42], %70 {strides = array<i32>} : memref<8x128x32xf32, #tpu.memory_space<vmem>>, vector<1x128x32xf32>,
    %c6_i32 = arith.constant 6 : i32
    %cst_43 = arith.constant dense<0.000000e+00> : vector<128x32xf32>
    %71 = tpu.matmul %66, %9, %cst_43 {dimension_numbers = #tpu.dot_dimension_numbers<[1], [0], [0], [1], [0, 0, 1, 1], [], []>} : vector<128x32xf32>, vector<32x32xf32>, vector<128x32xf32> -> vector<128x32xf32>
    %72 = arith.index_cast %c6_i32 : i32 to index
    %c0_44 = arith.constant 0 : index
    %c0_45 = arith.constant 0 : index
    %73 = vector.load %arg10[%72, %c0_44, %c0_45] : memref<8x128x32xf32, #tpu.memory_space<vmem>>, vector<1x128x32xf32>
    %74 = vector.shape_cast %73 : vector<1x128x32xf32> to vector<128x32xf32>
    %75 = arith.addf %71, %74 : vector<128x32xf32>
    %76 = math.tanh %75 : vector<128x32xf32>
    %77 = arith.index_cast %c6_i32 : i32 to index
    %c0_46 = arith.constant 0 : index
    %c0_47 = arith.constant 0 : index
    %78 = vector.load %arg11[%77, %c0_46, %c0_47] : memref<8x128x32xf32, #tpu.memory_space<vmem>>, vector<1x128x32xf32>
    %79 = vector.shape_cast %78 : vector<1x128x32xf32> to vector<128x32xf32>
    %80 = vector.shape_cast %76 : vector<128x32xf32> to vector<1x128x32xf32>
    tpu.vector_store %arg11[%77, %c0_46, %c0_47], %80 {strides = array<i32>} : memref<8x128x32xf32, #tpu.memory_space<vmem>>, vector<1x128x32xf32>,
    %c7_i32 = arith.constant 7 : i32
    %cst_48 = arith.constant dense<0.000000e+00> : vector<128x32xf32>
    %81 = tpu.matmul %76, %9, %cst_48 {dimension_numbers = #tpu.dot_dimension_numbers<[1], [0], [0], [1], [0, 0, 1, 1], [], []>} : vector<128x32xf32>, vector<32x32xf32>, vector<128x32xf32> -> vector<128x32xf32>
    %82 = arith.index_cast %c7_i32 : i32 to index
    %c0_49 = arith.constant 0 : index
    %c0_50 = arith.constant 0 : index
    %83 = vector.load %arg10[%82, %c0_49, %c0_50] : memref<8x128x32xf32, #tpu.memory_space<vmem>>, vector<1x128x32xf32>
    %84 = vector.shape_cast %83 : vector<1x128x32xf32> to vector<128x32xf32>
    %85 = arith.addf %81, %84 : vector<128x32xf32>
    %86 = math.tanh %85 : vector<128x32xf32>
    %87 = arith.index_cast %c7_i32 : i32 to index
    %c0_51 = arith.constant 0 : index
    %c0_52 = arith.constant 0 : index
    %88 = vector.load %arg11[%87, %c0_51, %c0_52] : memref<8x128x32xf32, #tpu.memory_space<vmem>>, vector<1x128x32xf32>
    %89 = vector.shape_cast %88 : vector<1x128x32xf32> to vector<128x32xf32>
    %90 = vector.shape_cast %86 : vector<128x32xf32> to vector<1x128x32xf32>
    tpu.vector_store %arg11[%87, %c0_51, %c0_52], %90 {strides = array<i32>} : memref<8x128x32xf32, #tpu.memory_space<vmem>>, vector<1x128x32xf32>,
    %c8_i32 = arith.constant 8 : i32
    %c0_53 = arith.constant 0 : index
    %c0_54 = arith.constant 0 : index
    %91 = vector.load %arg9[%c0_53, %c0_54] : memref<128x32xf32, #tpu.memory_space<vmem>>, vector<128x32xf32>
    tpu.vector_store %arg9[%c0_53, %c0_54], %86 {strides = array<i32>} : memref<128x32xf32, #tpu.memory_space<vmem>>, vector<128x32xf32>,
    %c0_55 = arith.constant 0 : index
    %c0_56 = arith.constant 0 : index
    %c0_57 = arith.constant 0 : index
    %92 = vector.load %arg11[%c0_55, %c0_56, %c0_57] : memref<8x128x32xf32, #tpu.memory_space<vmem>>, vector<8x128x32xf32>
    %93 = vector.shape_cast %92 : vector<8x128x32xf32> to vector<1024x32xf32>
    %c0_58 = arith.constant 0 : index
    %c0_59 = arith.constant 0 : index
    %94 = vector.load %arg6[%c0_58, %c0_59] : memref<32x8xf32, #tpu.memory_space<vmem>>, vector<32x8xf32>
    %cst_60 = arith.constant dense<0.000000e+00> : vector<1024x8xf32>
    %95 = tpu.matmul %93, %94, %cst_60 {dimension_numbers = #tpu.dot_dimension_numbers<[1], [0], [0], [1], [0, 0, 1, 1], [], []>} : vector<1024x32xf32>, vector<32x8xf32>, vector<1024x8xf32> -> vector<1024x8xf32>
    %c0_61 = arith.constant 0 : index
    %c0_62 = arith.constant 0 : index
    %96 = vector.load %arg7[%c0_61, %c0_62] : memref<1x8xf32, #tpu.memory_space<vmem>>, vector<1x8xf32>
    %97 = vector.broadcast %96 : vector<1x8xf32> to vector<1024x8xf32>
    %98 = arith.addf %95, %97 : vector<1024x8xf32>
    %99 = vector.shape_cast %98 : vector<1024x8xf32> to vector<8x128x8xf32>
    %c0_63 = arith.constant 0 : index
    %c0_64 = arith.constant 0 : index
    %c0_65 = arith.constant 0 : index
    %100 = vector.load %arg8[%c0_63, %c0_64, %c0_65] : memref<8x128x8xf32, #tpu.memory_space<vmem>>, vector<8x128x8xf32>
    tpu.vector_store %arg8[%c0_63, %c0_64, %c0_65], %99 {strides = array<i32>} : memref<8x128x8xf32, #tpu.memory_space<vmem>>, vector<8x128x8xf32>,
    return
  }
  func.func @transform_0(%arg0: i32) -> (i32, i32, i32) {
    %c0_i32 = arith.constant 0 : i32
    %c0_i32_0 = arith.constant 0 : i32
    %c0_i32_1 = arith.constant 0 : i32
    return %c0_i32, %arg0, %c0_i32_0 : i32, i32, i32
  }
  func.func @transform_1(%arg0: i32) -> (i32, i32) {
    %c0_i32 = arith.constant 0 : i32
    %c0_i32_0 = arith.constant 0 : i32
    return %arg0, %c0_i32 : i32, i32
  }
  func.func @transform_2(%arg0: i32) -> (i32, i32) {
    %c0_i32 = arith.constant 0 : i32
    %c0_i32_0 = arith.constant 0 : i32
    %c0_i32_1 = arith.constant 0 : i32
    return %c0_i32, %c0_i32_0 : i32, i32
  }
  func.func @transform_3(%arg0: i32) -> (i32, i32) {
    %c0_i32 = arith.constant 0 : i32
    %c0_i32_0 = arith.constant 0 : i32
    %c0_i32_1 = arith.constant 0 : i32
    return %c0_i32, %c0_i32_0 : i32, i32
  }
  func.func @transform_4(%arg0: i32) -> (i32, i32) {
    %c0_i32 = arith.constant 0 : i32
    %c0_i32_0 = arith.constant 0 : i32
    %c0_i32_1 = arith.constant 0 : i32
    return %c0_i32, %c0_i32_0 : i32, i32
  }
  func.func @transform_5(%arg0: i32) -> (i32, i32) {
    %c0_i32 = arith.constant 0 : i32
    %c0_i32_0 = arith.constant 0 : i32
    %c0_i32_1 = arith.constant 0 : i32
    return %c0_i32, %c0_i32_0 : i32, i32
  }
  func.func @transform_6(%arg0: i32) -> (i32, i32) {
    %c0_i32 = arith.constant 0 : i32
    %c0_i32_0 = arith.constant 0 : i32
    %c0_i32_1 = arith.constant 0 : i32
    return %c0_i32, %c0_i32_0 : i32, i32
  }
  func.func @transform_7(%arg0: i32) -> (i32, i32, i32) {
    %c0_i32 = arith.constant 0 : i32
    %c0_i32_0 = arith.constant 0 : i32
    %c0_i32_1 = arith.constant 0 : i32
    return %c0_i32, %arg0, %c0_i32_0 : i32, i32, i32
  }
  func.func @transform_8(%arg0: i32) -> (i32, i32) {
    %c0_i32 = arith.constant 0 : i32
    %c0_i32_0 = arith.constant 0 : i32
    return %arg0, %c0_i32 : i32, i32
  }
}

</mosaic_0001>

<llo_original>
// kernel: tpu_custom_call.1
$region0: #{tpu_custom_call.1}
  #allocation0 [shape = 'u32[]', space=smem, size = 0x4, offset = 0x4, fixed_abs, tag = 'smem constant byte address 0x4 - core index']
  #allocation1 [shape = 'u32[144,128]{1,0:T(1,128)}', space=vmem, size = 0x12000, scoped, tag = 'internal scratch']
  #allocation2 [shape = 'f32[8,128,32]{2,1,0:T(8,128)}', space=vmem, size = 0x80000, scoped, tag = 'scratch operand']
  #allocation3 [shape = 'f32[8,128,32]{2,1,0:T(8,128)}', space=vmem, size = 0x80000, scoped, tag = 'scratch operand']
  %s0 = inlined_call_operand.vmem [shape: f32[8,256,16], index: 0, kind: input, shape index: {}]
  %s1 = inlined_call_operand.vmem [shape: f32[256,32], index: 1, kind: input, shape index: {}]
  %s2 = inlined_call_operand.vmem [shape: f32[16,32], index: 2, kind: input, shape index: {}]
  %s3 = inlined_call_operand.vmem [shape: f32[32,32], index: 3, kind: input, shape index: {}]
  %s4 = inlined_call_operand.vmem [shape: f32[1,32], index: 4, kind: input, shape index: {}]
  %s5 = inlined_call_operand.vmem [shape: f32[32,8], index: 5, kind: input, shape index: {}]
  %s6 = inlined_call_operand.vmem [shape: f32[1,8], index: 6, kind: input, shape index: {}]
  %s7 = inlined_call_operand.vmem [shape: f32[8,256,8], index: 7, kind: output, shape index: {0}]
  %s8 = inlined_call_operand.vmem [shape: f32[256,32], index: 8, kind: output, shape index: {1}]
  %9 = xla_tuple %s7, %s8
  %s10 = sld [smem:[#allocation0]]
  $region141: #{tpu_custom_call.1} parent=0
    _
  %s12 = ssub.s32 1, %s10
  %s13 = scalar_select 0, %s12, %s10
  $region1: #{tpu_custom_call.1} parent=0
    #allocation4 [shape = 'u8[1048576]{0}', space=vmem, size = 0x100000, scoped, tag = 'input window, operand 0']
    #allocation5 [shape = 'u8[1048576]{0}', space=vmem, size = 0x100000, scoped, tag = 'output window, operand 0']
    loop: start=0, step=1, limit=4
    $region2: #{tpu_custom_call.1} parent=1 // loop_pre_header
      _
    $region3: #{tpu_custom_call.1} parent=1 // loop_header
      %s15 = sphi 0, %s19
      %p16 = scmp.ge.s32.totalorder %s15, 4
      %s25 = sphi 0, %s27
      %s28 = sphi 0, %s25
      %s29 = sphi 0, %s28
      %s45 = sphi 0, %s29
      %s51 = sphi 0, %s53
      %s54 = sphi 0, %s51
      %s55 = sphi 0, %s54
      %s71 = sphi 0, %s55
      %s75 = sphi 0, %s75
      %s77 = sphi 0, %s75
      %s78 = sphi 0, %s77
      %s92 = sphi 0, %s78
      %s96 = sphi 0, %s96
      %s98 = sphi 0, %s96
      %s99 = sphi 0, %s98
      %s113 = sphi 0, %s99
      %s117 = sphi 0, %s117
      %s119 = sphi 0, %s117
      %s120 = sphi 0, %s119
      %s134 = sphi 0, %s120
      %s138 = sphi 0, %s138
      %s140 = sphi 0, %s138
      %s141 = sphi 0, %s140
      %s155 = sphi 0, %s141
      %s159 = sphi 0, %s159
      %s161 = sphi 0, %s159
      %s162 = sphi 0, %s161
      %s176 = sphi 0, %s162
      %s182 = sphi 0, %s184
      %s185 = sphi 0, %s182
      %s186 = sphi 0, %s185
      %s202 = sphi 0, %s186
      %s208 = sphi 0, %s210
      %s211 = sphi 0, %s208
      %s212 = sphi 0, %s211
      %s228 = sphi 0, %s212
    $region4: #{tpu_custom_call.1} parent=1 // loop_header_branch
      %18 = sbr.rel (%p16) target = $region8
    $region5: #{tpu_custom_call.1} parent=1 // loop_body
      %s20 = ssub.s32 %s15, 1
      %s21 = ssub.s32 %s15, 2
      %s22 = sadd.s32 %s15, 1
      %s23 = ssub.s32 %s15, %s22
      %p24 = scmp.eq.s32.totalorder %s23, 0
      %s26 = sadd.s32 %s25, 1
      %s27 = scalar_select %p24, %s25, %s26
      %p30 = pneg %p24
      %p31 = scmp.eq.s32.totalorder %s15, 1
      %p32 = por %p30, %p31
      %p33 = scmp.ne.s32.totalorder %s25, %s28
      %p34 = scmp.eq.s32.totalorder %s15, 0
      %p35 = por %p33, %p34
      %p36 = scmp.ne.s32.totalorder %s25, %s28
      %p37 = scmp.eq.s32.totalorder %s20, 1
      %p38 = por %p36, %p37
      %p39 = scmp.ne.s32.totalorder %s28, %s29
      %p40 = scmp.eq.s32.totalorder %s20, 0
      %p41 = por %p39, %p40
      %p42 = scmp.ne.s32.totalorder %s28, %s29
      %p43 = scmp.eq.s32.totalorder %s21, 1
      %p44 = por %p42, %p43
      %p46 = scmp.ne.s32.totalorder %s29, %s45
      %p47 = scmp.eq.s32.totalorder %s21, 0
      %p48 = por %p46, %p47
      %s49 = ssub.s32 %s15, %s22
      %p50 = scmp.eq.s32.totalorder %s49, 0
      %s52 = sadd.s32 %s51, 1
      %s53 = scalar_select %p50, %s51, %s52
      %p56 = pneg %p50
      %p57 = scmp.eq.s32.totalorder %s15, 1
      %p58 = por %p56, %p57
      %p59 = scmp.ne.s32.totalorder %s51, %s54
      %p60 = scmp.eq.s32.totalorder %s15, 0
      %p61 = por %p59, %p60
      %p62 = scmp.ne.s32.totalorder %s51, %s54
      %p63 = scmp.eq.s32.totalorder %s20, 1
      %p64 = por %p62, %p63
      %p65 = scmp.ne.s32.totalorder %s54, %s55
      %p66 = scmp.eq.s32.totalorder %s20, 0
      %p67 = por %p65, %p66
      %p68 = scmp.ne.s32.totalorder %s54, %s55
      %p69 = scmp.eq.s32.totalorder %s21, 1
      %p70 = por %p68, %p69
      %p72 = scmp.ne.s32.totalorder %s55, %s71
      %p73 = scmp.eq.s32.totalorder %s21, 0
      %p74 = por %p72, %p73
      %s76 = sadd.s32 %s75, 1
      %p79 = scmp.eq.s32.totalorder %s15, 1
      %p80 = scmp.ne.s32.totalorder %s75, %s77
      %p81 = scmp.eq.s32.totalorder %s15, 0
      %p82 = por %p80, %p81
      %p83 = scmp.ne.s32.totalorder %s75, %s77
      %p84 = scmp.eq.s32.totalorder %s20, 1
      %p85 = por %p83, %p84
      %p86 = scmp.ne.s32.totalorder %s77, %s78
      %p87 = scmp.eq.s32.totalorder %s20, 0
      %p88 = por %p86, %p87
      %p89 = scmp.ne.s32.totalorder %s77, %s78
      %p90 = scmp.eq.s32.totalorder %s21, 1
      %p91 = por %p89, %p90
      %p93 = scmp.ne.s32.totalorder %s78, %s92
      %p94 = scmp.eq.s32.totalorder %s21, 0
      %p95 = por %p93, %p94
      %s97 = sadd.s32 %s96, 1
      %p100 = scmp.eq.s32.totalorder %s15, 1
      %p101 = scmp.ne.s32.totalorder %s96, %s98
      %p102 = scmp.eq.s32.totalorder %s15, 0
      %p103 = por %p101, %p102
      %p104 = scmp.ne.s32.totalorder %s96, %s98
      %p105 = scmp.eq.s32.totalorder %s20, 1
      %p106 = por %p104, %p105
      %p107 = scmp.ne.s32.totalorder %s98, %s99
      %p108 = scmp.eq.s32.totalorder %s20, 0
      %p109 = por %p107, %p108
      %p110 = scmp.ne.s32.totalorder %s98, %s99
      %p111 = scmp.eq.s32.totalorder %s21, 1
      %p112 = por %p110, %p111
      %p114 = scmp.ne.s32.totalorder %s99, %s113
      %p115 = scmp.eq.s32.totalorder %s21, 0
      %p116 = por %p114, %p115
      %s118 = sadd.s32 %s117, 1
      %p121 = scmp.eq.s32.totalorder %s15, 1
      %p122 = scmp.ne.s32.totalorder %s117, %s119
      %p123 = scmp.eq.s32.totalorder %s15, 0
      %p124 = por %p122, %p123
      %p125 = scmp.ne.s32.totalorder %s117, %s119
      %p126 = scmp.eq.s32.totalorder %s20, 1
      %p127 = por %p125, %p126
      %p128 = scmp.ne.s32.totalorder %s119, %s120
      %p129 = scmp.eq.s32.totalorder %s20, 0
      %p130 = por %p128, %p129
      %p131 = scmp.ne.s32.totalorder %s119, %s120
      %p132 = scmp.eq.s32.totalorder %s21, 1
      %p133 = por %p131, %p132
      %p135 = scmp.ne.s32.totalorder %s120, %s134
      %p136 = scmp.eq.s32.totalorder %s21, 0
      %p137 = por %p135, %p136
      %s139 = sadd.s32 %s138, 1
      %p142 = scmp.eq.s32.totalorder %s15, 1
      %p143 = scmp.ne.s32.totalorder %s138, %s140
      %p144 = scmp.eq.s32.totalorder %s15, 0
      %p145 = por %p143, %p144
      %p146 = scmp.ne.s32.totalorder %s138, %s140
      %p147 = scmp.eq.s32.totalorder %s20, 1
      %p148 = por %p146, %p147
      %p149 = scmp.ne.s32.totalorder %s140, %s141
      %p150 = scmp.eq.s32.totalorder %s20, 0
      %p151 = por %p149, %p150
      %p152 = scmp.ne.s32.totalorder %s140, %s141
      %p153 = scmp.eq.s32.totalorder %s21, 1
      %p154 = por %p152, %p153
      %p156 = scmp.ne.s32.totalorder %s141, %s155
      %p157 = scmp.eq.s32.totalorder %s21, 0
      %p158 = por %p156, %p157
      %s160 = sadd.s32 %s159, 1
      %p163 = scmp.eq.s32.totalorder %s15, 1
      %p164 = scmp.ne.s32.totalorder %s159, %s161
      %p165 = scmp.eq.s32.totalorder %s15, 0
      %p166 = por %p164, %p165
      %p167 = scmp.ne.s32.totalorder %s159, %s161
      %p168 = scmp.eq.s32.totalorder %s20, 1
      %p169 = por %p167, %p168
      %p170 = scmp.ne.s32.totalorder %s161, %s162
      %p171 = scmp.eq.s32.totalorder %s20, 0
      %p172 = por %p170, %p171
      %p173 = scmp.ne.s32.totalorder %s161, %s162
      %p174 = scmp.eq.s32.totalorder %s21, 1
      %p175 = por %p173, %p174
      %p177 = scmp.ne.s32.totalorder %s162, %s176
      %p178 = scmp.eq.s32.totalorder %s21, 0
      %p179 = por %p177, %p178
      %s180 = ssub.s32 %s15, %s22
      %p181 = scmp.eq.s32.totalorder %s180, 0
      %s183 = sadd.s32 %s182, 1
      %s184 = scalar_select %p181, %s182, %s183
      %p187 = pneg %p181
      %p188 = scmp.eq.s32.totalorder %s15, 1
      %p189 = por %p187, %p188
      %p190 = scmp.ne.s32.totalorder %s182, %s185
      %p191 = scmp.eq.s32.totalorder %s15, 0
      %p192 = por %p190, %p191
      %p193 = scmp.ne.s32.totalorder %s182, %s185
      %p194 = scmp.eq.s32.totalorder %s20, 1
      %p195 = por %p193, %p194
      %p196 = scmp.ne.s32.totalorder %s185, %s186
      %p197 = scmp.eq.s32.totalorder %s20, 0
      %p198 = por %p196, %p197
      %p199 = scmp.ne.s32.totalorder %s185, %s186
      %p200 = scmp.eq.s32.totalorder %s21, 1
      %p201 = por %p199, %p200
      %p203 = scmp.ne.s32.totalorder %s186, %s202
      %p204 = scmp.eq.s32.totalorder %s21, 0
      %p205 = por %p203, %p204
      %s206 = ssub.s32 %s15, %s22
      %p207 = scmp.eq.s32.totalorder %s206, 0
      %s209 = sadd.s32 %s208, 1
      %s210 = scalar_select %p207, %s208, %s209
      %p213 = pneg %p207
      %p214 = scmp.eq.s32.totalorder %s15, 1
      %p215 = por %p213, %p214
      %p216 = scmp.ne.s32.totalorder %s208, %s211
      %p217 = scmp.eq.s32.totalorder %s15, 0
      %p218 = por %p216, %p217
      %p219 = scmp.ne.s32.totalorder %s208, %s211
      %p220 = scmp.eq.s32.totalorder %s20, 1
      %p221 = por %p219, %p220
      %p222 = scmp.ne.s32.totalorder %s211, %s212
      %p223 = scmp.eq.s32.totalorder %s20, 0
      %p224 = por %p222, %p223
      %p225 = scmp.ne.s32.totalorder %s211, %s212
      %p226 = scmp.eq.s32.totalorder %s21, 1
      %p227 = por %p225, %p226
      %p229 = scmp.ne.s32.totalorder %s212, %s228
      %p230 = scmp.eq.s32.totalorder %s21, 0
      %p231 = por %p229, %p230
      %p232 = scmp.le.s32.totalorder 1, %s15
      %p233 = scmp.lt.s32.totalorder %s15, 3
      %p234 = pnand %p232, %p233
      %p235 = pneg %p234
      // Predicated region
      $region9: #{tpu_custom_call.1} parent=5 // pred_check
        _
      $region10: #{tpu_custom_call.1} parent=5 // pred_check_branch
        %237 = sbr.rel (%p234) target = $region12
      $region11: #{tpu_custom_call.1} parent=5 // pred_region
        %s238 = ssub.s32 %s15, 1
        // Predicated region
        $region13: #{tpu_custom_call.1} parent=11 // pred_check
          %p239 = pneg %p88
        $region14: #{tpu_custom_call.1} parent=11 // pred_check_branch
          %241 = sbr.rel (%p239) target = $region16
        $region15: #{tpu_custom_call.1} parent=11 // pred_region
          _
        $region16: #{tpu_custom_call.1} parent=11 // pred_fallthru
          _
        // Predicated region
        $region17: #{tpu_custom_call.1} parent=11 // pred_check
          %p242 = pneg %p109
        $region18: #{tpu_custom_call.1} parent=11 // pred_check_branch
          %244 = sbr.rel (%p242) target = $region20
        $region19: #{tpu_custom_call.1} parent=11 // pred_region
          _
        $region20: #{tpu_custom_call.1} parent=11 // pred_fallthru
          _
        // Predicated region
        $region21: #{tpu_custom_call.1} parent=11 // pred_check
          %p245 = pneg %p130
        $region22: #{tpu_custom_call.1} parent=11 // pred_check_branch
          %247 = sbr.rel (%p245) target = $region24
        $region23: #{tpu_custom_call.1} parent=11 // pred_region
          _
        $region24: #{tpu_custom_call.1} parent=11 // pred_fallthru
          _
        // Predicated region
        $region25: #{tpu_custom_call.1} parent=11 // pred_check
          %p248 = pneg %p151
        $region26: #{tpu_custom_call.1} parent=11 // pred_check_branch
          %250 = sbr.rel (%p248) target = $region28
        $region27: #{tpu_custom_call.1} parent=11 // pred_region
          _
        $region28: #{tpu_custom_call.1} parent=11 // pred_fallthru
          _
        // Predicated region
        $region29: #{tpu_custom_call.1} parent=11 // pred_check
          %p251 = pneg %p172
        $region30: #{tpu_custom_call.1} parent=11 // pred_check_branch
          %253 = sbr.rel (%p251) target = $region32
        $region31: #{tpu_custom_call.1} parent=11 // pred_region
          _
        $region32: #{tpu_custom_call.1} parent=11 // pred_fallthru
          _
      $region12: #{tpu_custom_call.1} parent=5 // pred_fallthru
        _
      %p254 = scmp.lt.s32.totalorder %s15, 2
      // Predicated region
      $region33: #{tpu_custom_call.1} parent=5 // pred_check
        %p255 = pneg %p254
      $region34: #{tpu_custom_call.1} parent=5 // pred_check_branch
        %257 = sbr.rel (%p255) target = $region36
      $region35: #{tpu_custom_call.1} parent=5 // pred_region
        // Predicated region
        $region37: #{tpu_custom_call.1} parent=35 // pred_check
          %p258 = pneg %p35
        $region38: #{tpu_custom_call.1} parent=35 // pred_check_branch
          %260 = sbr.rel (%p258) target = $region40
        $region39: #{tpu_custom_call.1} parent=35 // pred_region
          %s261 = sand.u32 %s25, 1
          %s262 = sand.u32 %s25, 1
          %s263 = smul.addr %s262, 1024
          %s264 = scalar_lea.vmem [#allocation4], %s263
          %s265 = smul.u32 16, %s15
          %s266 = smul.addr %s265, 8
          %s267 = scalar_lea.vmem %s0, %s266
          // Predicated region
          $region41: #{tpu_custom_call.1} parent=39 // pred_check
            _
          $region42: #{tpu_custom_call.1} parent=39 // pred_check_branch
            %269 = sbr.rel (0) target = $region44
          $region43: #{tpu_custom_call.1} parent=39 // pred_region
            // Predicated region
            $region45: #{tpu_custom_call.1} parent=43 // pred_check
              _
            $region46: #{tpu_custom_call.1} parent=43 // pred_check_branch
              %271 = sbr.rel (0) target = $region48
            $region47: #{tpu_custom_call.1} parent=43 // pred_region
              // Predicated region
              $region60: #{tpu_custom_call.1} parent=47 // pred_check
                _
              $region61: #{tpu_custom_call.1} parent=47 // pred_check_branch
                %540 = sbr.rel (0) target = $region63
              $region62: #{tpu_custom_call.1} parent=47 // pred_region
                loop: start=0, step=1, limit=1
                $region64: #{tpu_custom_call.1} parent=62 // loop_pre_header
                  _
                $region65: #{tpu_custom_call.1} parent=62 // loop_header
                  %s542 = sphi 0, %s546
                  %p543 = scmp.ge.s32.totalorder %s542, 1
                  %s547 = sphi %s267, %s267
                  %s548 = sphi %s264, %s264
                $region66: #{tpu_custom_call.1} parent=62 // loop_header_branch
                  %545 = sbr.rel (%p543) target = $region70
                $region67: #{tpu_custom_call.1} parent=62 // loop_body
                  %v549 = vld [vmem:[%s547] sm:$0xff]
                  %550 = vst [vmem:[%s548] sm:$0xff] %v549
                  %v551 = vld [vmem:[%s547 + $0x8] sm:$0xff]
                  %552 = vst [vmem:[%s548 + $0x8] sm:$0xff] %v551
                  %v553 = vld [vmem:[%s547 + $0x10] sm:$0xff]
                  %554 = vst [vmem:[%s548 + $0x10] sm:$0xff] %v553
                  %v555 = vld [vmem:[%s547 + $0x18] sm:$0xff]
                  %556 = vst [vmem:[%s548 + $0x18] sm:$0xff] %v555
                  %v557 = vld [vmem:[%s547 + $0x20] sm:$0xff]
                  %558 = vst [vmem:[%s548 + $0x20] sm:$0xff] %v557
                  %v559 = vld [vmem:[%s547 + $0x28] sm:$0xff]
                  %560 = vst [vmem:[%s548 + $0x28] sm:$0xff] %v559
                  %v561 = vld [vmem:[%s547 + $0x30] sm:$0xff]
                  %562 = vst [vmem:[%s548 + $0x30] sm:$0xff] %v561
                  %v563 = vld [vmem:[%s547 + $0x38] sm:$0xff]
                  %564 = vst [vmem:[%s548 + $0x38] sm:$0xff] %v563
                  %v565 = vld [vmem:[%s547 + $0x40] sm:$0xff]
                  %566 = vst [vmem:[%s548 + $0x40] sm:$0xff] %v565
                  %v567 = vld [vmem:[%s547 + $0x48] sm:$0xff]
                  %568 = vst [vmem:[%s548 + $0x48] sm:$0xff] %v567
                  %v569 = vld [vmem:[%s547 + $0x50] sm:$0xff]
                  %570 = vst [vmem:[%s548 + $0x50] sm:$0xff] %v569
                  %v571 = vld [vmem:[%s547 + $0x58] sm:$0xff]
                  %572 = vst [vmem:[%s548 + $0x58] sm:$0xff] %v571
                  %v573 = vld [vmem:[%s547 + $0x60] sm:$0xff]
                  %574 = vst [vmem:[%s548 + $0x60] sm:$0xff] %v573
                  %v575 = vld [vmem:[%s547 + $0x68] sm:$0xff]
                  %576 = vst [vmem:[%s548 + $0x68] sm:$0xff] %v575
                  %v577 = vld [vmem:[%s547 + $0x70] sm:$0xff]
                  %578 = vst [vmem:[%s548 + $0x70] sm:$0xff] %v577
                  %v579 = vld [vmem:[%s547 + $0x78] sm:$0xff]
                  %580 = vst [vmem:[%s548 + $0x78] sm:$0xff] %v579
                  %v581 = vld [vmem:[%s547 + $0x100] sm:$0xff]
                  %582 = vst [vmem:[%s548 + $0x80] sm:$0xff] %v581
                  %v583 = vld [vmem:[%s547 + $0x108] sm:$0xff]
                  %584 = vst [vmem:[%s548 + $0x88] sm:$0xff] %v583
                  %v585 = vld [vmem:[%s547 + $0x110] sm:$0xff]
                  %586 = vst [vmem:[%s548 + $0x90] sm:$0xff] %v585
                  %v587 = vld [vmem:[%s547 + $0x118] sm:$0xff]
                  %588 = vst [vmem:[%s548 + $0x98] sm:$0xff] %v587
                  %v589 = vld [vmem:[%s547 + $0x120] sm:$0xff]
                  %590 = vst [vmem:[%s548 + $0xa0] sm:$0xff] %v589
                  %v591 = vld [vmem:[%s547 + $0x128] sm:$0xff]
                  %592 = vst [vmem:[%s548 + $0xa8] sm:$0xff] %v591
                  %v593 = vld [vmem:[%s547 + $0x130] sm:$0xff]
                  %594 = vst [vmem:[%s548 + $0xb0] sm:$0xff] %v593
                  %v595 = vld [vmem:[%s547 + $0x138] sm:$0xff]
                  %596 = vst [vmem:[%s548 + $0xb8] sm:$0xff] %v595
                  %v597 = vld [vmem:[%s547 + $0x140] sm:$0xff]
                  %598 = vst [vmem:[%s548 + $0xc0] sm:$0xff] %v597
                  %v599 = vld [vmem:[%s547 + $0x148] sm:$0xff]
                  %600 = vst [vmem:[%s548 + $0xc8] sm:$0xff] %v599
                  %v601 = vld [vmem:[%s547 + $0x150] sm:$0xff]
                  %602 = vst [vmem:[%s548 + $0xd0] sm:$0xff] %v601
                  %v603 = vld [vmem:[%s547 + $0x158] sm:$0xff]
                  %604 = vst [vmem:[%s548 + $0xd8] sm:$0xff] %v603
                  %v605 = vld [vmem:[%s547 + $0x160] sm:$0xff]
                  %606 = vst [vmem:[%s548 + $0xe0] sm:$0xff] %v605
                  %v607 = vld [vmem:[%s547 + $0x168] sm:$0xff]
                  %608 = vst [vmem:[%s548 + $0xe8] sm:$0xff] %v607
                  %v609 = vld [vmem:[%s547 + $0x170] sm:$0xff]
                  %610 = vst [vmem:[%s548 + $0xf0] sm:$0xff] %v609
                  %v611 = vld [vmem:[%s547 + $0x178] sm:$0xff]
                  %612 = vst [vmem:[%s548 + $0xf8] sm:$0xff] %v611
                  %v613 = vld [vmem:[%s547 + $0x200] sm:$0xff]
                  %614 = vst [vmem:[%s548 + $0x100] sm:$0xff] %v613
                  %v615 = vld [vmem:[%s547 + $0x208] sm:$0xff]
                  %616 = vst [vmem:[%s548 + $0x108] sm:$0xff] %v615
                  %v617 = vld [vmem:[%s547 + $0x210] sm:$0xff]
                  %618 = vst [vmem:[%s548 + $0x110] sm:$0xff] %v617
                  %v619 = vld [vmem:[%s547 + $0x218] sm:$0xff]
                  %620 = vst [vmem:[%s548 + $0x118] sm:$0xff] %v619
                  %v621 = vld [vmem:[%s547 + $0x220] sm:$0xff]
                  %622 = vst [vmem:[%s548 + $0x120] sm:$0xff] %v621
                  %v623 = vld [vmem:[%s547 + $0x228] sm:$0xff]
                  %624 = vst [vmem:[%s548 + $0x128] sm:$0xff] %v623
                  %v625 = vld [vmem:[%s547 + $0x230] sm:$0xff]
                  %626 = vst [vmem:[%s548 + $0x130] sm:$0xff] %v625
                  %v627 = vld [vmem:[%s547 + $0x238] sm:$0xff]
                  %628 = vst [vmem:[%s548 + $0x138] sm:$0xff] %v627
                  %v629 = vld [vmem:[%s547 + $0x240] sm:$0xff]
                  %630 = vst [vmem:[%s548 + $0x140] sm:$0xff] %v629
                  %v631 = vld [vmem:[%s547 + $0x248] sm:$0xff]
                  %632 = vst [vmem:[%s548 + $0x148] sm:$0xff] %v631
                  %v633 = vld [vmem:[%s547 + $0x250] sm:$0xff]
                  %634 = vst [vmem:[%s548 + $0x150] sm:$0xff] %v633
                  %v635 = vld [vmem:[%s547 + $0x258] sm:$0xff]
                  %636 = vst [vmem:[%s548 + $0x158] sm:$0xff] %v635
                  %v637 = vld [vmem:[%s547 + $0x260] sm:$0xff]
                  %638 = vst [vmem:[%s548 + $0x160] sm:$0xff] %v637
                  %v639 = vld [vmem:[%s547 + $0x268] sm:$0xff]
                  %640 = vst [vmem:[%s548 + $0x168] sm:$0xff] %v639
                  %v641 = vld [vmem:[%s547 + $0x270] sm:$0xff]
                  %642 = vst [vmem:[%s548 + $0x170] sm:$0xff] %v641
                  %v643 = vld [vmem:[%s547 + $0x278] sm:$0xff]
                  %644 = vst [vmem:[%s548 + $0x178] sm:$0xff] %v643
                  %v645 = vld [vmem:[%s547 + $0x300] sm:$0xff]
                  %646 = vst [vmem:[%s548 + $0x180] sm:$0xff] %v645
                  %v647 = vld [vmem:[%s547 + $0x308] sm:$0xff]
                  %648 = vst [vmem:[%s548 + $0x188] sm:$0xff] %v647
                  %v649 = vld [vmem:[%s547 + $0x310] sm:$0xff]
                  %650 = vst [vmem:[%s548 + $0x190] sm:$0xff] %v649
                  %v651 = vld [vmem:[%s547 + $0x318] sm:$0xff]
                  %652 = vst [vmem:[%s548 + $0x198] sm:$0xff] %v651
                  %v653 = vld [vmem:[%s547 + $0x320] sm:$0xff]
                  %654 = vst [vmem:[%s548 + $0x1a0] sm:$0xff] %v653
                  %v655 = vld [vmem:[%s547 + $0x328] sm:$0xff]
                  %656 = vst [vmem:[%s548 + $0x1a8] sm:$0xff] %v655
                  %v657 = vld [vmem:[%s547 + $0x330] sm:$0xff]
                  %658 = vst [vmem:[%s548 + $0x1b0] sm:$0xff] %v657
                  %v659 = vld [vmem:[%s547 + $0x338] sm:$0xff]
                  %660 = vst [vmem:[%s548 + $0x1b8] sm:$0xff] %v659
                  %v661 = vld [vmem:[%s547 + $0x340] sm:$0xff]
                  %662 = vst [vmem:[%s548 + $0x1c0] sm:$0xff] %v661
                  %v663 = vld [vmem:[%s547 + $0x348] sm:$0xff]
                  %664 = vst [vmem:[%s548 + $0x1c8] sm:$0xff] %v663
                  %v665 = vld [vmem:[%s547 + $0x350] sm:$0xff]
                  %666 = vst [vmem:[%s548 + $0x1d0] sm:$0xff] %v665
                  %v667 = vld [vmem:[%s547 + $0x358] sm:$0xff]
                  %668 = vst [vmem:[%s548 + $0x1d8] sm:$0xff] %v667
                  %v669 = vld [vmem:[%s547 + $0x360] sm:$0xff]
                  %670 = vst [vmem:[%s548 + $0x1e0] sm:$0xff] %v669
                  %v671 = vld [vmem:[%s547 + $0x368] sm:$0xff]
                  %672 = vst [vmem:[%s548 + $0x1e8] sm:$0xff] %v671
                  %v673 = vld [vmem:[%s547 + $0x370] sm:$0xff]
                  %674 = vst [vmem:[%s548 + $0x1f0] sm:$0xff] %v673
                  %v675 = vld [vmem:[%s547 + $0x378] sm:$0xff]
                  %676 = vst [vmem:[%s548 + $0x1f8] sm:$0xff] %v675
                  %v677 = vld [vmem:[%s547 + $0x400] sm:$0xff]
                  %678 = vst [vmem:[%s548 + $0x200] sm:$0xff] %v677
                  %v679 = vld [vmem:[%s547 + $0x408] sm:$0xff]
                  %680 = vst [vmem:[%s548 + $0x208] sm:$0xff] %v679
                  %v681 = vld [vmem:[%s547 + $0x410] sm:$0xff]
                  %682 = vst [vmem:[%s548 + $0x210] sm:$0xff] %v681
                  %v683 = vld [vmem:[%s547 + $0x418] sm:$0xff]
                  %684 = vst [vmem:[%s548 + $0x218] sm:$0xff] %v683
                  %v685 = vld [vmem:[%s547 + $0x420] sm:$0xff]
                  %686 = vst [vmem:[%s548 + $0x220] sm:$0xff] %v685
                  %v687 = vld [vmem:[%s547 + $0x428] sm:$0xff]
                  %688 = vst [vmem:[%s548 + $0x228] sm:$0xff] %v687
                  %v689 = vld [vmem:[%s547 + $0x430] sm:$0xff]
                  %690 = vst [vmem:[%s548 + $0x230] sm:$0xff] %v689
                  %v691 = vld [vmem:[%s547 + $0x438] sm:$0xff]
                  %692 = vst [vmem:[%s548 + $0x238] sm:$0xff] %v691
                  %v693 = vld [vmem:[%s547 + $0x440] sm:$0xff]
                  %694 = vst [vmem:[%s548 + $0x240] sm:$0xff] %v693
                  %v695 = vld [vmem:[%s547 + $0x448] sm:$0xff]
                  %696 = vst [vmem:[%s548 + $0x248] sm:$0xff] %v695
                  %v697 = vld [vmem:[%s547 + $0x450] sm:$0xff]
                  %698 = vst [vmem:[%s548 + $0x250] sm:$0xff] %v697
                  %v699 = vld [vmem:[%s547 + $0x458] sm:$0xff]
                  %700 = vst [vmem:[%s548 + $0x258] sm:$0xff] %v699
                  %v701 = vld [vmem:[%s547 + $0x460] sm:$0xff]
                  %702 = vst [vmem:[%s548 + $0x260] sm:$0xff] %v701
                  %v703 = vld [vmem:[%s547 + $0x468] sm:$0xff]
                  %704 = vst [vmem:[%s548 + $0x268] sm:$0xff] %v703
                  %v705 = vld [vmem:[%s547 + $0x470] sm:$0xff]
                  %706 = vst [vmem:[%s548 + $0x270] sm:$0xff] %v705
                  %v707 = vld [vmem:[%s547 + $0x478] sm:$0xff]
                  %708 = vst [vmem:[%s548 + $0x278] sm:$0xff] %v707
                  %v709 = vld [vmem:[%s547 + $0x500] sm:$0xff]
                  %710 = vst [vmem:[%s548 + $0x280] sm:$0xff] %v709
                  %v711 = vld [vmem:[%s547 + $0x508] sm:$0xff]
                  %712 = vst [vmem:[%s548 + $0x288] sm:$0xff] %v711
                  %v713 = vld [vmem:[%s547 + $0x510] sm:$0xff]
                  %714 = vst [vmem:[%s548 + $0x290] sm:$0xff] %v713
                  %v715 = vld [vmem:[%s547 + $0x518] sm:$0xff]
                  %716 = vst [vmem:[%s548 + $0x298] sm:$0xff] %v715
                  %v717 = vld [vmem:[%s547 + $0x520] sm:$0xff]
                  %718 = vst [vmem:[%s548 + $0x2a0] sm:$0xff] %v717
                  %v719 = vld [vmem:[%s547 + $0x528] sm:$0xff]
                  %720 = vst [vmem:[%s548 + $0x2a8] sm:$0xff] %v719
                  %v721 = vld [vmem:[%s547 + $0x530] sm:$0xff]
                  %722 = vst [vmem:[%s548 + $0x2b0] sm:$0xff] %v721
                  %v723 = vld [vmem:[%s547 + $0x538] sm:$0xff]
                  %724 = vst [vmem:[%s548 + $0x2b8] sm:$0xff] %v723
                  %v725 = vld [vmem:[%s547 + $0x540] sm:$0xff]
                  %726 = vst [vmem:[%s548 + $0x2c0] sm:$0xff] %v725
                  %v727 = vld [vmem:[%s547 + $0x548] sm:$0xff]
                  %728 = vst [vmem:[%s548 + $0x2c8] sm:$0xff] %v727
                  %v729 = vld [vmem:[%s547 + $0x550] sm:$0xff]
                  %730 = vst [vmem:[%s548 + $0x2d0] sm:$0xff] %v729
                  %v731 = vld [vmem:[%s547 + $0x558] sm:$0xff]
                  %732 = vst [vmem:[%s548 + $0x2d8] sm:$0xff] %v731
                  %v733 = vld [vmem:[%s547 + $0x560] sm:$0xff]
                  %734 = vst [vmem:[%s548 + $0x2e0] sm:$0xff] %v733
                  %v735 = vld [vmem:[%s547 + $0x568] sm:$0xff]
                  %736 = vst [vmem:[%s548 + $0x2e8] sm:$0xff] %v735
                  %v737 = vld [vmem:[%s547 + $0x570] sm:$0xff]
                  %738 = vst [vmem:[%s548 + $0x2f0] sm:$0xff] %v737
                  %v739 = vld [vmem:[%s547 + $0x578] sm:$0xff]
                  %740 = vst [vmem:[%s548 + $0x2f8] sm:$0xff] %v739
                  %v741 = vld [vmem:[%s547 + $0x600] sm:$0xff]
                  %742 = vst [vmem:[%s548 + $0x300] sm:$0xff] %v741
                  %v743 = vld [vmem:[%s547 + $0x608] sm:$0xff]
                  %744 = vst [vmem:[%s548 + $0x308] sm:$0xff] %v743
                  %v745 = vld [vmem:[%s547 + $0x610] sm:$0xff]
                  %746 = vst [vmem:[%s548 + $0x310] sm:$0xff] %v745
                  %v747 = vld [vmem:[%s547 + $0x618] sm:$0xff]
                  %748 = vst [vmem:[%s548 + $0x318] sm:$0xff] %v747
                  %v749 = vld [vmem:[%s547 + $0x620] sm:$0xff]
                  %750 = vst [vmem:[%s548 + $0x320] sm:$0xff] %v749
                  %v751 = vld [vmem:[%s547 + $0x628] sm:$0xff]
                  %752 = vst [vmem:[%s548 + $0x328] sm:$0xff] %v751
                  %v753 = vld [vmem:[%s547 + $0x630] sm:$0xff]
                  %754 = vst [vmem:[%s548 + $0x330] sm:$0xff] %v753
                  %v755 = vld [vmem:[%s547 + $0x638] sm:$0xff]
                  %756 = vst [vmem:[%s548 + $0x338] sm:$0xff] %v755
                  %v757 = vld [vmem:[%s547 + $0x640] sm:$0xff]
                  %758 = vst [vmem:[%s548 + $0x340] sm:$0xff] %v757
                  %v759 = vld [vmem:[%s547 + $0x648] sm:$0xff]
                  %760 = vst [vmem:[%s548 + $0x348] sm:$0xff] %v759
                  %v761 = vld [vmem:[%s547 + $0x650] sm:$0xff]
                  %762 = vst [vmem:[%s548 + $0x350] sm:$0xff] %v761
                  %v763 = vld [vmem:[%s547 + $0x658] sm:$0xff]
                  %764 = vst [vmem:[%s548 + $0x358] sm:$0xff] %v763
                  %v765 = vld [vmem:[%s547 + $0x660] sm:$0xff]
                  %766 = vst [vmem:[%s548 + $0x360] sm:$0xff] %v765
                  %v767 = vld [vmem:[%s547 + $0x668] sm:$0xff]
                  %768 = vst [vmem:[%s548 + $0x368] sm:$0xff] %v767
                  %v769 = vld [vmem:[%s547 + $0x670] sm:$0xff]
                  %770 = vst [vmem:[%s548 + $0x370] sm:$0xff] %v769
                  %v771 = vld [vmem:[%s547 + $0x678] sm:$0xff]
                  %772 = vst [vmem:[%s548 + $0x378] sm:$0xff] %v771
                  %v773 = vld [vmem:[%s547 + $0x700] sm:$0xff]
                  %774 = vst [vmem:[%s548 + $0x380] sm:$0xff] %v773
                  %v775 = vld [vmem:[%s547 + $0x708] sm:$0xff]
                  %776 = vst [vmem:[%s548 + $0x388] sm:$0xff] %v775
                  %v777 = vld [vmem:[%s547 + $0x710] sm:$0xff]
                  %778 = vst [vmem:[%s548 + $0x390] sm:$0xff] %v777
                  %v779 = vld [vmem:[%s547 + $0x718] sm:$0xff]
                  %780 = vst [vmem:[%s548 + $0x398] sm:$0xff] %v779
                  %v781 = vld [vmem:[%s547 + $0x720] sm:$0xff]
                  %782 = vst [vmem:[%s548 + $0x3a0] sm:$0xff] %v781
                  %v783 = vld [vmem:[%s547 + $0x728] sm:$0xff]
                  %784 = vst [vmem:[%s548 + $0x3a8] sm:$0xff] %v783
                  %v785 = vld [vmem:[%s547 + $0x730] sm:$0xff]
                  %786 = vst [vmem:[%s548 + $0x3b0] sm:$0xff] %v785
                  %v787 = vld [vmem:[%s547 + $0x738] sm:$0xff]
                  %788 = vst [vmem:[%s548 + $0x3b8] sm:$0xff] %v787
                  %v789 = vld [vmem:[%s547 + $0x740] sm:$0xff]
                  %790 = vst [vmem:[%s548 + $0x3c0] sm:$0xff] %v789
                  %v791 = vld [vmem:[%s547 + $0x748] sm:$0xff]
                  %792 = vst [vmem:[%s548 + $0x3c8] sm:$0xff] %v791
                  %v793 = vld [vmem:[%s547 + $0x750] sm:$0xff]
                  %794 = vst [vmem:[%s548 + $0x3d0] sm:$0xff] %v793
                  %v795 = vld [vmem:[%s547 + $0x758] sm:$0xff]
                  %796 = vst [vmem:[%s548 + $0x3d8] sm:$0xff] %v795
                  %v797 = vld [vmem:[%s547 + $0x760] sm:$0xff]
                  %798 = vst [vmem:[%s548 + $0x3e0] sm:$0xff] %v797
                  %v799 = vld [vmem:[%s547 + $0x768] sm:$0xff]
                  %800 = vst [vmem:[%s548 + $0x3e8] sm:$0xff] %v799
                  %v801 = vld [vmem:[%s547 + $0x770] sm:$0xff]
                  %802 = vst [vmem:[%s548 + $0x3f0] sm:$0xff] %v801
                  %v803 = vld [vmem:[%s547 + $0x778] sm:$0xff]
                  %804 = vst [vmem:[%s548 + $0x3f8] sm:$0xff] %v803
                $region68: #{tpu_custom_call.1} parent=62 // loop_footer
                  %s546 = sadd.s32 1, %s542
                $region69: #{tpu_custom_call.1} parent=62 // loop_footer_branch
                  %541 = sbr.rel target = $region65
                $region70: #{tpu_custom_call.1} parent=62 // loop_exit
                  _
              $region63: #{tpu_custom_call.1} parent=47 // pred_fallthru
                _
              // Predicated region
              $region71: #{tpu_custom_call.1} parent=47 // pred_check
                _
              $region72: #{tpu_custom_call.1} parent=47 // pred_check_branch
                %806 = sbr.rel target = $region74
              $region73: #{tpu_custom_call.1} parent=47 // pred_region
                _
              $region74: #{tpu_custom_call.1} parent=47 // pred_fallthru
                _
            $region48: #{tpu_custom_call.1} parent=43 // pred_fallthru
              _
            // Predicated region
            $region49: #{tpu_custom_call.1} parent=43 // pred_check
              _
            $region50: #{tpu_custom_call.1} parent=43 // pred_check_branch
              %273 = sbr.rel target = $region52
            $region51: #{tpu_custom_call.1} parent=43 // pred_region
              loop: start=0, step=1, limit=1
              $region53: #{tpu_custom_call.1} parent=51 // loop_pre_header
                _
              $region54: #{tpu_custom_call.1} parent=51 // loop_header
                %s276 = sphi 0, %s280
                %p277 = scmp.ge.s32.totalorder %s276, 1
                %s281 = sphi %s267, %s267
                %s282 = sphi %s264, %s264
              $region55: #{tpu_custom_call.1} parent=51 // loop_header_branch
                %279 = sbr.rel (%p277) target = $region59
              $region56: #{tpu_custom_call.1} parent=51 // loop_body
                %v283 = vld [vmem:[%s281] sm:$0xff]
                %284 = vst [vmem:[%s282] sm:$0xff] %v283
                %v285 = vld [vmem:[%s281 + $0x8] sm:$0xff]
                %286 = vst [vmem:[%s282 + $0x8] sm:$0xff] %v285
                %v287 = vld [vmem:[%s281 + $0x10] sm:$0xff]
                %288 = vst [vmem:[%s282 + $0x10] sm:$0xff] %v287
                %v289 = vld [vmem:[%s281 + $0x18] sm:$0xff]
                %290 = vst [vmem:[%s282 + $0x18] sm:$0xff] %v289
                %v291 = vld [vmem:[%s281 + $0x20] sm:$0xff]
                %292 = vst [vmem:[%s282 + $0x20] sm:$0xff] %v291
                %v293 = vld [vmem:[%s281 + $0x28] sm:$0xff]
                %294 = vst [vmem:[%s282 + $0x28] sm:$0xff] %v293
                %v295 = vld [vmem:[%s281 + $0x30] sm:$0xff]
                %296 = vst [vmem:[%s282 + $0x30] sm:$0xff] %v295
                %v297 = vld [vmem:[%s281 + $0x38] sm:$0xff]
                %298 = vst [vmem:[%s282 + $0x38] sm:$0xff] %v297
                %v299 = vld [vmem:[%s281 + $0x40] sm:$0xff]
                %300 = vst [vmem:[%s282 + $0x40] sm:$0xff] %v299
                %v301 = vld [vmem:[%s281 + $0x48] sm:$0xff]
                %302 = vst [vmem:[%s282 + $0x48] sm:$0xff] %v301
                %v303 = vld [vmem:[%s281 + $0x50] sm:$0xff]
                %304 = vst [vmem:[%s282 + $0x50] sm:$0xff] %v303
                %v305 = vld [vmem:[%s281 + $0x58] sm:$0xff]
                %306 = vst [vmem:[%s282 + $0x58] sm:$0xff] %v305
                %v307 = vld [vmem:[%s281 + $0x60] sm:$0xff]
                %308 = vst [vmem:[%s282 + $0x60] sm:$0xff] %v307
                %v309 = vld [vmem:[%s281 + $0x68] sm:$0xff]
                %310 = vst [vmem:[%s282 + $0x68] sm:$0xff] %v309
                %v311 = vld [vmem:[%s281 + $0x70] sm:$0xff]
                %312 = vst [vmem:[%s282 + $0x70] sm:$0xff] %v311
                %v313 = vld [vmem:[%s281 + $0x78] sm:$0xff]
                %314 = vst [vmem:[%s282 + $0x78] sm:$0xff] %v313
                %v315 = vld [vmem:[%s281 + $0x100] sm:$0xff]
                %316 = vst [vmem:[%s282 + $0x80] sm:$0xff] %v315
                %v317 = vld [vmem:[%s281 + $0x108] sm:$0xff]
                %318 = vst [vmem:[%s282 + $0x88] sm:$0xff] %v317
                %v319 = vld [vmem:[%s281 + $0x110] sm:$0xff]
                %320 = vst [vmem:[%s282 + $0x90] sm:$0xff] %v319
                %v321 = vld [vmem:[%s281 + $0x118] sm:$0xff]
                %322 = vst [vmem:[%s282 + $0x98] sm:$0xff] %v321
                %v323 = vld [vmem:[%s281 + $0x120] sm:$0xff]
                %324 = vst [vmem:[%s282 + $0xa0] sm:$0xff] %v323
                %v325 = vld [vmem:[%s281 + $0x128] sm:$0xff]
                %326 = vst [vmem:[%s282 + $0xa8] sm:$0xff] %v325
                %v327 = vld [vmem:[%s281 + $0x130] sm:$0xff]
                %328 = vst [vmem:[%s282 + $0xb0] sm:$0xff] %v327
                %v329 = vld [vmem:[%s281 + $0x138] sm:$0xff]
                %330 = vst [vmem:[%s282 + $0xb8] sm:$0xff] %v329
                %v331 = vld [vmem:[%s281 + $0x140] sm:$0xff]
                %332 = vst [vmem:[%s282 + $0xc0] sm:$0xff] %v331
                %v333 = vld [vmem:[%s281 + $0x148] sm:$0xff]
                %334 = vst [vmem:[%s282 + $0xc8] sm:$0xff] %v333
                %v335 = vld [vmem:[%s281 + $0x150] sm:$0xff]
                %336 = vst [vmem:[%s282 + $0xd0] sm:$0xff] %v335
                %v337 = vld [vmem:[%s281 + $0x158] sm:$0xff]
                %338 = vst [vmem:[%s282 + $0xd8] sm:$0xff] %v337
                %v339 = vld [vmem:[%s281 + $0x160] sm:$0xff]
                %340 = vst [vmem:[%s282 + $0xe0] sm:$0xff] %v339
                %v341 = vld [vmem:[%s281 + $0x168] sm:$0xff]
                %342 = vst [vmem:[%s282 + $0xe8] sm:$0xff] %v341
                %v343 = vld [vmem:[%s281 + $0x170] sm:$0xff]
                %344 = vst [vmem:[%s282 + $0xf0] sm:$0xff] %v343
                %v345 = vld [vmem:[%s281 + $0x178] sm:$0xff]
                %346 = vst [vmem:[%s282 + $0xf8] sm:$0xff] %v345
                %v347 = vld [vmem:[%s281 + $0x200] sm:$0xff]
                %348 = vst [vmem:[%s282 + $0x100] sm:$0xff] %v347
                %v349 = vld [vmem:[%s281 + $0x208] sm:$0xff]
                %350 = vst [vmem:[%s282 + $0x108] sm:$0xff] %v349
                %v351 = vld [vmem:[%s281 + $0x210] sm:$0xff]
                %352 = vst [vmem:[%s282 + $0x110] sm:$0xff] %v351
                %v353 = vld [vmem:[%s281 + $0x218] sm:$0xff]
                %354 = vst [vmem:[%s282 + $0x118] sm:$0xff] %v353
                %v355 = vld [vmem:[%s281 + $0x220] sm:$0xff]
                %356 = vst [vmem:[%s282 + $0x120] sm:$0xff] %v355
                %v357 = vld [vmem:[%s281 + $0x228] sm:$0xff]
                %358 = vst [vmem:[%s282 + $0x128] sm:$0xff] %v357
                %v359 = vld [vmem:[%s281 + $0x230] sm:$0xff]
                %360 = vst [vmem:[%s282 + $0x130] sm:$0xff] %v359
                %v361 = vld [vmem:[%s281 + $0x238] sm:$0xff]
                %362 = vst [vmem:[%s282 + $0x138] sm:$0xff] %v361
                %v363 = vld [vmem:[%s281 + $0x240] sm:$0xff]
                %364 = vst [vmem:[%s282 + $0x140] sm:$0xff] %v363
                %v365 = vld [vmem:[%s281 + $0x248] sm:$0xff]
                %366 = vst [vmem:[%s282 + $0x148] sm:$0xff] %v365
                %v367 = vld [vmem:[%s281 + $0x250] sm:$0xff]
                %368 = vst [vmem:[%s282 + $0x150] sm:$0xff] %v367
                %v369 = vld [vmem:[%s281 + $0x258] sm:$0xff]
                %370 = vst [vmem:[%s282 + $0x158] sm:$0xff] %v369
                %v371 = vld [vmem:[%s281 + $0x260] sm:$0xff]
                %372 = vst [vmem:[%s282 + $0x160] sm:$0xff] %v371
                %v373 = vld [vmem:[%s281 + $0x268] sm:$0xff]
                %374 = vst [vmem:[%s282 + $0x168] sm:$0xff] %v373
                %v375 = vld [vmem:[%s281 + $0x270] sm:$0xff]
                %376 = vst [vmem:[%s282 + $0x170] sm:$0xff] %v375
                %v377 = vld [vmem:[%s281 + $0x278] sm:$0xff]
                %378 = vst [vmem:[%s282 + $0x178] sm:$0xff] %v377
                %v379 = vld [vmem:[%s281 + $0x300] sm:$0xff]
                %380 = vst [vmem:[%s282 + $0x180] sm:$0xff] %v379
                %v381 = vld [vmem:[%s281 + $0x308] sm:$0xff]
                %382 = vst [vmem:[%s282 + $0x188] sm:$0xff] %v381
                %v383 = vld [vmem:[%s281 + $0x310] sm:$0xff]
                %384 = vst [vmem:[%s282 + $0x190] sm:$0xff] %v383
                %v385 = vld [vmem:[%s281 + $0x318] sm:$0xff]
                %386 = vst [vmem:[%s282 + $0x198] sm:$0xff] %v385
                %v387 = vld [vmem:[%s281 + $0x320] sm:$0xff]
                %388 = vst [vmem:[%s282 + $0x1a0] sm:$0xff] %v387
                %v389 = vld [vmem:[%s281 + $0x328] sm:$0xff]
                %390 = vst [vmem:[%s282 + $0x1a8] sm:$0xff] %v389
                %v391 = vld [vmem:[%s281 + $0x330] sm:$0xff]
                %392 = vst [vmem:[%s282 + $0x1b0] sm:$0xff] %v391
                %v393 = vld [vmem:[%s281 + $0x338] sm:$0xff]
                %394 = vst [vmem:[%s282 + $0x1b8] sm:$0xff] %v393
                %v395 = vld [vmem:[%s281 + $0x340] sm:$0xff]
                %396 = vst [vmem:[%s282 + $0x1c0] sm:$0xff] %v395
                %v397 = vld [vmem:[%s281 + $0x348] sm:$0xff]
                %398 = vst [vmem:[%s282 + $0x1c8] sm:$0xff] %v397
                %v399 = vld [vmem:[%s281 + $0x350] sm:$0xff]
                %400 = vst [vmem:[%s282 + $0x1d0] sm:$0xff] %v399
                %v401 = vld [vmem:[%s281 + $0x358] sm:$0xff]
                %402 = vst [vmem:[%s282 + $0x1d8] sm:$0xff] %v401
                %v403 = vld [vmem:[%s281 + $0x360] sm:$0xff]
                %404 = vst [vmem:[%s282 + $0x1e0] sm:$0xff] %v403
                %v405 = vld [vmem:[%s281 + $0x368] sm:$0xff]
                %406 = vst [vmem:[%s282 + $0x1e8] sm:$0xff] %v405
                %v407 = vld [vmem:[%s281 + $0x370] sm:$0xff]
                %408 = vst [vmem:[%s282 + $0x1f0] sm:$0xff] %v407
                %v409 = vld [vmem:[%s281 + $0x378] sm:$0xff]
                %410 = vst [vmem:[%s282 + $0x1f8] sm:$0xff] %v409
                %v411 = vld [vmem:[%s281 + $0x400] sm:$0xff]
                %412 = vst [vmem:[%s282 + $0x200] sm:$0xff] %v411
                %v413 = vld [vmem:[%s281 + $0x408] sm:$0xff]
                %414 = vst [vmem:[%s282 + $0x208] sm:$0xff] %v413
                %v415 = vld [vmem:[%s281 + $0x410] sm:$0xff]
                %416 = vst [vmem:[%s282 + $0x210] sm:$0xff] %v415
                %v417 = vld [vmem:[%s281 + $0x418] sm:$0xff]
                %418 = vst [vmem:[%s282 + $0x218] sm:$0xff] %v417
                %v419 = vld [vmem:[%s281 + $0x420] sm:$0xff]
                %420 = vst [vmem:[%s282 + $0x220] sm:$0xff] %v419
                %v421 = vld [vmem:[%s281 + $0x428] sm:$0xff]
                %422 = vst [vmem:[%s282 + $0x228] sm:$0xff] %v421
                %v423 = vld [vmem:[%s281 + $0x430] sm:$0xff]
                %424 = vst [vmem:[%s282 + $0x230] sm:$0xff] %v423
                %v425 = vld [vmem:[%s281 + $0x438] sm:$0xff]
                %426 = vst [vmem:[%s282 + $0x238] sm:$0xff] %v425
                %v427 = vld [vmem:[%s281 + $0x440] sm:$0xff]
                %428 = vst [vmem:[%s282 + $0x240] sm:$0xff] %v427
                %v429 = vld [vmem:[%s281 + $0x448] sm:$0xff]
                %430 = vst [vmem:[%s282 + $0x248] sm:$0xff] %v429
                %v431 = vld [vmem:[%s281 + $0x450] sm:$0xff]
                %432 = vst [vmem:[%s282 + $0x250] sm:$0xff] %v431
                %v433 = vld [vmem:[%s281 + $0x458] sm:$0xff]
                %434 = vst [vmem:[%s282 + $0x258] sm:$0xff] %v433
                %v435 = vld [vmem:[%s281 + $0x460] sm:$0xff]
                %436 = vst [vmem:[%s282 + $0x260] sm:$0xff] %v435
                %v437 = vld [vmem:[%s281 + $0x468] sm:$0xff]
                %438 = vst [vmem:[%s282 + $0x268] sm:$0xff] %v437
                %v439 = vld [vmem:[%s281 + $0x470] sm:$0xff]
                %440 = vst [vmem:[%s282 + $0x270] sm:$0xff] %v439
                %v441 = vld [vmem:[%s281 + $0x478] sm:$0xff]
                %442 = vst [vmem:[%s282 + $0x278] sm:$0xff] %v441
                %v443 = vld [vmem:[%s281 + $0x500] sm:$0xff]
                %444 = vst [vmem:[%s282 + $0x280] sm:$0xff] %v443
                %v445 = vld [vmem:[%s281 + $0x508] sm:$0xff]
                %446 = vst [vmem:[%s282 + $0x288] sm:$0xff] %v445
                %v447 = vld [vmem:[%s281 + $0x510] sm:$0xff]
                %448 = vst [vmem:[%s282 + $0x290] sm:$0xff] %v447
                %v449 = vld [vmem:[%s281 + $0x518] sm:$0xff]
                %450 = vst [vmem:[%s282 + $0x298] sm:$0xff] %v449
                %v451 = vld [vmem:[%s281 + $0x520] sm:$0xff]
                %452 = vst [vmem:[%s282 + $0x2a0] sm:$0xff] %v451
                %v453 = vld [vmem:[%s281 + $0x528] sm:$0xff]
                %454 = vst [vmem:[%s282 + $0x2a8] sm:$0xff] %v453
                %v455 = vld [vmem:[%s281 + $0x530] sm:$0xff]
                %456 = vst [vmem:[%s282 + $0x2b0] sm:$0xff] %v455
                %v457 = vld [vmem:[%s281 + $0x538] sm:$0xff]
                %458 = vst [vmem:[%s282 + $0x2b8] sm:$0xff] %v457
                %v459 = vld [vmem:[%s281 + $0x540] sm:$0xff]
                %460 = vst [vmem:[%s282 + $0x2c0] sm:$0xff] %v459
                %v461 = vld [vmem:[%s281 + $0x548] sm:$0xff]
                %462 = vst [vmem:[%s282 + $0x2c8] sm:$0xff] %v461
                %v463 = vld [vmem:[%s281 + $0x550] sm:$0xff]
                %464 = vst [vmem:[%s282 + $0x2d0] sm:$0xff] %v463
                %v465 = vld [vmem:[%s281 + $0x558] sm:$0xff]
                %466 = vst [vmem:[%s282 + $0x2d8] sm:$0xff] %v465
                %v467 = vld [vmem:[%s281 + $0x560] sm:$0xff]
                %468 = vst [vmem:[%s282 + $0x2e0] sm:$0xff] %v467
                %v469 = vld [vmem:[%s281 + $0x568] sm:$0xff]
                %470 = vst [vmem:[%s282 + $0x2e8] sm:$0xff] %v469
                %v471 = vld [vmem:[%s281 + $0x570] sm:$0xff]
                %472 = vst [vmem:[%s282 + $0x2f0] sm:$0xff] %v471
                %v473 = vld [vmem:[%s281 + $0x578] sm:$0xff]
                %474 = vst [vmem:[%s282 + $0x2f8] sm:$0xff] %v473
                %v475 = vld [vmem:[%s281 + $0x600] sm:$0xff]
                %476 = vst [vmem:[%s282 + $0x300] sm:$0xff] %v475
                %v477 = vld [vmem:[%s281 + $0x608] sm:$0xff]
                %478 = vst [vmem:[%s282 + $0x308] sm:$0xff] %v477
                %v479 = vld [vmem:[%s281 + $0x610] sm:$0xff]
                %480 = vst [vmem:[%s282 + $0x310] sm:$0xff] %v479
                %v481 = vld [vmem:[%s281 + $0x618] sm:$0xff]
                %482 = vst [vmem:[%s282 + $0x318] sm:$0xff] %v481
                %v483 = vld [vmem:[%s281 + $0x620] sm:$0xff]
                %484 = vst [vmem:[%s282 + $0x320] sm:$0xff] %v483
                %v485 = vld [vmem:[%s281 + $0x628] sm:$0xff]
                %486 = vst [vmem:[%s282 + $0x328] sm:$0xff] %v485
                %v487 = vld [vmem:[%s281 + $0x630] sm:$0xff]
                %488 = vst [vmem:[%s282 + $0x330] sm:$0xff] %v487
                %v489 = vld [vmem:[%s281 + $0x638] sm:$0xff]
                %490 = vst [vmem:[%s282 + $0x338] sm:$0xff] %v489
                %v491 = vld [vmem:[%s281 + $0x640] sm:$0xff]
                %492 = vst [vmem:[%s282 + $0x340] sm:$0xff] %v491
                %v493 = vld [vmem:[%s281 + $0x648] sm:$0xff]
                %494 = vst [vmem:[%s282 + $0x348] sm:$0xff] %v493
                %v495 = vld [vmem:[%s281 + $0x650] sm:$0xff]
                %496 = vst [vmem:[%s282 + $0x350] sm:$0xff] %v495
                %v497 = vld [vmem:[%s281 + $0x658] sm:$0xff]
                %498 = vst [vmem:[%s282 + $0x358] sm:$0xff] %v497
                %v499 = vld [vmem:[%s281 + $0x660] sm:$0xff]
                %500 = vst [vmem:[%s282 + $0x360] sm:$0xff] %v499
                %v501 = vld [vmem:[%s281 + $0x668] sm:$0xff]
                %502 = vst [vmem:[%s282 + $0x368] sm:$0xff] %v501
                %v503 = vld [vmem:[%s281 + $0x670] sm:$0xff]
                %504 = vst [vmem:[%s282 + $0x370] sm:$0xff] %v503
                %v505 = vld [vmem:[%s281 + $0x678] sm:$0xff]
                %506 = vst [vmem:[%s282 + $0x378] sm:$0xff] %v505
                %v507 = vld [vmem:[%s281 + $0x700] sm:$0xff]
                %508 = vst [vmem:[%s282 + $0x380] sm:$0xff] %v507
                %v509 = vld [vmem:[%s281 + $0x708] sm:$0xff]
                %510 = vst [vmem:[%s282 + $0x388] sm:$0xff] %v509
                %v511 = vld [vmem:[%s281 + $0x710] sm:$0xff]
                %512 = vst [vmem:[%s282 + $0x390] sm:$0xff] %v511
                %v513 = vld [vmem:[%s281 + $0x718] sm:$0xff]
                %514 = vst [vmem:[%s282 + $0x398] sm:$0xff] %v513
                %v515 = vld [vmem:[%s281 + $0x720] sm:$0xff]
                %516 = vst [vmem:[%s282 + $0x3a0] sm:$0xff] %v515
                %v517 = vld [vmem:[%s281 + $0x728] sm:$0xff]
                %518 = vst [vmem:[%s282 + $0x3a8] sm:$0xff] %v517
                %v519 = vld [vmem:[%s281 + $0x730] sm:$0xff]
                %520 = vst [vmem:[%s282 + $0x3b0] sm:$0xff] %v519
                %v521 = vld [vmem:[%s281 + $0x738] sm:$0xff]
                %522 = vst [vmem:[%s282 + $0x3b8] sm:$0xff] %v521
                %v523 = vld [vmem:[%s281 + $0x740] sm:$0xff]
                %524 = vst [vmem:[%s282 + $0x3c0] sm:$0xff] %v523
                %v525 = vld [vmem:[%s281 + $0x748] sm:$0xff]
                %526 = vst [vmem:[%s282 + $0x3c8] sm:$0xff] %v525
                %v527 = vld [vmem:[%s281 + $0x750] sm:$0xff]
                %528 = vst [vmem:[%s282 + $0x3d0] sm:$0xff] %v527
                %v529 = vld [vmem:[%s281 + $0x758] sm:$0xff]
                %530 = vst [vmem:[%s282 + $0x3d8] sm:$0xff] %v529
                %v531 = vld [vmem:[%s281 + $0x760] sm:$0xff]
                %532 = vst [vmem:[%s282 + $0x3e0] sm:$0xff] %v531
                %v533 = vld [vmem:[%s281 + $0x768] sm:$0xff]
                %534 = vst [vmem:[%s282 + $0x3e8] sm:$0xff] %v533
                %v535 = vld [vmem:[%s281 + $0x770] sm:$0xff]
                %536 = vst [vmem:[%s282 + $0x3f0] sm:$0xff] %v535
                %v537 = vld [vmem:[%s281 + $0x778] sm:$0xff]
                %538 = vst [vmem:[%s282 + $0x3f8] sm:$0xff] %v537
              $region57: #{tpu_custom_call.1} parent=51 // loop_footer
                %s280 = sadd.s32 1, %s276
              $region58: #{tpu_custom_call.1} parent=51 // loop_footer_branch
                %275 = sbr.rel target = $region54
              $region59: #{tpu_custom_call.1} parent=51 // loop_exit
                _
            $region52: #{tpu_custom_call.1} parent=43 // pred_fallthru
              _
          $region44: #{tpu_custom_call.1} parent=39 // pred_fallthru
            _
          %807 = vnop
        $region40: #{tpu_custom_call.1} parent=35 // pred_fallthru
          _
        // Predicated region
        $region75: #{tpu_custom_call.1} parent=35 // pred_check
          %p808 = pneg %p61
        $region76: #{tpu_custom_call.1} parent=35 // pred_check_branch
          %810 = sbr.rel (%p808) target = $region78
        $region77: #{tpu_custom_call.1} parent=35 // pred_region
          %s811 = smul.u32 16, %s15
          %p812 = scmp.lt.s32.totalorder %s811, 31
          %s813 = scalar_select %p812, %s811, 31
          %s814 = smul.addr %s813, 8
          %s815 = scalar_lea.vmem %s1, %s814
          %s816 = smul.u32 16, %s15
        $region78: #{tpu_custom_call.1} parent=35 // pred_fallthru
          _
      $region36: #{tpu_custom_call.1} parent=5 // pred_fallthru
        _
      %p817 = scmp.le.s32.totalorder 1, %s15
      %p818 = scmp.lt.s32.totalorder %s15, 3
      %p819 = pnand %p817, %p818
      %p820 = pneg %p819
      // Predicated region
      $region79: #{tpu_custom_call.1} parent=5 // pred_check
        _
      $region80: #{tpu_custom_call.1} parent=5 // pred_check_branch
        %822 = sbr.rel (%p819) target = $region82
      $region81: #{tpu_custom_call.1} parent=5 // pred_region
        %s823 = ssub.s32 %s15, 1
        %s824 = sand.u32 %s28, 1
        %s825 = sand.u32 %s28, 1
        %s826 = smul.addr %s825, 1024
        %s827 = scalar_lea.vmem [#allocation4], %s826
        // Predicated region
        $region83: #{tpu_custom_call.1} parent=81 // pred_check
          %p828 = pneg %p41
        $region84: #{tpu_custom_call.1} parent=81 // pred_check_branch
          %830 = sbr.rel (%p828) target = $region86
        $region85: #{tpu_custom_call.1} parent=81 // pred_region
          _
        $region86: #{tpu_custom_call.1} parent=81 // pred_fallthru
          _
        %s831 = sand.u32 %s28, 1
        %s832 = sand.u32 %s28, 1
        %s833 = smul.addr %s832, 1024
        %s834 = scalar_lea.vmem [#allocation4], %s833
        %p835 = pneg %p41
        %p836 = pneg %p38
        %s837 = smul.u32 16, %s20
        %p838 = scmp.lt.s32.totalorder %s837, 31
        %s839 = scalar_select %p838, %s837, 31
        %s840 = smul.addr %s839, 8
        %s841 = scalar_lea.vmem %s1, %s840
        %p842 = pneg %p67
        %p843 = pneg %p64
        %p844 = pneg %p88
        %p845 = pneg %p85
        %p846 = pneg %p109
        %p847 = pneg %p106
        %p848 = pneg %p130
        %p849 = pneg %p127
        %p850 = pneg %p151
        %p851 = pneg %p148
        %p852 = pneg %p172
        %p853 = pneg %p169
        %p854 = pneg %p198
        %p855 = pneg %p195
        %s856 = sand.u32 %s185, 1
        %s857 = sand.u32 %s185, 1
        %s858 = smul.addr %s857, 1024
        %s859 = scalar_lea.vmem [#allocation5], %s858
        %p860 = pneg %p224
        %p861 = pneg %p221
        %s862 = smul.u32 16, %s20
        %p863 = scmp.lt.s32.totalorder %s862, 31
        %s864 = scalar_select %p863, %s862, 31
        %s865 = smul.addr %s864, 8
        %s866 = scalar_lea.vmem %s8, %s865
        %s867 = smul.u32 16, %s20
        %s868 = smul.u32 16, %s20
        %p869 = scmp.lt.s32.totalorder %s868, 31
        %s870 = scalar_select %p869, %s868, 31
        %s871 = smul.addr %s870, 8
        %s872 = scalar_lea.vmem %s1, %s871
        %s873 = smul.u32 16, %s20
        %s874 = smul.u32 16, %s20
        %s875 = smul.u32 16, %s20
        %p876 = scmp.lt.s32.totalorder %s875, 31
        %s877 = scalar_select %p876, %s875, 31
        %s878 = smul.addr %s877, 8
        %s879 = scalar_lea.vmem %s8, %s878
        %s880 = smul.u32 16, %s20
        %v881 = vld [vmem:[%s827] sm:$0xff]
        %v882 = vld [vmem:[%s827 + $0x8] sm:$0xff]
        %v883 = vld [vmem:[%s827 + $0x10] sm:$0xff]
        %v884 = vld [vmem:[%s827 + $0x18] sm:$0xff]
        %v885 = vld [vmem:[%s827 + $0x20] sm:$0xff]
        %v886 = vld [vmem:[%s827 + $0x28] sm:$0xff]
        %v887 = vld [vmem:[%s827 + $0x30] sm:$0xff]
        %v888 = vld [vmem:[%s827 + $0x38] sm:$0xff]
        %v889 = vld [vmem:[%s827 + $0x40] sm:$0xff]
        %v890 = vld [vmem:[%s827 + $0x48] sm:$0xff]
        %v891 = vld [vmem:[%s827 + $0x50] sm:$0xff]
        %v892 = vld [vmem:[%s827 + $0x58] sm:$0xff]
        %v893 = vld [vmem:[%s827 + $0x60] sm:$0xff]
        %v894 = vld [vmem:[%s827 + $0x68] sm:$0xff]
        %v895 = vld [vmem:[%s827 + $0x70] sm:$0xff]
        %v896 = vld [vmem:[%s827 + $0x78] sm:$0xff]
        %v897 = vld [vmem:[%s827 + $0x80] sm:$0xff]
        %v898 = vld [vmem:[%s827 + $0x88] sm:$0xff]
        %v899 = vld [vmem:[%s827 + $0x90] sm:$0xff]
        %v900 = vld [vmem:[%s827 + $0x98] sm:$0xff]
        %v901 = vld [vmem:[%s827 + $0xa0] sm:$0xff]
        %v902 = vld [vmem:[%s827 + $0xa8] sm:$0xff]
        %v903 = vld [vmem:[%s827 + $0xb0] sm:$0xff]
        %v904 = vld [vmem:[%s827 + $0xb8] sm:$0xff]
        %v905 = vld [vmem:[%s827 + $0xc0] sm:$0xff]
        %v906 = vld [vmem:[%s827 + $0xc8] sm:$0xff]
        %v907 = vld [vmem:[%s827 + $0xd0] sm:$0xff]
        %v908 = vld [vmem:[%s827 + $0xd8] sm:$0xff]
        %v909 = vld [vmem:[%s827 + $0xe0] sm:$0xff]
        %v910 = vld [vmem:[%s827 + $0xe8] sm:$0xff]
        %v911 = vld [vmem:[%s827 + $0xf0] sm:$0xff]
        %v912 = vld [vmem:[%s827 + $0xf8] sm:$0xff]
        %v913 = vld [vmem:[%s827 + $0x100] sm:$0xff]
        %v914 = vld [vmem:[%s827 + $0x108] sm:$0xff]
        %v915 = vld [vmem:[%s827 + $0x110] sm:$0xff]
        %v916 = vld [vmem:[%s827 + $0x118] sm:$0xff]
        %v917 = vld [vmem:[%s827 + $0x120] sm:$0xff]
        %v918 = vld [vmem:[%s827 + $0x128] sm:$0xff]
        %v919 = vld [vmem:[%s827 + $0x130] sm:$0xff]
        %v920 = vld [vmem:[%s827 + $0x138] sm:$0xff]
        %v921 = vld [vmem:[%s827 + $0x140] sm:$0xff]
        %v922 = vld [vmem:[%s827 + $0x148] sm:$0xff]
        %v923 = vld [vmem:[%s827 + $0x150] sm:$0xff]
        %v924 = vld [vmem:[%s827 + $0x158] sm:$0xff]
        %v925 = vld [vmem:[%s827 + $0x160] sm:$0xff]
        %v926 = vld [vmem:[%s827 + $0x168] sm:$0xff]
        %v927 = vld [vmem:[%s827 + $0x170] sm:$0xff]
        %v928 = vld [vmem:[%s827 + $0x178] sm:$0xff]
        %v929 = vld [vmem:[%s827 + $0x180] sm:$0xff]
        %v930 = vld [vmem:[%s827 + $0x188] sm:$0xff]
        %v931 = vld [vmem:[%s827 + $0x190] sm:$0xff]
        %v932 = vld [vmem:[%s827 + $0x198] sm:$0xff]
        %v933 = vld [vmem:[%s827 + $0x1a0] sm:$0xff]
        %v934 = vld [vmem:[%s827 + $0x1a8] sm:$0xff]
        %v935 = vld [vmem:[%s827 + $0x1b0] sm:$0xff]
        %v936 = vld [vmem:[%s827 + $0x1b8] sm:$0xff]
        %v937 = vld [vmem:[%s827 + $0x1c0] sm:$0xff]
        %v938 = vld [vmem:[%s827 + $0x1c8] sm:$0xff]
        %v939 = vld [vmem:[%s827 + $0x1d0] sm:$0xff]
        %v940 = vld [vmem:[%s827 + $0x1d8] sm:$0xff]
        %v941 = vld [vmem:[%s827 + $0x1e0] sm:$0xff]
        %v942 = vld [vmem:[%s827 + $0x1e8] sm:$0xff]
        %v943 = vld [vmem:[%s827 + $0x1f0] sm:$0xff]
        %v944 = vld [vmem:[%s827 + $0x1f8] sm:$0xff]
        %v945 = vld [vmem:[%s827 + $0x200] sm:$0xff]
        %v946 = vld [vmem:[%s827 + $0x208] sm:$0xff]
        %v947 = vld [vmem:[%s827 + $0x210] sm:$0xff]
        %v948 = vld [vmem:[%s827 + $0x218] sm:$0xff]
        %v949 = vld [vmem:[%s827 + $0x220] sm:$0xff]
        %v950 = vld [vmem:[%s827 + $0x228] sm:$0xff]
        %v951 = vld [vmem:[%s827 + $0x230] sm:$0xff]
        %v952 = vld [vmem:[%s827 + $0x238] sm:$0xff]
        %v953 = vld [vmem:[%s827 + $0x240] sm:$0xff]
        %v954 = vld [vmem:[%s827 + $0x248] sm:$0xff]
        %v955 = vld [vmem:[%s827 + $0x250] sm:$0xff]
        %v956 = vld [vmem:[%s827 + $0x258] sm:$0xff]
        %v957 = vld [vmem:[%s827 + $0x260] sm:$0xff]
        %v958 = vld [vmem:[%s827 + $0x268] sm:$0xff]
        %v959 = vld [vmem:[%s827 + $0x270] sm:$0xff]
        %v960 = vld [vmem:[%s827 + $0x278] sm:$0xff]
        %v961 = vld [vmem:[%s827 + $0x280] sm:$0xff]
        %v962 = vld [vmem:[%s827 + $0x288] sm:$0xff]
        %v963 = vld [vmem:[%s827 + $0x290] sm:$0xff]
        %v964 = vld [vmem:[%s827 + $0x298] sm:$0xff]
        %v965 = vld [vmem:[%s827 + $0x2a0] sm:$0xff]
        %v966 = vld [vmem:[%s827 + $0x2a8] sm:$0xff]
        %v967 = vld [vmem:[%s827 + $0x2b0] sm:$0xff]
        %v968 = vld [vmem:[%s827 + $0x2b8] sm:$0xff]
        %v969 = vld [vmem:[%s827 + $0x2c0] sm:$0xff]
        %v970 = vld [vmem:[%s827 + $0x2c8] sm:$0xff]
        %v971 = vld [vmem:[%s827 + $0x2d0] sm:$0xff]
        %v972 = vld [vmem:[%s827 + $0x2d8] sm:$0xff]
        %v973 = vld [vmem:[%s827 + $0x2e0] sm:$0xff]
        %v974 = vld [vmem:[%s827 + $0x2e8] sm:$0xff]
        %v975 = vld [vmem:[%s827 + $0x2f0] sm:$0xff]
        %v976 = vld [vmem:[%s827 + $0x2f8] sm:$0xff]
        %v977 = vld [vmem:[%s827 + $0x300] sm:$0xff]
        %v978 = vld [vmem:[%s827 + $0x308] sm:$0xff]
        %v979 = vld [vmem:[%s827 + $0x310] sm:$0xff]
        %v980 = vld [vmem:[%s827 + $0x318] sm:$0xff]
        %v981 = vld [vmem:[%s827 + $0x320] sm:$0xff]
        %v982 = vld [vmem:[%s827 + $0x328] sm:$0xff]
        %v983 = vld [vmem:[%s827 + $0x330] sm:$0xff]
        %v984 = vld [vmem:[%s827 + $0x338] sm:$0xff]
        %v985 = vld [vmem:[%s827 + $0x340] sm:$0xff]
        %v986 = vld [vmem:[%s827 + $0x348] sm:$0xff]
        %v987 = vld [vmem:[%s827 + $0x350] sm:$0xff]
        %v988 = vld [vmem:[%s827 + $0x358] sm:$0xff]
        %v989 = vld [vmem:[%s827 + $0x360] sm:$0xff]
        %v990 = vld [vmem:[%s827 + $0x368] sm:$0xff]
        %v991 = vld [vmem:[%s827 + $0x370] sm:$0xff]
        %v992 = vld [vmem:[%s827 + $0x378] sm:$0xff]
        %v993 = vld [vmem:[%s827 + $0x380] sm:$0xff]
        %v994 = vld [vmem:[%s827 + $0x388] sm:$0xff]
        %v995 = vld [vmem:[%s827 + $0x390] sm:$0xff]
        %v996 = vld [vmem:[%s827 + $0x398] sm:$0xff]
        %v997 = vld [vmem:[%s827 + $0x3a0] sm:$0xff]
        %v998 = vld [vmem:[%s827 + $0x3a8] sm:$0xff]
        %v999 = vld [vmem:[%s827 + $0x3b0] sm:$0xff]
        %v1000 = vld [vmem:[%s827 + $0x3b8] sm:$0xff]
        %v1001 = vld [vmem:[%s827 + $0x3c0] sm:$0xff]
        %v1002 = vld [vmem:[%s827 + $0x3c8] sm:$0xff]
        %v1003 = vld [vmem:[%s827 + $0x3d0] sm:$0xff]
        %v1004 = vld [vmem:[%s827 + $0x3d8] sm:$0xff]
        %v1005 = vld [vmem:[%s827 + $0x3e0] sm:$0xff]
        %v1006 = vld [vmem:[%s827 + $0x3e8] sm:$0xff]
        %v1007 = vld [vmem:[%s827 + $0x3f0] sm:$0xff]
        %v1008 = vld [vmem:[%s827 + $0x3f8] sm:$0xff]
        %v1009 = vld [vmem:[%s2] sm:$0xff]
        %v1010 = vld [vmem:[%s2 + $0x8] sm:$0xff]
        %v1011 = vld [vmem:[%s4] sm:$0x1]
        %v1013 = vlaneseq
        %v1014 = vshrl.u32 %v1013, 7
        %v1015 = vsub.s32 0, %v1014
        %v1016 = vrot.slane %v1011, %v1015
        %vm1018 = vcmask 130048
        %v1020 = vsel %vm1018, %v881, 0
        %v1023 = vsel %vm1018, %v882, 0
        %v1026 = vsel %vm1018, %v883, 0
        %v1029 = vsel %vm1018, %v884, 0
        %v1032 = vsel %vm1018, %v885, 0
        %v1035 = vsel %vm1018, %v886, 0
        %v1038 = vsel %vm1018, %v887, 0
        %v1041 = vsel %vm1018, %v888, 0
        %v1044 = vsel %vm1018, %v889, 0
        %v1047 = vsel %vm1018, %v890, 0
        %v1050 = vsel %vm1018, %v891, 0
        %v1053 = vsel %vm1018, %v892, 0
        %v1056 = vsel %vm1018, %v893, 0
        %v1059 = vsel %vm1018, %v894, 0
        %v1062 = vsel %vm1018, %v895, 0
        %v1065 = vsel %vm1018, %v896, 0
        %v1068 = vsel %vm1018, %v897, 0
        %v1071 = vsel %vm1018, %v898, 0
        %v1074 = vsel %vm1018, %v899, 0
        %v1077 = vsel %vm1018, %v900, 0
        %v1080 = vsel %vm1018, %v901, 0
        %v1083 = vsel %vm1018, %v902, 0
        %v1086 = vsel %vm1018, %v903, 0
        %v1089 = vsel %vm1018, %v904, 0
        %v1092 = vsel %vm1018, %v905, 0
        %v1095 = vsel %vm1018, %v906, 0
        %v1098 = vsel %vm1018, %v907, 0
        %v1101 = vsel %vm1018, %v908, 0
        %v1104 = vsel %vm1018, %v909, 0
        %v1107 = vsel %vm1018, %v910, 0
        %v1110 = vsel %vm1018, %v911, 0
        %v1113 = vsel %vm1018, %v912, 0
        %v1116 = vsel %vm1018, %v913, 0
        %v1119 = vsel %vm1018, %v914, 0
        %v1122 = vsel %vm1018, %v915, 0
        %v1125 = vsel %vm1018, %v916, 0
        %v1128 = vsel %vm1018, %v917, 0
        %v1131 = vsel %vm1018, %v918, 0
        %v1134 = vsel %vm1018, %v919, 0
        %v1137 = vsel %vm1018, %v920, 0
        %v1140 = vsel %vm1018, %v921, 0
        %v1143 = vsel %vm1018, %v922, 0
        %v1146 = vsel %vm1018, %v923, 0
        %v1149 = vsel %vm1018, %v924, 0
        %v1152 = vsel %vm1018, %v925, 0
        %v1155 = vsel %vm1018, %v926, 0
        %v1158 = vsel %vm1018, %v927, 0
        %v1161 = vsel %vm1018, %v928, 0
        %v1164 = vsel %vm1018, %v929, 0
        %v1167 = vsel %vm1018, %v930, 0
        %v1170 = vsel %vm1018, %v931, 0
        %v1173 = vsel %vm1018, %v932, 0
        %v1176 = vsel %vm1018, %v933, 0
        %v1179 = vsel %vm1018, %v934, 0
        %v1182 = vsel %vm1018, %v935, 0
        %v1185 = vsel %vm1018, %v936, 0
        %v1188 = vsel %vm1018, %v937, 0
        %v1191 = vsel %vm1018, %v938, 0
        %v1194 = vsel %vm1018, %v939, 0
        %v1197 = vsel %vm1018, %v940, 0
        %v1200 = vsel %vm1018, %v941, 0
        %v1203 = vsel %vm1018, %v942, 0
        %v1206 = vsel %vm1018, %v943, 0
        %v1209 = vsel %vm1018, %v944, 0
        %v1212 = vsel %vm1018, %v945, 0
        %v1215 = vsel %vm1018, %v946, 0
        %v1218 = vsel %vm1018, %v947, 0
        %v1221 = vsel %vm1018, %v948, 0
        %v1224 = vsel %vm1018, %v949, 0
        %v1227 = vsel %vm1018, %v950, 0
        %v1230 = vsel %vm1018, %v951, 0
        %v1233 = vsel %vm1018, %v952, 0
        %v1236 = vsel %vm1018, %v953, 0
        %v1239 = vsel %vm1018, %v954, 0
        %v1242 = vsel %vm1018, %v955, 0
        %v1245 = vsel %vm1018, %v956, 0
        %v1248 = vsel %vm1018, %v957, 0
        %v1251 = vsel %vm1018, %v958, 0
        %v1254 = vsel %vm1018, %v959, 0
        %v1257 = vsel %vm1018, %v960, 0
        %v1260 = vsel %vm1018, %v961, 0
        %v1263 = vsel %vm1018, %v962, 0
        %v1266 = vsel %vm1018, %v963, 0
        %v1269 = vsel %vm1018, %v964, 0
        %v1272 = vsel %vm1018, %v965, 0
        %v1275 = vsel %vm1018, %v966, 0
        %v1278 = vsel %vm1018, %v967, 0
        %v1281 = vsel %vm1018, %v968, 0
        %v1284 = vsel %vm1018, %v969, 0
        %v1287 = vsel %vm1018, %v970, 0
        %v1290 = vsel %vm1018, %v971, 0
        %v1293 = vsel %vm1018, %v972, 0
        %v1296 = vsel %vm1018, %v973, 0
        %v1299 = vsel %vm1018, %v974, 0
        %v1302 = vsel %vm1018, %v975, 0
        %v1305 = vsel %vm1018, %v976, 0
        %v1308 = vsel %vm1018, %v977, 0
        %v1311 = vsel %vm1018, %v978, 0
        %v1314 = vsel %vm1018, %v979, 0
        %v1317 = vsel %vm1018, %v980, 0
        %v1320 = vsel %vm1018, %v981, 0
        %v1323 = vsel %vm1018, %v982, 0
        %v1326 = vsel %vm1018, %v983, 0
        %v1329 = vsel %vm1018, %v984, 0
        %v1332 = vsel %vm1018, %v985, 0
        %v1335 = vsel %vm1018, %v986, 0
        %v1338 = vsel %vm1018, %v987, 0
        %v1341 = vsel %vm1018, %v988, 0
        %v1344 = vsel %vm1018, %v989, 0
        %v1347 = vsel %vm1018, %v990, 0
        %v1350 = vsel %vm1018, %v991, 0
        %v1353 = vsel %vm1018, %v992, 0
        %v1356 = vsel %vm1018, %v993, 0
        %v1359 = vsel %vm1018, %v994, 0
        %v1362 = vsel %vm1018, %v995, 0
        %v1365 = vsel %vm1018, %v996, 0
        %v1368 = vsel %vm1018, %v997, 0
        %v1371 = vsel %vm1018, %v998, 0
        %v1374 = vsel %vm1018, %v999, 0
        %v1377 = vsel %vm1018, %v1000, 0
        %v1380 = vsel %vm1018, %v1001, 0
        %v1383 = vsel %vm1018, %v1002, 0
        %v1386 = vsel %vm1018, %v1003, 0
        %v1389 = vsel %vm1018, %v1004, 0
        %v1392 = vsel %vm1018, %v1005, 0
        %v1395 = vsel %vm1018, %v1006, 0
        %v1398 = vsel %vm1018, %v1007, 0
        %v1401 = vsel %vm1018, %v1008, 0
        %1403 = vmatprep.subr.mxu0 0.0
        %1404 = vmatpush1.msra.mxu0 %v1009
        %1405 = vmatprep.subr.mxu0 0.0
        %1406 = vmatpush1.msra.mxu0 %v1010
        %1407 = vmatprep.subr.mxu0 0.0
        %1408 = vmatpush1.msra.mxu0 0.0
        %1409 = vmatprep.subr.mxu0 0.0
        %1410 = vmatpush1.msra.mxu0 0.0
        %1411 = vmatprep.subr.mxu0 0.0
        %1412 = vmatpush1.msra.mxu0 0.0
        %1413 = vmatprep.subr.mxu0 0.0
        %1414 = vmatpush1.msra.mxu0 0.0
        %1415 = vmatprep.subr.mxu0 0.0
        %1416 = vmatpush1.msra.mxu0 0.0
        %1417 = vmatprep.subr.mxu0 0.0
        %1418 = vmatpush1.msra.mxu0 0.0
        %1419 = vmatprep.subr.mxu0 0.0
        %1420 = vmatpush1.msra.mxu0 0.0
        %1421 = vmatprep.subr.mxu0 0.0
        %1422 = vmatpush1.msra.mxu0 0.0
        %1423 = vmatprep.subr.mxu0 0.0
        %1424 = vmatpush1.msra.mxu0 0.0
        %1425 = vmatprep.subr.mxu0 0.0
        %1426 = vmatpush1.msra.mxu0 0.0
        %1427 = vmatprep.subr.mxu0 0.0
        %1428 = vmatpush1.msra.mxu0 0.0
        %1429 = vmatprep.subr.mxu0 0.0
        %1430 = vmatpush1.msra.mxu0 0.0
        %1431 = vmatprep.subr.mxu0 0.0
        %1432 = vmatpush1.msra.mxu0 0.0
        %1433 = vmatprep.subr.mxu0 0.0
        %1434 = vmatpush1.msra.mxu0 0.0
        %1435 = vmatprep.subr.mxu0 0.0
        %1436 = vmatpush1.msra.mxu0 0.0
        %1437 = vmatprep.subr.mxu0 0.0
        %1438 = vmatpush1.msra.mxu0 0.0
        %1439 = vmatprep.subr.mxu0 0.0
        %1440 = vmatpush1.msra.mxu0 0.0
        %1441 = vmatprep.subr.mxu0 0.0
        %1442 = vmatpush1.msra.mxu0 0.0
        %1443 = vmatprep.subr.mxu0 0.0
        %1444 = vmatpush1.msra.mxu0 0.0
        %1445 = vmatprep.subr.mxu0 0.0
        %1446 = vmatpush1.msra.mxu0 0.0
        %1447 = vmatprep.subr.mxu0 0.0
        %1448 = vmatpush1.msra.mxu0 0.0
        %1449 = vmatprep.subr.mxu0 0.0
        %1450 = vmatpush1.msra.mxu0 0.0
        %1451 = vmatprep.subr.mxu0 0.0
        %1452 = vmatpush1.msra.mxu0 0.0
        %1453 = vmatprep.subr.mxu0 0.0
        %1454 = vmatpush1.msra.mxu0 0.0
        %1455 = vmatprep.subr.mxu0 0.0
        %1456 = vmatpush1.msra.mxu0 0.0
        %1457 = vmatprep.subr.mxu0 0.0
        %1458 = vmatpush1.msra.mxu0 0.0
        %1459 = vmatprep.subr.mxu0 0.0
        %1460 = vmatpush1.msra.mxu0 0.0
        %1461 = vmatprep.subr.mxu0 0.0
        %1462 = vmatpush1.msra.mxu0 0.0
        %1463 = vmatprep.subr.mxu0 0.0
        %1464 = vmatpush1.msra.mxu0 0.0
        %1465 = vmatprep.subr.mxu0 0.0
        %1466 = vmatpush1.msra.mxu0 0.0
        %1467 = vmatprep.mubr.f32.mxu0 0.0
        %1468 = vmatmul.mubr.f32.gmra.mrb[0].mxu0 %v1020
        %v1469 = vpop.f32.mrb[0].mxu0
        %v1470 = vadd.f32 %v1016, %v1469
        %v1471 = vpop.f32.mrb[0].mxu0
        %1472 = vmatprep.mubr.f32.mxu0 0.0
        %1473 = vmatmul.mubr.f32.gmra.mrb[0].mxu0 %v1023
        %v1474 = vpop.f32.mrb[0].mxu0
        %v1475 = vadd.f32 %v1016, %v1474
        %v1476 = vpop.f32.mrb[0].mxu0
        %1477 = vmatprep.mubr.f32.mxu0 0.0
        %1478 = vmatmul.mubr.f32.gmra.mrb[0].mxu0 %v1026
        %v1479 = vpop.f32.mrb[0].mxu0
        %v1480 = vadd.f32 %v1016, %v1479
        %v1481 = vpop.f32.mrb[0].mxu0
        %1482 = vmatprep.mubr.f32.mxu0 0.0
        %1483 = vmatmul.mubr.f32.gmra.mrb[0].mxu0 %v1029
        %v1484 = vpop.f32.mrb[0].mxu0
        %v1485 = vadd.f32 %v1016, %v1484
        %v1486 = vpop.f32.mrb[0].mxu0
        %1487 = vmatprep.mubr.f32.mxu0 0.0
        %1488 = vmatmul.mubr.f32.gmra.mrb[0].mxu0 %v1032
        %v1489 = vpop.f32.mrb[0].mxu0
        %v1490 = vadd.f32 %v1016, %v1489
        %v1491 = vpop.f32.mrb[0].mxu0
        %1492 = vmatprep.mubr.f32.mxu0 0.0
        %1493 = vmatmul.mubr.f32.gmra.mrb[0].mxu0 %v1035
        %v1494 = vpop.f32.mrb[0].mxu0
        %v1495 = vadd.f32 %v1016, %v1494
        %v1496 = vpop.f32.mrb[0].mxu0
        %1497 = vmatprep.mubr.f32.mxu0 0.0
        %1498 = vmatmul.mubr.f32.gmra.mrb[0].mxu0 %v1038
        %v1499 = vpop.f32.mrb[0].mxu0
        %v1500 = vadd.f32 %v1016, %v1499
        %v1501 = vpop.f32.mrb[0].mxu0
        %1502 = vmatprep.mubr.f32.mxu0 0.0
        %1503 = vmatmul.mubr.f32.gmra.mrb[0].mxu0 %v1041
        %v1504 = vpop.f32.mrb[0].mxu0
        %v1505 = vadd.f32 %v1016, %v1504
        %v1506 = vpop.f32.mrb[0].mxu0
        %1507 = vmatprep.mubr.f32.mxu0 0.0
        %1508 = vmatmul.mubr.f32.gmra.mrb[0].mxu0 %v1044
        %v1509 = vpop.f32.mrb[0].mxu0
        %v1510 = vadd.f32 %v1016, %v1509
        %v1511 = vpop.f32.mrb[0].mxu0
        %1512 = vmatprep.mubr.f32.mxu0 0.0
        %1513 = vmatmul.mubr.f32.gmra.mrb[0].mxu0 %v1047
        %v1514 = vpop.f32.mrb[0].mxu0
        %v1515 = vadd.f32 %v1016, %v1514
        %v1516 = vpop.f32.mrb[0].mxu0
        %1517 = vmatprep.mubr.f32.mxu0 0.0
        %1518 = vmatmul.mubr.f32.gmra.mrb[0].mxu0 %v1050
        %v1519 = vpop.f32.mrb[0].mxu0
        %v1520 = vadd.f32 %v1016, %v1519
        %v1521 = vpop.f32.mrb[0].mxu0
        %1522 = vmatprep.mubr.f32.mxu0 0.0
        %1523 = vmatmul.mubr.f32.gmra.mrb[0].mxu0 %v1053
        %v1524 = vpop.f32.mrb[0].mxu0
        %v1525 = vadd.f32 %v1016, %v1524
        %v1526 = vpop.f32.mrb[0].mxu0
        %1527 = vmatprep.mubr.f32.mxu0 0.0
        %1528 = vmatmul.mubr.f32.gmra.mrb[0].mxu0 %v1056
        %v1529 = vpop.f32.mrb[0].mxu0
        %v1530 = vadd.f32 %v1016, %v1529
        %v1531 = vpop.f32.mrb[0].mxu0
        %1532 = vmatprep.mubr.f32.mxu0 0.0
        %1533 = vmatmul.mubr.f32.gmra.mrb[0].mxu0 %v1059
        %v1534 = vpop.f32.mrb[0].mxu0
        %v1535 = vadd.f32 %v1016, %v1534
        %v1536 = vpop.f32.mrb[0].mxu0
        %1537 = vmatprep.mubr.f32.mxu0 0.0
        %1538 = vmatmul.mubr.f32.gmra.mrb[0].mxu0 %v1062
        %v1539 = vpop.f32.mrb[0].mxu0
        %v1540 = vadd.f32 %v1016, %v1539
        %v1541 = vpop.f32.mrb[0].mxu0
        %1542 = vmatprep.mubr.f32.mxu0 0.0
        %1543 = vmatmul.mubr.f32.gmra.mrb[0].mxu0 %v1065
        %v1544 = vpop.f32.mrb[0].mxu0
        %v1545 = vadd.f32 %v1016, %v1544
        %v1546 = vpop.f32.mrb[0].mxu0
        %1547 = vmatprep.mubr.f32.mxu0 0.0
        %1548 = vmatmul.mubr.f32.gmra.mrb[0].mxu0 %v1068
        %v1549 = vpop.f32.mrb[0].mxu0
        %v1550 = vadd.f32 %v1016, %v1549
        %v1551 = vpop.f32.mrb[0].mxu0
        %1552 = vmatprep.mubr.f32.mxu0 0.0
        %1553 = vmatmul.mubr.f32.gmra.mrb[0].mxu0 %v1071
        %v1554 = vpop.f32.mrb[0].mxu0
        %v1555 = vadd.f32 %v1016, %v1554
        %v1556 = vpop.f32.mrb[0].mxu0
        %1557 = vmatprep.mubr.f32.mxu0 0.0
        %1558 = vmatmul.mubr.f32.gmra.mrb[0].mxu0 %v1074
        %v1559 = vpop.f32.mrb[0].mxu0
        %v1560 = vadd.f32 %v1016, %v1559
        %v1561 = vpop.f32.mrb[0].mxu0
        %1562 = vmatprep.mubr.f32.mxu0 0.0
        %1563 = vmatmul.mubr.f32.gmra.mrb[0].mxu0 %v1077
        %v1564 = vpop.f32.mrb[0].mxu0
        %v1565 = vadd.f32 %v1016, %v1564
        %v1566 = vpop.f32.mrb[0].mxu0
        %1567 = vmatprep.mubr.f32.mxu0 0.0
        %1568 = vmatmul.mubr.f32.gmra.mrb[0].mxu0 %v1080
        %v1569 = vpop.f32.mrb[0].mxu0
        %v1570 = vadd.f32 %v1016, %v1569
        %v1571 = vpop.f32.mrb[0].mxu0
        %1572 = vmatprep.mubr.f32.mxu0 0.0
        %1573 = vmatmul.mubr.f32.gmra.mrb[0].mxu0 %v1083
        %v1574 = vpop.f32.mrb[0].mxu0
        %v1575 = vadd.f32 %v1016, %v1574
        %v1576 = vpop.f32.mrb[0].mxu0
        %1577 = vmatprep.mubr.f32.mxu0 0.0
        %1578 = vmatmul.mubr.f32.gmra.mrb[0].mxu0 %v1086
        %v1579 = vpop.f32.mrb[0].mxu0
        %v1580 = vadd.f32 %v1016, %v1579
        %v1581 = vpop.f32.mrb[0].mxu0
        %1582 = vmatprep.mubr.f32.mxu0 0.0
        %1583 = vmatmul.mubr.f32.gmra.mrb[0].mxu0 %v1089
        %v1584 = vpop.f32.mrb[0].mxu0
        %v1585 = vadd.f32 %v1016, %v1584
        %v1586 = vpop.f32.mrb[0].mxu0
        %1587 = vmatprep.mubr.f32.mxu0 0.0
        %1588 = vmatmul.mubr.f32.gmra.mrb[0].mxu0 %v1092
        %v1589 = vpop.f32.mrb[0].mxu0
        %v1590 = vadd.f32 %v1016, %v1589
        %v1591 = vpop.f32.mrb[0].mxu0
        %1592 = vmatprep.mubr.f32.mxu0 0.0
        %1593 = vmatmul.mubr.f32.gmra.mrb[0].mxu0 %v1095
        %v1594 = vpop.f32.mrb[0].mxu0
        %v1595 = vadd.f32 %v1016, %v1594
        %v1596 = vpop.f32.mrb[0].mxu0
        %1597 = vmatprep.mubr.f32.mxu0 0.0
        %1598 = vmatmul.mubr.f32.gmra.mrb[0].mxu0 %v1098
        %v1599 = vpop.f32.mrb[0].mxu0
        %v1600 = vadd.f32 %v1016, %v1599
        %v1601 = vpop.f32.mrb[0].mxu0
        %1602 = vmatprep.mubr.f32.mxu0 0.0
        %1603 = vmatmul.mubr.f32.gmra.mrb[0].mxu0 %v1101
        %v1604 = vpop.f32.mrb[0].mxu0
        %v1605 = vadd.f32 %v1016, %v1604
        %v1606 = vpop.f32.mrb[0].mxu0
        %1607 = vmatprep.mubr.f32.mxu0 0.0
        %1608 = vmatmul.mubr.f32.gmra.mrb[0].mxu0 %v1104
        %v1609 = vpop.f32.mrb[0].mxu0
        %v1610 = vadd.f32 %v1016, %v1609
        %v1611 = vpop.f32.mrb[0].mxu0
        %1612 = vmatprep.mubr.f32.mxu0 0.0
        %1613 = vmatmul.mubr.f32.gmra.mrb[0].mxu0 %v1107
        %v1614 = vpop.f32.mrb[0].mxu0
        %v1615 = vadd.f32 %v1016, %v1614
        %v1616 = vpop.f32.mrb[0].mxu0
        %1617 = vmatprep.mubr.f32.mxu0 0.0
        %1618 = vmatmul.mubr.f32.gmra.mrb[0].mxu0 %v1110
        %v1619 = vpop.f32.mrb[0].mxu0
        %v1620 = vadd.f32 %v1016, %v1619
        %v1621 = vpop.f32.mrb[0].mxu0
        %1622 = vmatprep.mubr.f32.mxu0 0.0
        %1623 = vmatmul.mubr.f32.gmra.mrb[0].mxu0 %v1113
        %v1624 = vpop.f32.mrb[0].mxu0
        %v1625 = vadd.f32 %v1016, %v1624
        %v1626 = vpop.f32.mrb[0].mxu0
        %1627 = vmatprep.mubr.f32.mxu0 0.0
        %1628 = vmatmul.mubr.f32.gmra.mrb[0].mxu0 %v1116
        %v1629 = vpop.f32.mrb[0].mxu0
        %v1630 = vadd.f32 %v1016, %v1629
        %v1631 = vpop.f32.mrb[0].mxu0
        %1632 = vmatprep.mubr.f32.mxu0 0.0
        %1633 = vmatmul.mubr.f32.gmra.mrb[0].mxu0 %v1119
        %v1634 = vpop.f32.mrb[0].mxu0
        %v1635 = vadd.f32 %v1016, %v1634
        %v1636 = vpop.f32.mrb[0].mxu0
        %1637 = vmatprep.mubr.f32.mxu0 0.0
        %1638 = vmatmul.mubr.f32.gmra.mrb[0].mxu0 %v1122
        %v1639 = vpop.f32.mrb[0].mxu0
        %v1640 = vadd.f32 %v1016, %v1639
        %v1641 = vpop.f32.mrb[0].mxu0
        %1642 = vmatprep.mubr.f32.mxu0 0.0
        %1643 = vmatmul.mubr.f32.gmra.mrb[0].mxu0 %v1125
        %v1644 = vpop.f32.mrb[0].mxu0
        %v1645 = vadd.f32 %v1016, %v1644
        %v1646 = vpop.f32.mrb[0].mxu0
        %1647 = vmatprep.mubr.f32.mxu0 0.0
        %1648 = vmatmul.mubr.f32.gmra.mrb[0].mxu0 %v1128
        %v1649 = vpop.f32.mrb[0].mxu0
        %v1650 = vadd.f32 %v1016, %v1649
        %v1651 = vpop.f32.mrb[0].mxu0
        %1652 = vmatprep.mubr.f32.mxu0 0.0
        %1653 = vmatmul.mubr.f32.gmra.mrb[0].mxu0 %v1131
        %v1654 = vpop.f32.mrb[0].mxu0
        %v1655 = vadd.f32 %v1016, %v1654
        %v1656 = vpop.f32.mrb[0].mxu0
        %1657 = vmatprep.mubr.f32.mxu0 0.0
        %1658 = vmatmul.mubr.f32.gmra.mrb[0].mxu0 %v1134
        %v1659 = vpop.f32.mrb[0].mxu0
        %v1660 = vadd.f32 %v1016, %v1659
        %v1661 = vpop.f32.mrb[0].mxu0
        %1662 = vmatprep.mubr.f32.mxu0 0.0
        %1663 = vmatmul.mubr.f32.gmra.mrb[0].mxu0 %v1137
        %v1664 = vpop.f32.mrb[0].mxu0
        %v1665 = vadd.f32 %v1016, %v1664
        %v1666 = vpop.f32.mrb[0].mxu0
        %1667 = vmatprep.mubr.f32.mxu0 0.0
        %1668 = vmatmul.mubr.f32.gmra.mrb[0].mxu0 %v1140
        %v1669 = vpop.f32.mrb[0].mxu0
        %v1670 = vadd.f32 %v1016, %v1669
        %v1671 = vpop.f32.mrb[0].mxu0
        %1672 = vmatprep.mubr.f32.mxu0 0.0
        %1673 = vmatmul.mubr.f32.gmra.mrb[0].mxu0 %v1143
        %v1674 = vpop.f32.mrb[0].mxu0
        %v1675 = vadd.f32 %v1016, %v1674
        %v1676 = vpop.f32.mrb[0].mxu0
        %1677 = vmatprep.mubr.f32.mxu0 0.0
        %1678 = vmatmul.mubr.f32.gmra.mrb[0].mxu0 %v1146
        %v1679 = vpop.f32.mrb[0].mxu0
        %v1680 = vadd.f32 %v1016, %v1679
        %v1681 = vpop.f32.mrb[0].mxu0
        %1682 = vmatprep.mubr.f32.mxu0 0.0
        %1683 = vmatmul.mubr.f32.gmra.mrb[0].mxu0 %v1149
        %v1684 = vpop.f32.mrb[0].mxu0
        %v1685 = vadd.f32 %v1016, %v1684
        %v1686 = vpop.f32.mrb[0].mxu0
        %1687 = vmatprep.mubr.f32.mxu0 0.0
        %1688 = vmatmul.mubr.f32.gmra.mrb[0].mxu0 %v1152
        %v1689 = vpop.f32.mrb[0].mxu0
        %v1690 = vadd.f32 %v1016, %v1689
        %v1691 = vpop.f32.mrb[0].mxu0
        %1692 = vmatprep.mubr.f32.mxu0 0.0
        %1693 = vmatmul.mubr.f32.gmra.mrb[0].mxu0 %v1155
        %v1694 = vpop.f32.mrb[0].mxu0
        %v1695 = vadd.f32 %v1016, %v1694
        %v1696 = vpop.f32.mrb[0].mxu0
        %1697 = vmatprep.mubr.f32.mxu0 0.0
        %1698 = vmatmul.mubr.f32.gmra.mrb[0].mxu0 %v1158
        %v1699 = vpop.f32.mrb[0].mxu0
        %v1700 = vadd.f32 %v1016, %v1699
        %v1701 = vpop.f32.mrb[0].mxu0
        %1702 = vmatprep.mubr.f32.mxu0 0.0
        %1703 = vmatmul.mubr.f32.gmra.mrb[0].mxu0 %v1161
        %v1704 = vpop.f32.mrb[0].mxu0
        %v1705 = vadd.f32 %v1016, %v1704
        %v1706 = vpop.f32.mrb[0].mxu0
        %1707 = vmatprep.mubr.f32.mxu0 0.0
        %1708 = vmatmul.mubr.f32.gmra.mrb[0].mxu0 %v1164
        %v1709 = vpop.f32.mrb[0].mxu0
        %v1710 = vadd.f32 %v1016, %v1709
        %v1711 = vpop.f32.mrb[0].mxu0
        %1712 = vmatprep.mubr.f32.mxu0 0.0
        %1713 = vmatmul.mubr.f32.gmra.mrb[0].mxu0 %v1167
        %v1714 = vpop.f32.mrb[0].mxu0
        %v1715 = vadd.f32 %v1016, %v1714
        %v1716 = vpop.f32.mrb[0].mxu0
        %1717 = vmatprep.mubr.f32.mxu0 0.0
        %1718 = vmatmul.mubr.f32.gmra.mrb[0].mxu0 %v1170
        %v1719 = vpop.f32.mrb[0].mxu0
        %v1720 = vadd.f32 %v1016, %v1719
        %v1721 = vpop.f32.mrb[0].mxu0
        %1722 = vmatprep.mubr.f32.mxu0 0.0
        %1723 = vmatmul.mubr.f32.gmra.mrb[0].mxu0 %v1173
        %v1724 = vpop.f32.mrb[0].mxu0
        %v1725 = vadd.f32 %v1016, %v1724
        %v1726 = vpop.f32.mrb[0].mxu0
        %1727 = vmatprep.mubr.f32.mxu0 0.0
        %1728 = vmatmul.mubr.f32.gmra.mrb[0].mxu0 %v1176
        %v1729 = vpop.f32.mrb[0].mxu0
        %v1730 = vadd.f32 %v1016, %v1729
        %v1731 = vpop.f32.mrb[0].mxu0
        %1732 = vmatprep.mubr.f32.mxu0 0.0
        %1733 = vmatmul.mubr.f32.gmra.mrb[0].mxu0 %v1179
        %v1734 = vpop.f32.mrb[0].mxu0
        %v1735 = vadd.f32 %v1016, %v1734
        %v1736 = vpop.f32.mrb[0].mxu0
        %1737 = vmatprep.mubr.f32.mxu0 0.0
        %1738 = vmatmul.mubr.f32.gmra.mrb[0].mxu0 %v1182
        %v1739 = vpop.f32.mrb[0].mxu0
        %v1740 = vadd.f32 %v1016, %v1739
        %v1741 = vpop.f32.mrb[0].mxu0
        %1742 = vmatprep.mubr.f32.mxu0 0.0
        %1743 = vmatmul.mubr.f32.gmra.mrb[0].mxu0 %v1185
        %v1744 = vpop.f32.mrb[0].mxu0
        %v1745 = vadd.f32 %v1016, %v1744
        %v1746 = vpop.f32.mrb[0].mxu0
        %1747 = vmatprep.mubr.f32.mxu0 0.0
        %1748 = vmatmul.mubr.f32.gmra.mrb[0].mxu0 %v1188
        %v1749 = vpop.f32.mrb[0].mxu0
        %v1750 = vadd.f32 %v1016, %v1749
        %v1751 = vpop.f32.mrb[0].mxu0
        %1752 = vmatprep.mubr.f32.mxu0 0.0
        %1753 = vmatmul.mubr.f32.gmra.mrb[0].mxu0 %v1191
        %v1754 = vpop.f32.mrb[0].mxu0
        %v1755 = vadd.f32 %v1016, %v1754
        %v1756 = vpop.f32.mrb[0].mxu0
        %1757 = vmatprep.mubr.f32.mxu0 0.0
        %1758 = vmatmul.mubr.f32.gmra.mrb[0].mxu0 %v1194
        %v1759 = vpop.f32.mrb[0].mxu0
        %v1760 = vadd.f32 %v1016, %v1759
        %v1761 = vpop.f32.mrb[0].mxu0
        %1762 = vmatprep.mubr.f32.mxu0 0.0
        %1763 = vmatmul.mubr.f32.gmra.mrb[0].mxu0 %v1197
        %v1764 = vpop.f32.mrb[0].mxu0
        %v1765 = vadd.f32 %v1016, %v1764
        %v1766 = vpop.f32.mrb[0].mxu0
        %1767 = vmatprep.mubr.f32.mxu0 0.0
        %1768 = vmatmul.mubr.f32.gmra.mrb[0].mxu0 %v1200
        %v1769 = vpop.f32.mrb[0].mxu0
        %v1770 = vadd.f32 %v1016, %v1769
        %v1771 = vpop.f32.mrb[0].mxu0
        %1772 = vmatprep.mubr.f32.mxu0 0.0
        %1773 = vmatmul.mubr.f32.gmra.mrb[0].mxu0 %v1203
        %v1774 = vpop.f32.mrb[0].mxu0
        %v1775 = vadd.f32 %v1016, %v1774
        %v1776 = vpop.f32.mrb[0].mxu0
        %1777 = vmatprep.mubr.f32.mxu0 0.0
        %1778 = vmatmul.mubr.f32.gmra.mrb[0].mxu0 %v1206
        %v1779 = vpop.f32.mrb[0].mxu0
        %v1780 = vadd.f32 %v1016, %v1779
        %v1781 = vpop.f32.mrb[0].mxu0
        %1782 = vmatprep.mubr.f32.mxu0 0.0
        %1783 = vmatmul.mubr.f32.gmra.mrb[0].mxu0 %v1209
        %v1784 = vpop.f32.mrb[0].mxu0
        %v1785 = vadd.f32 %v1016, %v1784
        %v1786 = vpop.f32.mrb[0].mxu0
        %1787 = vmatprep.mubr.f32.mxu0 0.0
        %1788 = vmatmul.mubr.f32.gmra.mrb[0].mxu0 %v1212
        %v1789 = vpop.f32.mrb[0].mxu0
        %v1790 = vadd.f32 %v1016, %v1789
        %v1791 = vpop.f32.mrb[0].mxu0
        %1792 = vmatprep.mubr.f32.mxu0 0.0
        %1793 = vmatmul.mubr.f32.gmra.mrb[0].mxu0 %v1215
        %v1794 = vpop.f32.mrb[0].mxu0
        %v1795 = vadd.f32 %v1016, %v1794
        %v1796 = vpop.f32.mrb[0].mxu0
        %1797 = vmatprep.mubr.f32.mxu0 0.0
        %1798 = vmatmul.mubr.f32.gmra.mrb[0].mxu0 %v1218
        %v1799 = vpop.f32.mrb[0].mxu0
        %v1800 = vadd.f32 %v1016, %v1799
        %v1801 = vpop.f32.mrb[0].mxu0
        %1802 = vmatprep.mubr.f32.mxu0 0.0
        %1803 = vmatmul.mubr.f32.gmra.mrb[0].mxu0 %v1221
        %v1804 = vpop.f32.mrb[0].mxu0
        %v1805 = vadd.f32 %v1016, %v1804
        %v1806 = vpop.f32.mrb[0].mxu0
        %1807 = vmatprep.mubr.f32.mxu0 0.0
        %1808 = vmatmul.mubr.f32.gmra.mrb[0].mxu0 %v1224
        %v1809 = vpop.f32.mrb[0].mxu0
        %v1810 = vadd.f32 %v1016, %v1809
        %v1811 = vpop.f32.mrb[0].mxu0
        %1812 = vmatprep.mubr.f32.mxu0 0.0
        %1813 = vmatmul.mubr.f32.gmra.mrb[0].mxu0 %v1227
        %v1814 = vpop.f32.mrb[0].mxu0
        %v1815 = vadd.f32 %v1016, %v1814
        %v1816 = vpop.f32.mrb[0].mxu0
        %1817 = vmatprep.mubr.f32.mxu0 0.0
        %1818 = vmatmul.mubr.f32.gmra.mrb[0].mxu0 %v1230
        %v1819 = vpop.f32.mrb[0].mxu0
        %v1820 = vadd.f32 %v1016, %v1819
        %v1821 = vpop.f32.mrb[0].mxu0
        %1822 = vmatprep.mubr.f32.mxu0 0.0
        %1823 = vmatmul.mubr.f32.gmra.mrb[0].mxu0 %v1233
        %v1824 = vpop.f32.mrb[0].mxu0
        %v1825 = vadd.f32 %v1016, %v1824
        %v1826 = vpop.f32.mrb[0].mxu0
        %1827 = vmatprep.mubr.f32.mxu0 0.0
        %1828 = vmatmul.mubr.f32.gmra.mrb[0].mxu0 %v1236
        %v1829 = vpop.f32.mrb[0].mxu0
        %v1830 = vadd.f32 %v1016, %v1829
        %v1831 = vpop.f32.mrb[0].mxu0
        %1832 = vmatprep.mubr.f32.mxu0 0.0
        %1833 = vmatmul.mubr.f32.gmra.mrb[0].mxu0 %v1239
        %v1834 = vpop.f32.mrb[0].mxu0
        %v1835 = vadd.f32 %v1016, %v1834
        %v1836 = vpop.f32.mrb[0].mxu0
        %1837 = vmatprep.mubr.f32.mxu0 0.0
        %1838 = vmatmul.mubr.f32.gmra.mrb[0].mxu0 %v1242
        %v1839 = vpop.f32.mrb[0].mxu0
        %v1840 = vadd.f32 %v1016, %v1839
        %v1841 = vpop.f32.mrb[0].mxu0
        %1842 = vmatprep.mubr.f32.mxu0 0.0
        %1843 = vmatmul.mubr.f32.gmra.mrb[0].mxu0 %v1245
        %v1844 = vpop.f32.mrb[0].mxu0
        %v1845 = vadd.f32 %v1016, %v1844
        %v1846 = vpop.f32.mrb[0].mxu0
        %1847 = vmatprep.mubr.f32.mxu0 0.0
        %1848 = vmatmul.mubr.f32.gmra.mrb[0].mxu0 %v1248
        %v1849 = vpop.f32.mrb[0].mxu0
        %v1850 = vadd.f32 %v1016, %v1849
        %v1851 = vpop.f32.mrb[0].mxu0
        %1852 = vmatprep.mubr.f32.mxu0 0.0
        %1853 = vmatmul.mubr.f32.gmra.mrb[0].mxu0 %v1251
        %v1854 = vpop.f32.mrb[0].mxu0
        %v1855 = vadd.f32 %v1016, %v1854
        %v1856 = vpop.f32.mrb[0].mxu0
        %1857 = vmatprep.mubr.f32.mxu0 0.0
        %1858 = vmatmul.mubr.f32.gmra.mrb[0].mxu0 %v1254
        %v1859 = vpop.f32.mrb[0].mxu0
        %v1860 = vadd.f32 %v1016, %v1859
        %v1861 = vpop.f32.mrb[0].mxu0
        %1862 = vmatprep.mubr.f32.mxu0 0.0
        %1863 = vmatmul.mubr.f32.gmra.mrb[0].mxu0 %v1257
        %v1864 = vpop.f32.mrb[0].mxu0
        %v1865 = vadd.f32 %v1016, %v1864
        %v1866 = vpop.f32.mrb[0].mxu0
        %1867 = vmatprep.mubr.f32.mxu0 0.0
        %1868 = vmatmul.mubr.f32.gmra.mrb[0].mxu0 %v1260
        %v1869 = vpop.f32.mrb[0].mxu0
        %v1870 = vadd.f32 %v1016, %v1869
        %v1871 = vpop.f32.mrb[0].mxu0
        %1872 = vmatprep.mubr.f32.mxu0 0.0
        %1873 = vmatmul.mubr.f32.gmra.mrb[0].mxu0 %v1263
        %v1874 = vpop.f32.mrb[0].mxu0
        %v1875 = vadd.f32 %v1016, %v1874
        %v1876 = vpop.f32.mrb[0].mxu0
        %1877 = vmatprep.mubr.f32.mxu0 0.0
        %1878 = vmatmul.mubr.f32.gmra.mrb[0].mxu0 %v1266
        %v1879 = vpop.f32.mrb[0].mxu0
        %v1880 = vadd.f32 %v1016, %v1879
        %v1881 = vpop.f32.mrb[0].mxu0
        %1882 = vmatprep.mubr.f32.mxu0 0.0
        %1883 = vmatmul.mubr.f32.gmra.mrb[0].mxu0 %v1269
        %v1884 = vpop.f32.mrb[0].mxu0
        %v1885 = vadd.f32 %v1016, %v1884
        %v1886 = vpop.f32.mrb[0].mxu0
        %1887 = vmatprep.mubr.f32.mxu0 0.0
        %1888 = vmatmul.mubr.f32.gmra.mrb[0].mxu0 %v1272
        %v1889 = vpop.f32.mrb[0].mxu0
        %v1890 = vadd.f32 %v1016, %v1889
        %v1891 = vpop.f32.mrb[0].mxu0
        %1892 = vmatprep.mubr.f32.mxu0 0.0
        %1893 = vmatmul.mubr.f32.gmra.mrb[0].mxu0 %v1275
        %v1894 = vpop.f32.mrb[0].mxu0
        %v1895 = vadd.f32 %v1016, %v1894
        %v1896 = vpop.f32.mrb[0].mxu0
        %1897 = vmatprep.mubr.f32.mxu0 0.0
        %1898 = vmatmul.mubr.f32.gmra.mrb[0].mxu0 %v1278
        %v1899 = vpop.f32.mrb[0].mxu0
        %v1900 = vadd.f32 %v1016, %v1899
        %v1901 = vpop.f32.mrb[0].mxu0
        %1902 = vmatprep.mubr.f32.mxu0 0.0
        %1903 = vmatmul.mubr.f32.gmra.mrb[0].mxu0 %v1281
        %v1904 = vpop.f32.mrb[0].mxu0
        %v1905 = vadd.f32 %v1016, %v1904
        %v1906 = vpop.f32.mrb[0].mxu0
        %1907 = vmatprep.mubr.f32.mxu0 0.0
        %1908 = vmatmul.mubr.f32.gmra.mrb[0].mxu0 %v1284
        %v1909 = vpop.f32.mrb[0].mxu0
        %v1910 = vadd.f32 %v1016, %v1909
        %v1911 = vpop.f32.mrb[0].mxu0
        %1912 = vmatprep.mubr.f32.mxu0 0.0
        %1913 = vmatmul.mubr.f32.gmra.mrb[0].mxu0 %v1287
        %v1914 = vpop.f32.mrb[0].mxu0
        %v1915 = vadd.f32 %v1016, %v1914
        %v1916 = vpop.f32.mrb[0].mxu0
        %1917 = vmatprep.mubr.f32.mxu0 0.0
        %1918 = vmatmul.mubr.f32.gmra.mrb[0].mxu0 %v1290
        %v1919 = vpop.f32.mrb[0].mxu0
        %v1920 = vadd.f32 %v1016, %v1919
        %v1921 = vpop.f32.mrb[0].mxu0
        %1922 = vmatprep.mubr.f32.mxu0 0.0
        %1923 = vmatmul.mubr.f32.gmra.mrb[0].mxu0 %v1293
        %v1924 = vpop.f32.mrb[0].mxu0
        %v1925 = vadd.f32 %v1016, %v1924
        %v1926 = vpop.f32.mrb[0].mxu0
        %1927 = vmatprep.mubr.f32.mxu0 0.0
        %1928 = vmatmul.mubr.f32.gmra.mrb[0].mxu0 %v1296
        %v1929 = vpop.f32.mrb[0].mxu0
        %v1930 = vadd.f32 %v1016, %v1929
        %v1931 = vpop.f32.mrb[0].mxu0
        %1932 = vmatprep.mubr.f32.mxu0 0.0
        %1933 = vmatmul.mubr.f32.gmra.mrb[0].mxu0 %v1299
        %v1934 = vpop.f32.mrb[0].mxu0
        %v1935 = vadd.f32 %v1016, %v1934
        %v1936 = vpop.f32.mrb[0].mxu0
        %1937 = vmatprep.mubr.f32.mxu0 0.0
        %1938 = vmatmul.mubr.f32.gmra.mrb[0].mxu0 %v1302
        %v1939 = vpop.f32.mrb[0].mxu0
        %v1940 = vadd.f32 %v1016, %v1939
        %v1941 = vpop.f32.mrb[0].mxu0
        %1942 = vmatprep.mubr.f32.mxu0 0.0
        %1943 = vmatmul.mubr.f32.gmra.mrb[0].mxu0 %v1305
        %v1944 = vpop.f32.mrb[0].mxu0
        %v1945 = vadd.f32 %v1016, %v1944
        %v1946 = vpop.f32.mrb[0].mxu0
        %1947 = vmatprep.mubr.f32.mxu0 0.0
        %1948 = vmatmul.mubr.f32.gmra.mrb[0].mxu0 %v1308
        %v1949 = vpop.f32.mrb[0].mxu0
        %v1950 = vadd.f32 %v1016, %v1949
        %v1951 = vpop.f32.mrb[0].mxu0
        %1952 = vmatprep.mubr.f32.mxu0 0.0
        %1953 = vmatmul.mubr.f32.gmra.mrb[0].mxu0 %v1311
        %v1954 = vpop.f32.mrb[0].mxu0
        %v1955 = vadd.f32 %v1016, %v1954
        %v1956 = vpop.f32.mrb[0].mxu0
        %1957 = vmatprep.mubr.f32.mxu0 0.0
        %1958 = vmatmul.mubr.f32.gmra.mrb[0].mxu0 %v1314
        %v1959 = vpop.f32.mrb[0].mxu0
        %v1960 = vadd.f32 %v1016, %v1959
        %v1961 = vpop.f32.mrb[0].mxu0
        %1962 = vmatprep.mubr.f32.mxu0 0.0
        %1963 = vmatmul.mubr.f32.gmra.mrb[0].mxu0 %v1317
        %v1964 = vpop.f32.mrb[0].mxu0
        %v1965 = vadd.f32 %v1016, %v1964
        %v1966 = vpop.f32.mrb[0].mxu0
        %1967 = vmatprep.mubr.f32.mxu0 0.0
        %1968 = vmatmul.mubr.f32.gmra.mrb[0].mxu0 %v1320
        %v1969 = vpop.f32.mrb[0].mxu0
        %v1970 = vadd.f32 %v1016, %v1969
        %v1971 = vpop.f32.mrb[0].mxu0
        %1972 = vmatprep.mubr.f32.mxu0 0.0
        %1973 = vmatmul.mubr.f32.gmra.mrb[0].mxu0 %v1323
        %v1974 = vpop.f32.mrb[0].mxu0
        %v1975 = vadd.f32 %v1016, %v1974
        %v1976 = vpop.f32.mrb[0].mxu0
        %1977 = vmatprep.mubr.f32.mxu0 0.0
        %1978 = vmatmul.mubr.f32.gmra.mrb[0].mxu0 %v1326
        %v1979 = vpop.f32.mrb[0].mxu0
        %v1980 = vadd.f32 %v1016, %v1979
        %v1981 = vpop.f32.mrb[0].mxu0
        %1982 = vmatprep.mubr.f32.mxu0 0.0
        %1983 = vmatmul.mubr.f32.gmra.mrb[0].mxu0 %v1329
        %v1984 = vpop.f32.mrb[0].mxu0
        %v1985 = vadd.f32 %v1016, %v1984
        %v1986 = vpop.f32.mrb[0].mxu0
        %1987 = vmatprep.mubr.f32.mxu0 0.0
        %1988 = vmatmul.mubr.f32.gmra.mrb[0].mxu0 %v1332
        %v1989 = vpop.f32.mrb[0].mxu0
        %v1990 = vadd.f32 %v1016, %v1989
        %v1991 = vpop.f32.mrb[0].mxu0
        %1992 = vmatprep.mubr.f32.mxu0 0.0
        %1993 = vmatmul.mubr.f32.gmra.mrb[0].mxu0 %v1335
        %v1994 = vpop.f32.mrb[0].mxu0
        %v1995 = vadd.f32 %v1016, %v1994
        %v1996 = vpop.f32.mrb[0].mxu0
        %1997 = vmatprep.mubr.f32.mxu0 0.0
        %1998 = vmatmul.mubr.f32.gmra.mrb[0].mxu0 %v1338
        %v1999 = vpop.f32.mrb[0].mxu0
        %v2000 = vadd.f32 %v1016, %v1999
        %v2001 = vpop.f32.mrb[0].mxu0
        %2002 = vmatprep.mubr.f32.mxu0 0.0
        %2003 = vmatmul.mubr.f32.gmra.mrb[0].mxu0 %v1341
        %v2004 = vpop.f32.mrb[0].mxu0
        %v2005 = vadd.f32 %v1016, %v2004
        %v2006 = vpop.f32.mrb[0].mxu0
        %2007 = vmatprep.mubr.f32.mxu0 0.0
        %2008 = vmatmul.mubr.f32.gmra.mrb[0].mxu0 %v1344
        %v2009 = vpop.f32.mrb[0].mxu0
        %v2010 = vadd.f32 %v1016, %v2009
        %v2011 = vpop.f32.mrb[0].mxu0
        %2012 = vmatprep.mubr.f32.mxu0 0.0
        %2013 = vmatmul.mubr.f32.gmra.mrb[0].mxu0 %v1347
        %v2014 = vpop.f32.mrb[0].mxu0
        %v2015 = vadd.f32 %v1016, %v2014
        %v2016 = vpop.f32.mrb[0].mxu0
        %2017 = vmatprep.mubr.f32.mxu0 0.0
        %2018 = vmatmul.mubr.f32.gmra.mrb[0].mxu0 %v1350
        %v2019 = vpop.f32.mrb[0].mxu0
        %v2020 = vadd.f32 %v1016, %v2019
        %v2021 = vpop.f32.mrb[0].mxu0
        %2022 = vmatprep.mubr.f32.mxu0 0.0
        %2023 = vmatmul.mubr.f32.gmra.mrb[0].mxu0 %v1353
        %v2024 = vpop.f32.mrb[0].mxu0
        %v2025 = vadd.f32 %v1016, %v2024
        %v2026 = vpop.f32.mrb[0].mxu0
        %2027 = vmatprep.mubr.f32.mxu0 0.0
        %2028 = vmatmul.mubr.f32.gmra.mrb[0].mxu0 %v1356
        %v2029 = vpop.f32.mrb[0].mxu0
        %v2030 = vadd.f32 %v1016, %v2029
        %v2031 = vpop.f32.mrb[0].mxu0
        %2032 = vmatprep.mubr.f32.mxu0 0.0
        %2033 = vmatmul.mubr.f32.gmra.mrb[0].mxu0 %v1359
        %v2034 = vpop.f32.mrb[0].mxu0
        %v2035 = vadd.f32 %v1016, %v2034
        %v2036 = vpop.f32.mrb[0].mxu0
        %2037 = vmatprep.mubr.f32.mxu0 0.0
        %2038 = vmatmul.mubr.f32.gmra.mrb[0].mxu0 %v1362
        %v2039 = vpop.f32.mrb[0].mxu0
        %v2040 = vadd.f32 %v1016, %v2039
        %v2041 = vpop.f32.mrb[0].mxu0
        %2042 = vmatprep.mubr.f32.mxu0 0.0
        %2043 = vmatmul.mubr.f32.gmra.mrb[0].mxu0 %v1365
        %v2044 = vpop.f32.mrb[0].mxu0
        %v2045 = vadd.f32 %v1016, %v2044
        %v2046 = vpop.f32.mrb[0].mxu0
        %2047 = vmatprep.mubr.f32.mxu0 0.0
        %2048 = vmatmul.mubr.f32.gmra.mrb[0].mxu0 %v1368
        %v2049 = vpop.f32.mrb[0].mxu0
        %v2050 = vadd.f32 %v1016, %v2049
        %v2051 = vpop.f32.mrb[0].mxu0
        %2052 = vmatprep.mubr.f32.mxu0 0.0
        %2053 = vmatmul.mubr.f32.gmra.mrb[0].mxu0 %v1371
        %v2054 = vpop.f32.mrb[0].mxu0
        %v2055 = vadd.f32 %v1016, %v2054
        %v2056 = vpop.f32.mrb[0].mxu0
        %2057 = vmatprep.mubr.f32.mxu0 0.0
        %2058 = vmatmul.mubr.f32.gmra.mrb[0].mxu0 %v1374
        %v2059 = vpop.f32.mrb[0].mxu0
        %v2060 = vadd.f32 %v1016, %v2059
        %v2061 = vpop.f32.mrb[0].mxu0
        %2062 = vmatprep.mubr.f32.mxu0 0.0
        %2063 = vmatmul.mubr.f32.gmra.mrb[0].mxu0 %v1377
        %v2064 = vpop.f32.mrb[0].mxu0
        %v2065 = vadd.f32 %v1016, %v2064
        %v2066 = vpop.f32.mrb[0].mxu0
        %2067 = vmatprep.mubr.f32.mxu0 0.0
        %2068 = vmatmul.mubr.f32.gmra.mrb[0].mxu0 %v1380
        %v2069 = vpop.f32.mrb[0].mxu0
        %v2070 = vadd.f32 %v1016, %v2069
        %v2071 = vpop.f32.mrb[0].mxu0
        %2072 = vmatprep.mubr.f32.mxu0 0.0
        %2073 = vmatmul.mubr.f32.gmra.mrb[0].mxu0 %v1383
        %v2074 = vpop.f32.mrb[0].mxu0
        %v2075 = vadd.f32 %v1016, %v2074
        %v2076 = vpop.f32.mrb[0].mxu0
        %2077 = vmatprep.mubr.f32.mxu0 0.0
        %2078 = vmatmul.mubr.f32.gmra.mrb[0].mxu0 %v1386
        %v2079 = vpop.f32.mrb[0].mxu0
        %v2080 = vadd.f32 %v1016, %v2079
        %v2081 = vpop.f32.mrb[0].mxu0
        %2082 = vmatprep.mubr.f32.mxu0 0.0
        %2083 = vmatmul.mubr.f32.gmra.mrb[0].mxu0 %v1389
        %v2084 = vpop.f32.mrb[0].mxu0
        %v2085 = vadd.f32 %v1016, %v2084
        %v2086 = vpop.f32.mrb[0].mxu0
        %2087 = vmatprep.mubr.f32.mxu0 0.0
        %2088 = vmatmul.mubr.f32.gmra.mrb[0].mxu0 %v1392
        %v2089 = vpop.f32.mrb[0].mxu0
        %v2090 = vadd.f32 %v1016, %v2089
        %v2091 = vpop.f32.mrb[0].mxu0
        %2092 = vmatprep.mubr.f32.mxu0 0.0
        %2093 = vmatmul.mubr.f32.gmra.mrb[0].mxu0 %v1395
        %v2094 = vpop.f32.mrb[0].mxu0
        %v2095 = vadd.f32 %v1016, %v2094
        %v2096 = vpop.f32.mrb[0].mxu0
        %2097 = vmatprep.mubr.f32.mxu0 0.0
        %2098 = vmatmul.mubr.f32.gmra.mrb[0].mxu0 %v1398
        %v2099 = vpop.f32.mrb[0].mxu0
        %v2100 = vadd.f32 %v1016, %v2099
        %v2101 = vpop.f32.mrb[0].mxu0
        %2102 = vmatprep.mubr.f32.mxu0 0.0
        %2103 = vmatmul.mubr.f32.gmra.mrb[0].mxu0 %v1401
        %v2104 = vpop.f32.mrb[0].mxu0
        %v2105 = vadd.f32 %v1016, %v2104
        %v2106 = vpop.f32.mrb[0].mxu0
        %2107 = vdwg.mxu0
        %vm2108 = vcmask 261120
        %2109 = vst.msk [vmem:[#allocation2] sm:$0xff] %vm2108, %v1470
        %2110 = vst.msk [vmem:[#allocation2 + $0x8] sm:$0xff] %vm2108, %v1475
        %2111 = vst.msk [vmem:[#allocation2 + $0x10] sm:$0xff] %vm2108, %v1480
        %2112 = vst.msk [vmem:[#allocation2 + $0x18] sm:$0xff] %vm2108, %v1485
        %2113 = vst.msk [vmem:[#allocation2 + $0x20] sm:$0xff] %vm2108, %v1490
        %2114 = vst.msk [vmem:[#allocation2 + $0x28] sm:$0xff] %vm2108, %v1495
        %2115 = vst.msk [vmem:[#allocation2 + $0x30] sm:$0xff] %vm2108, %v1500
        %2116 = vst.msk [vmem:[#allocation2 + $0x38] sm:$0xff] %vm2108, %v1505
        %2117 = vst.msk [vmem:[#allocation2 + $0x40] sm:$0xff] %vm2108, %v1510
        %2118 = vst.msk [vmem:[#allocation2 + $0x48] sm:$0xff] %vm2108, %v1515
        %2119 = vst.msk [vmem:[#allocation2 + $0x50] sm:$0xff] %vm2108, %v1520
        %2120 = vst.msk [vmem:[#allocation2 + $0x58] sm:$0xff] %vm2108, %v1525
        %2121 = vst.msk [vmem:[#allocation2 + $0x60] sm:$0xff] %vm2108, %v1530
        %2122 = vst.msk [vmem:[#allocation2 + $0x68] sm:$0xff] %vm2108, %v1535
        %2123 = vst.msk [vmem:[#allocation2 + $0x70] sm:$0xff] %vm2108, %v1540
        %2124 = vst.msk [vmem:[#allocation2 + $0x78] sm:$0xff] %vm2108, %v1545
        %2125 = vst.msk [vmem:[#allocation2 + $0x80] sm:$0xff] %vm2108, %v1550
        %2126 = vst.msk [vmem:[#allocation2 + $0x88] sm:$0xff] %vm2108, %v1555
        %2127 = vst.msk [vmem:[#allocation2 + $0x90] sm:$0xff] %vm2108, %v1560
        %2128 = vst.msk [vmem:[#allocation2 + $0x98] sm:$0xff] %vm2108, %v1565
        %2129 = vst.msk [vmem:[#allocation2 + $0xa0] sm:$0xff] %vm2108, %v1570
        %2130 = vst.msk [vmem:[#allocation2 + $0xa8] sm:$0xff] %vm2108, %v1575
        %2131 = vst.msk [vmem:[#allocation2 + $0xb0] sm:$0xff] %vm2108, %v1580
        %2132 = vst.msk [vmem:[#allocation2 + $0xb8] sm:$0xff] %vm2108, %v1585
        %2133 = vst.msk [vmem:[#allocation2 + $0xc0] sm:$0xff] %vm2108, %v1590
        %2134 = vst.msk [vmem:[#allocation2 + $0xc8] sm:$0xff] %vm2108, %v1595
        %2135 = vst.msk [vmem:[#allocation2 + $0xd0] sm:$0xff] %vm2108, %v1600
        %2136 = vst.msk [vmem:[#allocation2 + $0xd8] sm:$0xff] %vm2108, %v1605
        %2137 = vst.msk [vmem:[#allocation2 + $0xe0] sm:$0xff] %vm2108, %v1610
        %2138 = vst.msk [vmem:[#allocation2 + $0xe8] sm:$0xff] %vm2108, %v1615
        %2139 = vst.msk [vmem:[#allocation2 + $0xf0] sm:$0xff] %vm2108, %v1620
        %2140 = vst.msk [vmem:[#allocation2 + $0xf8] sm:$0xff] %vm2108, %v1625
        %2141 = vst.msk [vmem:[#allocation2 + $0x100] sm:$0xff] %vm2108, %v1630
        %2142 = vst.msk [vmem:[#allocation2 + $0x108] sm:$0xff] %vm2108, %v1635
        %2143 = vst.msk [vmem:[#allocation2 + $0x110] sm:$0xff] %vm2108, %v1640
        %2144 = vst.msk [vmem:[#allocation2 + $0x118] sm:$0xff] %vm2108, %v1645
        %2145 = vst.msk [vmem:[#allocation2 + $0x120] sm:$0xff] %vm2108, %v1650
        %2146 = vst.msk [vmem:[#allocation2 + $0x128] sm:$0xff] %vm2108, %v1655
        %2147 = vst.msk [vmem:[#allocation2 + $0x130] sm:$0xff] %vm2108, %v1660
        %2148 = vst.msk [vmem:[#allocation2 + $0x138] sm:$0xff] %vm2108, %v1665
        %2149 = vst.msk [vmem:[#allocation2 + $0x140] sm:$0xff] %vm2108, %v1670
        %2150 = vst.msk [vmem:[#allocation2 + $0x148] sm:$0xff] %vm2108, %v1675
        %2151 = vst.msk [vmem:[#allocation2 + $0x150] sm:$0xff] %vm2108, %v1680
        %2152 = vst.msk [vmem:[#allocation2 + $0x158] sm:$0xff] %vm2108, %v1685
        %2153 = vst.msk [vmem:[#allocation2 + $0x160] sm:$0xff] %vm2108, %v1690
        %2154 = vst.msk [vmem:[#allocation2 + $0x168] sm:$0xff] %vm2108, %v1695
        %2155 = vst.msk [vmem:[#allocation2 + $0x170] sm:$0xff] %vm2108, %v1700
        %2156 = vst.msk [vmem:[#allocation2 + $0x178] sm:$0xff] %vm2108, %v1705
        %2157 = vst.msk [vmem:[#allocation2 + $0x180] sm:$0xff] %vm2108, %v1710
        %2158 = vst.msk [vmem:[#allocation2 + $0x188] sm:$0xff] %vm2108, %v1715
        %2159 = vst.msk [vmem:[#allocation2 + $0x190] sm:$0xff] %vm2108, %v1720
        %2160 = vst.msk [vmem:[#allocation2 + $0x198] sm:$0xff] %vm2108, %v1725
        %2161 = vst.msk [vmem:[#allocation2 + $0x1a0] sm:$0xff] %vm2108, %v1730
        %2162 = vst.msk [vmem:[#allocation2 + $0x1a8] sm:$0xff] %vm2108, %v1735
        %2163 = vst.msk [vmem:[#allocation2 + $0x1b0] sm:$0xff] %vm2108, %v1740
        %2164 = vst.msk [vmem:[#allocation2 + $0x1b8] sm:$0xff] %vm2108, %v1745
        %2165 = vst.msk [vmem:[#allocation2 + $0x1c0] sm:$0xff] %vm2108, %v1750
        %2166 = vst.msk [vmem:[#allocation2 + $0x1c8] sm:$0xff] %vm2108, %v1755
        %2167 = vst.msk [vmem:[#allocation2 + $0x1d0] sm:$0xff] %vm2108, %v1760
        %2168 = vst.msk [vmem:[#allocation2 + $0x1d8] sm:$0xff] %vm2108, %v1765
        %2169 = vst.msk [vmem:[#allocation2 + $0x1e0] sm:$0xff] %vm2108, %v1770
        %2170 = vst.msk [vmem:[#allocation2 + $0x1e8] sm:$0xff] %vm2108, %v1775
        %2171 = vst.msk [vmem:[#allocation2 + $0x1f0] sm:$0xff] %vm2108, %v1780
        %2172 = vst.msk [vmem:[#allocation2 + $0x1f8] sm:$0xff] %vm2108, %v1785
        %2173 = vst.msk [vmem:[#allocation2 + $0x200] sm:$0xff] %vm2108, %v1790
        %2174 = vst.msk [vmem:[#allocation2 + $0x208] sm:$0xff] %vm2108, %v1795
        %2175 = vst.msk [vmem:[#allocation2 + $0x210] sm:$0xff] %vm2108, %v1800
        %2176 = vst.msk [vmem:[#allocation2 + $0x218] sm:$0xff] %vm2108, %v1805
        %2177 = vst.msk [vmem:[#allocation2 + $0x220] sm:$0xff] %vm2108, %v1810
        %2178 = vst.msk [vmem:[#allocation2 + $0x228] sm:$0xff] %vm2108, %v1815
        %2179 = vst.msk [vmem:[#allocation2 + $0x230] sm:$0xff] %vm2108, %v1820
        %2180 = vst.msk [vmem:[#allocation2 + $0x238] sm:$0xff] %vm2108, %v1825
        %2181 = vst.msk [vmem:[#allocation2 + $0x240] sm:$0xff] %vm2108, %v1830
        %2182 = vst.msk [vmem:[#allocation2 + $0x248] sm:$0xff] %vm2108, %v1835
        %2183 = vst.msk [vmem:[#allocation2 + $0x250] sm:$0xff] %vm2108, %v1840
        %2184 = vst.msk [vmem:[#allocation2 + $0x258] sm:$0xff] %vm2108, %v1845
        %2185 = vst.msk [vmem:[#allocation2 + $0x260] sm:$0xff] %vm2108, %v1850
        %2186 = vst.msk [vmem:[#allocation2 + $0x268] sm:$0xff] %vm2108, %v1855
        %2187 = vst.msk [vmem:[#allocation2 + $0x270] sm:$0xff] %vm2108, %v1860
        %2188 = vst.msk [vmem:[#allocation2 + $0x278] sm:$0xff] %vm2108, %v1865
        %2189 = vst.msk [vmem:[#allocation2 + $0x280] sm:$0xff] %vm2108, %v1870
        %2190 = vst.msk [vmem:[#allocation2 + $0x288] sm:$0xff] %vm2108, %v1875
        %2191 = vst.msk [vmem:[#allocation2 + $0x290] sm:$0xff] %vm2108, %v1880
        %2192 = vst.msk [vmem:[#allocation2 + $0x298] sm:$0xff] %vm2108, %v1885
        %2193 = vst.msk [vmem:[#allocation2 + $0x2a0] sm:$0xff] %vm2108, %v1890
        %2194 = vst.msk [vmem:[#allocation2 + $0x2a8] sm:$0xff] %vm2108, %v1895
        %2195 = vst.msk [vmem:[#allocation2 + $0x2b0] sm:$0xff] %vm2108, %v1900
        %2196 = vst.msk [vmem:[#allocation2 + $0x2b8] sm:$0xff] %vm2108, %v1905
        %2197 = vst.msk [vmem:[#allocation2 + $0x2c0] sm:$0xff] %vm2108, %v1910
        %2198 = vst.msk [vmem:[#allocation2 + $0x2c8] sm:$0xff] %vm2108, %v1915
        %2199 = vst.msk [vmem:[#allocation2 + $0x2d0] sm:$0xff] %vm2108, %v1920
        %2200 = vst.msk [vmem:[#allocation2 + $0x2d8] sm:$0xff] %vm2108, %v1925
        %2201 = vst.msk [vmem:[#allocation2 + $0x2e0] sm:$0xff] %vm2108, %v1930
        %2202 = vst.msk [vmem:[#allocation2 + $0x2e8] sm:$0xff] %vm2108, %v1935
        %2203 = vst.msk [vmem:[#allocation2 + $0x2f0] sm:$0xff] %vm2108, %v1940
        %2204 = vst.msk [vmem:[#allocation2 + $0x2f8] sm:$0xff] %vm2108, %v1945
        %2205 = vst.msk [vmem:[#allocation2 + $0x300] sm:$0xff] %vm2108, %v1950
        %2206 = vst.msk [vmem:[#allocation2 + $0x308] sm:$0xff] %vm2108, %v1955
        %2207 = vst.msk [vmem:[#allocation2 + $0x310] sm:$0xff] %vm2108, %v1960
        %2208 = vst.msk [vmem:[#allocation2 + $0x318] sm:$0xff] %vm2108, %v1965
        %2209 = vst.msk [vmem:[#allocation2 + $0x320] sm:$0xff] %vm2108, %v1970
        %2210 = vst.msk [vmem:[#allocation2 + $0x328] sm:$0xff] %vm2108, %v1975
        %2211 = vst.msk [vmem:[#allocation2 + $0x330] sm:$0xff] %vm2108, %v1980
        %2212 = vst.msk [vmem:[#allocation2 + $0x338] sm:$0xff] %vm2108, %v1985
        %2213 = vst.msk [vmem:[#allocation2 + $0x340] sm:$0xff] %vm2108, %v1990
        %2214 = vst.msk [vmem:[#allocation2 + $0x348] sm:$0xff] %vm2108, %v1995
        %2215 = vst.msk [vmem:[#allocation2 + $0x350] sm:$0xff] %vm2108, %v2000
        %2216 = vst.msk [vmem:[#allocation2 + $0x358] sm:$0xff] %vm2108, %v2005
        %2217 = vst.msk [vmem:[#allocation2 + $0x360] sm:$0xff] %vm2108, %v2010
        %2218 = vst.msk [vmem:[#allocation2 + $0x368] sm:$0xff] %vm2108, %v2015
        %2219 = vst.msk [vmem:[#allocation2 + $0x370] sm:$0xff] %vm2108, %v2020
        %2220 = vst.msk [vmem:[#allocation2 + $0x378] sm:$0xff] %vm2108, %v2025
        %2221 = vst.msk [vmem:[#allocation2 + $0x380] sm:$0xff] %vm2108, %v2030
        %2222 = vst.msk [vmem:[#allocation2 + $0x388] sm:$0xff] %vm2108, %v2035
        %2223 = vst.msk [vmem:[#allocation2 + $0x390] sm:$0xff] %vm2108, %v2040
        %2224 = vst.msk [vmem:[#allocation2 + $0x398] sm:$0xff] %vm2108, %v2045
        %2225 = vst.msk [vmem:[#allocation2 + $0x3a0] sm:$0xff] %vm2108, %v2050
        %2226 = vst.msk [vmem:[#allocation2 + $0x3a8] sm:$0xff] %vm2108, %v2055
        %2227 = vst.msk [vmem:[#allocation2 + $0x3b0] sm:$0xff] %vm2108, %v2060
        %2228 = vst.msk [vmem:[#allocation2 + $0x3b8] sm:$0xff] %vm2108, %v2065
        %2229 = vst.msk [vmem:[#allocation2 + $0x3c0] sm:$0xff] %vm2108, %v2070
        %2230 = vst.msk [vmem:[#allocation2 + $0x3c8] sm:$0xff] %vm2108, %v2075
        %2231 = vst.msk [vmem:[#allocation2 + $0x3d0] sm:$0xff] %vm2108, %v2080
        %2232 = vst.msk [vmem:[#allocation2 + $0x3d8] sm:$0xff] %vm2108, %v2085
        %2233 = vst.msk [vmem:[#allocation2 + $0x3e0] sm:$0xff] %vm2108, %v2090
        %2234 = vst.msk [vmem:[#allocation2 + $0x3e8] sm:$0xff] %vm2108, %v2095
        %2235 = vst.msk [vmem:[#allocation2 + $0x3f0] sm:$0xff] %vm2108, %v2100
        %2236 = vst.msk [vmem:[#allocation2 + $0x3f8] sm:$0xff] %vm2108, %v2105
        %v2237 = vld [vmem:[%s3] sm:$0xff]
        %v2238 = vld [vmem:[%s3 + $0x8] sm:$0xff]
        %v2239 = vld [vmem:[%s3 + $0x10] sm:$0xff]
        %v2240 = vld [vmem:[%s3 + $0x18] sm:$0xff]
        %v2241 = vld [vmem:[%s872] sm:$0xff]
        %v2242 = vld [vmem:[%s872 + $0x8] sm:$0xff]
        %v2243 = vld [vmem:[%s872 + $0x10] sm:$0xff]
        %v2244 = vld [vmem:[%s872 + $0x18] sm:$0xff]
        %v2245 = vld [vmem:[%s872 + $0x20] sm:$0xff]
        %v2246 = vld [vmem:[%s872 + $0x28] sm:$0xff]
        %v2247 = vld [vmem:[%s872 + $0x30] sm:$0xff]
        %v2248 = vld [vmem:[%s872 + $0x38] sm:$0xff]
        %v2249 = vld [vmem:[%s872 + $0x40] sm:$0xff]
        %v2250 = vld [vmem:[%s872 + $0x48] sm:$0xff]
        %v2251 = vld [vmem:[%s872 + $0x50] sm:$0xff]
        %v2252 = vld [vmem:[%s872 + $0x58] sm:$0xff]
        %v2253 = vld [vmem:[%s872 + $0x60] sm:$0xff]
        %v2254 = vld [vmem:[%s872 + $0x68] sm:$0xff]
        %v2255 = vld [vmem:[%s872 + $0x70] sm:$0xff]
        %v2256 = vld [vmem:[%s872 + $0x78] sm:$0xff]
        %v2257 = vld [vmem:[#allocation2] sm:$0xff]
        %v2258 = vld [vmem:[#allocation2 + $0x8] sm:$0xff]
        %v2259 = vld [vmem:[#allocation2 + $0x10] sm:$0xff]
        %v2260 = vld [vmem:[#allocation2 + $0x18] sm:$0xff]
        %v2261 = vld [vmem:[#allocation2 + $0x20] sm:$0xff]
        %v2262 = vld [vmem:[#allocation2 + $0x28] sm:$0xff]
        %v2263 = vld [vmem:[#allocation2 + $0x30] sm:$0xff]
        %v2264 = vld [vmem:[#allocation2 + $0x38] sm:$0xff]
        %v2265 = vld [vmem:[#allocation2 + $0x40] sm:$0xff]
        %v2266 = vld [vmem:[#allocation2 + $0x48] sm:$0xff]
        %v2267 = vld [vmem:[#allocation2 + $0x50] sm:$0xff]
        %v2268 = vld [vmem:[#allocation2 + $0x58] sm:$0xff]
        %v2269 = vld [vmem:[#allocation2 + $0x60] sm:$0xff]
        %v2270 = vld [vmem:[#allocation2 + $0x68] sm:$0xff]
        %v2271 = vld [vmem:[#allocation2 + $0x70] sm:$0xff]
        %v2272 = vld [vmem:[#allocation2 + $0x78] sm:$0xff]
        %v2274 = vsel %vm2108, %v2241, 0
        %v2277 = vsel %vm2108, %v2242, 0
        %v2280 = vsel %vm2108, %v2243, 0
        %v2283 = vsel %vm2108, %v2244, 0
        %v2286 = vsel %vm2108, %v2245, 0
        %v2289 = vsel %vm2108, %v2246, 0
        %v2292 = vsel %vm2108, %v2247, 0
        %v2295 = vsel %vm2108, %v2248, 0
        %v2298 = vsel %vm2108, %v2249, 0
        %v2301 = vsel %vm2108, %v2250, 0
        %v2304 = vsel %vm2108, %v2251, 0
        %v2307 = vsel %vm2108, %v2252, 0
        %v2310 = vsel %vm2108, %v2253, 0
        %v2313 = vsel %vm2108, %v2254, 0
        %v2316 = vsel %vm2108, %v2255, 0
        %v2319 = vsel %vm2108, %v2256, 0
        %2321 = vmatprep.subr.mxu0 0.0
        %2322 = vmatpush1.msra.mxu0 %v2237
        %2323 = vmatprep.subr.mxu0 0.0
        %2324 = vmatpush1.msra.mxu0 %v2238
        %2325 = vmatprep.subr.mxu0 0.0
        %2326 = vmatpush1.msra.mxu0 %v2239
        %2327 = vmatprep.subr.mxu0 0.0
        %2328 = vmatpush1.msra.mxu0 %v2240
        %2329 = vmatprep.subr.mxu0 0.0
        %2330 = vmatpush1.msra.mxu0 0.0
        %2331 = vmatprep.subr.mxu0 0.0
        %2332 = vmatpush1.msra.mxu0 0.0
        %2333 = vmatprep.subr.mxu0 0.0
        %2334 = vmatpush1.msra.mxu0 0.0
        %2335 = vmatprep.subr.mxu0 0.0
        %2336 = vmatpush1.msra.mxu0 0.0
        %2337 = vmatprep.subr.mxu0 0.0
        %2338 = vmatpush1.msra.mxu0 0.0
        %2339 = vmatprep.subr.mxu0 0.0
        %2340 = vmatpush1.msra.mxu0 0.0
        %2341 = vmatprep.subr.mxu0 0.0
        %2342 = vmatpush1.msra.mxu0 0.0
        %2343 = vmatprep.subr.mxu0 0.0
        %2344 = vmatpush1.msra.mxu0 0.0
        %2345 = vmatprep.subr.mxu0 0.0
        %2346 = vmatpush1.msra.mxu0 0.0
        %2347 = vmatprep.subr.mxu0 0.0
        %2348 = vmatpush1.msra.mxu0 0.0
        %2349 = vmatprep.subr.mxu0 0.0
        %2350 = vmatpush1.msra.mxu0 0.0
        %2351 = vmatprep.subr.mxu0 0.0
        %2352 = vmatpush1.msra.mxu0 0.0
        %2353 = vmatprep.subr.mxu0 0.0
        %2354 = vmatpush1.msra.mxu0 0.0
        %2355 = vmatprep.subr.mxu0 0.0
        %2356 = vmatpush1.msra.mxu0 0.0
        %2357 = vmatprep.subr.mxu0 0.0
        %2358 = vmatpush1.msra.mxu0 0.0
        %2359 = vmatprep.subr.mxu0 0.0
        %2360 = vmatpush1.msra.mxu0 0.0
        %2361 = vmatprep.subr.mxu0 0.0
        %2362 = vmatpush1.msra.mxu0 0.0
        %2363 = vmatprep.subr.mxu0 0.0
        %2364 = vmatpush1.msra.mxu0 0.0
        %2365 = vmatprep.subr.mxu0 0.0
        %2366 = vmatpush1.msra.mxu0 0.0
        %2367 = vmatprep.subr.mxu0 0.0
        %2368 = vmatpush1.msra.mxu0 0.0
        %2369 = vmatprep.subr.mxu0 0.0
        %2370 = vmatpush1.msra.mxu0 0.0
        %2371 = vmatprep.subr.mxu0 0.0
        %2372 = vmatpush1.msra.mxu0 0.0
        %2373 = vmatprep.subr.mxu0 0.0
        %2374 = vmatpush1.msra.mxu0 0.0
        %2375 = vmatprep.subr.mxu0 0.0
        %2376 = vmatpush1.msra.mxu0 0.0
        %2377 = vmatprep.subr.mxu0 0.0
        %2378 = vmatpush1.msra.mxu0 0.0
        %2379 = vmatprep.subr.mxu0 0.0
        %2380 = vmatpush1.msra.mxu0 0.0
        %2381 = vmatprep.subr.mxu0 0.0
        %2382 = vmatpush1.msra.mxu0 0.0
        %2383 = vmatprep.subr.mxu0 0.0
        %2384 = vmatpush1.msra.mxu0 0.0
        %2385 = vmatprep.mubr.f32.mxu0 0.0
        %2386 = vmatmul.mubr.f32.gmra.mrb[0].mxu0 %v2274
        %v2387 = vpop.f32.mrb[0].mxu0
        %v2388 = vadd.f32 %v2257, %v2387
        %v2389 = vpop.f32.mrb[0].mxu0
        %2390 = vmatprep.mubr.f32.mxu0 0.0
        %2391 = vmatmul.mubr.f32.gmra.mrb[0].mxu0 %v2277
        %v2392 = vpop.f32.mrb[0].mxu0
        %v2393 = vadd.f32 %v2258, %v2392
        %v2394 = vpop.f32.mrb[0].mxu0
        %2395 = vmatprep.mubr.f32.mxu0 0.0
        %2396 = vmatmul.mubr.f32.gmra.mrb[0].mxu0 %v2280
        %v2397 = vpop.f32.mrb[0].mxu0
        %v2398 = vadd.f32 %v2259, %v2397
        %v2399 = vpop.f32.mrb[0].mxu0
        %2400 = vmatprep.mubr.f32.mxu0 0.0
        %2401 = vmatmul.mubr.f32.gmra.mrb[0].mxu0 %v2283
        %v2402 = vpop.f32.mrb[0].mxu0
        %v2403 = vadd.f32 %v2260, %v2402
        %v2404 = vpop.f32.mrb[0].mxu0
        %2405 = vmatprep.mubr.f32.mxu0 0.0
        %2406 = vmatmul.mubr.f32.gmra.mrb[0].mxu0 %v2286
        %v2407 = vpop.f32.mrb[0].mxu0
        %v2408 = vadd.f32 %v2261, %v2407
        %v2409 = vpop.f32.mrb[0].mxu0
        %2410 = vmatprep.mubr.f32.mxu0 0.0
        %2411 = vmatmul.mubr.f32.gmra.mrb[0].mxu0 %v2289
        %v2412 = vpop.f32.mrb[0].mxu0
        %v2413 = vadd.f32 %v2262, %v2412
        %v2414 = vpop.f32.mrb[0].mxu0
        %2415 = vmatprep.mubr.f32.mxu0 0.0
        %2416 = vmatmul.mubr.f32.gmra.mrb[0].mxu0 %v2292
        %v2417 = vpop.f32.mrb[0].mxu0
        %v2418 = vadd.f32 %v2263, %v2417
        %v2419 = vpop.f32.mrb[0].mxu0
        %2420 = vmatprep.mubr.f32.mxu0 0.0
        %2421 = vmatmul.mubr.f32.gmra.mrb[0].mxu0 %v2295
        %v2422 = vpop.f32.mrb[0].mxu0
        %v2423 = vadd.f32 %v2264, %v2422
        %v2424 = vpop.f32.mrb[0].mxu0
        %2425 = vmatprep.mubr.f32.mxu0 0.0
        %2426 = vmatmul.mubr.f32.gmra.mrb[0].mxu0 %v2298
        %v2427 = vpop.f32.mrb[0].mxu0
        %v2428 = vadd.f32 %v2265, %v2427
        %v2429 = vpop.f32.mrb[0].mxu0
        %2430 = vmatprep.mubr.f32.mxu0 0.0
        %2431 = vmatmul.mubr.f32.gmra.mrb[0].mxu0 %v2301
        %v2432 = vpop.f32.mrb[0].mxu0
        %v2433 = vadd.f32 %v2266, %v2432
        %v2434 = vpop.f32.mrb[0].mxu0
        %2435 = vmatprep.mubr.f32.mxu0 0.0
        %2436 = vmatmul.mubr.f32.gmra.mrb[0].mxu0 %v2304
        %v2437 = vpop.f32.mrb[0].mxu0
        %v2438 = vadd.f32 %v2267, %v2437
        %v2439 = vpop.f32.mrb[0].mxu0
        %2440 = vmatprep.mubr.f32.mxu0 0.0
        %2441 = vmatmul.mubr.f32.gmra.mrb[0].mxu0 %v2307
        %v2442 = vpop.f32.mrb[0].mxu0
        %v2443 = vadd.f32 %v2268, %v2442
        %v2444 = vpop.f32.mrb[0].mxu0
        %2445 = vmatprep.mubr.f32.mxu0 0.0
        %2446 = vmatmul.mubr.f32.gmra.mrb[0].mxu0 %v2310
        %v2447 = vpop.f32.mrb[0].mxu0
        %v2448 = vadd.f32 %v2269, %v2447
        %v2449 = vpop.f32.mrb[0].mxu0
        %2450 = vmatprep.mubr.f32.mxu0 0.0
        %2451 = vmatmul.mubr.f32.gmra.mrb[0].mxu0 %v2313
        %v2452 = vpop.f32.mrb[0].mxu0
        %v2453 = vadd.f32 %v2270, %v2452
        %v2454 = vpop.f32.mrb[0].mxu0
        %2455 = vmatprep.mubr.f32.mxu0 0.0
        %2456 = vmatmul.mubr.f32.gmra.mrb[0].mxu0 %v2316
        %v2457 = vpop.f32.mrb[0].mxu0
        %v2458 = vadd.f32 %v2271, %v2457
        %v2459 = vpop.f32.mrb[0].mxu0
        %2460 = vmatprep.mubr.f32.mxu0 0.0
        %2461 = vmatmul.mubr.f32.gmra.mrb[0].mxu0 %v2319
        %v2462 = vpop.f32.mrb[0].mxu0
        %v2463 = vadd.f32 %v2272, %v2462
        %v2464 = vpop.f32.mrb[0].mxu0
        %2465 = vdwg.mxu0
        %v2466 = vtanh.pop %v2388
        %v2467 = vtanh.pop %v2393
        %v2468 = vtanh.pop %v2398
        %v2469 = vtanh.pop %v2403
        %v2470 = vtanh.pop %v2408
        %v2471 = vtanh.pop %v2413
        %v2472 = vtanh.pop %v2418
        %v2473 = vtanh.pop %v2423
        %v2474 = vtanh.pop %v2428
        %v2475 = vtanh.pop %v2433
        %v2476 = vtanh.pop %v2438
        %v2477 = vtanh.pop %v2443
        %v2478 = vtanh.pop %v2448
        %v2479 = vtanh.pop %v2453
        %v2480 = vtanh.pop %v2458
        %v2481 = vtanh.pop %v2463
        %2482 = vst.msk [vmem:[#allocation3] sm:$0xff] %vm2108, %v2466
        %2483 = vst.msk [vmem:[#allocation3 + $0x8] sm:$0xff] %vm2108, %v2467
        %2484 = vst.msk [vmem:[#allocation3 + $0x10] sm:$0xff] %vm2108, %v2468
        %2485 = vst.msk [vmem:[#allocation3 + $0x18] sm:$0xff] %vm2108, %v2469
        %2486 = vst.msk [vmem:[#allocation3 + $0x20] sm:$0xff] %vm2108, %v2470
        %2487 = vst.msk [vmem:[#allocation3 + $0x28] sm:$0xff] %vm2108, %v2471
        %2488 = vst.msk [vmem:[#allocation3 + $0x30] sm:$0xff] %vm2108, %v2472
        %2489 = vst.msk [vmem:[#allocation3 + $0x38] sm:$0xff] %vm2108, %v2473
        %2490 = vst.msk [vmem:[#allocation3 + $0x40] sm:$0xff] %vm2108, %v2474
        %2491 = vst.msk [vmem:[#allocation3 + $0x48] sm:$0xff] %vm2108, %v2475
        %2492 = vst.msk [vmem:[#allocation3 + $0x50] sm:$0xff] %vm2108, %v2476
        %2493 = vst.msk [vmem:[#allocation3 + $0x58] sm:$0xff] %vm2108, %v2477
        %2494 = vst.msk [vmem:[#allocation3 + $0x60] sm:$0xff] %vm2108, %v2478
        %2495 = vst.msk [vmem:[#allocation3 + $0x68] sm:$0xff] %vm2108, %v2479
        %2496 = vst.msk [vmem:[#allocation3 + $0x70] sm:$0xff] %vm2108, %v2480
        %2497 = vst.msk [vmem:[#allocation3 + $0x78] sm:$0xff] %vm2108, %v2481
        %s2498 = scalar_lea.vmem [#allocation2], 128
        %v2499 = vld [vmem:[%s2498] sm:$0xff]
        %v2500 = vld [vmem:[%s2498 + $0x8] sm:$0xff]
        %v2501 = vld [vmem:[%s2498 + $0x10] sm:$0xff]
        %v2502 = vld [vmem:[%s2498 + $0x18] sm:$0xff]
        %v2503 = vld [vmem:[%s2498 + $0x20] sm:$0xff]
        %v2504 = vld [vmem:[%s2498 + $0x28] sm:$0xff]
        %v2505 = vld [vmem:[%s2498 + $0x30] sm:$0xff]
        %v2506 = vld [vmem:[%s2498 + $0x38] sm:$0xff]
        %v2507 = vld [vmem:[%s2498 + $0x40] sm:$0xff]
        %v2508 = vld [vmem:[%s2498 + $0x48] sm:$0xff]
        %v2509 = vld [vmem:[%s2498 + $0x50] sm:$0xff]
        %v2510 = vld [vmem:[%s2498 + $0x58] sm:$0xff]
        %v2511 = vld [vmem:[%s2498 + $0x60] sm:$0xff]
        %v2512 = vld [vmem:[%s2498 + $0x68] sm:$0xff]
        %v2513 = vld [vmem:[%s2498 + $0x70] sm:$0xff]
        %v2514 = vld [vmem:[%s2498 + $0x78] sm:$0xff]
        %v2516 = vsel %vm2108, %v2466, 0
        %v2519 = vsel %vm2108, %v2467, 0
        %v2522 = vsel %vm2108, %v2468, 0
        %v2525 = vsel %vm2108, %v2469, 0
        %v2528 = vsel %vm2108, %v2470, 0
        %v2531 = vsel %vm2108, %v2471, 0
        %v2534 = vsel %vm2108, %v2472, 0
        %v2537 = vsel %vm2108, %v2473, 0
        %v2540 = vsel %vm2108, %v2474, 0
        %v2543 = vsel %vm2108, %v2475, 0
        %v2546 = vsel %vm2108, %v2476, 0
        %v2549 = vsel %vm2108, %v2477, 0
        %v2552 = vsel %vm2108, %v2478, 0
        %v2555 = vsel %vm2108, %v2479, 0
        %v2558 = vsel %vm2108, %v2480, 0
        %v2561 = vsel %vm2108, %v2481, 0
        %2563 = vmatprep.subr.mxu0 0.0
        %2564 = vmatpush1.msra.mxu0 %v2237
        %2565 = vmatprep.subr.mxu0 0.0
        %2566 = vmatpush1.msra.mxu0 %v2238
        %2567 = vmatprep.subr.mxu0 0.0
        %2568 = vmatpush1.msra.mxu0 %v2239
        %2569 = vmatprep.subr.mxu0 0.0
        %2570 = vmatpush1.msra.mxu0 %v2240
        %2571 = vmatprep.subr.mxu0 0.0
        %2572 = vmatpush1.msra.mxu0 0.0
        %2573 = vmatprep.subr.mxu0 0.0
        %2574 = vmatpush1.msra.mxu0 0.0
        %2575 = vmatprep.subr.mxu0 0.0
        %2576 = vmatpush1.msra.mxu0 0.0
        %2577 = vmatprep.subr.mxu0 0.0
        %2578 = vmatpush1.msra.mxu0 0.0
        %2579 = vmatprep.subr.mxu0 0.0
        %2580 = vmatpush1.msra.mxu0 0.0
        %2581 = vmatprep.subr.mxu0 0.0
        %2582 = vmatpush1.msra.mxu0 0.0
        %2583 = vmatprep.subr.mxu0 0.0
        %2584 = vmatpush1.msra.mxu0 0.0
        %2585 = vmatprep.subr.mxu0 0.0
        %2586 = vmatpush1.msra.mxu0 0.0
        %2587 = vmatprep.subr.mxu0 0.0
        %2588 = vmatpush1.msra.mxu0 0.0
        %2589 = vmatprep.subr.mxu0 0.0
        %2590 = vmatpush1.msra.mxu0 0.0
        %2591 = vmatprep.subr.mxu0 0.0
        %2592 = vmatpush1.msra.mxu0 0.0
        %2593 = vmatprep.subr.mxu0 0.0
        %2594 = vmatpush1.msra.mxu0 0.0
        %2595 = vmatprep.subr.mxu0 0.0
        %2596 = vmatpush1.msra.mxu0 0.0
        %2597 = vmatprep.subr.mxu0 0.0
        %2598 = vmatpush1.msra.mxu0 0.0
        %2599 = vmatprep.subr.mxu0 0.0
        %2600 = vmatpush1.msra.mxu0 0.0
        %2601 = vmatprep.subr.mxu0 0.0
        %2602 = vmatpush1.msra.mxu0 0.0
        %2603 = vmatprep.subr.mxu0 0.0
        %2604 = vmatpush1.msra.mxu0 0.0
        %2605 = vmatprep.subr.mxu0 0.0
        %2606 = vmatpush1.msra.mxu0 0.0
        %2607 = vmatprep.subr.mxu0 0.0
        %2608 = vmatpush1.msra.mxu0 0.0
        %2609 = vmatprep.subr.mxu0 0.0
        %2610 = vmatpush1.msra.mxu0 0.0
        %2611 = vmatprep.subr.mxu0 0.0
        %2612 = vmatpush1.msra.mxu0 0.0
        %2613 = vmatprep.subr.mxu0 0.0
        %2614 = vmatpush1.msra.mxu0 0.0
        %2615 = vmatprep.subr.mxu0 0.0
        %2616 = vmatpush1.msra.mxu0 0.0
        %2617 = vmatprep.subr.mxu0 0.0
        %2618 = vmatpush1.msra.mxu0 0.0
        %2619 = vmatprep.subr.mxu0 0.0
        %2620 = vmatpush1.msra.mxu0 0.0
        %2621 = vmatprep.subr.mxu0 0.0
        %2622 = vmatpush1.msra.mxu0 0.0
        %2623 = vmatprep.subr.mxu0 0.0
        %2624 = vmatpush1.msra.mxu0 0.0
        %2625 = vmatprep.subr.mxu0 0.0
        %2626 = vmatpush1.msra.mxu0 0.0
        %2627 = vmatprep.mubr.f32.mxu0 0.0
        %2628 = vmatmul.mubr.f32.gmra.mrb[0].mxu0 %v2516
        %v2629 = vpop.f32.mrb[0].mxu0
        %v2630 = vadd.f32 %v2499, %v2629
        %v2631 = vpop.f32.mrb[0].mxu0
        %2632 = vmatprep.mubr.f32.mxu0 0.0
        %2633 = vmatmul.mubr.f32.gmra.mrb[0].mxu0 %v2519
        %v2634 = vpop.f32.mrb[0].mxu0
        %v2635 = vadd.f32 %v2500, %v2634
        %v2636 = vpop.f32.mrb[0].mxu0
        %2637 = vmatprep.mubr.f32.mxu0 0.0
        %2638 = vmatmul.mubr.f32.gmra.mrb[0].mxu0 %v2522
        %v2639 = vpop.f32.mrb[0].mxu0
        %v2640 = vadd.f32 %v2501, %v2639
        %v2641 = vpop.f32.mrb[0].mxu0
        %2642 = vmatprep.mubr.f32.mxu0 0.0
        %2643 = vmatmul.mubr.f32.gmra.mrb[0].mxu0 %v2525
        %v2644 = vpop.f32.mrb[0].mxu0
        %v2645 = vadd.f32 %v2502, %v2644
        %v2646 = vpop.f32.mrb[0].mxu0
        %2647 = vmatprep.mubr.f32.mxu0 0.0
        %2648 = vmatmul.mubr.f32.gmra.mrb[0].mxu0 %v2528
        %v2649 = vpop.f32.mrb[0].mxu0
        %v2650 = vadd.f32 %v2503, %v2649
        %v2651 = vpop.f32.mrb[0].mxu0
        %2652 = vmatprep.mubr.f32.mxu0 0.0
        %2653 = vmatmul.mubr.f32.gmra.mrb[0].mxu0 %v2531
        %v2654 = vpop.f32.mrb[0].mxu0
        %v2655 = vadd.f32 %v2504, %v2654
        %v2656 = vpop.f32.mrb[0].mxu0
        %2657 = vmatprep.mubr.f32.mxu0 0.0
        %2658 = vmatmul.mubr.f32.gmra.mrb[0].mxu0 %v2534
        %v2659 = vpop.f32.mrb[0].mxu0
        %v2660 = vadd.f32 %v2505, %v2659
        %v2661 = vpop.f32.mrb[0].mxu0
        %2662 = vmatprep.mubr.f32.mxu0 0.0
        %2663 = vmatmul.mubr.f32.gmra.mrb[0].mxu0 %v2537
        %v2664 = vpop.f32.mrb[0].mxu0
        %v2665 = vadd.f32 %v2506, %v2664
        %v2666 = vpop.f32.mrb[0].mxu0
        %2667 = vmatprep.mubr.f32.mxu0 0.0
        %2668 = vmatmul.mubr.f32.gmra.mrb[0].mxu0 %v2540
        %v2669 = vpop.f32.mrb[0].mxu0
        %v2670 = vadd.f32 %v2507, %v2669
        %v2671 = vpop.f32.mrb[0].mxu0
        %2672 = vmatprep.mubr.f32.mxu0 0.0
        %2673 = vmatmul.mubr.f32.gmra.mrb[0].mxu0 %v2543
        %v2674 = vpop.f32.mrb[0].mxu0
        %v2675 = vadd.f32 %v2508, %v2674
        %v2676 = vpop.f32.mrb[0].mxu0
        %2677 = vmatprep.mubr.f32.mxu0 0.0
        %2678 = vmatmul.mubr.f32.gmra.mrb[0].mxu0 %v2546
        %v2679 = vpop.f32.mrb[0].mxu0
        %v2680 = vadd.f32 %v2509, %v2679
        %v2681 = vpop.f32.mrb[0].mxu0
        %2682 = vmatprep.mubr.f32.mxu0 0.0
        %2683 = vmatmul.mubr.f32.gmra.mrb[0].mxu0 %v2549
        %v2684 = vpop.f32.mrb[0].mxu0
        %v2685 = vadd.f32 %v2510, %v2684
        %v2686 = vpop.f32.mrb[0].mxu0
        %2687 = vmatprep.mubr.f32.mxu0 0.0
        %2688 = vmatmul.mubr.f32.gmra.mrb[0].mxu0 %v2552
        %v2689 = vpop.f32.mrb[0].mxu0
        %v2690 = vadd.f32 %v2511, %v2689
        %v2691 = vpop.f32.mrb[0].mxu0
        %2692 = vmatprep.mubr.f32.mxu0 0.0
        %2693 = vmatmul.mubr.f32.gmra.mrb[0].mxu0 %v2555
        %v2694 = vpop.f32.mrb[0].mxu0
        %v2695 = vadd.f32 %v2512, %v2694
        %v2696 = vpop.f32.mrb[0].mxu0
        %2697 = vmatprep.mubr.f32.mxu0 0.0
        %2698 = vmatmul.mubr.f32.gmra.mrb[0].mxu0 %v2558
        %v2699 = vpop.f32.mrb[0].mxu0
        %v2700 = vadd.f32 %v2513, %v2699
        %v2701 = vpop.f32.mrb[0].mxu0
        %2702 = vmatprep.mubr.f32.mxu0 0.0
        %2703 = vmatmul.mubr.f32.gmra.mrb[0].mxu0 %v2561
        %v2704 = vpop.f32.mrb[0].mxu0
        %v2705 = vadd.f32 %v2514, %v2704
        %v2706 = vpop.f32.mrb[0].mxu0
        %2707 = vdwg.mxu0
        %v2708 = vtanh.pop %v2630
        %v2709 = vtanh.pop %v2635
        %v2710 = vtanh.pop %v2640
        %v2711 = vtanh.pop %v2645
        %v2712 = vtanh.pop %v2650
        %v2713 = vtanh.pop %v2655
        %v2714 = vtanh.pop %v2660
        %v2715 = vtanh.pop %v2665
        %v2716 = vtanh.pop %v2670
        %v2717 = vtanh.pop %v2675
        %v2718 = vtanh.pop %v2680
        %v2719 = vtanh.pop %v2685
        %v2720 = vtanh.pop %v2690
        %v2721 = vtanh.pop %v2695
        %v2722 = vtanh.pop %v2700
        %v2723 = vtanh.pop %v2705
        %s2724 = scalar_lea.vmem [#allocation3], 128
        %2725 = vst.msk [vmem:[%s2724] sm:$0xff] %vm2108, %v2708
        %2726 = vst.msk [vmem:[%s2724 + $0x8] sm:$0xff] %vm2108, %v2709
        %2727 = vst.msk [vmem:[%s2724 + $0x10] sm:$0xff] %vm2108, %v2710
        %2728 = vst.msk [vmem:[%s2724 + $0x18] sm:$0xff] %vm2108, %v2711
        %2729 = vst.msk [vmem:[%s2724 + $0x20] sm:$0xff] %vm2108, %v2712
        %2730 = vst.msk [vmem:[%s2724 + $0x28] sm:$0xff] %vm2108, %v2713
        %2731 = vst.msk [vmem:[%s2724 + $0x30] sm:$0xff] %vm2108, %v2714
        %2732 = vst.msk [vmem:[%s2724 + $0x38] sm:$0xff] %vm2108, %v2715
        %2733 = vst.msk [vmem:[%s2724 + $0x40] sm:$0xff] %vm2108, %v2716
        %2734 = vst.msk [vmem:[%s2724 + $0x48] sm:$0xff] %vm2108, %v2717
        %2735 = vst.msk [vmem:[%s2724 + $0x50] sm:$0xff] %vm2108, %v2718
        %2736 = vst.msk [vmem:[%s2724 + $0x58] sm:$0xff] %vm2108, %v2719
        %2737 = vst.msk [vmem:[%s2724 + $0x60] sm:$0xff] %vm2108, %v2720
        %2738 = vst.msk [vmem:[%s2724 + $0x68] sm:$0xff] %vm2108, %v2721
        %2739 = vst.msk [vmem:[%s2724 + $0x70] sm:$0xff] %vm2108, %v2722
        %2740 = vst.msk [vmem:[%s2724 + $0x78] sm:$0xff] %vm2108, %v2723
        %s2741 = scalar_lea.vmem [#allocation2], 256
        %v2742 = vld [vmem:[%s2741] sm:$0xff]
        %v2743 = vld [vmem:[%s2741 + $0x8] sm:$0xff]
        %v2744 = vld [vmem:[%s2741 + $0x10] sm:$0xff]
        %v2745 = vld [vmem:[%s2741 + $0x18] sm:$0xff]
        %v2746 = vld [vmem:[%s2741 + $0x20] sm:$0xff]
        %v2747 = vld [vmem:[%s2741 + $0x28] sm:$0xff]
        %v2748 = vld [vmem:[%s2741 + $0x30] sm:$0xff]
        %v2749 = vld [vmem:[%s2741 + $0x38] sm:$0xff]
        %v2750 = vld [vmem:[%s2741 + $0x40] sm:$0xff]
        %v2751 = vld [vmem:[%s2741 + $0x48] sm:$0xff]
        %v2752 = vld [vmem:[%s2741 + $0x50] sm:$0xff]
        %v2753 = vld [vmem:[%s2741 + $0x58] sm:$0xff]
        %v2754 = vld [vmem:[%s2741 + $0x60] sm:$0xff]
        %v2755 = vld [vmem:[%s2741 + $0x68] sm:$0xff]
        %v2756 = vld [vmem:[%s2741 + $0x70] sm:$0xff]
        %v2757 = vld [vmem:[%s2741 + $0x78] sm:$0xff]
        %v2759 = vsel %vm2108, %v2708, 0
        %v2762 = vsel %vm2108, %v2709, 0
        %v2765 = vsel %vm2108, %v2710, 0
        %v2768 = vsel %vm2108, %v2711, 0
        %v2771 = vsel %vm2108, %v2712, 0
        %v2774 = vsel %vm2108, %v2713, 0
        %v2777 = vsel %vm2108, %v2714, 0
        %v2780 = vsel %vm2108, %v2715, 0
        %v2783 = vsel %vm2108, %v2716, 0
        %v2786 = vsel %vm2108, %v2717, 0
        %v2789 = vsel %vm2108, %v2718, 0
        %v2792 = vsel %vm2108, %v2719, 0
        %v2795 = vsel %vm2108, %v2720, 0
        %v2798 = vsel %vm2108, %v2721, 0
        %v2801 = vsel %vm2108, %v2722, 0
        %v2804 = vsel %vm2108, %v2723, 0
        %2806 = vmatprep.subr.mxu0 0.0
        %2807 = vmatpush1.msra.mxu0 %v2237
        %2808 = vmatprep.subr.mxu0 0.0
        %2809 = vmatpush1.msra.mxu0 %v2238
        %2810 = vmatprep.subr.mxu0 0.0
        %2811 = vmatpush1.msra.mxu0 %v2239
        %2812 = vmatprep.subr.mxu0 0.0
        %2813 = vmatpush1.msra.mxu0 %v2240
        %2814 = vmatprep.subr.mxu0 0.0
        %2815 = vmatpush1.msra.mxu0 0.0
        %2816 = vmatprep.subr.mxu0 0.0
        %2817 = vmatpush1.msra.mxu0 0.0
        %2818 = vmatprep.subr.mxu0 0.0
        %2819 = vmatpush1.msra.mxu0 0.0
        %2820 = vmatprep.subr.mxu0 0.0
        %2821 = vmatpush1.msra.mxu0 0.0
        %2822 = vmatprep.subr.mxu0 0.0
        %2823 = vmatpush1.msra.mxu0 0.0
        %2824 = vmatprep.subr.mxu0 0.0
        %2825 = vmatpush1.msra.mxu0 0.0
        %2826 = vmatprep.subr.mxu0 0.0
        %2827 = vmatpush1.msra.mxu0 0.0
        %2828 = vmatprep.subr.mxu0 0.0
        %2829 = vmatpush1.msra.mxu0 0.0
        %2830 = vmatprep.subr.mxu0 0.0
        %2831 = vmatpush1.msra.mxu0 0.0
        %2832 = vmatprep.subr.mxu0 0.0
        %2833 = vmatpush1.msra.mxu0 0.0
        %2834 = vmatprep.subr.mxu0 0.0
        %2835 = vmatpush1.msra.mxu0 0.0
        %2836 = vmatprep.subr.mxu0 0.0
        %2837 = vmatpush1.msra.mxu0 0.0
        %2838 = vmatprep.subr.mxu0 0.0
        %2839 = vmatpush1.msra.mxu0 0.0
        %2840 = vmatprep.subr.mxu0 0.0
        %2841 = vmatpush1.msra.mxu0 0.0
        %2842 = vmatprep.subr.mxu0 0.0
        %2843 = vmatpush1.msra.mxu0 0.0
        %2844 = vmatprep.subr.mxu0 0.0
        %2845 = vmatpush1.msra.mxu0 0.0
        %2846 = vmatprep.subr.mxu0 0.0
        %2847 = vmatpush1.msra.mxu0 0.0
        %2848 = vmatprep.subr.mxu0 0.0
        %2849 = vmatpush1.msra.mxu0 0.0
        %2850 = vmatprep.subr.mxu0 0.0
        %2851 = vmatpush1.msra.mxu0 0.0
        %2852 = vmatprep.subr.mxu0 0.0
        %2853 = vmatpush1.msra.mxu0 0.0
        %2854 = vmatprep.subr.mxu0 0.0
        %2855 = vmatpush1.msra.mxu0 0.0
        %2856 = vmatprep.subr.mxu0 0.0
        %2857 = vmatpush1.msra.mxu0 0.0
        %2858 = vmatprep.subr.mxu0 0.0
        %2859 = vmatpush1.msra.mxu0 0.0
        %2860 = vmatprep.subr.mxu0 0.0
        %2861 = vmatpush1.msra.mxu0 0.0
        %2862 = vmatprep.subr.mxu0 0.0
        %2863 = vmatpush1.msra.mxu0 0.0
        %2864 = vmatprep.subr.mxu0 0.0
        %2865 = vmatpush1.msra.mxu0 0.0
        %2866 = vmatprep.subr.mxu0 0.0
        %2867 = vmatpush1.msra.mxu0 0.0
        %2868 = vmatprep.subr.mxu0 0.0
        %2869 = vmatpush1.msra.mxu0 0.0
        %2870 = vmatprep.mubr.f32.mxu0 0.0
        %2871 = vmatmul.mubr.f32.gmra.mrb[0].mxu0 %v2759
        %v2872 = vpop.f32.mrb[0].mxu0
        %v2873 = vadd.f32 %v2742, %v2872
        %v2874 = vpop.f32.mrb[0].mxu0
        %2875 = vmatprep.mubr.f32.mxu0 0.0
        %2876 = vmatmul.mubr.f32.gmra.mrb[0].mxu0 %v2762
        %v2877 = vpop.f32.mrb[0].mxu0
        %v2878 = vadd.f32 %v2743, %v2877
        %v2879 = vpop.f32.mrb[0].mxu0
        %2880 = vmatprep.mubr.f32.mxu0 0.0
        %2881 = vmatmul.mubr.f32.gmra.mrb[0].mxu0 %v2765
        %v2882 = vpop.f32.mrb[0].mxu0
        %v2883 = vadd.f32 %v2744, %v2882
        %v2884 = vpop.f32.mrb[0].mxu0
        %2885 = vmatprep.mubr.f32.mxu0 0.0
        %2886 = vmatmul.mubr.f32.gmra.mrb[0].mxu0 %v2768
        %v2887 = vpop.f32.mrb[0].mxu0
        %v2888 = vadd.f32 %v2745, %v2887
        %v2889 = vpop.f32.mrb[0].mxu0
        %2890 = vmatprep.mubr.f32.mxu0 0.0
        %2891 = vmatmul.mubr.f32.gmra.mrb[0].mxu0 %v2771
        %v2892 = vpop.f32.mrb[0].mxu0
        %v2893 = vadd.f32 %v2746, %v2892
        %v2894 = vpop.f32.mrb[0].mxu0
        %2895 = vmatprep.mubr.f32.mxu0 0.0
        %2896 = vmatmul.mubr.f32.gmra.mrb[0].mxu0 %v2774
        %v2897 = vpop.f32.mrb[0].mxu0
        %v2898 = vadd.f32 %v2747, %v2897
        %v2899 = vpop.f32.mrb[0].mxu0
        %2900 = vmatprep.mubr.f32.mxu0 0.0
        %2901 = vmatmul.mubr.f32.gmra.mrb[0].mxu0 %v2777
        %v2902 = vpop.f32.mrb[0].mxu0
        %v2903 = vadd.f32 %v2748, %v2902
        %v2904 = vpop.f32.mrb[0].mxu0
        %2905 = vmatprep.mubr.f32.mxu0 0.0
        %2906 = vmatmul.mubr.f32.gmra.mrb[0].mxu0 %v2780
        %v2907 = vpop.f32.mrb[0].mxu0
        %v2908 = vadd.f32 %v2749, %v2907
        %v2909 = vpop.f32.mrb[0].mxu0
        %2910 = vmatprep.mubr.f32.mxu0 0.0
        %2911 = vmatmul.mubr.f32.gmra.mrb[0].mxu0 %v2783
        %v2912 = vpop.f32.mrb[0].mxu0
        %v2913 = vadd.f32 %v2750, %v2912
        %v2914 = vpop.f32.mrb[0].mxu0
        %2915 = vmatprep.mubr.f32.mxu0 0.0
        %2916 = vmatmul.mubr.f32.gmra.mrb[0].mxu0 %v2786
        %v2917 = vpop.f32.mrb[0].mxu0
        %v2918 = vadd.f32 %v2751, %v2917
        %v2919 = vpop.f32.mrb[0].mxu0
        %2920 = vmatprep.mubr.f32.mxu0 0.0
        %2921 = vmatmul.mubr.f32.gmra.mrb[0].mxu0 %v2789
        %v2922 = vpop.f32.mrb[0].mxu0
        %v2923 = vadd.f32 %v2752, %v2922
        %v2924 = vpop.f32.mrb[0].mxu0
        %2925 = vmatprep.mubr.f32.mxu0 0.0
        %2926 = vmatmul.mubr.f32.gmra.mrb[0].mxu0 %v2792
        %v2927 = vpop.f32.mrb[0].mxu0
        %v2928 = vadd.f32 %v2753, %v2927
        %v2929 = vpop.f32.mrb[0].mxu0
        %2930 = vmatprep.mubr.f32.mxu0 0.0
        %2931 = vmatmul.mubr.f32.gmra.mrb[0].mxu0 %v2795
        %v2932 = vpop.f32.mrb[0].mxu0
        %v2933 = vadd.f32 %v2754, %v2932
        %v2934 = vpop.f32.mrb[0].mxu0
        %2935 = vmatprep.mubr.f32.mxu0 0.0
        %2936 = vmatmul.mubr.f32.gmra.mrb[0].mxu0 %v2798
        %v2937 = vpop.f32.mrb[0].mxu0
        %v2938 = vadd.f32 %v2755, %v2937
        %v2939 = vpop.f32.mrb[0].mxu0
        %2940 = vmatprep.mubr.f32.mxu0 0.0
        %2941 = vmatmul.mubr.f32.gmra.mrb[0].mxu0 %v2801
        %v2942 = vpop.f32.mrb[0].mxu0
        %v2943 = vadd.f32 %v2756, %v2942
        %v2944 = vpop.f32.mrb[0].mxu0
        %2945 = vmatprep.mubr.f32.mxu0 0.0
        %2946 = vmatmul.mubr.f32.gmra.mrb[0].mxu0 %v2804
        %v2947 = vpop.f32.mrb[0].mxu0
        %v2948 = vadd.f32 %v2757, %v2947
        %v2949 = vpop.f32.mrb[0].mxu0
        %2950 = vdwg.mxu0
        %v2951 = vtanh.pop %v2873
        %v2952 = vtanh.pop %v2878
        %v2953 = vtanh.pop %v2883
        %v2954 = vtanh.pop %v2888
        %v2955 = vtanh.pop %v2893
        %v2956 = vtanh.pop %v2898
        %v2957 = vtanh.pop %v2903
        %v2958 = vtanh.pop %v2908
        %v2959 = vtanh.pop %v2913
        %v2960 = vtanh.pop %v2918
        %v2961 = vtanh.pop %v2923
        %v2962 = vtanh.pop %v2928
        %v2963 = vtanh.pop %v2933
        %v2964 = vtanh.pop %v2938
        %v2965 = vtanh.pop %v2943
        %v2966 = vtanh.pop %v2948
        %s2967 = scalar_lea.vmem [#allocation3], 256
        %2968 = vst.msk [vmem:[%s2967] sm:$0xff] %vm2108, %v2951
        %2969 = vst.msk [vmem:[%s2967 + $0x8] sm:$0xff] %vm2108, %v2952
        %2970 = vst.msk [vmem:[%s2967 + $0x10] sm:$0xff] %vm2108, %v2953
        %2971 = vst.msk [vmem:[%s2967 + $0x18] sm:$0xff] %vm2108, %v2954
        %2972 = vst.msk [vmem:[%s2967 + $0x20] sm:$0xff] %vm2108, %v2955
        %2973 = vst.msk [vmem:[%s2967 + $0x28] sm:$0xff] %vm2108, %v2956
        %2974 = vst.msk [vmem:[%s2967 + $0x30] sm:$0xff] %vm2108, %v2957
        %2975 = vst.msk [vmem:[%s2967 + $0x38] sm:$0xff] %vm2108, %v2958
        %2976 = vst.msk [vmem:[%s2967 + $0x40] sm:$0xff] %vm2108, %v2959
        %2977 = vst.msk [vmem:[%s2967 + $0x48] sm:$0xff] %vm2108, %v2960
        %2978 = vst.msk [vmem:[%s2967 + $0x50] sm:$0xff] %vm2108, %v2961
        %2979 = vst.msk [vmem:[%s2967 + $0x58] sm:$0xff] %vm2108, %v2962
        %2980 = vst.msk [vmem:[%s2967 + $0x60] sm:$0xff] %vm2108, %v2963
        %2981 = vst.msk [vmem:[%s2967 + $0x68] sm:$0xff] %vm2108, %v2964
        %2982 = vst.msk [vmem:[%s2967 + $0x70] sm:$0xff] %vm2108, %v2965
        %2983 = vst.msk [vmem:[%s2967 + $0x78] sm:$0xff] %vm2108, %v2966
        %s2984 = scalar_lea.vmem [#allocation2], 384
        %v2985 = vld [vmem:[%s2984] sm:$0xff]
        %v2986 = vld [vmem:[%s2984 + $0x8] sm:$0xff]
        %v2987 = vld [vmem:[%s2984 + $0x10] sm:$0xff]
        %v2988 = vld [vmem:[%s2984 + $0x18] sm:$0xff]
        %v2989 = vld [vmem:[%s2984 + $0x20] sm:$0xff]
        %v2990 = vld [vmem:[%s2984 + $0x28] sm:$0xff]
        %v2991 = vld [vmem:[%s2984 + $0x30] sm:$0xff]
        %v2992 = vld [vmem:[%s2984 + $0x38] sm:$0xff]
        %v2993 = vld [vmem:[%s2984 + $0x40] sm:$0xff]
        %v2994 = vld [vmem:[%s2984 + $0x48] sm:$0xff]
        %v2995 = vld [vmem:[%s2984 + $0x50] sm:$0xff]
        %v2996 = vld [vmem:[%s2984 + $0x58] sm:$0xff]
        %v2997 = vld [vmem:[%s2984 + $0x60] sm:$0xff]
        %v2998 = vld [vmem:[%s2984 + $0x68] sm:$0xff]
        %v2999 = vld [vmem:[%s2984 + $0x70] sm:$0xff]
        %v3000 = vld [vmem:[%s2984 + $0x78] sm:$0xff]
        %v3002 = vsel %vm2108, %v2951, 0
        %v3005 = vsel %vm2108, %v2952, 0
        %v3008 = vsel %vm2108, %v2953, 0
        %v3011 = vsel %vm2108, %v2954, 0
        %v3014 = vsel %vm2108, %v2955, 0
        %v3017 = vsel %vm2108, %v2956, 0
        %v3020 = vsel %vm2108, %v2957, 0
        %v3023 = vsel %vm2108, %v2958, 0
        %v3026 = vsel %vm2108, %v2959, 0
        %v3029 = vsel %vm2108, %v2960, 0
        %v3032 = vsel %vm2108, %v2961, 0
        %v3035 = vsel %vm2108, %v2962, 0
        %v3038 = vsel %vm2108, %v2963, 0
        %v3041 = vsel %vm2108, %v2964, 0
        %v3044 = vsel %vm2108, %v2965, 0
        %v3047 = vsel %vm2108, %v2966, 0
        %3049 = vmatprep.subr.mxu0 0.0
        %3050 = vmatpush1.msra.mxu0 %v2237
        %3051 = vmatprep.subr.mxu0 0.0
        %3052 = vmatpush1.msra.mxu0 %v2238
        %3053 = vmatprep.subr.mxu0 0.0
        %3054 = vmatpush1.msra.mxu0 %v2239
        %3055 = vmatprep.subr.mxu0 0.0
        %3056 = vmatpush1.msra.mxu0 %v2240
        %3057 = vmatprep.subr.mxu0 0.0
        %3058 = vmatpush1.msra.mxu0 0.0
        %3059 = vmatprep.subr.mxu0 0.0
        %3060 = vmatpush1.msra.mxu0 0.0
        %3061 = vmatprep.subr.mxu0 0.0
        %3062 = vmatpush1.msra.mxu0 0.0
        %3063 = vmatprep.subr.mxu0 0.0
        %3064 = vmatpush1.msra.mxu0 0.0
        %3065 = vmatprep.subr.mxu0 0.0
        %3066 = vmatpush1.msra.mxu0 0.0
        %3067 = vmatprep.subr.mxu0 0.0
        %3068 = vmatpush1.msra.mxu0 0.0
        %3069 = vmatprep.subr.mxu0 0.0
        %3070 = vmatpush1.msra.mxu0 0.0
        %3071 = vmatprep.subr.mxu0 0.0
        %3072 = vmatpush1.msra.mxu0 0.0
        %3073 = vmatprep.subr.mxu0 0.0
        %3074 = vmatpush1.msra.mxu0 0.0
        %3075 = vmatprep.subr.mxu0 0.0
        %3076 = vmatpush1.msra.mxu0 0.0
        %3077 = vmatprep.subr.mxu0 0.0
        %3078 = vmatpush1.msra.mxu0 0.0
        %3079 = vmatprep.subr.mxu0 0.0
        %3080 = vmatpush1.msra.mxu0 0.0
        %3081 = vmatprep.subr.mxu0 0.0
        %3082 = vmatpush1.msra.mxu0 0.0
        %3083 = vmatprep.subr.mxu0 0.0
        %3084 = vmatpush1.msra.mxu0 0.0
        %3085 = vmatprep.subr.mxu0 0.0
        %3086 = vmatpush1.msra.mxu0 0.0
        %3087 = vmatprep.subr.mxu0 0.0
        %3088 = vmatpush1.msra.mxu0 0.0
        %3089 = vmatprep.subr.mxu0 0.0
        %3090 = vmatpush1.msra.mxu0 0.0
        %3091 = vmatprep.subr.mxu0 0.0
        %3092 = vmatpush1.msra.mxu0 0.0
        %3093 = vmatprep.subr.mxu0 0.0
        %3094 = vmatpush1.msra.mxu0 0.0
        %3095 = vmatprep.subr.mxu0 0.0
        %3096 = vmatpush1.msra.mxu0 0.0
        %3097 = vmatprep.subr.mxu0 0.0
        %3098 = vmatpush1.msra.mxu0 0.0
        %3099 = vmatprep.subr.mxu0 0.0
        %3100 = vmatpush1.msra.mxu0 0.0
        %3101 = vmatprep.subr.mxu0 0.0
        %3102 = vmatpush1.msra.mxu0 0.0
        %3103 = vmatprep.subr.mxu0 0.0
        %3104 = vmatpush1.msra.mxu0 0.0
        %3105 = vmatprep.subr.mxu0 0.0
        %3106 = vmatpush1.msra.mxu0 0.0
        %3107 = vmatprep.subr.mxu0 0.0
        %3108 = vmatpush1.msra.mxu0 0.0
        %3109 = vmatprep.subr.mxu0 0.0
        %3110 = vmatpush1.msra.mxu0 0.0
        %3111 = vmatprep.subr.mxu0 0.0
        %3112 = vmatpush1.msra.mxu0 0.0
        %3113 = vmatprep.mubr.f32.mxu0 0.0
        %3114 = vmatmul.mubr.f32.gmra.mrb[0].mxu0 %v3002
        %v3115 = vpop.f32.mrb[0].mxu0
        %v3116 = vadd.f32 %v2985, %v3115
        %v3117 = vpop.f32.mrb[0].mxu0
        %3118 = vmatprep.mubr.f32.mxu0 0.0
        %3119 = vmatmul.mubr.f32.gmra.mrb[0].mxu0 %v3005
        %v3120 = vpop.f32.mrb[0].mxu0
        %v3121 = vadd.f32 %v2986, %v3120
        %v3122 = vpop.f32.mrb[0].mxu0
        %3123 = vmatprep.mubr.f32.mxu0 0.0
        %3124 = vmatmul.mubr.f32.gmra.mrb[0].mxu0 %v3008
        %v3125 = vpop.f32.mrb[0].mxu0
        %v3126 = vadd.f32 %v2987, %v3125
        %v3127 = vpop.f32.mrb[0].mxu0
        %3128 = vmatprep.mubr.f32.mxu0 0.0
        %3129 = vmatmul.mubr.f32.gmra.mrb[0].mxu0 %v3011
        %v3130 = vpop.f32.mrb[0].mxu0
        %v3131 = vadd.f32 %v2988, %v3130
        %v3132 = vpop.f32.mrb[0].mxu0
        %3133 = vmatprep.mubr.f32.mxu0 0.0
        %3134 = vmatmul.mubr.f32.gmra.mrb[0].mxu0 %v3014
        %v3135 = vpop.f32.mrb[0].mxu0
        %v3136 = vadd.f32 %v2989, %v3135
        %v3137 = vpop.f32.mrb[0].mxu0
        %3138 = vmatprep.mubr.f32.mxu0 0.0
        %3139 = vmatmul.mubr.f32.gmra.mrb[0].mxu0 %v3017
        %v3140 = vpop.f32.mrb[0].mxu0
        %v3141 = vadd.f32 %v2990, %v3140
        %v3142 = vpop.f32.mrb[0].mxu0
        %3143 = vmatprep.mubr.f32.mxu0 0.0
        %3144 = vmatmul.mubr.f32.gmra.mrb[0].mxu0 %v3020
        %v3145 = vpop.f32.mrb[0].mxu0
        %v3146 = vadd.f32 %v2991, %v3145
        %v3147 = vpop.f32.mrb[0].mxu0
        %3148 = vmatprep.mubr.f32.mxu0 0.0
        %3149 = vmatmul.mubr.f32.gmra.mrb[0].mxu0 %v3023
        %v3150 = vpop.f32.mrb[0].mxu0
        %v3151 = vadd.f32 %v2992, %v3150
        %v3152 = vpop.f32.mrb[0].mxu0
        %3153 = vmatprep.mubr.f32.mxu0 0.0
        %3154 = vmatmul.mubr.f32.gmra.mrb[0].mxu0 %v3026
        %v3155 = vpop.f32.mrb[0].mxu0
        %v3156 = vadd.f32 %v2993, %v3155
        %v3157 = vpop.f32.mrb[0].mxu0
        %3158 = vmatprep.mubr.f32.mxu0 0.0
        %3159 = vmatmul.mubr.f32.gmra.mrb[0].mxu0 %v3029
        %v3160 = vpop.f32.mrb[0].mxu0
        %v3161 = vadd.f32 %v2994, %v3160
        %v3162 = vpop.f32.mrb[0].mxu0
        %3163 = vmatprep.mubr.f32.mxu0 0.0
        %3164 = vmatmul.mubr.f32.gmra.mrb[0].mxu0 %v3032
        %v3165 = vpop.f32.mrb[0].mxu0
        %v3166 = vadd.f32 %v2995, %v3165
        %v3167 = vpop.f32.mrb[0].mxu0
        %3168 = vmatprep.mubr.f32.mxu0 0.0
        %3169 = vmatmul.mubr.f32.gmra.mrb[0].mxu0 %v3035
        %v3170 = vpop.f32.mrb[0].mxu0
        %v3171 = vadd.f32 %v2996, %v3170
        %v3172 = vpop.f32.mrb[0].mxu0
        %3173 = vmatprep.mubr.f32.mxu0 0.0
        %3174 = vmatmul.mubr.f32.gmra.mrb[0].mxu0 %v3038
        %v3175 = vpop.f32.mrb[0].mxu0
        %v3176 = vadd.f32 %v2997, %v3175
        %v3177 = vpop.f32.mrb[0].mxu0
        %3178 = vmatprep.mubr.f32.mxu0 0.0
        %3179 = vmatmul.mubr.f32.gmra.mrb[0].mxu0 %v3041
        %v3180 = vpop.f32.mrb[0].mxu0
        %v3181 = vadd.f32 %v2998, %v3180
        %v3182 = vpop.f32.mrb[0].mxu0
        %3183 = vmatprep.mubr.f32.mxu0 0.0
        %3184 = vmatmul.mubr.f32.gmra.mrb[0].mxu0 %v3044
        %v3185 = vpop.f32.mrb[0].mxu0
        %v3186 = vadd.f32 %v2999, %v3185
        %v3187 = vpop.f32.mrb[0].mxu0
        %3188 = vmatprep.mubr.f32.mxu0 0.0
        %3189 = vmatmul.mubr.f32.gmra.mrb[0].mxu0 %v3047
        %v3190 = vpop.f32.mrb[0].mxu0
        %v3191 = vadd.f32 %v3000, %v3190
        %v3192 = vpop.f32.mrb[0].mxu0
        %3193 = vdwg.mxu0
        %v3194 = vtanh.pop %v3116
        %v3195 = vtanh.pop %v3121
        %v3196 = vtanh.pop %v3126
        %v3197 = vtanh.pop %v3131
        %v3198 = vtanh.pop %v3136
        %v3199 = vtanh.pop %v3141
        %v3200 = vtanh.pop %v3146
        %v3201 = vtanh.pop %v3151
        %v3202 = vtanh.pop %v3156
        %v3203 = vtanh.pop %v3161
        %v3204 = vtanh.pop %v3166
        %v3205 = vtanh.pop %v3171
        %v3206 = vtanh.pop %v3176
        %v3207 = vtanh.pop %v3181
        %v3208 = vtanh.pop %v3186
        %v3209 = vtanh.pop %v3191
        %s3210 = scalar_lea.vmem [#allocation3], 384
        %3211 = vst.msk [vmem:[%s3210] sm:$0xff] %vm2108, %v3194
        %3212 = vst.msk [vmem:[%s3210 + $0x8] sm:$0xff] %vm2108, %v3195
        %3213 = vst.msk [vmem:[%s3210 + $0x10] sm:$0xff] %vm2108, %v3196
        %3214 = vst.msk [vmem:[%s3210 + $0x18] sm:$0xff] %vm2108, %v3197
        %3215 = vst.msk [vmem:[%s3210 + $0x20] sm:$0xff] %vm2108, %v3198
        %3216 = vst.msk [vmem:[%s3210 + $0x28] sm:$0xff] %vm2108, %v3199
        %3217 = vst.msk [vmem:[%s3210 + $0x30] sm:$0xff] %vm2108, %v3200
        %3218 = vst.msk [vmem:[%s3210 + $0x38] sm:$0xff] %vm2108, %v3201
        %3219 = vst.msk [vmem:[%s3210 + $0x40] sm:$0xff] %vm2108, %v3202
        %3220 = vst.msk [vmem:[%s3210 + $0x48] sm:$0xff] %vm2108, %v3203
        %3221 = vst.msk [vmem:[%s3210 + $0x50] sm:$0xff] %vm2108, %v3204
        %3222 = vst.msk [vmem:[%s3210 + $0x58] sm:$0xff] %vm2108, %v3205
        %3223 = vst.msk [vmem:[%s3210 + $0x60] sm:$0xff] %vm2108, %v3206
        %3224 = vst.msk [vmem:[%s3210 + $0x68] sm:$0xff] %vm2108, %v3207
        %3225 = vst.msk [vmem:[%s3210 + $0x70] sm:$0xff] %vm2108, %v3208
        %3226 = vst.msk [vmem:[%s3210 + $0x78] sm:$0xff] %vm2108, %v3209
        %s3227 = scalar_lea.vmem [#allocation2], 512
        %v3228 = vld [vmem:[%s3227] sm:$0xff]
        %v3229 = vld [vmem:[%s3227 + $0x8] sm:$0xff]
        %v3230 = vld [vmem:[%s3227 + $0x10] sm:$0xff]
        %v3231 = vld [vmem:[%s3227 + $0x18] sm:$0xff]
        %v3232 = vld [vmem:[%s3227 + $0x20] sm:$0xff]
        %v3233 = vld [vmem:[%s3227 + $0x28] sm:$0xff]
        %v3234 = vld [vmem:[%s3227 + $0x30] sm:$0xff]
        %v3235 = vld [vmem:[%s3227 + $0x38] sm:$0xff]
        %v3236 = vld [vmem:[%s3227 + $0x40] sm:$0xff]
        %v3237 = vld [vmem:[%s3227 + $0x48] sm:$0xff]
        %v3238 = vld [vmem:[%s3227 + $0x50] sm:$0xff]
        %v3239 = vld [vmem:[%s3227 + $0x58] sm:$0xff]
        %v3240 = vld [vmem:[%s3227 + $0x60] sm:$0xff]
        %v3241 = vld [vmem:[%s3227 + $0x68] sm:$0xff]
        %v3242 = vld [vmem:[%s3227 + $0x70] sm:$0xff]
        %v3243 = vld [vmem:[%s3227 + $0x78] sm:$0xff]
        %v3245 = vsel %vm2108, %v3194, 0
        %v3248 = vsel %vm2108, %v3195, 0
        %v3251 = vsel %vm2108, %v3196, 0
        %v3254 = vsel %vm2108, %v3197, 0
        %v3257 = vsel %vm2108, %v3198, 0
        %v3260 = vsel %vm2108, %v3199, 0
        %v3263 = vsel %vm2108, %v3200, 0
        %v3266 = vsel %vm2108, %v3201, 0
        %v3269 = vsel %vm2108, %v3202, 0
        %v3272 = vsel %vm2108, %v3203, 0
        %v3275 = vsel %vm2108, %v3204, 0
        %v3278 = vsel %vm2108, %v3205, 0
        %v3281 = vsel %vm2108, %v3206, 0
        %v3284 = vsel %vm2108, %v3207, 0
        %v3287 = vsel %vm2108, %v3208, 0
        %v3290 = vsel %vm2108, %v3209, 0
        %3292 = vmatprep.subr.mxu0 0.0
        %3293 = vmatpush1.msra.mxu0 %v2237
        %3294 = vmatprep.subr.mxu0 0.0
        %3295 = vmatpush1.msra.mxu0 %v2238
        %3296 = vmatprep.subr.mxu0 0.0
        %3297 = vmatpush1.msra.mxu0 %v2239
        %3298 = vmatprep.subr.mxu0 0.0
        %3299 = vmatpush1.msra.mxu0 %v2240
        %3300 = vmatprep.subr.mxu0 0.0
        %3301 = vmatpush1.msra.mxu0 0.0
        %3302 = vmatprep.subr.mxu0 0.0
        %3303 = vmatpush1.msra.mxu0 0.0
        %3304 = vmatprep.subr.mxu0 0.0
        %3305 = vmatpush1.msra.mxu0 0.0
        %3306 = vmatprep.subr.mxu0 0.0
        %3307 = vmatpush1.msra.mxu0 0.0
        %3308 = vmatprep.subr.mxu0 0.0
        %3309 = vmatpush1.msra.mxu0 0.0
        %3310 = vmatprep.subr.mxu0 0.0
        %3311 = vmatpush1.msra.mxu0 0.0
        %3312 = vmatprep.subr.mxu0 0.0
        %3313 = vmatpush1.msra.mxu0 0.0
        %3314 = vmatprep.subr.mxu0 0.0
        %3315 = vmatpush1.msra.mxu0 0.0
        %3316 = vmatprep.subr.mxu0 0.0
        %3317 = vmatpush1.msra.mxu0 0.0
        %3318 = vmatprep.subr.mxu0 0.0
        %3319 = vmatpush1.msra.mxu0 0.0
        %3320 = vmatprep.subr.mxu0 0.0
        %3321 = vmatpush1.msra.mxu0 0.0
        %3322 = vmatprep.subr.mxu0 0.0
        %3323 = vmatpush1.msra.mxu0 0.0
        %3324 = vmatprep.subr.mxu0 0.0
        %3325 = vmatpush1.msra.mxu0 0.0
        %3326 = vmatprep.subr.mxu0 0.0
        %3327 = vmatpush1.msra.mxu0 0.0
        %3328 = vmatprep.subr.mxu0 0.0
        %3329 = vmatpush1.msra.mxu0 0.0
        %3330 = vmatprep.subr.mxu0 0.0
        %3331 = vmatpush1.msra.mxu0 0.0
        %3332 = vmatprep.subr.mxu0 0.0
        %3333 = vmatpush1.msra.mxu0 0.0
        %3334 = vmatprep.subr.mxu0 0.0
        %3335 = vmatpush1.msra.mxu0 0.0
        %3336 = vmatprep.subr.mxu0 0.0
        %3337 = vmatpush1.msra.mxu0 0.0
        %3338 = vmatprep.subr.mxu0 0.0
        %3339 = vmatpush1.msra.mxu0 0.0
        %3340 = vmatprep.subr.mxu0 0.0
        %3341 = vmatpush1.msra.mxu0 0.0
        %3342 = vmatprep.subr.mxu0 0.0
        %3343 = vmatpush1.msra.mxu0 0.0
        %3344 = vmatprep.subr.mxu0 0.0
        %3345 = vmatpush1.msra.mxu0 0.0
        %3346 = vmatprep.subr.mxu0 0.0
        %3347 = vmatpush1.msra.mxu0 0.0
        %3348 = vmatprep.subr.mxu0 0.0
        %3349 = vmatpush1.msra.mxu0 0.0
        %3350 = vmatprep.subr.mxu0 0.0
        %3351 = vmatpush1.msra.mxu0 0.0
        %3352 = vmatprep.subr.mxu0 0.0
        %3353 = vmatpush1.msra.mxu0 0.0
        %3354 = vmatprep.subr.mxu0 0.0
        %3355 = vmatpush1.msra.mxu0 0.0
        %3356 = vmatprep.mubr.f32.mxu0 0.0
        %3357 = vmatmul.mubr.f32.gmra.mrb[0].mxu0 %v3245
        %v3358 = vpop.f32.mrb[0].mxu0
        %v3359 = vadd.f32 %v3228, %v3358
        %v3360 = vpop.f32.mrb[0].mxu0
        %3361 = vmatprep.mubr.f32.mxu0 0.0
        %3362 = vmatmul.mubr.f32.gmra.mrb[0].mxu0 %v3248
        %v3363 = vpop.f32.mrb[0].mxu0
        %v3364 = vadd.f32 %v3229, %v3363
        %v3365 = vpop.f32.mrb[0].mxu0
        %3366 = vmatprep.mubr.f32.mxu0 0.0
        %3367 = vmatmul.mubr.f32.gmra.mrb[0].mxu0 %v3251
        %v3368 = vpop.f32.mrb[0].mxu0
        %v3369 = vadd.f32 %v3230, %v3368
        %v3370 = vpop.f32.mrb[0].mxu0
        %3371 = vmatprep.mubr.f32.mxu0 0.0
        %3372 = vmatmul.mubr.f32.gmra.mrb[0].mxu0 %v3254
        %v3373 = vpop.f32.mrb[0].mxu0
        %v3374 = vadd.f32 %v3231, %v3373
        %v3375 = vpop.f32.mrb[0].mxu0
        %3376 = vmatprep.mubr.f32.mxu0 0.0
        %3377 = vmatmul.mubr.f32.gmra.mrb[0].mxu0 %v3257
        %v3378 = vpop.f32.mrb[0].mxu0
        %v3379 = vadd.f32 %v3232, %v3378
        %v3380 = vpop.f32.mrb[0].mxu0
        %3381 = vmatprep.mubr.f32.mxu0 0.0
        %3382 = vmatmul.mubr.f32.gmra.mrb[0].mxu0 %v3260
        %v3383 = vpop.f32.mrb[0].mxu0
        %v3384 = vadd.f32 %v3233, %v3383
        %v3385 = vpop.f32.mrb[0].mxu0
        %3386 = vmatprep.mubr.f32.mxu0 0.0
        %3387 = vmatmul.mubr.f32.gmra.mrb[0].mxu0 %v3263
        %v3388 = vpop.f32.mrb[0].mxu0
        %v3389 = vadd.f32 %v3234, %v3388
        %v3390 = vpop.f32.mrb[0].mxu0
        %3391 = vmatprep.mubr.f32.mxu0 0.0
        %3392 = vmatmul.mubr.f32.gmra.mrb[0].mxu0 %v3266
        %v3393 = vpop.f32.mrb[0].mxu0
        %v3394 = vadd.f32 %v3235, %v3393
        %v3395 = vpop.f32.mrb[0].mxu0
        %3396 = vmatprep.mubr.f32.mxu0 0.0
        %3397 = vmatmul.mubr.f32.gmra.mrb[0].mxu0 %v3269
        %v3398 = vpop.f32.mrb[0].mxu0
        %v3399 = vadd.f32 %v3236, %v3398
        %v3400 = vpop.f32.mrb[0].mxu0
        %3401 = vmatprep.mubr.f32.mxu0 0.0
        %3402 = vmatmul.mubr.f32.gmra.mrb[0].mxu0 %v3272
        %v3403 = vpop.f32.mrb[0].mxu0
        %v3404 = vadd.f32 %v3237, %v3403
        %v3405 = vpop.f32.mrb[0].mxu0
        %3406 = vmatprep.mubr.f32.mxu0 0.0
        %3407 = vmatmul.mubr.f32.gmra.mrb[0].mxu0 %v3275
        %v3408 = vpop.f32.mrb[0].mxu0
        %v3409 = vadd.f32 %v3238, %v3408
        %v3410 = vpop.f32.mrb[0].mxu0
        %3411 = vmatprep.mubr.f32.mxu0 0.0
        %3412 = vmatmul.mubr.f32.gmra.mrb[0].mxu0 %v3278
        %v3413 = vpop.f32.mrb[0].mxu0
        %v3414 = vadd.f32 %v3239, %v3413
        %v3415 = vpop.f32.mrb[0].mxu0
        %3416 = vmatprep.mubr.f32.mxu0 0.0
        %3417 = vmatmul.mubr.f32.gmra.mrb[0].mxu0 %v3281
        %v3418 = vpop.f32.mrb[0].mxu0
        %v3419 = vadd.f32 %v3240, %v3418
        %v3420 = vpop.f32.mrb[0].mxu0
        %3421 = vmatprep.mubr.f32.mxu0 0.0
        %3422 = vmatmul.mubr.f32.gmra.mrb[0].mxu0 %v3284
        %v3423 = vpop.f32.mrb[0].mxu0
        %v3424 = vadd.f32 %v3241, %v3423
        %v3425 = vpop.f32.mrb[0].mxu0
        %3426 = vmatprep.mubr.f32.mxu0 0.0
        %3427 = vmatmul.mubr.f32.gmra.mrb[0].mxu0 %v3287
        %v3428 = vpop.f32.mrb[0].mxu0
        %v3429 = vadd.f32 %v3242, %v3428
        %v3430 = vpop.f32.mrb[0].mxu0
        %3431 = vmatprep.mubr.f32.mxu0 0.0
        %3432 = vmatmul.mubr.f32.gmra.mrb[0].mxu0 %v3290
        %v3433 = vpop.f32.mrb[0].mxu0
        %v3434 = vadd.f32 %v3243, %v3433
        %v3435 = vpop.f32.mrb[0].mxu0
        %3436 = vdwg.mxu0
        %v3437 = vtanh.pop %v3359
        %v3438 = vtanh.pop %v3364
        %v3439 = vtanh.pop %v3369
        %v3440 = vtanh.pop %v3374
        %v3441 = vtanh.pop %v3379
        %v3442 = vtanh.pop %v3384
        %v3443 = vtanh.pop %v3389
        %v3444 = vtanh.pop %v3394
        %v3445 = vtanh.pop %v3399
        %v3446 = vtanh.pop %v3404
        %v3447 = vtanh.pop %v3409
        %v3448 = vtanh.pop %v3414
        %v3449 = vtanh.pop %v3419
        %v3450 = vtanh.pop %v3424
        %v3451 = vtanh.pop %v3429
        %v3452 = vtanh.pop %v3434
        %s3453 = scalar_lea.vmem [#allocation3], 512
        %3454 = vst.msk [vmem:[%s3453] sm:$0xff] %vm2108, %v3437
        %3455 = vst.msk [vmem:[%s3453 + $0x8] sm:$0xff] %vm2108, %v3438
        %3456 = vst.msk [vmem:[%s3453 + $0x10] sm:$0xff] %vm2108, %v3439
        %3457 = vst.msk [vmem:[%s3453 + $0x18] sm:$0xff] %vm2108, %v3440
        %3458 = vst.msk [vmem:[%s3453 + $0x20] sm:$0xff] %vm2108, %v3441
        %3459 = vst.msk [vmem:[%s3453 + $0x28] sm:$0xff] %vm2108, %v3442
        %3460 = vst.msk [vmem:[%s3453 + $0x30] sm:$0xff] %vm2108, %v3443
        %3461 = vst.msk [vmem:[%s3453 + $0x38] sm:$0xff] %vm2108, %v3444
        %3462 = vst.msk [vmem:[%s3453 + $0x40] sm:$0xff] %vm2108, %v3445
        %3463 = vst.msk [vmem:[%s3453 + $0x48] sm:$0xff] %vm2108, %v3446
        %3464 = vst.msk [vmem:[%s3453 + $0x50] sm:$0xff] %vm2108, %v3447
        %3465 = vst.msk [vmem:[%s3453 + $0x58] sm:$0xff] %vm2108, %v3448
        %3466 = vst.msk [vmem:[%s3453 + $0x60] sm:$0xff] %vm2108, %v3449
        %3467 = vst.msk [vmem:[%s3453 + $0x68] sm:$0xff] %vm2108, %v3450
        %3468 = vst.msk [vmem:[%s3453 + $0x70] sm:$0xff] %vm2108, %v3451
        %3469 = vst.msk [vmem:[%s3453 + $0x78] sm:$0xff] %vm2108, %v3452
        %s3470 = scalar_lea.vmem [#allocation2], 640
        %v3471 = vld [vmem:[%s3470] sm:$0xff]
        %v3472 = vld [vmem:[%s3470 + $0x8] sm:$0xff]
        %v3473 = vld [vmem:[%s3470 + $0x10] sm:$0xff]
        %v3474 = vld [vmem:[%s3470 + $0x18] sm:$0xff]
        %v3475 = vld [vmem:[%s3470 + $0x20] sm:$0xff]
        %v3476 = vld [vmem:[%s3470 + $0x28] sm:$0xff]
        %v3477 = vld [vmem:[%s3470 + $0x30] sm:$0xff]
        %v3478 = vld [vmem:[%s3470 + $0x38] sm:$0xff]
        %v3479 = vld [vmem:[%s3470 + $0x40] sm:$0xff]
        %v3480 = vld [vmem:[%s3470 + $0x48] sm:$0xff]
        %v3481 = vld [vmem:[%s3470 + $0x50] sm:$0xff]
        %v3482 = vld [vmem:[%s3470 + $0x58] sm:$0xff]
        %v3483 = vld [vmem:[%s3470 + $0x60] sm:$0xff]
        %v3484 = vld [vmem:[%s3470 + $0x68] sm:$0xff]
        %v3485 = vld [vmem:[%s3470 + $0x70] sm:$0xff]
        %v3486 = vld [vmem:[%s3470 + $0x78] sm:$0xff]
        %v3488 = vsel %vm2108, %v3437, 0
        %v3491 = vsel %vm2108, %v3438, 0
        %v3494 = vsel %vm2108, %v3439, 0
        %v3497 = vsel %vm2108, %v3440, 0
        %v3500 = vsel %vm2108, %v3441, 0
        %v3503 = vsel %vm2108, %v3442, 0
        %v3506 = vsel %vm2108, %v3443, 0
        %v3509 = vsel %vm2108, %v3444, 0
        %v3512 = vsel %vm2108, %v3445, 0
        %v3515 = vsel %vm2108, %v3446, 0
        %v3518 = vsel %vm2108, %v3447, 0
        %v3521 = vsel %vm2108, %v3448, 0
        %v3524 = vsel %vm2108, %v3449, 0
        %v3527 = vsel %vm2108, %v3450, 0
        %v3530 = vsel %vm2108, %v3451, 0
        %v3533 = vsel %vm2108, %v3452, 0
        %3535 = vmatprep.subr.mxu0 0.0
        %3536 = vmatpush1.msra.mxu0 %v2237
        %3537 = vmatprep.subr.mxu0 0.0
        %3538 = vmatpush1.msra.mxu0 %v2238
        %3539 = vmatprep.subr.mxu0 0.0
        %3540 = vmatpush1.msra.mxu0 %v2239
        %3541 = vmatprep.subr.mxu0 0.0
        %3542 = vmatpush1.msra.mxu0 %v2240
        %3543 = vmatprep.subr.mxu0 0.0
        %3544 = vmatpush1.msra.mxu0 0.0
        %3545 = vmatprep.subr.mxu0 0.0
        %3546 = vmatpush1.msra.mxu0 0.0
        %3547 = vmatprep.subr.mxu0 0.0
        %3548 = vmatpush1.msra.mxu0 0.0
        %3549 = vmatprep.subr.mxu0 0.0
        %3550 = vmatpush1.msra.mxu0 0.0
        %3551 = vmatprep.subr.mxu0 0.0
        %3552 = vmatpush1.msra.mxu0 0.0
        %3553 = vmatprep.subr.mxu0 0.0
        %3554 = vmatpush1.msra.mxu0 0.0
        %3555 = vmatprep.subr.mxu0 0.0
        %3556 = vmatpush1.msra.mxu0 0.0
        %3557 = vmatprep.subr.mxu0 0.0
        %3558 = vmatpush1.msra.mxu0 0.0
        %3559 = vmatprep.subr.mxu0 0.0
        %3560 = vmatpush1.msra.mxu0 0.0
        %3561 = vmatprep.subr.mxu0 0.0
        %3562 = vmatpush1.msra.mxu0 0.0
        %3563 = vmatprep.subr.mxu0 0.0
        %3564 = vmatpush1.msra.mxu0 0.0
        %3565 = vmatprep.subr.mxu0 0.0
        %3566 = vmatpush1.msra.mxu0 0.0
        %3567 = vmatprep.subr.mxu0 0.0
        %3568 = vmatpush1.msra.mxu0 0.0
        %3569 = vmatprep.subr.mxu0 0.0
        %3570 = vmatpush1.msra.mxu0 0.0
        %3571 = vmatprep.subr.mxu0 0.0
        %3572 = vmatpush1.msra.mxu0 0.0
        %3573 = vmatprep.subr.mxu0 0.0
        %3574 = vmatpush1.msra.mxu0 0.0
        %3575 = vmatprep.subr.mxu0 0.0
        %3576 = vmatpush1.msra.mxu0 0.0
        %3577 = vmatprep.subr.mxu0 0.0
        %3578 = vmatpush1.msra.mxu0 0.0
        %3579 = vmatprep.subr.mxu0 0.0
        %3580 = vmatpush1.msra.mxu0 0.0
        %3581 = vmatprep.subr.mxu0 0.0
        %3582 = vmatpush1.msra.mxu0 0.0
        %3583 = vmatprep.subr.mxu0 0.0
        %3584 = vmatpush1.msra.mxu0 0.0
        %3585 = vmatprep.subr.mxu0 0.0
        %3586 = vmatpush1.msra.mxu0 0.0
        %3587 = vmatprep.subr.mxu0 0.0
        %3588 = vmatpush1.msra.mxu0 0.0
        %3589 = vmatprep.subr.mxu0 0.0
        %3590 = vmatpush1.msra.mxu0 0.0
        %3591 = vmatprep.subr.mxu0 0.0
        %3592 = vmatpush1.msra.mxu0 0.0
        %3593 = vmatprep.subr.mxu0 0.0
        %3594 = vmatpush1.msra.mxu0 0.0
        %3595 = vmatprep.subr.mxu0 0.0
        %3596 = vmatpush1.msra.mxu0 0.0
        %3597 = vmatprep.subr.mxu0 0.0
        %3598 = vmatpush1.msra.mxu0 0.0
        %3599 = vmatprep.mubr.f32.mxu0 0.0
        %3600 = vmatmul.mubr.f32.gmra.mrb[0].mxu0 %v3488
        %v3601 = vpop.f32.mrb[0].mxu0
        %v3602 = vadd.f32 %v3471, %v3601
        %v3603 = vpop.f32.mrb[0].mxu0
        %3604 = vmatprep.mubr.f32.mxu0 0.0
        %3605 = vmatmul.mubr.f32.gmra.mrb[0].mxu0 %v3491
        %v3606 = vpop.f32.mrb[0].mxu0
        %v3607 = vadd.f32 %v3472, %v3606
        %v3608 = vpop.f32.mrb[0].mxu0
        %3609 = vmatprep.mubr.f32.mxu0 0.0
        %3610 = vmatmul.mubr.f32.gmra.mrb[0].mxu0 %v3494
        %v3611 = vpop.f32.mrb[0].mxu0
        %v3612 = vadd.f32 %v3473, %v3611
        %v3613 = vpop.f32.mrb[0].mxu0
        %3614 = vmatprep.mubr.f32.mxu0 0.0
        %3615 = vmatmul.mubr.f32.gmra.mrb[0].mxu0 %v3497
        %v3616 = vpop.f32.mrb[0].mxu0
        %v3617 = vadd.f32 %v3474, %v3616
        %v3618 = vpop.f32.mrb[0].mxu0
        %3619 = vmatprep.mubr.f32.mxu0 0.0
        %3620 = vmatmul.mubr.f32.gmra.mrb[0].mxu0 %v3500
        %v3621 = vpop.f32.mrb[0].mxu0
        %v3622 = vadd.f32 %v3475, %v3621
        %v3623 = vpop.f32.mrb[0].mxu0
        %3624 = vmatprep.mubr.f32.mxu0 0.0
        %3625 = vmatmul.mubr.f32.gmra.mrb[0].mxu0 %v3503
        %v3626 = vpop.f32.mrb[0].mxu0
        %v3627 = vadd.f32 %v3476, %v3626
        %v3628 = vpop.f32.mrb[0].mxu0
        %3629 = vmatprep.mubr.f32.mxu0 0.0
        %3630 = vmatmul.mubr.f32.gmra.mrb[0].mxu0 %v3506
        %v3631 = vpop.f32.mrb[0].mxu0
        %v3632 = vadd.f32 %v3477, %v3631
        %v3633 = vpop.f32.mrb[0].mxu0
        %3634 = vmatprep.mubr.f32.mxu0 0.0
        %3635 = vmatmul.mubr.f32.gmra.mrb[0].mxu0 %v3509
        %v3636 = vpop.f32.mrb[0].mxu0
        %v3637 = vadd.f32 %v3478, %v3636
        %v3638 = vpop.f32.mrb[0].mxu0
        %3639 = vmatprep.mubr.f32.mxu0 0.0
        %3640 = vmatmul.mubr.f32.gmra.mrb[0].mxu0 %v3512
        %v3641 = vpop.f32.mrb[0].mxu0
        %v3642 = vadd.f32 %v3479, %v3641
        %v3643 = vpop.f32.mrb[0].mxu0
        %3644 = vmatprep.mubr.f32.mxu0 0.0
        %3645 = vmatmul.mubr.f32.gmra.mrb[0].mxu0 %v3515
        %v3646 = vpop.f32.mrb[0].mxu0
        %v3647 = vadd.f32 %v3480, %v3646
        %v3648 = vpop.f32.mrb[0].mxu0
        %3649 = vmatprep.mubr.f32.mxu0 0.0
        %3650 = vmatmul.mubr.f32.gmra.mrb[0].mxu0 %v3518
        %v3651 = vpop.f32.mrb[0].mxu0
        %v3652 = vadd.f32 %v3481, %v3651
        %v3653 = vpop.f32.mrb[0].mxu0
        %3654 = vmatprep.mubr.f32.mxu0 0.0
        %3655 = vmatmul.mubr.f32.gmra.mrb[0].mxu0 %v3521
        %v3656 = vpop.f32.mrb[0].mxu0
        %v3657 = vadd.f32 %v3482, %v3656
        %v3658 = vpop.f32.mrb[0].mxu0
        %3659 = vmatprep.mubr.f32.mxu0 0.0
        %3660 = vmatmul.mubr.f32.gmra.mrb[0].mxu0 %v3524
        %v3661 = vpop.f32.mrb[0].mxu0
        %v3662 = vadd.f32 %v3483, %v3661
        %v3663 = vpop.f32.mrb[0].mxu0
        %3664 = vmatprep.mubr.f32.mxu0 0.0
        %3665 = vmatmul.mubr.f32.gmra.mrb[0].mxu0 %v3527
        %v3666 = vpop.f32.mrb[0].mxu0
        %v3667 = vadd.f32 %v3484, %v3666
        %v3668 = vpop.f32.mrb[0].mxu0
        %3669 = vmatprep.mubr.f32.mxu0 0.0
        %3670 = vmatmul.mubr.f32.gmra.mrb[0].mxu0 %v3530
        %v3671 = vpop.f32.mrb[0].mxu0
        %v3672 = vadd.f32 %v3485, %v3671
        %v3673 = vpop.f32.mrb[0].mxu0
        %3674 = vmatprep.mubr.f32.mxu0 0.0
        %3675 = vmatmul.mubr.f32.gmra.mrb[0].mxu0 %v3533
        %v3676 = vpop.f32.mrb[0].mxu0
        %v3677 = vadd.f32 %v3486, %v3676
        %v3678 = vpop.f32.mrb[0].mxu0
        %3679 = vdwg.mxu0
        %v3680 = vtanh.pop %v3602
        %v3681 = vtanh.pop %v3607
        %v3682 = vtanh.pop %v3612
        %v3683 = vtanh.pop %v3617
        %v3684 = vtanh.pop %v3622
        %v3685 = vtanh.pop %v3627
        %v3686 = vtanh.pop %v3632
        %v3687 = vtanh.pop %v3637
        %v3688 = vtanh.pop %v3642
        %v3689 = vtanh.pop %v3647
        %v3690 = vtanh.pop %v3652
        %v3691 = vtanh.pop %v3657
        %v3692 = vtanh.pop %v3662
        %v3693 = vtanh.pop %v3667
        %v3694 = vtanh.pop %v3672
        %v3695 = vtanh.pop %v3677
        %s3696 = scalar_lea.vmem [#allocation3], 640
        %3697 = vst.msk [vmem:[%s3696] sm:$0xff] %vm2108, %v3680
        %3698 = vst.msk [vmem:[%s3696 + $0x8] sm:$0xff] %vm2108, %v3681
        %3699 = vst.msk [vmem:[%s3696 + $0x10] sm:$0xff] %vm2108, %v3682
        %3700 = vst.msk [vmem:[%s3696 + $0x18] sm:$0xff] %vm2108, %v3683
        %3701 = vst.msk [vmem:[%s3696 + $0x20] sm:$0xff] %vm2108, %v3684
        %3702 = vst.msk [vmem:[%s3696 + $0x28] sm:$0xff] %vm2108, %v3685
        %3703 = vst.msk [vmem:[%s3696 + $0x30] sm:$0xff] %vm2108, %v3686
        %3704 = vst.msk [vmem:[%s3696 + $0x38] sm:$0xff] %vm2108, %v3687
        %3705 = vst.msk [vmem:[%s3696 + $0x40] sm:$0xff] %vm2108, %v3688
        %3706 = vst.msk [vmem:[%s3696 + $0x48] sm:$0xff] %vm2108, %v3689
        %3707 = vst.msk [vmem:[%s3696 + $0x50] sm:$0xff] %vm2108, %v3690
        %3708 = vst.msk [vmem:[%s3696 + $0x58] sm:$0xff] %vm2108, %v3691
        %3709 = vst.msk [vmem:[%s3696 + $0x60] sm:$0xff] %vm2108, %v3692
        %3710 = vst.msk [vmem:[%s3696 + $0x68] sm:$0xff] %vm2108, %v3693
        %3711 = vst.msk [vmem:[%s3696 + $0x70] sm:$0xff] %vm2108, %v3694
        %3712 = vst.msk [vmem:[%s3696 + $0x78] sm:$0xff] %vm2108, %v3695
        %s3713 = scalar_lea.vmem [#allocation2], 768
        %v3714 = vld [vmem:[%s3713] sm:$0xff]
        %v3715 = vld [vmem:[%s3713 + $0x8] sm:$0xff]
        %v3716 = vld [vmem:[%s3713 + $0x10] sm:$0xff]
        %v3717 = vld [vmem:[%s3713 + $0x18] sm:$0xff]
        %v3718 = vld [vmem:[%s3713 + $0x20] sm:$0xff]
        %v3719 = vld [vmem:[%s3713 + $0x28] sm:$0xff]
        %v3720 = vld [vmem:[%s3713 + $0x30] sm:$0xff]
        %v3721 = vld [vmem:[%s3713 + $0x38] sm:$0xff]
        %v3722 = vld [vmem:[%s3713 + $0x40] sm:$0xff]
        %v3723 = vld [vmem:[%s3713 + $0x48] sm:$0xff]
        %v3724 = vld [vmem:[%s3713 + $0x50] sm:$0xff]
        %v3725 = vld [vmem:[%s3713 + $0x58] sm:$0xff]
        %v3726 = vld [vmem:[%s3713 + $0x60] sm:$0xff]
        %v3727 = vld [vmem:[%s3713 + $0x68] sm:$0xff]
        %v3728 = vld [vmem:[%s3713 + $0x70] sm:$0xff]
        %v3729 = vld [vmem:[%s3713 + $0x78] sm:$0xff]
        %v3731 = vsel %vm2108, %v3680, 0
        %v3734 = vsel %vm2108, %v3681, 0
        %v3737 = vsel %vm2108, %v3682, 0
        %v3740 = vsel %vm2108, %v3683, 0
        %v3743 = vsel %vm2108, %v3684, 0
        %v3746 = vsel %vm2108, %v3685, 0
        %v3749 = vsel %vm2108, %v3686, 0
        %v3752 = vsel %vm2108, %v3687, 0
        %v3755 = vsel %vm2108, %v3688, 0
        %v3758 = vsel %vm2108, %v3689, 0
        %v3761 = vsel %vm2108, %v3690, 0
        %v3764 = vsel %vm2108, %v3691, 0
        %v3767 = vsel %vm2108, %v3692, 0
        %v3770 = vsel %vm2108, %v3693, 0
        %v3773 = vsel %vm2108, %v3694, 0
        %v3776 = vsel %vm2108, %v3695, 0
        %3778 = vmatprep.subr.mxu0 0.0
        %3779 = vmatpush1.msra.mxu0 %v2237
        %3780 = vmatprep.subr.mxu0 0.0
        %3781 = vmatpush1.msra.mxu0 %v2238
        %3782 = vmatprep.subr.mxu0 0.0
        %3783 = vmatpush1.msra.mxu0 %v2239
        %3784 = vmatprep.subr.mxu0 0.0
        %3785 = vmatpush1.msra.mxu0 %v2240
        %3786 = vmatprep.subr.mxu0 0.0
        %3787 = vmatpush1.msra.mxu0 0.0
        %3788 = vmatprep.subr.mxu0 0.0
        %3789 = vmatpush1.msra.mxu0 0.0
        %3790 = vmatprep.subr.mxu0 0.0
        %3791 = vmatpush1.msra.mxu0 0.0
        %3792 = vmatprep.subr.mxu0 0.0
        %3793 = vmatpush1.msra.mxu0 0.0
        %3794 = vmatprep.subr.mxu0 0.0
        %3795 = vmatpush1.msra.mxu0 0.0
        %3796 = vmatprep.subr.mxu0 0.0
        %3797 = vmatpush1.msra.mxu0 0.0
        %3798 = vmatprep.subr.mxu0 0.0
        %3799 = vmatpush1.msra.mxu0 0.0
        %3800 = vmatprep.subr.mxu0 0.0
        %3801 = vmatpush1.msra.mxu0 0.0
        %3802 = vmatprep.subr.mxu0 0.0
        %3803 = vmatpush1.msra.mxu0 0.0
        %3804 = vmatprep.subr.mxu0 0.0
        %3805 = vmatpush1.msra.mxu0 0.0
        %3806 = vmatprep.subr.mxu0 0.0
        %3807 = vmatpush1.msra.mxu0 0.0
        %3808 = vmatprep.subr.mxu0 0.0
        %3809 = vmatpush1.msra.mxu0 0.0
        %3810 = vmatprep.subr.mxu0 0.0
        %3811 = vmatpush1.msra.mxu0 0.0
        %3812 = vmatprep.subr.mxu0 0.0
        %3813 = vmatpush1.msra.mxu0 0.0
        %3814 = vmatprep.subr.mxu0 0.0
        %3815 = vmatpush1.msra.mxu0 0.0
        %3816 = vmatprep.subr.mxu0 0.0
        %3817 = vmatpush1.msra.mxu0 0.0
        %3818 = vmatprep.subr.mxu0 0.0
        %3819 = vmatpush1.msra.mxu0 0.0
        %3820 = vmatprep.subr.mxu0 0.0
        %3821 = vmatpush1.msra.mxu0 0.0
        %3822 = vmatprep.subr.mxu0 0.0
        %3823 = vmatpush1.msra.mxu0 0.0
        %3824 = vmatprep.subr.mxu0 0.0
        %3825 = vmatpush1.msra.mxu0 0.0
        %3826 = vmatprep.subr.mxu0 0.0
        %3827 = vmatpush1.msra.mxu0 0.0
        %3828 = vmatprep.subr.mxu0 0.0
        %3829 = vmatpush1.msra.mxu0 0.0
        %3830 = vmatprep.subr.mxu0 0.0
        %3831 = vmatpush1.msra.mxu0 0.0
        %3832 = vmatprep.subr.mxu0 0.0
        %3833 = vmatpush1.msra.mxu0 0.0
        %3834 = vmatprep.subr.mxu0 0.0
        %3835 = vmatpush1.msra.mxu0 0.0
        %3836 = vmatprep.subr.mxu0 0.0
        %3837 = vmatpush1.msra.mxu0 0.0
        %3838 = vmatprep.subr.mxu0 0.0
        %3839 = vmatpush1.msra.mxu0 0.0
        %3840 = vmatprep.subr.mxu0 0.0
        %3841 = vmatpush1.msra.mxu0 0.0
        %3842 = vmatprep.mubr.f32.mxu0 0.0
        %3843 = vmatmul.mubr.f32.gmra.mrb[0].mxu0 %v3731
        %v3844 = vpop.f32.mrb[0].mxu0
        %v3845 = vadd.f32 %v3714, %v3844
        %v3846 = vpop.f32.mrb[0].mxu0
        %3847 = vmatprep.mubr.f32.mxu0 0.0
        %3848 = vmatmul.mubr.f32.gmra.mrb[0].mxu0 %v3734
        %v3849 = vpop.f32.mrb[0].mxu0
        %v3850 = vadd.f32 %v3715, %v3849
        %v3851 = vpop.f32.mrb[0].mxu0
        %3852 = vmatprep.mubr.f32.mxu0 0.0
        %3853 = vmatmul.mubr.f32.gmra.mrb[0].mxu0 %v3737
        %v3854 = vpop.f32.mrb[0].mxu0
        %v3855 = vadd.f32 %v3716, %v3854
        %v3856 = vpop.f32.mrb[0].mxu0
        %3857 = vmatprep.mubr.f32.mxu0 0.0
        %3858 = vmatmul.mubr.f32.gmra.mrb[0].mxu0 %v3740
        %v3859 = vpop.f32.mrb[0].mxu0
        %v3860 = vadd.f32 %v3717, %v3859
        %v3861 = vpop.f32.mrb[0].mxu0
        %3862 = vmatprep.mubr.f32.mxu0 0.0
        %3863 = vmatmul.mubr.f32.gmra.mrb[0].mxu0 %v3743
        %v3864 = vpop.f32.mrb[0].mxu0
        %v3865 = vadd.f32 %v3718, %v3864
        %v3866 = vpop.f32.mrb[0].mxu0
        %3867 = vmatprep.mubr.f32.mxu0 0.0
        %3868 = vmatmul.mubr.f32.gmra.mrb[0].mxu0 %v3746
        %v3869 = vpop.f32.mrb[0].mxu0
        %v3870 = vadd.f32 %v3719, %v3869
        %v3871 = vpop.f32.mrb[0].mxu0
        %3872 = vmatprep.mubr.f32.mxu0 0.0
        %3873 = vmatmul.mubr.f32.gmra.mrb[0].mxu0 %v3749
        %v3874 = vpop.f32.mrb[0].mxu0
        %v3875 = vadd.f32 %v3720, %v3874
        %v3876 = vpop.f32.mrb[0].mxu0
        %3877 = vmatprep.mubr.f32.mxu0 0.0
        %3878 = vmatmul.mubr.f32.gmra.mrb[0].mxu0 %v3752
        %v3879 = vpop.f32.mrb[0].mxu0
        %v3880 = vadd.f32 %v3721, %v3879
        %v3881 = vpop.f32.mrb[0].mxu0
        %3882 = vmatprep.mubr.f32.mxu0 0.0
        %3883 = vmatmul.mubr.f32.gmra.mrb[0].mxu0 %v3755
        %v3884 = vpop.f32.mrb[0].mxu0
        %v3885 = vadd.f32 %v3722, %v3884
        %v3886 = vpop.f32.mrb[0].mxu0
        %3887 = vmatprep.mubr.f32.mxu0 0.0
        %3888 = vmatmul.mubr.f32.gmra.mrb[0].mxu0 %v3758
        %v3889 = vpop.f32.mrb[0].mxu0
        %v3890 = vadd.f32 %v3723, %v3889
        %v3891 = vpop.f32.mrb[0].mxu0
        %3892 = vmatprep.mubr.f32.mxu0 0.0
        %3893 = vmatmul.mubr.f32.gmra.mrb[0].mxu0 %v3761
        %v3894 = vpop.f32.mrb[0].mxu0
        %v3895 = vadd.f32 %v3724, %v3894
        %v3896 = vpop.f32.mrb[0].mxu0
        %3897 = vmatprep.mubr.f32.mxu0 0.0
        %3898 = vmatmul.mubr.f32.gmra.mrb[0].mxu0 %v3764
        %v3899 = vpop.f32.mrb[0].mxu0
        %v3900 = vadd.f32 %v3725, %v3899
        %v3901 = vpop.f32.mrb[0].mxu0
        %3902 = vmatprep.mubr.f32.mxu0 0.0
        %3903 = vmatmul.mubr.f32.gmra.mrb[0].mxu0 %v3767
        %v3904 = vpop.f32.mrb[0].mxu0
        %v3905 = vadd.f32 %v3726, %v3904
        %v3906 = vpop.f32.mrb[0].mxu0
        %3907 = vmatprep.mubr.f32.mxu0 0.0
        %3908 = vmatmul.mubr.f32.gmra.mrb[0].mxu0 %v3770
        %v3909 = vpop.f32.mrb[0].mxu0
        %v3910 = vadd.f32 %v3727, %v3909
        %v3911 = vpop.f32.mrb[0].mxu0
        %3912 = vmatprep.mubr.f32.mxu0 0.0
        %3913 = vmatmul.mubr.f32.gmra.mrb[0].mxu0 %v3773
        %v3914 = vpop.f32.mrb[0].mxu0
        %v3915 = vadd.f32 %v3728, %v3914
        %v3916 = vpop.f32.mrb[0].mxu0
        %3917 = vmatprep.mubr.f32.mxu0 0.0
        %3918 = vmatmul.mubr.f32.gmra.mrb[0].mxu0 %v3776
        %v3919 = vpop.f32.mrb[0].mxu0
        %v3920 = vadd.f32 %v3729, %v3919
        %v3921 = vpop.f32.mrb[0].mxu0
        %3922 = vdwg.mxu0
        %v3923 = vtanh.pop %v3845
        %v3924 = vtanh.pop %v3850
        %v3925 = vtanh.pop %v3855
        %v3926 = vtanh.pop %v3860
        %v3927 = vtanh.pop %v3865
        %v3928 = vtanh.pop %v3870
        %v3929 = vtanh.pop %v3875
        %v3930 = vtanh.pop %v3880
        %v3931 = vtanh.pop %v3885
        %v3932 = vtanh.pop %v3890
        %v3933 = vtanh.pop %v3895
        %v3934 = vtanh.pop %v3900
        %v3935 = vtanh.pop %v3905
        %v3936 = vtanh.pop %v3910
        %v3937 = vtanh.pop %v3915
        %v3938 = vtanh.pop %v3920
        %s3939 = scalar_lea.vmem [#allocation3], 768
        %3940 = vst.msk [vmem:[%s3939] sm:$0xff] %vm2108, %v3923
        %3941 = vst.msk [vmem:[%s3939 + $0x8] sm:$0xff] %vm2108, %v3924
        %3942 = vst.msk [vmem:[%s3939 + $0x10] sm:$0xff] %vm2108, %v3925
        %3943 = vst.msk [vmem:[%s3939 + $0x18] sm:$0xff] %vm2108, %v3926
        %3944 = vst.msk [vmem:[%s3939 + $0x20] sm:$0xff] %vm2108, %v3927
        %3945 = vst.msk [vmem:[%s3939 + $0x28] sm:$0xff] %vm2108, %v3928
        %3946 = vst.msk [vmem:[%s3939 + $0x30] sm:$0xff] %vm2108, %v3929
        %3947 = vst.msk [vmem:[%s3939 + $0x38] sm:$0xff] %vm2108, %v3930
        %3948 = vst.msk [vmem:[%s3939 + $0x40] sm:$0xff] %vm2108, %v3931
        %3949 = vst.msk [vmem:[%s3939 + $0x48] sm:$0xff] %vm2108, %v3932
        %3950 = vst.msk [vmem:[%s3939 + $0x50] sm:$0xff] %vm2108, %v3933
        %3951 = vst.msk [vmem:[%s3939 + $0x58] sm:$0xff] %vm2108, %v3934
        %3952 = vst.msk [vmem:[%s3939 + $0x60] sm:$0xff] %vm2108, %v3935
        %3953 = vst.msk [vmem:[%s3939 + $0x68] sm:$0xff] %vm2108, %v3936
        %3954 = vst.msk [vmem:[%s3939 + $0x70] sm:$0xff] %vm2108, %v3937
        %3955 = vst.msk [vmem:[%s3939 + $0x78] sm:$0xff] %vm2108, %v3938
        %s3956 = scalar_lea.vmem [#allocation2], 896
        %v3957 = vld [vmem:[%s3956] sm:$0xff]
        %v3958 = vld [vmem:[%s3956 + $0x8] sm:$0xff]
        %v3959 = vld [vmem:[%s3956 + $0x10] sm:$0xff]
        %v3960 = vld [vmem:[%s3956 + $0x18] sm:$0xff]
        %v3961 = vld [vmem:[%s3956 + $0x20] sm:$0xff]
        %v3962 = vld [vmem:[%s3956 + $0x28] sm:$0xff]
        %v3963 = vld [vmem:[%s3956 + $0x30] sm:$0xff]
        %v3964 = vld [vmem:[%s3956 + $0x38] sm:$0xff]
        %v3965 = vld [vmem:[%s3956 + $0x40] sm:$0xff]
        %v3966 = vld [vmem:[%s3956 + $0x48] sm:$0xff]
        %v3967 = vld [vmem:[%s3956 + $0x50] sm:$0xff]
        %v3968 = vld [vmem:[%s3956 + $0x58] sm:$0xff]
        %v3969 = vld [vmem:[%s3956 + $0x60] sm:$0xff]
        %v3970 = vld [vmem:[%s3956 + $0x68] sm:$0xff]
        %v3971 = vld [vmem:[%s3956 + $0x70] sm:$0xff]
        %v3972 = vld [vmem:[%s3956 + $0x78] sm:$0xff]
        %v3974 = vsel %vm2108, %v3923, 0
        %v3977 = vsel %vm2108, %v3924, 0
        %v3980 = vsel %vm2108, %v3925, 0
        %v3983 = vsel %vm2108, %v3926, 0
        %v3986 = vsel %vm2108, %v3927, 0
        %v3989 = vsel %vm2108, %v3928, 0
        %v3992 = vsel %vm2108, %v3929, 0
        %v3995 = vsel %vm2108, %v3930, 0
        %v3998 = vsel %vm2108, %v3931, 0
        %v4001 = vsel %vm2108, %v3932, 0
        %v4004 = vsel %vm2108, %v3933, 0
        %v4007 = vsel %vm2108, %v3934, 0
        %v4010 = vsel %vm2108, %v3935, 0
        %v4013 = vsel %vm2108, %v3936, 0
        %v4016 = vsel %vm2108, %v3937, 0
        %v4019 = vsel %vm2108, %v3938, 0
        %4021 = vmatprep.subr.mxu0 0.0
        %4022 = vmatpush1.msra.mxu0 %v2237
        %4023 = vmatprep.subr.mxu0 0.0
        %4024 = vmatpush1.msra.mxu0 %v2238
        %4025 = vmatprep.subr.mxu0 0.0
        %4026 = vmatpush1.msra.mxu0 %v2239
        %4027 = vmatprep.subr.mxu0 0.0
        %4028 = vmatpush1.msra.mxu0 %v2240
        %4029 = vmatprep.subr.mxu0 0.0
        %4030 = vmatpush1.msra.mxu0 0.0
        %4031 = vmatprep.subr.mxu0 0.0
        %4032 = vmatpush1.msra.mxu0 0.0
        %4033 = vmatprep.subr.mxu0 0.0
        %4034 = vmatpush1.msra.mxu0 0.0
        %4035 = vmatprep.subr.mxu0 0.0
        %4036 = vmatpush1.msra.mxu0 0.0
        %4037 = vmatprep.subr.mxu0 0.0
        %4038 = vmatpush1.msra.mxu0 0.0
        %4039 = vmatprep.subr.mxu0 0.0
        %4040 = vmatpush1.msra.mxu0 0.0
        %4041 = vmatprep.subr.mxu0 0.0
        %4042 = vmatpush1.msra.mxu0 0.0
        %4043 = vmatprep.subr.mxu0 0.0
        %4044 = vmatpush1.msra.mxu0 0.0
        %4045 = vmatprep.subr.mxu0 0.0
        %4046 = vmatpush1.msra.mxu0 0.0
        %4047 = vmatprep.subr.mxu0 0.0
        %4048 = vmatpush1.msra.mxu0 0.0
        %4049 = vmatprep.subr.mxu0 0.0
        %4050 = vmatpush1.msra.mxu0 0.0
        %4051 = vmatprep.subr.mxu0 0.0
        %4052 = vmatpush1.msra.mxu0 0.0
        %4053 = vmatprep.subr.mxu0 0.0
        %4054 = vmatpush1.msra.mxu0 0.0
        %4055 = vmatprep.subr.mxu0 0.0
        %4056 = vmatpush1.msra.mxu0 0.0
        %4057 = vmatprep.subr.mxu0 0.0
        %4058 = vmatpush1.msra.mxu0 0.0
        %4059 = vmatprep.subr.mxu0 0.0
        %4060 = vmatpush1.msra.mxu0 0.0
        %4061 = vmatprep.subr.mxu0 0.0
        %4062 = vmatpush1.msra.mxu0 0.0
        %4063 = vmatprep.subr.mxu0 0.0
        %4064 = vmatpush1.msra.mxu0 0.0
        %4065 = vmatprep.subr.mxu0 0.0
        %4066 = vmatpush1.msra.mxu0 0.0
        %4067 = vmatprep.subr.mxu0 0.0
        %4068 = vmatpush1.msra.mxu0 0.0
        %4069 = vmatprep.subr.mxu0 0.0
        %4070 = vmatpush1.msra.mxu0 0.0
        %4071 = vmatprep.subr.mxu0 0.0
        %4072 = vmatpush1.msra.mxu0 0.0
        %4073 = vmatprep.subr.mxu0 0.0
        %4074 = vmatpush1.msra.mxu0 0.0
        %4075 = vmatprep.subr.mxu0 0.0
        %4076 = vmatpush1.msra.mxu0 0.0
        %4077 = vmatprep.subr.mxu0 0.0
        %4078 = vmatpush1.msra.mxu0 0.0
        %4079 = vmatprep.subr.mxu0 0.0
        %4080 = vmatpush1.msra.mxu0 0.0
        %4081 = vmatprep.subr.mxu0 0.0
        %4082 = vmatpush1.msra.mxu0 0.0
        %4083 = vmatprep.subr.mxu0 0.0
        %4084 = vmatpush1.msra.mxu0 0.0
        %4085 = vmatprep.mubr.f32.mxu0 0.0
        %4086 = vmatmul.mubr.f32.gmra.mrb[0].mxu0 %v3974
        %v4087 = vpop.f32.mrb[0].mxu0
        %v4088 = vadd.f32 %v3957, %v4087
        %v4089 = vpop.f32.mrb[0].mxu0
        %4090 = vmatprep.mubr.f32.mxu0 0.0
        %4091 = vmatmul.mubr.f32.gmra.mrb[0].mxu0 %v3977
        %v4092 = vpop.f32.mrb[0].mxu0
        %v4093 = vadd.f32 %v3958, %v4092
        %v4094 = vpop.f32.mrb[0].mxu0
        %4095 = vmatprep.mubr.f32.mxu0 0.0
        %4096 = vmatmul.mubr.f32.gmra.mrb[0].mxu0 %v3980
        %v4097 = vpop.f32.mrb[0].mxu0
        %v4098 = vadd.f32 %v3959, %v4097
        %v4099 = vpop.f32.mrb[0].mxu0
        %4100 = vmatprep.mubr.f32.mxu0 0.0
        %4101 = vmatmul.mubr.f32.gmra.mrb[0].mxu0 %v3983
        %v4102 = vpop.f32.mrb[0].mxu0
        %v4103 = vadd.f32 %v3960, %v4102
        %v4104 = vpop.f32.mrb[0].mxu0
        %4105 = vmatprep.mubr.f32.mxu0 0.0
        %4106 = vmatmul.mubr.f32.gmra.mrb[0].mxu0 %v3986
        %v4107 = vpop.f32.mrb[0].mxu0
        %v4108 = vadd.f32 %v3961, %v4107
        %v4109 = vpop.f32.mrb[0].mxu0
        %4110 = vmatprep.mubr.f32.mxu0 0.0
        %4111 = vmatmul.mubr.f32.gmra.mrb[0].mxu0 %v3989
        %v4112 = vpop.f32.mrb[0].mxu0
        %v4113 = vadd.f32 %v3962, %v4112
        %v4114 = vpop.f32.mrb[0].mxu0
        %4115 = vmatprep.mubr.f32.mxu0 0.0
        %4116 = vmatmul.mubr.f32.gmra.mrb[0].mxu0 %v3992
        %v4117 = vpop.f32.mrb[0].mxu0
        %v4118 = vadd.f32 %v3963, %v4117
        %v4119 = vpop.f32.mrb[0].mxu0
        %4120 = vmatprep.mubr.f32.mxu0 0.0
        %4121 = vmatmul.mubr.f32.gmra.mrb[0].mxu0 %v3995
        %v4122 = vpop.f32.mrb[0].mxu0
        %v4123 = vadd.f32 %v3964, %v4122
        %v4124 = vpop.f32.mrb[0].mxu0
        %4125 = vmatprep.mubr.f32.mxu0 0.0
        %4126 = vmatmul.mubr.f32.gmra.mrb[0].mxu0 %v3998
        %v4127 = vpop.f32.mrb[0].mxu0
        %v4128 = vadd.f32 %v3965, %v4127
        %v4129 = vpop.f32.mrb[0].mxu0
        %4130 = vmatprep.mubr.f32.mxu0 0.0
        %4131 = vmatmul.mubr.f32.gmra.mrb[0].mxu0 %v4001
        %v4132 = vpop.f32.mrb[0].mxu0
        %v4133 = vadd.f32 %v3966, %v4132
        %v4134 = vpop.f32.mrb[0].mxu0
        %4135 = vmatprep.mubr.f32.mxu0 0.0
        %4136 = vmatmul.mubr.f32.gmra.mrb[0].mxu0 %v4004
        %v4137 = vpop.f32.mrb[0].mxu0
        %v4138 = vadd.f32 %v3967, %v4137
        %v4139 = vpop.f32.mrb[0].mxu0
        %4140 = vmatprep.mubr.f32.mxu0 0.0
        %4141 = vmatmul.mubr.f32.gmra.mrb[0].mxu0 %v4007
        %v4142 = vpop.f32.mrb[0].mxu0
        %v4143 = vadd.f32 %v3968, %v4142
        %v4144 = vpop.f32.mrb[0].mxu0
        %4145 = vmatprep.mubr.f32.mxu0 0.0
        %4146 = vmatmul.mubr.f32.gmra.mrb[0].mxu0 %v4010
        %v4147 = vpop.f32.mrb[0].mxu0
        %v4148 = vadd.f32 %v3969, %v4147
        %v4149 = vpop.f32.mrb[0].mxu0
        %4150 = vmatprep.mubr.f32.mxu0 0.0
        %4151 = vmatmul.mubr.f32.gmra.mrb[0].mxu0 %v4013
        %v4152 = vpop.f32.mrb[0].mxu0
        %v4153 = vadd.f32 %v3970, %v4152
        %v4154 = vpop.f32.mrb[0].mxu0
        %4155 = vmatprep.mubr.f32.mxu0 0.0
        %4156 = vmatmul.mubr.f32.gmra.mrb[0].mxu0 %v4016
        %v4157 = vpop.f32.mrb[0].mxu0
        %v4158 = vadd.f32 %v3971, %v4157
        %v4159 = vpop.f32.mrb[0].mxu0
        %4160 = vmatprep.mubr.f32.mxu0 0.0
        %4161 = vmatmul.mubr.f32.gmra.mrb[0].mxu0 %v4019
        %v4162 = vpop.f32.mrb[0].mxu0
        %v4163 = vadd.f32 %v3972, %v4162
        %v4164 = vpop.f32.mrb[0].mxu0
        %4165 = vdwg.mxu0
        %v4166 = vtanh.pop %v4088
        %v4167 = vtanh.pop %v4093
        %v4168 = vtanh.pop %v4098
        %v4169 = vtanh.pop %v4103
        %v4170 = vtanh.pop %v4108
        %v4171 = vtanh.pop %v4113
        %v4172 = vtanh.pop %v4118
        %v4173 = vtanh.pop %v4123
        %v4174 = vtanh.pop %v4128
        %v4175 = vtanh.pop %v4133
        %v4176 = vtanh.pop %v4138
        %v4177 = vtanh.pop %v4143
        %v4178 = vtanh.pop %v4148
        %v4179 = vtanh.pop %v4153
        %v4180 = vtanh.pop %v4158
        %v4181 = vtanh.pop %v4163
        %s4182 = scalar_lea.vmem [#allocation3], 896
        %4183 = vst.msk [vmem:[%s4182] sm:$0xff] %vm2108, %v4166
        %4184 = vst.msk [vmem:[%s4182 + $0x8] sm:$0xff] %vm2108, %v4167
        %4185 = vst.msk [vmem:[%s4182 + $0x10] sm:$0xff] %vm2108, %v4168
        %4186 = vst.msk [vmem:[%s4182 + $0x18] sm:$0xff] %vm2108, %v4169
        %4187 = vst.msk [vmem:[%s4182 + $0x20] sm:$0xff] %vm2108, %v4170
        %4188 = vst.msk [vmem:[%s4182 + $0x28] sm:$0xff] %vm2108, %v4171
        %4189 = vst.msk [vmem:[%s4182 + $0x30] sm:$0xff] %vm2108, %v4172
        %4190 = vst.msk [vmem:[%s4182 + $0x38] sm:$0xff] %vm2108, %v4173
        %4191 = vst.msk [vmem:[%s4182 + $0x40] sm:$0xff] %vm2108, %v4174
        %4192 = vst.msk [vmem:[%s4182 + $0x48] sm:$0xff] %vm2108, %v4175
        %4193 = vst.msk [vmem:[%s4182 + $0x50] sm:$0xff] %vm2108, %v4176
        %4194 = vst.msk [vmem:[%s4182 + $0x58] sm:$0xff] %vm2108, %v4177
        %4195 = vst.msk [vmem:[%s4182 + $0x60] sm:$0xff] %vm2108, %v4178
        %4196 = vst.msk [vmem:[%s4182 + $0x68] sm:$0xff] %vm2108, %v4179
        %4197 = vst.msk [vmem:[%s4182 + $0x70] sm:$0xff] %vm2108, %v4180
        %4198 = vst.msk [vmem:[%s4182 + $0x78] sm:$0xff] %vm2108, %v4181
        %4199 = vst.msk [vmem:[%s879] sm:$0xff] %vm2108, %v4166
        %4200 = vst.msk [vmem:[%s879 + $0x8] sm:$0xff] %vm2108, %v4167
        %4201 = vst.msk [vmem:[%s879 + $0x10] sm:$0xff] %vm2108, %v4168
        %4202 = vst.msk [vmem:[%s879 + $0x18] sm:$0xff] %vm2108, %v4169
        %4203 = vst.msk [vmem:[%s879 + $0x20] sm:$0xff] %vm2108, %v4170
        %4204 = vst.msk [vmem:[%s879 + $0x28] sm:$0xff] %vm2108, %v4171
        %4205 = vst.msk [vmem:[%s879 + $0x30] sm:$0xff] %vm2108, %v4172
        %4206 = vst.msk [vmem:[%s879 + $0x38] sm:$0xff] %vm2108, %v4173
        %4207 = vst.msk [vmem:[%s879 + $0x40] sm:$0xff] %vm2108, %v4174
        %4208 = vst.msk [vmem:[%s879 + $0x48] sm:$0xff] %vm2108, %v4175
        %4209 = vst.msk [vmem:[%s879 + $0x50] sm:$0xff] %vm2108, %v4176
        %4210 = vst.msk [vmem:[%s879 + $0x58] sm:$0xff] %vm2108, %v4177
        %4211 = vst.msk [vmem:[%s879 + $0x60] sm:$0xff] %vm2108, %v4178
        %4212 = vst.msk [vmem:[%s879 + $0x68] sm:$0xff] %vm2108, %v4179
        %4213 = vst.msk [vmem:[%s879 + $0x70] sm:$0xff] %vm2108, %v4180
        %4214 = vst.msk [vmem:[%s879 + $0x78] sm:$0xff] %vm2108, %v4181
        %v4215 = vld [vmem:[#allocation3] sm:$0xff]
        %v4216 = vld [vmem:[#allocation3 + $0x8] sm:$0xff]
        %v4217 = vld [vmem:[#allocation3 + $0x10] sm:$0xff]
        %v4218 = vld [vmem:[#allocation3 + $0x18] sm:$0xff]
        %v4219 = vld [vmem:[#allocation3 + $0x20] sm:$0xff]
        %v4220 = vld [vmem:[#allocation3 + $0x28] sm:$0xff]
        %v4221 = vld [vmem:[#allocation3 + $0x30] sm:$0xff]
        %v4222 = vld [vmem:[#allocation3 + $0x38] sm:$0xff]
        %v4223 = vld [vmem:[#allocation3 + $0x40] sm:$0xff]
        %v4224 = vld [vmem:[#allocation3 + $0x48] sm:$0xff]
        %v4225 = vld [vmem:[#allocation3 + $0x50] sm:$0xff]
        %v4226 = vld [vmem:[#allocation3 + $0x58] sm:$0xff]
        %v4227 = vld [vmem:[#allocation3 + $0x60] sm:$0xff]
        %v4228 = vld [vmem:[#allocation3 + $0x68] sm:$0xff]
        %v4229 = vld [vmem:[#allocation3 + $0x70] sm:$0xff]
        %v4230 = vld [vmem:[#allocation3 + $0x78] sm:$0xff]
        %v4231 = vld [vmem:[#allocation3 + $0x80] sm:$0xff]
        %v4232 = vld [vmem:[#allocation3 + $0x88] sm:$0xff]
        %v4233 = vld [vmem:[#allocation3 + $0x90] sm:$0xff]
        %v4234 = vld [vmem:[#allocation3 + $0x98] sm:$0xff]
        %v4235 = vld [vmem:[#allocation3 + $0xa0] sm:$0xff]
        %v4236 = vld [vmem:[#allocation3 + $0xa8] sm:$0xff]
        %v4237 = vld [vmem:[#allocation3 + $0xb0] sm:$0xff]
        %v4238 = vld [vmem:[#allocation3 + $0xb8] sm:$0xff]
        %v4239 = vld [vmem:[#allocation3 + $0xc0] sm:$0xff]
        %v4240 = vld [vmem:[#allocation3 + $0xc8] sm:$0xff]
        %v4241 = vld [vmem:[#allocation3 + $0xd0] sm:$0xff]
        %v4242 = vld [vmem:[#allocation3 + $0xd8] sm:$0xff]
        %v4243 = vld [vmem:[#allocation3 + $0xe0] sm:$0xff]
        %v4244 = vld [vmem:[#allocation3 + $0xe8] sm:$0xff]
        %v4245 = vld [vmem:[#allocation3 + $0xf0] sm:$0xff]
        %v4246 = vld [vmem:[#allocation3 + $0xf8] sm:$0xff]
        %v4247 = vld [vmem:[#allocation3 + $0x100] sm:$0xff]
        %v4248 = vld [vmem:[#allocation3 + $0x108] sm:$0xff]
        %v4249 = vld [vmem:[#allocation3 + $0x110] sm:$0xff]
        %v4250 = vld [vmem:[#allocation3 + $0x118] sm:$0xff]
        %v4251 = vld [vmem:[#allocation3 + $0x120] sm:$0xff]
        %v4252 = vld [vmem:[#allocation3 + $0x128] sm:$0xff]
        %v4253 = vld [vmem:[#allocation3 + $0x130] sm:$0xff]
        %v4254 = vld [vmem:[#allocation3 + $0x138] sm:$0xff]
        %v4255 = vld [vmem:[#allocation3 + $0x140] sm:$0xff]
        %v4256 = vld [vmem:[#allocation3 + $0x148] sm:$0xff]
        %v4257 = vld [vmem:[#allocation3 + $0x150] sm:$0xff]
        %v4258 = vld [vmem:[#allocation3 + $0x158] sm:$0xff]
        %v4259 = vld [vmem:[#allocation3 + $0x160] sm:$0xff]
        %v4260 = vld [vmem:[#allocation3 + $0x168] sm:$0xff]
        %v4261 = vld [vmem:[#allocation3 + $0x170] sm:$0xff]
        %v4262 = vld [vmem:[#allocation3 + $0x178] sm:$0xff]
        %v4263 = vld [vmem:[#allocation3 + $0x180] sm:$0xff]
        %v4264 = vld [vmem:[#allocation3 + $0x188] sm:$0xff]
        %v4265 = vld [vmem:[#allocation3 + $0x190] sm:$0xff]
        %v4266 = vld [vmem:[#allocation3 + $0x198] sm:$0xff]
        %v4267 = vld [vmem:[#allocation3 + $0x1a0] sm:$0xff]
        %v4268 = vld [vmem:[#allocation3 + $0x1a8] sm:$0xff]
        %v4269 = vld [vmem:[#allocation3 + $0x1b0] sm:$0xff]
        %v4270 = vld [vmem:[#allocation3 + $0x1b8] sm:$0xff]
        %v4271 = vld [vmem:[#allocation3 + $0x1c0] sm:$0xff]
        %v4272 = vld [vmem:[#allocation3 + $0x1c8] sm:$0xff]
        %v4273 = vld [vmem:[#allocation3 + $0x1d0] sm:$0xff]
        %v4274 = vld [vmem:[#allocation3 + $0x1d8] sm:$0xff]
        %v4275 = vld [vmem:[#allocation3 + $0x1e0] sm:$0xff]
        %v4276 = vld [vmem:[#allocation3 + $0x1e8] sm:$0xff]
        %v4277 = vld [vmem:[#allocation3 + $0x1f0] sm:$0xff]
        %v4278 = vld [vmem:[#allocation3 + $0x1f8] sm:$0xff]
        %v4279 = vld [vmem:[#allocation3 + $0x200] sm:$0xff]
        %v4280 = vld [vmem:[#allocation3 + $0x208] sm:$0xff]
        %v4281 = vld [vmem:[#allocation3 + $0x210] sm:$0xff]
        %v4282 = vld [vmem:[#allocation3 + $0x218] sm:$0xff]
        %v4283 = vld [vmem:[#allocation3 + $0x220] sm:$0xff]
        %v4284 = vld [vmem:[#allocation3 + $0x228] sm:$0xff]
        %v4285 = vld [vmem:[#allocation3 + $0x230] sm:$0xff]
        %v4286 = vld [vmem:[#allocation3 + $0x238] sm:$0xff]
        %v4287 = vld [vmem:[#allocation3 + $0x240] sm:$0xff]
        %v4288 = vld [vmem:[#allocation3 + $0x248] sm:$0xff]
        %v4289 = vld [vmem:[#allocation3 + $0x250] sm:$0xff]
        %v4290 = vld [vmem:[#allocation3 + $0x258] sm:$0xff]
        %v4291 = vld [vmem:[#allocation3 + $0x260] sm:$0xff]
        %v4292 = vld [vmem:[#allocation3 + $0x268] sm:$0xff]
        %v4293 = vld [vmem:[#allocation3 + $0x270] sm:$0xff]
        %v4294 = vld [vmem:[#allocation3 + $0x278] sm:$0xff]
        %v4295 = vld [vmem:[#allocation3 + $0x280] sm:$0xff]
        %v4296 = vld [vmem:[#allocation3 + $0x288] sm:$0xff]
        %v4297 = vld [vmem:[#allocation3 + $0x290] sm:$0xff]
        %v4298 = vld [vmem:[#allocation3 + $0x298] sm:$0xff]
        %v4299 = vld [vmem:[#allocation3 + $0x2a0] sm:$0xff]
        %v4300 = vld [vmem:[#allocation3 + $0x2a8] sm:$0xff]
        %v4301 = vld [vmem:[#allocation3 + $0x2b0] sm:$0xff]
        %v4302 = vld [vmem:[#allocation3 + $0x2b8] sm:$0xff]
        %v4303 = vld [vmem:[#allocation3 + $0x2c0] sm:$0xff]
        %v4304 = vld [vmem:[#allocation3 + $0x2c8] sm:$0xff]
        %v4305 = vld [vmem:[#allocation3 + $0x2d0] sm:$0xff]
        %v4306 = vld [vmem:[#allocation3 + $0x2d8] sm:$0xff]
        %v4307 = vld [vmem:[#allocation3 + $0x2e0] sm:$0xff]
        %v4308 = vld [vmem:[#allocation3 + $0x2e8] sm:$0xff]
        %v4309 = vld [vmem:[#allocation3 + $0x2f0] sm:$0xff]
        %v4310 = vld [vmem:[#allocation3 + $0x2f8] sm:$0xff]
        %v4311 = vld [vmem:[#allocation3 + $0x300] sm:$0xff]
        %v4312 = vld [vmem:[#allocation3 + $0x308] sm:$0xff]
        %v4313 = vld [vmem:[#allocation3 + $0x310] sm:$0xff]
        %v4314 = vld [vmem:[#allocation3 + $0x318] sm:$0xff]
        %v4315 = vld [vmem:[#allocation3 + $0x320] sm:$0xff]
        %v4316 = vld [vmem:[#allocation3 + $0x328] sm:$0xff]
        %v4317 = vld [vmem:[#allocation3 + $0x330] sm:$0xff]
        %v4318 = vld [vmem:[#allocation3 + $0x338] sm:$0xff]
        %v4319 = vld [vmem:[#allocation3 + $0x340] sm:$0xff]
        %v4320 = vld [vmem:[#allocation3 + $0x348] sm:$0xff]
        %v4321 = vld [vmem:[#allocation3 + $0x350] sm:$0xff]
        %v4322 = vld [vmem:[#allocation3 + $0x358] sm:$0xff]
        %v4323 = vld [vmem:[#allocation3 + $0x360] sm:$0xff]
        %v4324 = vld [vmem:[#allocation3 + $0x368] sm:$0xff]
        %v4325 = vld [vmem:[#allocation3 + $0x370] sm:$0xff]
        %v4326 = vld [vmem:[#allocation3 + $0x378] sm:$0xff]
        %v4327 = vld [vmem:[#allocation3 + $0x380] sm:$0xff]
        %v4328 = vld [vmem:[#allocation3 + $0x388] sm:$0xff]
        %v4329 = vld [vmem:[#allocation3 + $0x390] sm:$0xff]
        %v4330 = vld [vmem:[#allocation3 + $0x398] sm:$0xff]
        %v4331 = vld [vmem:[#allocation3 + $0x3a0] sm:$0xff]
        %v4332 = vld [vmem:[#allocation3 + $0x3a8] sm:$0xff]
        %v4333 = vld [vmem:[#allocation3 + $0x3b0] sm:$0xff]
        %v4334 = vld [vmem:[#allocation3 + $0x3b8] sm:$0xff]
        %v4335 = vld [vmem:[#allocation3 + $0x3c0] sm:$0xff]
        %v4336 = vld [vmem:[#allocation3 + $0x3c8] sm:$0xff]
        %v4337 = vld [vmem:[#allocation3 + $0x3d0] sm:$0xff]
        %v4338 = vld [vmem:[#allocation3 + $0x3d8] sm:$0xff]
        %v4339 = vld [vmem:[#allocation3 + $0x3e0] sm:$0xff]
        %v4340 = vld [vmem:[#allocation3 + $0x3e8] sm:$0xff]
        %v4341 = vld [vmem:[#allocation3 + $0x3f0] sm:$0xff]
        %v4342 = vld [vmem:[#allocation3 + $0x3f8] sm:$0xff]
        %v4343 = vld [vmem:[%s5] sm:$0xff]
        %v4344 = vld [vmem:[%s5 + $0x8] sm:$0xff]
        %v4345 = vld [vmem:[%s5 + $0x10] sm:$0xff]
        %v4346 = vld [vmem:[%s5 + $0x18] sm:$0xff]
        %v4347 = vld [vmem:[%s6] sm:$0x1]
        %v4349 = vlaneseq
        %v4350 = vshrl.u32 %v4349, 7
        %v4351 = vsub.s32 0, %v4350
        %v4352 = vrot.slane %v4347, %v4351
        %v4355 = vsel %vm2108, %v4215, 0
        %v4358 = vsel %vm2108, %v4216, 0
        %v4361 = vsel %vm2108, %v4217, 0
        %v4364 = vsel %vm2108, %v4218, 0
        %v4367 = vsel %vm2108, %v4219, 0
        %v4370 = vsel %vm2108, %v4220, 0
        %v4373 = vsel %vm2108, %v4221, 0
        %v4376 = vsel %vm2108, %v4222, 0
        %v4379 = vsel %vm2108, %v4223, 0
        %v4382 = vsel %vm2108, %v4224, 0
        %v4385 = vsel %vm2108, %v4225, 0
        %v4388 = vsel %vm2108, %v4226, 0
        %v4391 = vsel %vm2108, %v4227, 0
        %v4394 = vsel %vm2108, %v4228, 0
        %v4397 = vsel %vm2108, %v4229, 0
        %v4400 = vsel %vm2108, %v4230, 0
        %v4403 = vsel %vm2108, %v4231, 0
        %v4406 = vsel %vm2108, %v4232, 0
        %v4409 = vsel %vm2108, %v4233, 0
        %v4412 = vsel %vm2108, %v4234, 0
        %v4415 = vsel %vm2108, %v4235, 0
        %v4418 = vsel %vm2108, %v4236, 0
        %v4421 = vsel %vm2108, %v4237, 0
        %v4424 = vsel %vm2108, %v4238, 0
        %v4427 = vsel %vm2108, %v4239, 0
        %v4430 = vsel %vm2108, %v4240, 0
        %v4433 = vsel %vm2108, %v4241, 0
        %v4436 = vsel %vm2108, %v4242, 0
        %v4439 = vsel %vm2108, %v4243, 0
        %v4442 = vsel %vm2108, %v4244, 0
        %v4445 = vsel %vm2108, %v4245, 0
        %v4448 = vsel %vm2108, %v4246, 0
        %v4451 = vsel %vm2108, %v4247, 0
        %v4454 = vsel %vm2108, %v4248, 0
        %v4457 = vsel %vm2108, %v4249, 0
        %v4460 = vsel %vm2108, %v4250, 0
        %v4463 = vsel %vm2108, %v4251, 0
        %v4466 = vsel %vm2108, %v4252, 0
        %v4469 = vsel %vm2108, %v4253, 0
        %v4472 = vsel %vm2108, %v4254, 0
        %v4475 = vsel %vm2108, %v4255, 0
        %v4478 = vsel %vm2108, %v4256, 0
        %v4481 = vsel %vm2108, %v4257, 0
        %v4484 = vsel %vm2108, %v4258, 0
        %v4487 = vsel %vm2108, %v4259, 0
        %v4490 = vsel %vm2108, %v4260, 0
        %v4493 = vsel %vm2108, %v4261, 0
        %v4496 = vsel %vm2108, %v4262, 0
        %v4499 = vsel %vm2108, %v4263, 0
        %v4502 = vsel %vm2108, %v4264, 0
        %v4505 = vsel %vm2108, %v4265, 0
        %v4508 = vsel %vm2108, %v4266, 0
        %v4511 = vsel %vm2108, %v4267, 0
        %v4514 = vsel %vm2108, %v4268, 0
        %v4517 = vsel %vm2108, %v4269, 0
        %v4520 = vsel %vm2108, %v4270, 0
        %v4523 = vsel %vm2108, %v4271, 0
        %v4526 = vsel %vm2108, %v4272, 0
        %v4529 = vsel %vm2108, %v4273, 0
        %v4532 = vsel %vm2108, %v4274, 0
        %v4535 = vsel %vm2108, %v4275, 0
        %v4538 = vsel %vm2108, %v4276, 0
        %v4541 = vsel %vm2108, %v4277, 0
        %v4544 = vsel %vm2108, %v4278, 0
        %v4547 = vsel %vm2108, %v4279, 0
        %v4550 = vsel %vm2108, %v4280, 0
        %v4553 = vsel %vm2108, %v4281, 0
        %v4556 = vsel %vm2108, %v4282, 0
        %v4559 = vsel %vm2108, %v4283, 0
        %v4562 = vsel %vm2108, %v4284, 0
        %v4565 = vsel %vm2108, %v4285, 0
        %v4568 = vsel %vm2108, %v4286, 0
        %v4571 = vsel %vm2108, %v4287, 0
        %v4574 = vsel %vm2108, %v4288, 0
        %v4577 = vsel %vm2108, %v4289, 0
        %v4580 = vsel %vm2108, %v4290, 0
        %v4583 = vsel %vm2108, %v4291, 0
        %v4586 = vsel %vm2108, %v4292, 0
        %v4589 = vsel %vm2108, %v4293, 0
        %v4592 = vsel %vm2108, %v4294, 0
        %v4595 = vsel %vm2108, %v4295, 0
        %v4598 = vsel %vm2108, %v4296, 0
        %v4601 = vsel %vm2108, %v4297, 0
        %v4604 = vsel %vm2108, %v4298, 0
        %v4607 = vsel %vm2108, %v4299, 0
        %v4610 = vsel %vm2108, %v4300, 0
        %v4613 = vsel %vm2108, %v4301, 0
        %v4616 = vsel %vm2108, %v4302, 0
        %v4619 = vsel %vm2108, %v4303, 0
        %v4622 = vsel %vm2108, %v4304, 0
        %v4625 = vsel %vm2108, %v4305, 0
        %v4628 = vsel %vm2108, %v4306, 0
        %v4631 = vsel %vm2108, %v4307, 0
        %v4634 = vsel %vm2108, %v4308, 0
        %v4637 = vsel %vm2108, %v4309, 0
        %v4640 = vsel %vm2108, %v4310, 0
        %v4643 = vsel %vm2108, %v4311, 0
        %v4646 = vsel %vm2108, %v4312, 0
        %v4649 = vsel %vm2108, %v4313, 0
        %v4652 = vsel %vm2108, %v4314, 0
        %v4655 = vsel %vm2108, %v4315, 0
        %v4658 = vsel %vm2108, %v4316, 0
        %v4661 = vsel %vm2108, %v4317, 0
        %v4664 = vsel %vm2108, %v4318, 0
        %v4667 = vsel %vm2108, %v4319, 0
        %v4670 = vsel %vm2108, %v4320, 0
        %v4673 = vsel %vm2108, %v4321, 0
        %v4676 = vsel %vm2108, %v4322, 0
        %v4679 = vsel %vm2108, %v4323, 0
        %v4682 = vsel %vm2108, %v4324, 0
        %v4685 = vsel %vm2108, %v4325, 0
        %v4688 = vsel %vm2108, %v4326, 0
        %v4691 = vsel %vm2108, %v4327, 0
        %v4694 = vsel %vm2108, %v4328, 0
        %v4697 = vsel %vm2108, %v4329, 0
        %v4700 = vsel %vm2108, %v4330, 0
        %v4703 = vsel %vm2108, %v4331, 0
        %v4706 = vsel %vm2108, %v4332, 0
        %v4709 = vsel %vm2108, %v4333, 0
        %v4712 = vsel %vm2108, %v4334, 0
        %v4715 = vsel %vm2108, %v4335, 0
        %v4718 = vsel %vm2108, %v4336, 0
        %v4721 = vsel %vm2108, %v4337, 0
        %v4724 = vsel %vm2108, %v4338, 0
        %v4727 = vsel %vm2108, %v4339, 0
        %v4730 = vsel %vm2108, %v4340, 0
        %v4733 = vsel %vm2108, %v4341, 0
        %v4736 = vsel %vm2108, %v4342, 0
        %4738 = vmatprep.subr.mxu0 0.0
        %4739 = vmatpush1.msra.mxu0 %v4343
        %4740 = vmatprep.subr.mxu0 0.0
        %4741 = vmatpush1.msra.mxu0 %v4344
        %4742 = vmatprep.subr.mxu0 0.0
        %4743 = vmatpush1.msra.mxu0 %v4345
        %4744 = vmatprep.subr.mxu0 0.0
        %4745 = vmatpush1.msra.mxu0 %v4346
        %4746 = vmatprep.subr.mxu0 0.0
        %4747 = vmatpush1.msra.mxu0 0.0
        %4748 = vmatprep.subr.mxu0 0.0
        %4749 = vmatpush1.msra.mxu0 0.0
        %4750 = vmatprep.subr.mxu0 0.0
        %4751 = vmatpush1.msra.mxu0 0.0
        %4752 = vmatprep.subr.mxu0 0.0
        %4753 = vmatpush1.msra.mxu0 0.0
        %4754 = vmatprep.subr.mxu0 0.0
        %4755 = vmatpush1.msra.mxu0 0.0
        %4756 = vmatprep.subr.mxu0 0.0
        %4757 = vmatpush1.msra.mxu0 0.0
        %4758 = vmatprep.subr.mxu0 0.0
        %4759 = vmatpush1.msra.mxu0 0.0
        %4760 = vmatprep.subr.mxu0 0.0
        %4761 = vmatpush1.msra.mxu0 0.0
        %4762 = vmatprep.subr.mxu0 0.0
        %4763 = vmatpush1.msra.mxu0 0.0
        %4764 = vmatprep.subr.mxu0 0.0
        %4765 = vmatpush1.msra.mxu0 0.0
        %4766 = vmatprep.subr.mxu0 0.0
        %4767 = vmatpush1.msra.mxu0 0.0
        %4768 = vmatprep.subr.mxu0 0.0
        %4769 = vmatpush1.msra.mxu0 0.0
        %4770 = vmatprep.subr.mxu0 0.0
        %4771 = vmatpush1.msra.mxu0 0.0
        %4772 = vmatprep.subr.mxu0 0.0
        %4773 = vmatpush1.msra.mxu0 0.0
        %4774 = vmatprep.subr.mxu0 0.0
        %4775 = vmatpush1.msra.mxu0 0.0
        %4776 = vmatprep.subr.mxu0 0.0
        %4777 = vmatpush1.msra.mxu0 0.0
        %4778 = vmatprep.subr.mxu0 0.0
        %4779 = vmatpush1.msra.mxu0 0.0
        %4780 = vmatprep.subr.mxu0 0.0
        %4781 = vmatpush1.msra.mxu0 0.0
        %4782 = vmatprep.subr.mxu0 0.0
        %4783 = vmatpush1.msra.mxu0 0.0
        %4784 = vmatprep.subr.mxu0 0.0
        %4785 = vmatpush1.msra.mxu0 0.0
        %4786 = vmatprep.subr.mxu0 0.0
        %4787 = vmatpush1.msra.mxu0 0.0
        %4788 = vmatprep.subr.mxu0 0.0
        %4789 = vmatpush1.msra.mxu0 0.0
        %4790 = vmatprep.subr.mxu0 0.0
        %4791 = vmatpush1.msra.mxu0 0.0
        %4792 = vmatprep.subr.mxu0 0.0
        %4793 = vmatpush1.msra.mxu0 0.0
        %4794 = vmatprep.subr.mxu0 0.0
        %4795 = vmatpush1.msra.mxu0 0.0
        %4796 = vmatprep.subr.mxu0 0.0
        %4797 = vmatpush1.msra.mxu0 0.0
        %4798 = vmatprep.subr.mxu0 0.0
        %4799 = vmatpush1.msra.mxu0 0.0
        %4800 = vmatprep.subr.mxu0 0.0
        %4801 = vmatpush1.msra.mxu0 0.0
        %4802 = vmatprep.mubr.f32.mxu0 0.0
        %4803 = vmatmul.mubr.f32.gmra.mrb[0].mxu0 %v4355
        %v4804 = vpop.f32.mrb[0].mxu0
        %v4805 = vadd.f32 %v4352, %v4804
        %v4806 = vpop.f32.mrb[0].mxu0
        %4807 = vmatprep.mubr.f32.mxu0 0.0
        %4808 = vmatmul.mubr.f32.gmra.mrb[0].mxu0 %v4358
        %v4809 = vpop.f32.mrb[0].mxu0
        %v4810 = vadd.f32 %v4352, %v4809
        %v4811 = vpop.f32.mrb[0].mxu0
        %4812 = vmatprep.mubr.f32.mxu0 0.0
        %4813 = vmatmul.mubr.f32.gmra.mrb[0].mxu0 %v4361
        %v4814 = vpop.f32.mrb[0].mxu0
        %v4815 = vadd.f32 %v4352, %v4814
        %v4816 = vpop.f32.mrb[0].mxu0
        %4817 = vmatprep.mubr.f32.mxu0 0.0
        %4818 = vmatmul.mubr.f32.gmra.mrb[0].mxu0 %v4364
        %v4819 = vpop.f32.mrb[0].mxu0
        %v4820 = vadd.f32 %v4352, %v4819
        %v4821 = vpop.f32.mrb[0].mxu0
        %4822 = vmatprep.mubr.f32.mxu0 0.0
        %4823 = vmatmul.mubr.f32.gmra.mrb[0].mxu0 %v4367
        %v4824 = vpop.f32.mrb[0].mxu0
        %v4825 = vadd.f32 %v4352, %v4824
        %v4826 = vpop.f32.mrb[0].mxu0
        %4827 = vmatprep.mubr.f32.mxu0 0.0
        %4828 = vmatmul.mubr.f32.gmra.mrb[0].mxu0 %v4370
        %v4829 = vpop.f32.mrb[0].mxu0
        %v4830 = vadd.f32 %v4352, %v4829
        %v4831 = vpop.f32.mrb[0].mxu0
        %4832 = vmatprep.mubr.f32.mxu0 0.0
        %4833 = vmatmul.mubr.f32.gmra.mrb[0].mxu0 %v4373
        %v4834 = vpop.f32.mrb[0].mxu0
        %v4835 = vadd.f32 %v4352, %v4834
        %v4836 = vpop.f32.mrb[0].mxu0
        %4837 = vmatprep.mubr.f32.mxu0 0.0
        %4838 = vmatmul.mubr.f32.gmra.mrb[0].mxu0 %v4376
        %v4839 = vpop.f32.mrb[0].mxu0
        %v4840 = vadd.f32 %v4352, %v4839
        %v4841 = vpop.f32.mrb[0].mxu0
        %4842 = vmatprep.mubr.f32.mxu0 0.0
        %4843 = vmatmul.mubr.f32.gmra.mrb[0].mxu0 %v4379
        %v4844 = vpop.f32.mrb[0].mxu0
        %v4845 = vadd.f32 %v4352, %v4844
        %v4846 = vpop.f32.mrb[0].mxu0
        %4847 = vmatprep.mubr.f32.mxu0 0.0
        %4848 = vmatmul.mubr.f32.gmra.mrb[0].mxu0 %v4382
        %v4849 = vpop.f32.mrb[0].mxu0
        %v4850 = vadd.f32 %v4352, %v4849
        %v4851 = vpop.f32.mrb[0].mxu0
        %4852 = vmatprep.mubr.f32.mxu0 0.0
        %4853 = vmatmul.mubr.f32.gmra.mrb[0].mxu0 %v4385
        %v4854 = vpop.f32.mrb[0].mxu0
        %v4855 = vadd.f32 %v4352, %v4854
        %v4856 = vpop.f32.mrb[0].mxu0
        %4857 = vmatprep.mubr.f32.mxu0 0.0
        %4858 = vmatmul.mubr.f32.gmra.mrb[0].mxu0 %v4388
        %v4859 = vpop.f32.mrb[0].mxu0
        %v4860 = vadd.f32 %v4352, %v4859
        %v4861 = vpop.f32.mrb[0].mxu0
        %4862 = vmatprep.mubr.f32.mxu0 0.0
        %4863 = vmatmul.mubr.f32.gmra.mrb[0].mxu0 %v4391
        %v4864 = vpop.f32.mrb[0].mxu0
        %v4865 = vadd.f32 %v4352, %v4864
        %v4866 = vpop.f32.mrb[0].mxu0
        %4867 = vmatprep.mubr.f32.mxu0 0.0
        %4868 = vmatmul.mubr.f32.gmra.mrb[0].mxu0 %v4394
        %v4869 = vpop.f32.mrb[0].mxu0
        %v4870 = vadd.f32 %v4352, %v4869
        %v4871 = vpop.f32.mrb[0].mxu0
        %4872 = vmatprep.mubr.f32.mxu0 0.0
        %4873 = vmatmul.mubr.f32.gmra.mrb[0].mxu0 %v4397
        %v4874 = vpop.f32.mrb[0].mxu0
        %v4875 = vadd.f32 %v4352, %v4874
        %v4876 = vpop.f32.mrb[0].mxu0
        %4877 = vmatprep.mubr.f32.mxu0 0.0
        %4878 = vmatmul.mubr.f32.gmra.mrb[0].mxu0 %v4400
        %v4879 = vpop.f32.mrb[0].mxu0
        %v4880 = vadd.f32 %v4352, %v4879
        %v4881 = vpop.f32.mrb[0].mxu0
        %4882 = vmatprep.mubr.f32.mxu0 0.0
        %4883 = vmatmul.mubr.f32.gmra.mrb[0].mxu0 %v4403
        %v4884 = vpop.f32.mrb[0].mxu0
        %v4885 = vadd.f32 %v4352, %v4884
        %v4886 = vpop.f32.mrb[0].mxu0
        %4887 = vmatprep.mubr.f32.mxu0 0.0
        %4888 = vmatmul.mubr.f32.gmra.mrb[0].mxu0 %v4406
        %v4889 = vpop.f32.mrb[0].mxu0
        %v4890 = vadd.f32 %v4352, %v4889
        %v4891 = vpop.f32.mrb[0].mxu0
        %4892 = vmatprep.mubr.f32.mxu0 0.0
        %4893 = vmatmul.mubr.f32.gmra.mrb[0].mxu0 %v4409
        %v4894 = vpop.f32.mrb[0].mxu0
        %v4895 = vadd.f32 %v4352, %v4894
        %v4896 = vpop.f32.mrb[0].mxu0
        %4897 = vmatprep.mubr.f32.mxu0 0.0
        %4898 = vmatmul.mubr.f32.gmra.mrb[0].mxu0 %v4412
        %v4899 = vpop.f32.mrb[0].mxu0
        %v4900 = vadd.f32 %v4352, %v4899
        %v4901 = vpop.f32.mrb[0].mxu0
        %4902 = vmatprep.mubr.f32.mxu0 0.0
        %4903 = vmatmul.mubr.f32.gmra.mrb[0].mxu0 %v4415
        %v4904 = vpop.f32.mrb[0].mxu0
        %v4905 = vadd.f32 %v4352, %v4904
        %v4906 = vpop.f32.mrb[0].mxu0
        %4907 = vmatprep.mubr.f32.mxu0 0.0
        %4908 = vmatmul.mubr.f32.gmra.mrb[0].mxu0 %v4418
        %v4909 = vpop.f32.mrb[0].mxu0
        %v4910 = vadd.f32 %v4352, %v4909
        %v4911 = vpop.f32.mrb[0].mxu0
        %4912 = vmatprep.mubr.f32.mxu0 0.0
        %4913 = vmatmul.mubr.f32.gmra.mrb[0].mxu0 %v4421
        %v4914 = vpop.f32.mrb[0].mxu0
        %v4915 = vadd.f32 %v4352, %v4914
        %v4916 = vpop.f32.mrb[0].mxu0
        %4917 = vmatprep.mubr.f32.mxu0 0.0
        %4918 = vmatmul.mubr.f32.gmra.mrb[0].mxu0 %v4424
        %v4919 = vpop.f32.mrb[0].mxu0
        %v4920 = vadd.f32 %v4352, %v4919
        %v4921 = vpop.f32.mrb[0].mxu0
        %4922 = vmatprep.mubr.f32.mxu0 0.0
        %4923 = vmatmul.mubr.f32.gmra.mrb[0].mxu0 %v4427
        %v4924 = vpop.f32.mrb[0].mxu0
        %v4925 = vadd.f32 %v4352, %v4924
        %v4926 = vpop.f32.mrb[0].mxu0
        %4927 = vmatprep.mubr.f32.mxu0 0.0
        %4928 = vmatmul.mubr.f32.gmra.mrb[0].mxu0 %v4430
        %v4929 = vpop.f32.mrb[0].mxu0
        %v4930 = vadd.f32 %v4352, %v4929
        %v4931 = vpop.f32.mrb[0].mxu0
        %4932 = vmatprep.mubr.f32.mxu0 0.0
        %4933 = vmatmul.mubr.f32.gmra.mrb[0].mxu0 %v4433
        %v4934 = vpop.f32.mrb[0].mxu0
        %v4935 = vadd.f32 %v4352, %v4934
        %v4936 = vpop.f32.mrb[0].mxu0
        %4937 = vmatprep.mubr.f32.mxu0 0.0
        %4938 = vmatmul.mubr.f32.gmra.mrb[0].mxu0 %v4436
        %v4939 = vpop.f32.mrb[0].mxu0
        %v4940 = vadd.f32 %v4352, %v4939
        %v4941 = vpop.f32.mrb[0].mxu0
        %4942 = vmatprep.mubr.f32.mxu0 0.0
        %4943 = vmatmul.mubr.f32.gmra.mrb[0].mxu0 %v4439
        %v4944 = vpop.f32.mrb[0].mxu0
        %v4945 = vadd.f32 %v4352, %v4944
        %v4946 = vpop.f32.mrb[0].mxu0
        %4947 = vmatprep.mubr.f32.mxu0 0.0
        %4948 = vmatmul.mubr.f32.gmra.mrb[0].mxu0 %v4442
        %v4949 = vpop.f32.mrb[0].mxu0
        %v4950 = vadd.f32 %v4352, %v4949
        %v4951 = vpop.f32.mrb[0].mxu0
        %4952 = vmatprep.mubr.f32.mxu0 0.0
        %4953 = vmatmul.mubr.f32.gmra.mrb[0].mxu0 %v4445
        %v4954 = vpop.f32.mrb[0].mxu0
        %v4955 = vadd.f32 %v4352, %v4954
        %v4956 = vpop.f32.mrb[0].mxu0
        %4957 = vmatprep.mubr.f32.mxu0 0.0
        %4958 = vmatmul.mubr.f32.gmra.mrb[0].mxu0 %v4448
        %v4959 = vpop.f32.mrb[0].mxu0
        %v4960 = vadd.f32 %v4352, %v4959
        %v4961 = vpop.f32.mrb[0].mxu0
        %4962 = vmatprep.mubr.f32.mxu0 0.0
        %4963 = vmatmul.mubr.f32.gmra.mrb[0].mxu0 %v4451
        %v4964 = vpop.f32.mrb[0].mxu0
        %v4965 = vadd.f32 %v4352, %v4964
        %v4966 = vpop.f32.mrb[0].mxu0
        %4967 = vmatprep.mubr.f32.mxu0 0.0
        %4968 = vmatmul.mubr.f32.gmra.mrb[0].mxu0 %v4454
        %v4969 = vpop.f32.mrb[0].mxu0
        %v4970 = vadd.f32 %v4352, %v4969
        %v4971 = vpop.f32.mrb[0].mxu0
        %4972 = vmatprep.mubr.f32.mxu0 0.0
        %4973 = vmatmul.mubr.f32.gmra.mrb[0].mxu0 %v4457
        %v4974 = vpop.f32.mrb[0].mxu0
        %v4975 = vadd.f32 %v4352, %v4974
        %v4976 = vpop.f32.mrb[0].mxu0
        %4977 = vmatprep.mubr.f32.mxu0 0.0
        %4978 = vmatmul.mubr.f32.gmra.mrb[0].mxu0 %v4460
        %v4979 = vpop.f32.mrb[0].mxu0
        %v4980 = vadd.f32 %v4352, %v4979
        %v4981 = vpop.f32.mrb[0].mxu0
        %4982 = vmatprep.mubr.f32.mxu0 0.0
        %4983 = vmatmul.mubr.f32.gmra.mrb[0].mxu0 %v4463
        %v4984 = vpop.f32.mrb[0].mxu0
        %v4985 = vadd.f32 %v4352, %v4984
        %v4986 = vpop.f32.mrb[0].mxu0
        %4987 = vmatprep.mubr.f32.mxu0 0.0
        %4988 = vmatmul.mubr.f32.gmra.mrb[0].mxu0 %v4466
        %v4989 = vpop.f32.mrb[0].mxu0
        %v4990 = vadd.f32 %v4352, %v4989
        %v4991 = vpop.f32.mrb[0].mxu0
        %4992 = vmatprep.mubr.f32.mxu0 0.0
        %4993 = vmatmul.mubr.f32.gmra.mrb[0].mxu0 %v4469
        %v4994 = vpop.f32.mrb[0].mxu0
        %v4995 = vadd.f32 %v4352, %v4994
        %v4996 = vpop.f32.mrb[0].mxu0
        %4997 = vmatprep.mubr.f32.mxu0 0.0
        %4998 = vmatmul.mubr.f32.gmra.mrb[0].mxu0 %v4472
        %v4999 = vpop.f32.mrb[0].mxu0
        %v5000 = vadd.f32 %v4352, %v4999
        %v5001 = vpop.f32.mrb[0].mxu0
        %5002 = vmatprep.mubr.f32.mxu0 0.0
        %5003 = vmatmul.mubr.f32.gmra.mrb[0].mxu0 %v4475
        %v5004 = vpop.f32.mrb[0].mxu0
        %v5005 = vadd.f32 %v4352, %v5004
        %v5006 = vpop.f32.mrb[0].mxu0
        %5007 = vmatprep.mubr.f32.mxu0 0.0
        %5008 = vmatmul.mubr.f32.gmra.mrb[0].mxu0 %v4478
        %v5009 = vpop.f32.mrb[0].mxu0
        %v5010 = vadd.f32 %v4352, %v5009
        %v5011 = vpop.f32.mrb[0].mxu0
        %5012 = vmatprep.mubr.f32.mxu0 0.0
        %5013 = vmatmul.mubr.f32.gmra.mrb[0].mxu0 %v4481
        %v5014 = vpop.f32.mrb[0].mxu0
        %v5015 = vadd.f32 %v4352, %v5014
        %v5016 = vpop.f32.mrb[0].mxu0
        %5017 = vmatprep.mubr.f32.mxu0 0.0
        %5018 = vmatmul.mubr.f32.gmra.mrb[0].mxu0 %v4484
        %v5019 = vpop.f32.mrb[0].mxu0
        %v5020 = vadd.f32 %v4352, %v5019
        %v5021 = vpop.f32.mrb[0].mxu0
        %5022 = vmatprep.mubr.f32.mxu0 0.0
        %5023 = vmatmul.mubr.f32.gmra.mrb[0].mxu0 %v4487
        %v5024 = vpop.f32.mrb[0].mxu0
        %v5025 = vadd.f32 %v4352, %v5024
        %v5026 = vpop.f32.mrb[0].mxu0
        %5027 = vmatprep.mubr.f32.mxu0 0.0
        %5028 = vmatmul.mubr.f32.gmra.mrb[0].mxu0 %v4490
        %v5029 = vpop.f32.mrb[0].mxu0
        %v5030 = vadd.f32 %v4352, %v5029
        %v5031 = vpop.f32.mrb[0].mxu0
        %5032 = vmatprep.mubr.f32.mxu0 0.0
        %5033 = vmatmul.mubr.f32.gmra.mrb[0].mxu0 %v4493
        %v5034 = vpop.f32.mrb[0].mxu0
        %v5035 = vadd.f32 %v4352, %v5034
        %v5036 = vpop.f32.mrb[0].mxu0
        %5037 = vmatprep.mubr.f32.mxu0 0.0
        %5038 = vmatmul.mubr.f32.gmra.mrb[0].mxu0 %v4496
        %v5039 = vpop.f32.mrb[0].mxu0
        %v5040 = vadd.f32 %v4352, %v5039
        %v5041 = vpop.f32.mrb[0].mxu0
        %5042 = vmatprep.mubr.f32.mxu0 0.0
        %5043 = vmatmul.mubr.f32.gmra.mrb[0].mxu0 %v4499
        %v5044 = vpop.f32.mrb[0].mxu0
        %v5045 = vadd.f32 %v4352, %v5044
        %v5046 = vpop.f32.mrb[0].mxu0
        %5047 = vmatprep.mubr.f32.mxu0 0.0
        %5048 = vmatmul.mubr.f32.gmra.mrb[0].mxu0 %v4502
        %v5049 = vpop.f32.mrb[0].mxu0
        %v5050 = vadd.f32 %v4352, %v5049
        %v5051 = vpop.f32.mrb[0].mxu0
        %5052 = vmatprep.mubr.f32.mxu0 0.0
        %5053 = vmatmul.mubr.f32.gmra.mrb[0].mxu0 %v4505
        %v5054 = vpop.f32.mrb[0].mxu0
        %v5055 = vadd.f32 %v4352, %v5054
        %v5056 = vpop.f32.mrb[0].mxu0
        %5057 = vmatprep.mubr.f32.mxu0 0.0
        %5058 = vmatmul.mubr.f32.gmra.mrb[0].mxu0 %v4508
        %v5059 = vpop.f32.mrb[0].mxu0
        %v5060 = vadd.f32 %v4352, %v5059
        %v5061 = vpop.f32.mrb[0].mxu0
        %5062 = vmatprep.mubr.f32.mxu0 0.0
        %5063 = vmatmul.mubr.f32.gmra.mrb[0].mxu0 %v4511
        %v5064 = vpop.f32.mrb[0].mxu0
        %v5065 = vadd.f32 %v4352, %v5064
        %v5066 = vpop.f32.mrb[0].mxu0
        %5067 = vmatprep.mubr.f32.mxu0 0.0
        %5068 = vmatmul.mubr.f32.gmra.mrb[0].mxu0 %v4514
        %v5069 = vpop.f32.mrb[0].mxu0
        %v5070 = vadd.f32 %v4352, %v5069
        %v5071 = vpop.f32.mrb[0].mxu0
        %5072 = vmatprep.mubr.f32.mxu0 0.0
        %5073 = vmatmul.mubr.f32.gmra.mrb[0].mxu0 %v4517
        %v5074 = vpop.f32.mrb[0].mxu0
        %v5075 = vadd.f32 %v4352, %v5074
        %v5076 = vpop.f32.mrb[0].mxu0
        %5077 = vmatprep.mubr.f32.mxu0 0.0
        %5078 = vmatmul.mubr.f32.gmra.mrb[0].mxu0 %v4520
        %v5079 = vpop.f32.mrb[0].mxu0
        %v5080 = vadd.f32 %v4352, %v5079
        %v5081 = vpop.f32.mrb[0].mxu0
        %5082 = vmatprep.mubr.f32.mxu0 0.0
        %5083 = vmatmul.mubr.f32.gmra.mrb[0].mxu0 %v4523
        %v5084 = vpop.f32.mrb[0].mxu0
        %v5085 = vadd.f32 %v4352, %v5084
        %v5086 = vpop.f32.mrb[0].mxu0
        %5087 = vmatprep.mubr.f32.mxu0 0.0
        %5088 = vmatmul.mubr.f32.gmra.mrb[0].mxu0 %v4526
        %v5089 = vpop.f32.mrb[0].mxu0
        %v5090 = vadd.f32 %v4352, %v5089
        %v5091 = vpop.f32.mrb[0].mxu0
        %5092 = vmatprep.mubr.f32.mxu0 0.0
        %5093 = vmatmul.mubr.f32.gmra.mrb[0].mxu0 %v4529
        %v5094 = vpop.f32.mrb[0].mxu0
        %v5095 = vadd.f32 %v4352, %v5094
        %v5096 = vpop.f32.mrb[0].mxu0
        %5097 = vmatprep.mubr.f32.mxu0 0.0
        %5098 = vmatmul.mubr.f32.gmra.mrb[0].mxu0 %v4532
        %v5099 = vpop.f32.mrb[0].mxu0
        %v5100 = vadd.f32 %v4352, %v5099
        %v5101 = vpop.f32.mrb[0].mxu0
        %5102 = vmatprep.mubr.f32.mxu0 0.0
        %5103 = vmatmul.mubr.f32.gmra.mrb[0].mxu0 %v4535
        %v5104 = vpop.f32.mrb[0].mxu0
        %v5105 = vadd.f32 %v4352, %v5104
        %v5106 = vpop.f32.mrb[0].mxu0
        %5107 = vmatprep.mubr.f32.mxu0 0.0
        %5108 = vmatmul.mubr.f32.gmra.mrb[0].mxu0 %v4538
        %v5109 = vpop.f32.mrb[0].mxu0
        %v5110 = vadd.f32 %v4352, %v5109
        %v5111 = vpop.f32.mrb[0].mxu0
        %5112 = vmatprep.mubr.f32.mxu0 0.0
        %5113 = vmatmul.mubr.f32.gmra.mrb[0].mxu0 %v4541
        %v5114 = vpop.f32.mrb[0].mxu0
        %v5115 = vadd.f32 %v4352, %v5114
        %v5116 = vpop.f32.mrb[0].mxu0
        %5117 = vmatprep.mubr.f32.mxu0 0.0
        %5118 = vmatmul.mubr.f32.gmra.mrb[0].mxu0 %v4544
        %v5119 = vpop.f32.mrb[0].mxu0
        %v5120 = vadd.f32 %v4352, %v5119
        %v5121 = vpop.f32.mrb[0].mxu0
        %5122 = vmatprep.mubr.f32.mxu0 0.0
        %5123 = vmatmul.mubr.f32.gmra.mrb[0].mxu0 %v4547
        %v5124 = vpop.f32.mrb[0].mxu0
        %v5125 = vadd.f32 %v4352, %v5124
        %v5126 = vpop.f32.mrb[0].mxu0
        %5127 = vmatprep.mubr.f32.mxu0 0.0
        %5128 = vmatmul.mubr.f32.gmra.mrb[0].mxu0 %v4550
        %v5129 = vpop.f32.mrb[0].mxu0
        %v5130 = vadd.f32 %v4352, %v5129
        %v5131 = vpop.f32.mrb[0].mxu0
        %5132 = vmatprep.mubr.f32.mxu0 0.0
        %5133 = vmatmul.mubr.f32.gmra.mrb[0].mxu0 %v4553
        %v5134 = vpop.f32.mrb[0].mxu0
        %v5135 = vadd.f32 %v4352, %v5134
        %v5136 = vpop.f32.mrb[0].mxu0
        %5137 = vmatprep.mubr.f32.mxu0 0.0
        %5138 = vmatmul.mubr.f32.gmra.mrb[0].mxu0 %v4556
        %v5139 = vpop.f32.mrb[0].mxu0
        %v5140 = vadd.f32 %v4352, %v5139
        %v5141 = vpop.f32.mrb[0].mxu0
        %5142 = vmatprep.mubr.f32.mxu0 0.0
        %5143 = vmatmul.mubr.f32.gmra.mrb[0].mxu0 %v4559
        %v5144 = vpop.f32.mrb[0].mxu0
        %v5145 = vadd.f32 %v4352, %v5144
        %v5146 = vpop.f32.mrb[0].mxu0
        %5147 = vmatprep.mubr.f32.mxu0 0.0
        %5148 = vmatmul.mubr.f32.gmra.mrb[0].mxu0 %v4562
        %v5149 = vpop.f32.mrb[0].mxu0
        %v5150 = vadd.f32 %v4352, %v5149
        %v5151 = vpop.f32.mrb[0].mxu0
        %5152 = vmatprep.mubr.f32.mxu0 0.0
        %5153 = vmatmul.mubr.f32.gmra.mrb[0].mxu0 %v4565
        %v5154 = vpop.f32.mrb[0].mxu0
        %v5155 = vadd.f32 %v4352, %v5154
        %v5156 = vpop.f32.mrb[0].mxu0
        %5157 = vmatprep.mubr.f32.mxu0 0.0
        %5158 = vmatmul.mubr.f32.gmra.mrb[0].mxu0 %v4568
        %v5159 = vpop.f32.mrb[0].mxu0
        %v5160 = vadd.f32 %v4352, %v5159
        %v5161 = vpop.f32.mrb[0].mxu0
        %5162 = vmatprep.mubr.f32.mxu0 0.0
        %5163 = vmatmul.mubr.f32.gmra.mrb[0].mxu0 %v4571
        %v5164 = vpop.f32.mrb[0].mxu0
        %v5165 = vadd.f32 %v4352, %v5164
        %v5166 = vpop.f32.mrb[0].mxu0
        %5167 = vmatprep.mubr.f32.mxu0 0.0
        %5168 = vmatmul.mubr.f32.gmra.mrb[0].mxu0 %v4574
        %v5169 = vpop.f32.mrb[0].mxu0
        %v5170 = vadd.f32 %v4352, %v5169
        %v5171 = vpop.f32.mrb[0].mxu0
        %5172 = vmatprep.mubr.f32.mxu0 0.0
        %5173 = vmatmul.mubr.f32.gmra.mrb[0].mxu0 %v4577
        %v5174 = vpop.f32.mrb[0].mxu0
        %v5175 = vadd.f32 %v4352, %v5174
        %v5176 = vpop.f32.mrb[0].mxu0
        %5177 = vmatprep.mubr.f32.mxu0 0.0
        %5178 = vmatmul.mubr.f32.gmra.mrb[0].mxu0 %v4580
        %v5179 = vpop.f32.mrb[0].mxu0
        %v5180 = vadd.f32 %v4352, %v5179
        %v5181 = vpop.f32.mrb[0].mxu0
        %5182 = vmatprep.mubr.f32.mxu0 0.0
        %5183 = vmatmul.mubr.f32.gmra.mrb[0].mxu0 %v4583
        %v5184 = vpop.f32.mrb[0].mxu0
        %v5185 = vadd.f32 %v4352, %v5184
        %v5186 = vpop.f32.mrb[0].mxu0
        %5187 = vmatprep.mubr.f32.mxu0 0.0
        %5188 = vmatmul.mubr.f32.gmra.mrb[0].mxu0 %v4586
        %v5189 = vpop.f32.mrb[0].mxu0
        %v5190 = vadd.f32 %v4352, %v5189
        %v5191 = vpop.f32.mrb[0].mxu0
        %5192 = vmatprep.mubr.f32.mxu0 0.0
        %5193 = vmatmul.mubr.f32.gmra.mrb[0].mxu0 %v4589
        %v5194 = vpop.f32.mrb[0].mxu0
        %v5195 = vadd.f32 %v4352, %v5194
        %v5196 = vpop.f32.mrb[0].mxu0
        %5197 = vmatprep.mubr.f32.mxu0 0.0
        %5198 = vmatmul.mubr.f32.gmra.mrb[0].mxu0 %v4592
        %v5199 = vpop.f32.mrb[0].mxu0
        %v5200 = vadd.f32 %v4352, %v5199
        %v5201 = vpop.f32.mrb[0].mxu0
        %5202 = vmatprep.mubr.f32.mxu0 0.0
        %5203 = vmatmul.mubr.f32.gmra.mrb[0].mxu0 %v4595
        %v5204 = vpop.f32.mrb[0].mxu0
        %v5205 = vadd.f32 %v4352, %v5204
        %v5206 = vpop.f32.mrb[0].mxu0
        %5207 = vmatprep.mubr.f32.mxu0 0.0
        %5208 = vmatmul.mubr.f32.gmra.mrb[0].mxu0 %v4598
        %v5209 = vpop.f32.mrb[0].mxu0
        %v5210 = vadd.f32 %v4352, %v5209
        %v5211 = vpop.f32.mrb[0].mxu0
        %5212 = vmatprep.mubr.f32.mxu0 0.0
        %5213 = vmatmul.mubr.f32.gmra.mrb[0].mxu0 %v4601
        %v5214 = vpop.f32.mrb[0].mxu0
        %v5215 = vadd.f32 %v4352, %v5214
        %v5216 = vpop.f32.mrb[0].mxu0
        %5217 = vmatprep.mubr.f32.mxu0 0.0
        %5218 = vmatmul.mubr.f32.gmra.mrb[0].mxu0 %v4604
        %v5219 = vpop.f32.mrb[0].mxu0
        %v5220 = vadd.f32 %v4352, %v5219
        %v5221 = vpop.f32.mrb[0].mxu0
        %5222 = vmatprep.mubr.f32.mxu0 0.0
        %5223 = vmatmul.mubr.f32.gmra.mrb[0].mxu0 %v4607
        %v5224 = vpop.f32.mrb[0].mxu0
        %v5225 = vadd.f32 %v4352, %v5224
        %v5226 = vpop.f32.mrb[0].mxu0
        %5227 = vmatprep.mubr.f32.mxu0 0.0
        %5228 = vmatmul.mubr.f32.gmra.mrb[0].mxu0 %v4610
        %v5229 = vpop.f32.mrb[0].mxu0
        %v5230 = vadd.f32 %v4352, %v5229
        %v5231 = vpop.f32.mrb[0].mxu0
        %5232 = vmatprep.mubr.f32.mxu0 0.0
        %5233 = vmatmul.mubr.f32.gmra.mrb[0].mxu0 %v4613
        %v5234 = vpop.f32.mrb[0].mxu0
        %v5235 = vadd.f32 %v4352, %v5234
        %v5236 = vpop.f32.mrb[0].mxu0
        %5237 = vmatprep.mubr.f32.mxu0 0.0
        %5238 = vmatmul.mubr.f32.gmra.mrb[0].mxu0 %v4616
        %v5239 = vpop.f32.mrb[0].mxu0
        %v5240 = vadd.f32 %v4352, %v5239
        %v5241 = vpop.f32.mrb[0].mxu0
        %5242 = vmatprep.mubr.f32.mxu0 0.0
        %5243 = vmatmul.mubr.f32.gmra.mrb[0].mxu0 %v4619
        %v5244 = vpop.f32.mrb[0].mxu0
        %v5245 = vadd.f32 %v4352, %v5244
        %v5246 = vpop.f32.mrb[0].mxu0
        %5247 = vmatprep.mubr.f32.mxu0 0.0
        %5248 = vmatmul.mubr.f32.gmra.mrb[0].mxu0 %v4622
        %v5249 = vpop.f32.mrb[0].mxu0
        %v5250 = vadd.f32 %v4352, %v5249
        %v5251 = vpop.f32.mrb[0].mxu0
        %5252 = vmatprep.mubr.f32.mxu0 0.0
        %5253 = vmatmul.mubr.f32.gmra.mrb[0].mxu0 %v4625
        %v5254 = vpop.f32.mrb[0].mxu0
        %v5255 = vadd.f32 %v4352, %v5254
        %v5256 = vpop.f32.mrb[0].mxu0
        %5257 = vmatprep.mubr.f32.mxu0 0.0
        %5258 = vmatmul.mubr.f32.gmra.mrb[0].mxu0 %v4628
        %v5259 = vpop.f32.mrb[0].mxu0
        %v5260 = vadd.f32 %v4352, %v5259
        %v5261 = vpop.f32.mrb[0].mxu0
        %5262 = vmatprep.mubr.f32.mxu0 0.0
        %5263 = vmatmul.mubr.f32.gmra.mrb[0].mxu0 %v4631
        %v5264 = vpop.f32.mrb[0].mxu0
        %v5265 = vadd.f32 %v4352, %v5264
        %v5266 = vpop.f32.mrb[0].mxu0
        %5267 = vmatprep.mubr.f32.mxu0 0.0
        %5268 = vmatmul.mubr.f32.gmra.mrb[0].mxu0 %v4634
        %v5269 = vpop.f32.mrb[0].mxu0
        %v5270 = vadd.f32 %v4352, %v5269
        %v5271 = vpop.f32.mrb[0].mxu0
        %5272 = vmatprep.mubr.f32.mxu0 0.0
        %5273 = vmatmul.mubr.f32.gmra.mrb[0].mxu0 %v4637
        %v5274 = vpop.f32.mrb[0].mxu0
        %v5275 = vadd.f32 %v4352, %v5274
        %v5276 = vpop.f32.mrb[0].mxu0
        %5277 = vmatprep.mubr.f32.mxu0 0.0
        %5278 = vmatmul.mubr.f32.gmra.mrb[0].mxu0 %v4640
        %v5279 = vpop.f32.mrb[0].mxu0
        %v5280 = vadd.f32 %v4352, %v5279
        %v5281 = vpop.f32.mrb[0].mxu0
        %5282 = vmatprep.mubr.f32.mxu0 0.0
        %5283 = vmatmul.mubr.f32.gmra.mrb[0].mxu0 %v4643
        %v5284 = vpop.f32.mrb[0].mxu0
        %v5285 = vadd.f32 %v4352, %v5284
        %v5286 = vpop.f32.mrb[0].mxu0
        %5287 = vmatprep.mubr.f32.mxu0 0.0
        %5288 = vmatmul.mubr.f32.gmra.mrb[0].mxu0 %v4646
        %v5289 = vpop.f32.mrb[0].mxu0
        %v5290 = vadd.f32 %v4352, %v5289
        %v5291 = vpop.f32.mrb[0].mxu0
        %5292 = vmatprep.mubr.f32.mxu0 0.0
        %5293 = vmatmul.mubr.f32.gmra.mrb[0].mxu0 %v4649
        %v5294 = vpop.f32.mrb[0].mxu0
        %v5295 = vadd.f32 %v4352, %v5294
        %v5296 = vpop.f32.mrb[0].mxu0
        %5297 = vmatprep.mubr.f32.mxu0 0.0
        %5298 = vmatmul.mubr.f32.gmra.mrb[0].mxu0 %v4652
        %v5299 = vpop.f32.mrb[0].mxu0
        %v5300 = vadd.f32 %v4352, %v5299
        %v5301 = vpop.f32.mrb[0].mxu0
        %5302 = vmatprep.mubr.f32.mxu0 0.0
        %5303 = vmatmul.mubr.f32.gmra.mrb[0].mxu0 %v4655
        %v5304 = vpop.f32.mrb[0].mxu0
        %v5305 = vadd.f32 %v4352, %v5304
        %v5306 = vpop.f32.mrb[0].mxu0
        %5307 = vmatprep.mubr.f32.mxu0 0.0
        %5308 = vmatmul.mubr.f32.gmra.mrb[0].mxu0 %v4658
        %v5309 = vpop.f32.mrb[0].mxu0
        %v5310 = vadd.f32 %v4352, %v5309
        %v5311 = vpop.f32.mrb[0].mxu0
        %5312 = vmatprep.mubr.f32.mxu0 0.0
        %5313 = vmatmul.mubr.f32.gmra.mrb[0].mxu0 %v4661
        %v5314 = vpop.f32.mrb[0].mxu0
        %v5315 = vadd.f32 %v4352, %v5314
        %v5316 = vpop.f32.mrb[0].mxu0
        %5317 = vmatprep.mubr.f32.mxu0 0.0
        %5318 = vmatmul.mubr.f32.gmra.mrb[0].mxu0 %v4664
        %v5319 = vpop.f32.mrb[0].mxu0
        %v5320 = vadd.f32 %v4352, %v5319
        %v5321 = vpop.f32.mrb[0].mxu0
        %5322 = vmatprep.mubr.f32.mxu0 0.0
        %5323 = vmatmul.mubr.f32.gmra.mrb[0].mxu0 %v4667
        %v5324 = vpop.f32.mrb[0].mxu0
        %v5325 = vadd.f32 %v4352, %v5324
        %v5326 = vpop.f32.mrb[0].mxu0
        %5327 = vmatprep.mubr.f32.mxu0 0.0
        %5328 = vmatmul.mubr.f32.gmra.mrb[0].mxu0 %v4670
        %v5329 = vpop.f32.mrb[0].mxu0
        %v5330 = vadd.f32 %v4352, %v5329
        %v5331 = vpop.f32.mrb[0].mxu0
        %5332 = vmatprep.mubr.f32.mxu0 0.0
        %5333 = vmatmul.mubr.f32.gmra.mrb[0].mxu0 %v4673
        %v5334 = vpop.f32.mrb[0].mxu0
        %v5335 = vadd.f32 %v4352, %v5334
        %v5336 = vpop.f32.mrb[0].mxu0
        %5337 = vmatprep.mubr.f32.mxu0 0.0
        %5338 = vmatmul.mubr.f32.gmra.mrb[0].mxu0 %v4676
        %v5339 = vpop.f32.mrb[0].mxu0
        %v5340 = vadd.f32 %v4352, %v5339
        %v5341 = vpop.f32.mrb[0].mxu0
        %5342 = vmatprep.mubr.f32.mxu0 0.0
        %5343 = vmatmul.mubr.f32.gmra.mrb[0].mxu0 %v4679
        %v5344 = vpop.f32.mrb[0].mxu0
        %v5345 = vadd.f32 %v4352, %v5344
        %v5346 = vpop.f32.mrb[0].mxu0
        %5347 = vmatprep.mubr.f32.mxu0 0.0
        %5348 = vmatmul.mubr.f32.gmra.mrb[0].mxu0 %v4682
        %v5349 = vpop.f32.mrb[0].mxu0
        %v5350 = vadd.f32 %v4352, %v5349
        %v5351 = vpop.f32.mrb[0].mxu0
        %5352 = vmatprep.mubr.f32.mxu0 0.0
        %5353 = vmatmul.mubr.f32.gmra.mrb[0].mxu0 %v4685
        %v5354 = vpop.f32.mrb[0].mxu0
        %v5355 = vadd.f32 %v4352, %v5354
        %v5356 = vpop.f32.mrb[0].mxu0
        %5357 = vmatprep.mubr.f32.mxu0 0.0
        %5358 = vmatmul.mubr.f32.gmra.mrb[0].mxu0 %v4688
        %v5359 = vpop.f32.mrb[0].mxu0
        %v5360 = vadd.f32 %v4352, %v5359
        %v5361 = vpop.f32.mrb[0].mxu0
        %5362 = vmatprep.mubr.f32.mxu0 0.0
        %5363 = vmatmul.mubr.f32.gmra.mrb[0].mxu0 %v4691
        %v5364 = vpop.f32.mrb[0].mxu0
        %v5365 = vadd.f32 %v4352, %v5364
        %v5366 = vpop.f32.mrb[0].mxu0
        %5367 = vmatprep.mubr.f32.mxu0 0.0
        %5368 = vmatmul.mubr.f32.gmra.mrb[0].mxu0 %v4694
        %v5369 = vpop.f32.mrb[0].mxu0
        %v5370 = vadd.f32 %v4352, %v5369
        %v5371 = vpop.f32.mrb[0].mxu0
        %5372 = vmatprep.mubr.f32.mxu0 0.0
        %5373 = vmatmul.mubr.f32.gmra.mrb[0].mxu0 %v4697
        %v5374 = vpop.f32.mrb[0].mxu0
        %v5375 = vadd.f32 %v4352, %v5374
        %v5376 = vpop.f32.mrb[0].mxu0
        %5377 = vmatprep.mubr.f32.mxu0 0.0
        %5378 = vmatmul.mubr.f32.gmra.mrb[0].mxu0 %v4700
        %v5379 = vpop.f32.mrb[0].mxu0
        %v5380 = vadd.f32 %v4352, %v5379
        %v5381 = vpop.f32.mrb[0].mxu0
        %5382 = vmatprep.mubr.f32.mxu0 0.0
        %5383 = vmatmul.mubr.f32.gmra.mrb[0].mxu0 %v4703
        %v5384 = vpop.f32.mrb[0].mxu0
        %v5385 = vadd.f32 %v4352, %v5384
        %v5386 = vpop.f32.mrb[0].mxu0
        %5387 = vmatprep.mubr.f32.mxu0 0.0
        %5388 = vmatmul.mubr.f32.gmra.mrb[0].mxu0 %v4706
        %v5389 = vpop.f32.mrb[0].mxu0
        %v5390 = vadd.f32 %v4352, %v5389
        %v5391 = vpop.f32.mrb[0].mxu0
        %5392 = vmatprep.mubr.f32.mxu0 0.0
        %5393 = vmatmul.mubr.f32.gmra.mrb[0].mxu0 %v4709
        %v5394 = vpop.f32.mrb[0].mxu0
        %v5395 = vadd.f32 %v4352, %v5394
        %v5396 = vpop.f32.mrb[0].mxu0
        %5397 = vmatprep.mubr.f32.mxu0 0.0
        %5398 = vmatmul.mubr.f32.gmra.mrb[0].mxu0 %v4712
        %v5399 = vpop.f32.mrb[0].mxu0
        %v5400 = vadd.f32 %v4352, %v5399
        %v5401 = vpop.f32.mrb[0].mxu0
        %5402 = vmatprep.mubr.f32.mxu0 0.0
        %5403 = vmatmul.mubr.f32.gmra.mrb[0].mxu0 %v4715
        %v5404 = vpop.f32.mrb[0].mxu0
        %v5405 = vadd.f32 %v4352, %v5404
        %v5406 = vpop.f32.mrb[0].mxu0
        %5407 = vmatprep.mubr.f32.mxu0 0.0
        %5408 = vmatmul.mubr.f32.gmra.mrb[0].mxu0 %v4718
        %v5409 = vpop.f32.mrb[0].mxu0
        %v5410 = vadd.f32 %v4352, %v5409
        %v5411 = vpop.f32.mrb[0].mxu0
        %5412 = vmatprep.mubr.f32.mxu0 0.0
        %5413 = vmatmul.mubr.f32.gmra.mrb[0].mxu0 %v4721
        %v5414 = vpop.f32.mrb[0].mxu0
        %v5415 = vadd.f32 %v4352, %v5414
        %v5416 = vpop.f32.mrb[0].mxu0
        %5417 = vmatprep.mubr.f32.mxu0 0.0
        %5418 = vmatmul.mubr.f32.gmra.mrb[0].mxu0 %v4724
        %v5419 = vpop.f32.mrb[0].mxu0
        %v5420 = vadd.f32 %v4352, %v5419
        %v5421 = vpop.f32.mrb[0].mxu0
        %5422 = vmatprep.mubr.f32.mxu0 0.0
        %5423 = vmatmul.mubr.f32.gmra.mrb[0].mxu0 %v4727
        %v5424 = vpop.f32.mrb[0].mxu0
        %v5425 = vadd.f32 %v4352, %v5424
        %v5426 = vpop.f32.mrb[0].mxu0
        %5427 = vmatprep.mubr.f32.mxu0 0.0
        %5428 = vmatmul.mubr.f32.gmra.mrb[0].mxu0 %v4730
        %v5429 = vpop.f32.mrb[0].mxu0
        %v5430 = vadd.f32 %v4352, %v5429
        %v5431 = vpop.f32.mrb[0].mxu0
        %5432 = vmatprep.mubr.f32.mxu0 0.0
        %5433 = vmatmul.mubr.f32.gmra.mrb[0].mxu0 %v4733
        %v5434 = vpop.f32.mrb[0].mxu0
        %v5435 = vadd.f32 %v4352, %v5434
        %v5436 = vpop.f32.mrb[0].mxu0
        %5437 = vmatprep.mubr.f32.mxu0 0.0
        %5438 = vmatmul.mubr.f32.gmra.mrb[0].mxu0 %v4736
        %v5439 = vpop.f32.mrb[0].mxu0
        %v5440 = vadd.f32 %v4352, %v5439
        %v5441 = vpop.f32.mrb[0].mxu0
        %5442 = vdwg.mxu0
        %vm5443 = vcmask 64512
        %5444 = vst.msk [vmem:[%s859] sm:$0xff] %vm5443, %v4805
        %5445 = vst.msk [vmem:[%s859 + $0x8] sm:$0xff] %vm5443, %v4810
        %5446 = vst.msk [vmem:[%s859 + $0x10] sm:$0xff] %vm5443, %v4815
        %5447 = vst.msk [vmem:[%s859 + $0x18] sm:$0xff] %vm5443, %v4820
        %5448 = vst.msk [vmem:[%s859 + $0x20] sm:$0xff] %vm5443, %v4825
        %5449 = vst.msk [vmem:[%s859 + $0x28] sm:$0xff] %vm5443, %v4830
        %5450 = vst.msk [vmem:[%s859 + $0x30] sm:$0xff] %vm5443, %v4835
        %5451 = vst.msk [vmem:[%s859 + $0x38] sm:$0xff] %vm5443, %v4840
        %5452 = vst.msk [vmem:[%s859 + $0x40] sm:$0xff] %vm5443, %v4845
        %5453 = vst.msk [vmem:[%s859 + $0x48] sm:$0xff] %vm5443, %v4850
        %5454 = vst.msk [vmem:[%s859 + $0x50] sm:$0xff] %vm5443, %v4855
        %5455 = vst.msk [vmem:[%s859 + $0x58] sm:$0xff] %vm5443, %v4860
        %5456 = vst.msk [vmem:[%s859 + $0x60] sm:$0xff] %vm5443, %v4865
        %5457 = vst.msk [vmem:[%s859 + $0x68] sm:$0xff] %vm5443, %v4870
        %5458 = vst.msk [vmem:[%s859 + $0x70] sm:$0xff] %vm5443, %v4875
        %5459 = vst.msk [vmem:[%s859 + $0x78] sm:$0xff] %vm5443, %v4880
        %5460 = vst.msk [vmem:[%s859 + $0x80] sm:$0xff] %vm5443, %v4885
        %5461 = vst.msk [vmem:[%s859 + $0x88] sm:$0xff] %vm5443, %v4890
        %5462 = vst.msk [vmem:[%s859 + $0x90] sm:$0xff] %vm5443, %v4895
        %5463 = vst.msk [vmem:[%s859 + $0x98] sm:$0xff] %vm5443, %v4900
        %5464 = vst.msk [vmem:[%s859 + $0xa0] sm:$0xff] %vm5443, %v4905
        %5465 = vst.msk [vmem:[%s859 + $0xa8] sm:$0xff] %vm5443, %v4910
        %5466 = vst.msk [vmem:[%s859 + $0xb0] sm:$0xff] %vm5443, %v4915
        %5467 = vst.msk [vmem:[%s859 + $0xb8] sm:$0xff] %vm5443, %v4920
        %5468 = vst.msk [vmem:[%s859 + $0xc0] sm:$0xff] %vm5443, %v4925
        %5469 = vst.msk [vmem:[%s859 + $0xc8] sm:$0xff] %vm5443, %v4930
        %5470 = vst.msk [vmem:[%s859 + $0xd0] sm:$0xff] %vm5443, %v4935
        %5471 = vst.msk [vmem:[%s859 + $0xd8] sm:$0xff] %vm5443, %v4940
        %5472 = vst.msk [vmem:[%s859 + $0xe0] sm:$0xff] %vm5443, %v4945
        %5473 = vst.msk [vmem:[%s859 + $0xe8] sm:$0xff] %vm5443, %v4950
        %5474 = vst.msk [vmem:[%s859 + $0xf0] sm:$0xff] %vm5443, %v4955
        %5475 = vst.msk [vmem:[%s859 + $0xf8] sm:$0xff] %vm5443, %v4960
        %5476 = vst.msk [vmem:[%s859 + $0x100] sm:$0xff] %vm5443, %v4965
        %5477 = vst.msk [vmem:[%s859 + $0x108] sm:$0xff] %vm5443, %v4970
        %5478 = vst.msk [vmem:[%s859 + $0x110] sm:$0xff] %vm5443, %v4975
        %5479 = vst.msk [vmem:[%s859 + $0x118] sm:$0xff] %vm5443, %v4980
        %5480 = vst.msk [vmem:[%s859 + $0x120] sm:$0xff] %vm5443, %v4985
        %5481 = vst.msk [vmem:[%s859 + $0x128] sm:$0xff] %vm5443, %v4990
        %5482 = vst.msk [vmem:[%s859 + $0x130] sm:$0xff] %vm5443, %v4995
        %5483 = vst.msk [vmem:[%s859 + $0x138] sm:$0xff] %vm5443, %v5000
        %5484 = vst.msk [vmem:[%s859 + $0x140] sm:$0xff] %vm5443, %v5005
        %5485 = vst.msk [vmem:[%s859 + $0x148] sm:$0xff] %vm5443, %v5010
        %5486 = vst.msk [vmem:[%s859 + $0x150] sm:$0xff] %vm5443, %v5015
        %5487 = vst.msk [vmem:[%s859 + $0x158] sm:$0xff] %vm5443, %v5020
        %5488 = vst.msk [vmem:[%s859 + $0x160] sm:$0xff] %vm5443, %v5025
        %5489 = vst.msk [vmem:[%s859 + $0x168] sm:$0xff] %vm5443, %v5030
        %5490 = vst.msk [vmem:[%s859 + $0x170] sm:$0xff] %vm5443, %v5035
        %5491 = vst.msk [vmem:[%s859 + $0x178] sm:$0xff] %vm5443, %v5040
        %5492 = vst.msk [vmem:[%s859 + $0x180] sm:$0xff] %vm5443, %v5045
        %5493 = vst.msk [vmem:[%s859 + $0x188] sm:$0xff] %vm5443, %v5050
        %5494 = vst.msk [vmem:[%s859 + $0x190] sm:$0xff] %vm5443, %v5055
        %5495 = vst.msk [vmem:[%s859 + $0x198] sm:$0xff] %vm5443, %v5060
        %5496 = vst.msk [vmem:[%s859 + $0x1a0] sm:$0xff] %vm5443, %v5065
        %5497 = vst.msk [vmem:[%s859 + $0x1a8] sm:$0xff] %vm5443, %v5070
        %5498 = vst.msk [vmem:[%s859 + $0x1b0] sm:$0xff] %vm5443, %v5075
        %5499 = vst.msk [vmem:[%s859 + $0x1b8] sm:$0xff] %vm5443, %v5080
        %5500 = vst.msk [vmem:[%s859 + $0x1c0] sm:$0xff] %vm5443, %v5085
        %5501 = vst.msk [vmem:[%s859 + $0x1c8] sm:$0xff] %vm5443, %v5090
        %5502 = vst.msk [vmem:[%s859 + $0x1d0] sm:$0xff] %vm5443, %v5095
        %5503 = vst.msk [vmem:[%s859 + $0x1d8] sm:$0xff] %vm5443, %v5100
        %5504 = vst.msk [vmem:[%s859 + $0x1e0] sm:$0xff] %vm5443, %v5105
        %5505 = vst.msk [vmem:[%s859 + $0x1e8] sm:$0xff] %vm5443, %v5110
        %5506 = vst.msk [vmem:[%s859 + $0x1f0] sm:$0xff] %vm5443, %v5115
        %5507 = vst.msk [vmem:[%s859 + $0x1f8] sm:$0xff] %vm5443, %v5120
        %5508 = vst.msk [vmem:[%s859 + $0x200] sm:$0xff] %vm5443, %v5125
        %5509 = vst.msk [vmem:[%s859 + $0x208] sm:$0xff] %vm5443, %v5130
        %5510 = vst.msk [vmem:[%s859 + $0x210] sm:$0xff] %vm5443, %v5135
        %5511 = vst.msk [vmem:[%s859 + $0x218] sm:$0xff] %vm5443, %v5140
        %5512 = vst.msk [vmem:[%s859 + $0x220] sm:$0xff] %vm5443, %v5145
        %5513 = vst.msk [vmem:[%s859 + $0x228] sm:$0xff] %vm5443, %v5150
        %5514 = vst.msk [vmem:[%s859 + $0x230] sm:$0xff] %vm5443, %v5155
        %5515 = vst.msk [vmem:[%s859 + $0x238] sm:$0xff] %vm5443, %v5160
        %5516 = vst.msk [vmem:[%s859 + $0x240] sm:$0xff] %vm5443, %v5165
        %5517 = vst.msk [vmem:[%s859 + $0x248] sm:$0xff] %vm5443, %v5170
        %5518 = vst.msk [vmem:[%s859 + $0x250] sm:$0xff] %vm5443, %v5175
        %5519 = vst.msk [vmem:[%s859 + $0x258] sm:$0xff] %vm5443, %v5180
        %5520 = vst.msk [vmem:[%s859 + $0x260] sm:$0xff] %vm5443, %v5185
        %5521 = vst.msk [vmem:[%s859 + $0x268] sm:$0xff] %vm5443, %v5190
        %5522 = vst.msk [vmem:[%s859 + $0x270] sm:$0xff] %vm5443, %v5195
        %5523 = vst.msk [vmem:[%s859 + $0x278] sm:$0xff] %vm5443, %v5200
        %5524 = vst.msk [vmem:[%s859 + $0x280] sm:$0xff] %vm5443, %v5205
        %5525 = vst.msk [vmem:[%s859 + $0x288] sm:$0xff] %vm5443, %v5210
        %5526 = vst.msk [vmem:[%s859 + $0x290] sm:$0xff] %vm5443, %v5215
        %5527 = vst.msk [vmem:[%s859 + $0x298] sm:$0xff] %vm5443, %v5220
        %5528 = vst.msk [vmem:[%s859 + $0x2a0] sm:$0xff] %vm5443, %v5225
        %5529 = vst.msk [vmem:[%s859 + $0x2a8] sm:$0xff] %vm5443, %v5230
        %5530 = vst.msk [vmem:[%s859 + $0x2b0] sm:$0xff] %vm5443, %v5235
        %5531 = vst.msk [vmem:[%s859 + $0x2b8] sm:$0xff] %vm5443, %v5240
        %5532 = vst.msk [vmem:[%s859 + $0x2c0] sm:$0xff] %vm5443, %v5245
        %5533 = vst.msk [vmem:[%s859 + $0x2c8] sm:$0xff] %vm5443, %v5250
        %5534 = vst.msk [vmem:[%s859 + $0x2d0] sm:$0xff] %vm5443, %v5255
        %5535 = vst.msk [vmem:[%s859 + $0x2d8] sm:$0xff] %vm5443, %v5260
        %5536 = vst.msk [vmem:[%s859 + $0x2e0] sm:$0xff] %vm5443, %v5265
        %5537 = vst.msk [vmem:[%s859 + $0x2e8] sm:$0xff] %vm5443, %v5270
        %5538 = vst.msk [vmem:[%s859 + $0x2f0] sm:$0xff] %vm5443, %v5275
        %5539 = vst.msk [vmem:[%s859 + $0x2f8] sm:$0xff] %vm5443, %v5280
        %5540 = vst.msk [vmem:[%s859 + $0x300] sm:$0xff] %vm5443, %v5285
        %5541 = vst.msk [vmem:[%s859 + $0x308] sm:$0xff] %vm5443, %v5290
        %5542 = vst.msk [vmem:[%s859 + $0x310] sm:$0xff] %vm5443, %v5295
        %5543 = vst.msk [vmem:[%s859 + $0x318] sm:$0xff] %vm5443, %v5300
        %5544 = vst.msk [vmem:[%s859 + $0x320] sm:$0xff] %vm5443, %v5305
        %5545 = vst.msk [vmem:[%s859 + $0x328] sm:$0xff] %vm5443, %v5310
        %5546 = vst.msk [vmem:[%s859 + $0x330] sm:$0xff] %vm5443, %v5315
        %5547 = vst.msk [vmem:[%s859 + $0x338] sm:$0xff] %vm5443, %v5320
        %5548 = vst.msk [vmem:[%s859 + $0x340] sm:$0xff] %vm5443, %v5325
        %5549 = vst.msk [vmem:[%s859 + $0x348] sm:$0xff] %vm5443, %v5330
        %5550 = vst.msk [vmem:[%s859 + $0x350] sm:$0xff] %vm5443, %v5335
        %5551 = vst.msk [vmem:[%s859 + $0x358] sm:$0xff] %vm5443, %v5340
        %5552 = vst.msk [vmem:[%s859 + $0x360] sm:$0xff] %vm5443, %v5345
        %5553 = vst.msk [vmem:[%s859 + $0x368] sm:$0xff] %vm5443, %v5350
        %5554 = vst.msk [vmem:[%s859 + $0x370] sm:$0xff] %vm5443, %v5355
        %5555 = vst.msk [vmem:[%s859 + $0x378] sm:$0xff] %vm5443, %v5360
        %5556 = vst.msk [vmem:[%s859 + $0x380] sm:$0xff] %vm5443, %v5365
        %5557 = vst.msk [vmem:[%s859 + $0x388] sm:$0xff] %vm5443, %v5370
        %5558 = vst.msk [vmem:[%s859 + $0x390] sm:$0xff] %vm5443, %v5375
        %5559 = vst.msk [vmem:[%s859 + $0x398] sm:$0xff] %vm5443, %v5380
        %5560 = vst.msk [vmem:[%s859 + $0x3a0] sm:$0xff] %vm5443, %v5385
        %5561 = vst.msk [vmem:[%s859 + $0x3a8] sm:$0xff] %vm5443, %v5390
        %5562 = vst.msk [vmem:[%s859 + $0x3b0] sm:$0xff] %vm5443, %v5395
        %5563 = vst.msk [vmem:[%s859 + $0x3b8] sm:$0xff] %vm5443, %v5400
        %5564 = vst.msk [vmem:[%s859 + $0x3c0] sm:$0xff] %vm5443, %v5405
        %5565 = vst.msk [vmem:[%s859 + $0x3c8] sm:$0xff] %vm5443, %v5410
        %5566 = vst.msk [vmem:[%s859 + $0x3d0] sm:$0xff] %vm5443, %v5415
        %5567 = vst.msk [vmem:[%s859 + $0x3d8] sm:$0xff] %vm5443, %v5420
        %5568 = vst.msk [vmem:[%s859 + $0x3e0] sm:$0xff] %vm5443, %v5425
        %5569 = vst.msk [vmem:[%s859 + $0x3e8] sm:$0xff] %vm5443, %v5430
        %5570 = vst.msk [vmem:[%s859 + $0x3f0] sm:$0xff] %vm5443, %v5435
        %5571 = vst.msk [vmem:[%s859 + $0x3f8] sm:$0xff] %vm5443, %v5440
        %s5572 = sand.u32 %s185, 1
        %s5573 = sand.u32 %s185, 1
        %s5574 = smul.addr %s5573, 1024
        %s5575 = scalar_lea.vmem [#allocation5], %s5574
        %s5576 = smul.u32 16, %s20
        %p5577 = scmp.lt.s32.totalorder %s5576, 31
        %s5578 = scalar_select %p5577, %s5576, 31
        %s5579 = smul.addr %s5578, 8
        %s5580 = scalar_lea.vmem %s8, %s5579
        // Predicated region
        $region87: #{tpu_custom_call.1} parent=81 // pred_check
          %p5581 = pneg %p195
        $region88: #{tpu_custom_call.1} parent=81 // pred_check_branch
          %5583 = sbr.rel (%p5581) target = $region90
        $region89: #{tpu_custom_call.1} parent=81 // pred_region
          %s5584 = smul.u32 16, %s20
          %s5585 = smul.addr %s5584, 8
          %s5586 = scalar_lea.vmem %s7, %s5585
          // Predicated region
          $region91: #{tpu_custom_call.1} parent=89 // pred_check
            _
          $region92: #{tpu_custom_call.1} parent=89 // pred_check_branch
            %5588 = sbr.rel (0) target = $region94
          $region93: #{tpu_custom_call.1} parent=89 // pred_region
            // Predicated region
            $region95: #{tpu_custom_call.1} parent=93 // pred_check
              _
            $region96: #{tpu_custom_call.1} parent=93 // pred_check_branch
              %5590 = sbr.rel (0) target = $region98
            $region97: #{tpu_custom_call.1} parent=93 // pred_region
              // Predicated region
              $region110: #{tpu_custom_call.1} parent=97 // pred_check
                _
              $region111: #{tpu_custom_call.1} parent=97 // pred_check_branch
                %5859 = sbr.rel (0) target = $region113
              $region112: #{tpu_custom_call.1} parent=97 // pred_region
                loop: start=0, step=1, limit=1
                $region114: #{tpu_custom_call.1} parent=112 // loop_pre_header
                  _
                $region115: #{tpu_custom_call.1} parent=112 // loop_header
                  %s5861 = sphi 0, %s5865
                  %p5862 = scmp.ge.s32.totalorder %s5861, 1
                  %s5866 = sphi %s5575, %s5575
                  %s5867 = sphi %s5586, %s5586
                $region116: #{tpu_custom_call.1} parent=112 // loop_header_branch
                  %5864 = sbr.rel (%p5862) target = $region120
                $region117: #{tpu_custom_call.1} parent=112 // loop_body
                  %v5868 = vld [vmem:[%s5866] sm:$0xff]
                  %5869 = vst [vmem:[%s5867] sm:$0xff] %v5868
                  %v5870 = vld [vmem:[%s5866 + $0x8] sm:$0xff]
                  %5871 = vst [vmem:[%s5867 + $0x8] sm:$0xff] %v5870
                  %v5872 = vld [vmem:[%s5866 + $0x10] sm:$0xff]
                  %5873 = vst [vmem:[%s5867 + $0x10] sm:$0xff] %v5872
                  %v5874 = vld [vmem:[%s5866 + $0x18] sm:$0xff]
                  %5875 = vst [vmem:[%s5867 + $0x18] sm:$0xff] %v5874
                  %v5876 = vld [vmem:[%s5866 + $0x20] sm:$0xff]
                  %5877 = vst [vmem:[%s5867 + $0x20] sm:$0xff] %v5876
                  %v5878 = vld [vmem:[%s5866 + $0x28] sm:$0xff]
                  %5879 = vst [vmem:[%s5867 + $0x28] sm:$0xff] %v5878
                  %v5880 = vld [vmem:[%s5866 + $0x30] sm:$0xff]
                  %5881 = vst [vmem:[%s5867 + $0x30] sm:$0xff] %v5880
                  %v5882 = vld [vmem:[%s5866 + $0x38] sm:$0xff]
                  %5883 = vst [vmem:[%s5867 + $0x38] sm:$0xff] %v5882
                  %v5884 = vld [vmem:[%s5866 + $0x40] sm:$0xff]
                  %5885 = vst [vmem:[%s5867 + $0x40] sm:$0xff] %v5884
                  %v5886 = vld [vmem:[%s5866 + $0x48] sm:$0xff]
                  %5887 = vst [vmem:[%s5867 + $0x48] sm:$0xff] %v5886
                  %v5888 = vld [vmem:[%s5866 + $0x50] sm:$0xff]
                  %5889 = vst [vmem:[%s5867 + $0x50] sm:$0xff] %v5888
                  %v5890 = vld [vmem:[%s5866 + $0x58] sm:$0xff]
                  %5891 = vst [vmem:[%s5867 + $0x58] sm:$0xff] %v5890
                  %v5892 = vld [vmem:[%s5866 + $0x60] sm:$0xff]
                  %5893 = vst [vmem:[%s5867 + $0x60] sm:$0xff] %v5892
                  %v5894 = vld [vmem:[%s5866 + $0x68] sm:$0xff]
                  %5895 = vst [vmem:[%s5867 + $0x68] sm:$0xff] %v5894
                  %v5896 = vld [vmem:[%s5866 + $0x70] sm:$0xff]
                  %5897 = vst [vmem:[%s5867 + $0x70] sm:$0xff] %v5896
                  %v5898 = vld [vmem:[%s5866 + $0x78] sm:$0xff]
                  %5899 = vst [vmem:[%s5867 + $0x78] sm:$0xff] %v5898
                  %v5900 = vld [vmem:[%s5866 + $0x80] sm:$0xff]
                  %5901 = vst [vmem:[%s5867 + $0x100] sm:$0xff] %v5900
                  %v5902 = vld [vmem:[%s5866 + $0x88] sm:$0xff]
                  %5903 = vst [vmem:[%s5867 + $0x108] sm:$0xff] %v5902
                  %v5904 = vld [vmem:[%s5866 + $0x90] sm:$0xff]
                  %5905 = vst [vmem:[%s5867 + $0x110] sm:$0xff] %v5904
                  %v5906 = vld [vmem:[%s5866 + $0x98] sm:$0xff]
                  %5907 = vst [vmem:[%s5867 + $0x118] sm:$0xff] %v5906
                  %v5908 = vld [vmem:[%s5866 + $0xa0] sm:$0xff]
                  %5909 = vst [vmem:[%s5867 + $0x120] sm:$0xff] %v5908
                  %v5910 = vld [vmem:[%s5866 + $0xa8] sm:$0xff]
                  %5911 = vst [vmem:[%s5867 + $0x128] sm:$0xff] %v5910
                  %v5912 = vld [vmem:[%s5866 + $0xb0] sm:$0xff]
                  %5913 = vst [vmem:[%s5867 + $0x130] sm:$0xff] %v5912
                  %v5914 = vld [vmem:[%s5866 + $0xb8] sm:$0xff]
                  %5915 = vst [vmem:[%s5867 + $0x138] sm:$0xff] %v5914
                  %v5916 = vld [vmem:[%s5866 + $0xc0] sm:$0xff]
                  %5917 = vst [vmem:[%s5867 + $0x140] sm:$0xff] %v5916
                  %v5918 = vld [vmem:[%s5866 + $0xc8] sm:$0xff]
                  %5919 = vst [vmem:[%s5867 + $0x148] sm:$0xff] %v5918
                  %v5920 = vld [vmem:[%s5866 + $0xd0] sm:$0xff]
                  %5921 = vst [vmem:[%s5867 + $0x150] sm:$0xff] %v5920
                  %v5922 = vld [vmem:[%s5866 + $0xd8] sm:$0xff]
                  %5923 = vst [vmem:[%s5867 + $0x158] sm:$0xff] %v5922
                  %v5924 = vld [vmem:[%s5866 + $0xe0] sm:$0xff]
                  %5925 = vst [vmem:[%s5867 + $0x160] sm:$0xff] %v5924
                  %v5926 = vld [vmem:[%s5866 + $0xe8] sm:$0xff]
                  %5927 = vst [vmem:[%s5867 + $0x168] sm:$0xff] %v5926
                  %v5928 = vld [vmem:[%s5866 + $0xf0] sm:$0xff]
                  %5929 = vst [vmem:[%s5867 + $0x170] sm:$0xff] %v5928
                  %v5930 = vld [vmem:[%s5866 + $0xf8] sm:$0xff]
                  %5931 = vst [vmem:[%s5867 + $0x178] sm:$0xff] %v5930
                  %v5932 = vld [vmem:[%s5866 + $0x100] sm:$0xff]
                  %5933 = vst [vmem:[%s5867 + $0x200] sm:$0xff] %v5932
                  %v5934 = vld [vmem:[%s5866 + $0x108] sm:$0xff]
                  %5935 = vst [vmem:[%s5867 + $0x208] sm:$0xff] %v5934
                  %v5936 = vld [vmem:[%s5866 + $0x110] sm:$0xff]
                  %5937 = vst [vmem:[%s5867 + $0x210] sm:$0xff] %v5936
                  %v5938 = vld [vmem:[%s5866 + $0x118] sm:$0xff]
                  %5939 = vst [vmem:[%s5867 + $0x218] sm:$0xff] %v5938
                  %v5940 = vld [vmem:[%s5866 + $0x120] sm:$0xff]
                  %5941 = vst [vmem:[%s5867 + $0x220] sm:$0xff] %v5940
                  %v5942 = vld [vmem:[%s5866 + $0x128] sm:$0xff]
                  %5943 = vst [vmem:[%s5867 + $0x228] sm:$0xff] %v5942
                  %v5944 = vld [vmem:[%s5866 + $0x130] sm:$0xff]
                  %5945 = vst [vmem:[%s5867 + $0x230] sm:$0xff] %v5944
                  %v5946 = vld [vmem:[%s5866 + $0x138] sm:$0xff]
                  %5947 = vst [vmem:[%s5867 + $0x238] sm:$0xff] %v5946
                  %v5948 = vld [vmem:[%s5866 + $0x140] sm:$0xff]
                  %5949 = vst [vmem:[%s5867 + $0x240] sm:$0xff] %v5948
                  %v5950 = vld [vmem:[%s5866 + $0x148] sm:$0xff]
                  %5951 = vst [vmem:[%s5867 + $0x248] sm:$0xff] %v5950
                  %v5952 = vld [vmem:[%s5866 + $0x150] sm:$0xff]
                  %5953 = vst [vmem:[%s5867 + $0x250] sm:$0xff] %v5952
                  %v5954 = vld [vmem:[%s5866 + $0x158] sm:$0xff]
                  %5955 = vst [vmem:[%s5867 + $0x258] sm:$0xff] %v5954
                  %v5956 = vld [vmem:[%s5866 + $0x160] sm:$0xff]
                  %5957 = vst [vmem:[%s5867 + $0x260] sm:$0xff] %v5956
                  %v5958 = vld [vmem:[%s5866 + $0x168] sm:$0xff]
                  %5959 = vst [vmem:[%s5867 + $0x268] sm:$0xff] %v5958
                  %v5960 = vld [vmem:[%s5866 + $0x170] sm:$0xff]
                  %5961 = vst [vmem:[%s5867 + $0x270] sm:$0xff] %v5960
                  %v5962 = vld [vmem:[%s5866 + $0x178] sm:$0xff]
                  %5963 = vst [vmem:[%s5867 + $0x278] sm:$0xff] %v5962
                  %v5964 = vld [vmem:[%s5866 + $0x180] sm:$0xff]
                  %5965 = vst [vmem:[%s5867 + $0x300] sm:$0xff] %v5964
                  %v5966 = vld [vmem:[%s5866 + $0x188] sm:$0xff]
                  %5967 = vst [vmem:[%s5867 + $0x308] sm:$0xff] %v5966
                  %v5968 = vld [vmem:[%s5866 + $0x190] sm:$0xff]
                  %5969 = vst [vmem:[%s5867 + $0x310] sm:$0xff] %v5968
                  %v5970 = vld [vmem:[%s5866 + $0x198] sm:$0xff]
                  %5971 = vst [vmem:[%s5867 + $0x318] sm:$0xff] %v5970
                  %v5972 = vld [vmem:[%s5866 + $0x1a0] sm:$0xff]
                  %5973 = vst [vmem:[%s5867 + $0x320] sm:$0xff] %v5972
                  %v5974 = vld [vmem:[%s5866 + $0x1a8] sm:$0xff]
                  %5975 = vst [vmem:[%s5867 + $0x328] sm:$0xff] %v5974
                  %v5976 = vld [vmem:[%s5866 + $0x1b0] sm:$0xff]
                  %5977 = vst [vmem:[%s5867 + $0x330] sm:$0xff] %v5976
                  %v5978 = vld [vmem:[%s5866 + $0x1b8] sm:$0xff]
                  %5979 = vst [vmem:[%s5867 + $0x338] sm:$0xff] %v5978
                  %v5980 = vld [vmem:[%s5866 + $0x1c0] sm:$0xff]
                  %5981 = vst [vmem:[%s5867 + $0x340] sm:$0xff] %v5980
                  %v5982 = vld [vmem:[%s5866 + $0x1c8] sm:$0xff]
                  %5983 = vst [vmem:[%s5867 + $0x348] sm:$0xff] %v5982
                  %v5984 = vld [vmem:[%s5866 + $0x1d0] sm:$0xff]
                  %5985 = vst [vmem:[%s5867 + $0x350] sm:$0xff] %v5984
                  %v5986 = vld [vmem:[%s5866 + $0x1d8] sm:$0xff]
                  %5987 = vst [vmem:[%s5867 + $0x358] sm:$0xff] %v5986
                  %v5988 = vld [vmem:[%s5866 + $0x1e0] sm:$0xff]
                  %5989 = vst [vmem:[%s5867 + $0x360] sm:$0xff] %v5988
                  %v5990 = vld [vmem:[%s5866 + $0x1e8] sm:$0xff]
                  %5991 = vst [vmem:[%s5867 + $0x368] sm:$0xff] %v5990
                  %v5992 = vld [vmem:[%s5866 + $0x1f0] sm:$0xff]
                  %5993 = vst [vmem:[%s5867 + $0x370] sm:$0xff] %v5992
                  %v5994 = vld [vmem:[%s5866 + $0x1f8] sm:$0xff]
                  %5995 = vst [vmem:[%s5867 + $0x378] sm:$0xff] %v5994
                  %v5996 = vld [vmem:[%s5866 + $0x200] sm:$0xff]
                  %5997 = vst [vmem:[%s5867 + $0x400] sm:$0xff] %v5996
                  %v5998 = vld [vmem:[%s5866 + $0x208] sm:$0xff]
                  %5999 = vst [vmem:[%s5867 + $0x408] sm:$0xff] %v5998
                  %v6000 = vld [vmem:[%s5866 + $0x210] sm:$0xff]
                  %6001 = vst [vmem:[%s5867 + $0x410] sm:$0xff] %v6000
                  %v6002 = vld [vmem:[%s5866 + $0x218] sm:$0xff]
                  %6003 = vst [vmem:[%s5867 + $0x418] sm:$0xff] %v6002
                  %v6004 = vld [vmem:[%s5866 + $0x220] sm:$0xff]
                  %6005 = vst [vmem:[%s5867 + $0x420] sm:$0xff] %v6004
                  %v6006 = vld [vmem:[%s5866 + $0x228] sm:$0xff]
                  %6007 = vst [vmem:[%s5867 + $0x428] sm:$0xff] %v6006
                  %v6008 = vld [vmem:[%s5866 + $0x230] sm:$0xff]
                  %6009 = vst [vmem:[%s5867 + $0x430] sm:$0xff] %v6008
                  %v6010 = vld [vmem:[%s5866 + $0x238] sm:$0xff]
                  %6011 = vst [vmem:[%s5867 + $0x438] sm:$0xff] %v6010
                  %v6012 = vld [vmem:[%s5866 + $0x240] sm:$0xff]
                  %6013 = vst [vmem:[%s5867 + $0x440] sm:$0xff] %v6012
                  %v6014 = vld [vmem:[%s5866 + $0x248] sm:$0xff]
                  %6015 = vst [vmem:[%s5867 + $0x448] sm:$0xff] %v6014
                  %v6016 = vld [vmem:[%s5866 + $0x250] sm:$0xff]
                  %6017 = vst [vmem:[%s5867 + $0x450] sm:$0xff] %v6016
                  %v6018 = vld [vmem:[%s5866 + $0x258] sm:$0xff]
                  %6019 = vst [vmem:[%s5867 + $0x458] sm:$0xff] %v6018
                  %v6020 = vld [vmem:[%s5866 + $0x260] sm:$0xff]
                  %6021 = vst [vmem:[%s5867 + $0x460] sm:$0xff] %v6020
                  %v6022 = vld [vmem:[%s5866 + $0x268] sm:$0xff]
                  %6023 = vst [vmem:[%s5867 + $0x468] sm:$0xff] %v6022
                  %v6024 = vld [vmem:[%s5866 + $0x270] sm:$0xff]
                  %6025 = vst [vmem:[%s5867 + $0x470] sm:$0xff] %v6024
                  %v6026 = vld [vmem:[%s5866 + $0x278] sm:$0xff]
                  %6027 = vst [vmem:[%s5867 + $0x478] sm:$0xff] %v6026
                  %v6028 = vld [vmem:[%s5866 + $0x280] sm:$0xff]
                  %6029 = vst [vmem:[%s5867 + $0x500] sm:$0xff] %v6028
                  %v6030 = vld [vmem:[%s5866 + $0x288] sm:$0xff]
                  %6031 = vst [vmem:[%s5867 + $0x508] sm:$0xff] %v6030
                  %v6032 = vld [vmem:[%s5866 + $0x290] sm:$0xff]
                  %6033 = vst [vmem:[%s5867 + $0x510] sm:$0xff] %v6032
                  %v6034 = vld [vmem:[%s5866 + $0x298] sm:$0xff]
                  %6035 = vst [vmem:[%s5867 + $0x518] sm:$0xff] %v6034
                  %v6036 = vld [vmem:[%s5866 + $0x2a0] sm:$0xff]
                  %6037 = vst [vmem:[%s5867 + $0x520] sm:$0xff] %v6036
                  %v6038 = vld [vmem:[%s5866 + $0x2a8] sm:$0xff]
                  %6039 = vst [vmem:[%s5867 + $0x528] sm:$0xff] %v6038
                  %v6040 = vld [vmem:[%s5866 + $0x2b0] sm:$0xff]
                  %6041 = vst [vmem:[%s5867 + $0x530] sm:$0xff] %v6040
                  %v6042 = vld [vmem:[%s5866 + $0x2b8] sm:$0xff]
                  %6043 = vst [vmem:[%s5867 + $0x538] sm:$0xff] %v6042
                  %v6044 = vld [vmem:[%s5866 + $0x2c0] sm:$0xff]
                  %6045 = vst [vmem:[%s5867 + $0x540] sm:$0xff] %v6044
                  %v6046 = vld [vmem:[%s5866 + $0x2c8] sm:$0xff]
                  %6047 = vst [vmem:[%s5867 + $0x548] sm:$0xff] %v6046
                  %v6048 = vld [vmem:[%s5866 + $0x2d0] sm:$0xff]
                  %6049 = vst [vmem:[%s5867 + $0x550] sm:$0xff] %v6048
                  %v6050 = vld [vmem:[%s5866 + $0x2d8] sm:$0xff]
                  %6051 = vst [vmem:[%s5867 + $0x558] sm:$0xff] %v6050
                  %v6052 = vld [vmem:[%s5866 + $0x2e0] sm:$0xff]
                  %6053 = vst [vmem:[%s5867 + $0x560] sm:$0xff] %v6052
                  %v6054 = vld [vmem:[%s5866 + $0x2e8] sm:$0xff]
                  %6055 = vst [vmem:[%s5867 + $0x568] sm:$0xff] %v6054
                  %v6056 = vld [vmem:[%s5866 + $0x2f0] sm:$0xff]
                  %6057 = vst [vmem:[%s5867 + $0x570] sm:$0xff] %v6056
                  %v6058 = vld [vmem:[%s5866 + $0x2f8] sm:$0xff]
                  %6059 = vst [vmem:[%s5867 + $0x578] sm:$0xff] %v6058
                  %v6060 = vld [vmem:[%s5866 + $0x300] sm:$0xff]
                  %6061 = vst [vmem:[%s5867 + $0x600] sm:$0xff] %v6060
                  %v6062 = vld [vmem:[%s5866 + $0x308] sm:$0xff]
                  %6063 = vst [vmem:[%s5867 + $0x608] sm:$0xff] %v6062
                  %v6064 = vld [vmem:[%s5866 + $0x310] sm:$0xff]
                  %6065 = vst [vmem:[%s5867 + $0x610] sm:$0xff] %v6064
                  %v6066 = vld [vmem:[%s5866 + $0x318] sm:$0xff]
                  %6067 = vst [vmem:[%s5867 + $0x618] sm:$0xff] %v6066
                  %v6068 = vld [vmem:[%s5866 + $0x320] sm:$0xff]
                  %6069 = vst [vmem:[%s5867 + $0x620] sm:$0xff] %v6068
                  %v6070 = vld [vmem:[%s5866 + $0x328] sm:$0xff]
                  %6071 = vst [vmem:[%s5867 + $0x628] sm:$0xff] %v6070
                  %v6072 = vld [vmem:[%s5866 + $0x330] sm:$0xff]
                  %6073 = vst [vmem:[%s5867 + $0x630] sm:$0xff] %v6072
                  %v6074 = vld [vmem:[%s5866 + $0x338] sm:$0xff]
                  %6075 = vst [vmem:[%s5867 + $0x638] sm:$0xff] %v6074
                  %v6076 = vld [vmem:[%s5866 + $0x340] sm:$0xff]
                  %6077 = vst [vmem:[%s5867 + $0x640] sm:$0xff] %v6076
                  %v6078 = vld [vmem:[%s5866 + $0x348] sm:$0xff]
                  %6079 = vst [vmem:[%s5867 + $0x648] sm:$0xff] %v6078
                  %v6080 = vld [vmem:[%s5866 + $0x350] sm:$0xff]
                  %6081 = vst [vmem:[%s5867 + $0x650] sm:$0xff] %v6080
                  %v6082 = vld [vmem:[%s5866 + $0x358] sm:$0xff]
                  %6083 = vst [vmem:[%s5867 + $0x658] sm:$0xff] %v6082
                  %v6084 = vld [vmem:[%s5866 + $0x360] sm:$0xff]
                  %6085 = vst [vmem:[%s5867 + $0x660] sm:$0xff] %v6084
                  %v6086 = vld [vmem:[%s5866 + $0x368] sm:$0xff]
                  %6087 = vst [vmem:[%s5867 + $0x668] sm:$0xff] %v6086
                  %v6088 = vld [vmem:[%s5866 + $0x370] sm:$0xff]
                  %6089 = vst [vmem:[%s5867 + $0x670] sm:$0xff] %v6088
                  %v6090 = vld [vmem:[%s5866 + $0x378] sm:$0xff]
                  %6091 = vst [vmem:[%s5867 + $0x678] sm:$0xff] %v6090
                  %v6092 = vld [vmem:[%s5866 + $0x380] sm:$0xff]
                  %6093 = vst [vmem:[%s5867 + $0x700] sm:$0xff] %v6092
                  %v6094 = vld [vmem:[%s5866 + $0x388] sm:$0xff]
                  %6095 = vst [vmem:[%s5867 + $0x708] sm:$0xff] %v6094
                  %v6096 = vld [vmem:[%s5866 + $0x390] sm:$0xff]
                  %6097 = vst [vmem:[%s5867 + $0x710] sm:$0xff] %v6096
                  %v6098 = vld [vmem:[%s5866 + $0x398] sm:$0xff]
                  %6099 = vst [vmem:[%s5867 + $0x718] sm:$0xff] %v6098
                  %v6100 = vld [vmem:[%s5866 + $0x3a0] sm:$0xff]
                  %6101 = vst [vmem:[%s5867 + $0x720] sm:$0xff] %v6100
                  %v6102 = vld [vmem:[%s5866 + $0x3a8] sm:$0xff]
                  %6103 = vst [vmem:[%s5867 + $0x728] sm:$0xff] %v6102
                  %v6104 = vld [vmem:[%s5866 + $0x3b0] sm:$0xff]
                  %6105 = vst [vmem:[%s5867 + $0x730] sm:$0xff] %v6104
                  %v6106 = vld [vmem:[%s5866 + $0x3b8] sm:$0xff]
                  %6107 = vst [vmem:[%s5867 + $0x738] sm:$0xff] %v6106
                  %v6108 = vld [vmem:[%s5866 + $0x3c0] sm:$0xff]
                  %6109 = vst [vmem:[%s5867 + $0x740] sm:$0xff] %v6108
                  %v6110 = vld [vmem:[%s5866 + $0x3c8] sm:$0xff]
                  %6111 = vst [vmem:[%s5867 + $0x748] sm:$0xff] %v6110
                  %v6112 = vld [vmem:[%s5866 + $0x3d0] sm:$0xff]
                  %6113 = vst [vmem:[%s5867 + $0x750] sm:$0xff] %v6112
                  %v6114 = vld [vmem:[%s5866 + $0x3d8] sm:$0xff]
                  %6115 = vst [vmem:[%s5867 + $0x758] sm:$0xff] %v6114
                  %v6116 = vld [vmem:[%s5866 + $0x3e0] sm:$0xff]
                  %6117 = vst [vmem:[%s5867 + $0x760] sm:$0xff] %v6116
                  %v6118 = vld [vmem:[%s5866 + $0x3e8] sm:$0xff]
                  %6119 = vst [vmem:[%s5867 + $0x768] sm:$0xff] %v6118
                  %v6120 = vld [vmem:[%s5866 + $0x3f0] sm:$0xff]
                  %6121 = vst [vmem:[%s5867 + $0x770] sm:$0xff] %v6120
                  %v6122 = vld [vmem:[%s5866 + $0x3f8] sm:$0xff]
                  %6123 = vst [vmem:[%s5867 + $0x778] sm:$0xff] %v6122
                $region118: #{tpu_custom_call.1} parent=112 // loop_footer
                  %s5865 = sadd.s32 1, %s5861
                $region119: #{tpu_custom_call.1} parent=112 // loop_footer_branch
                  %5860 = sbr.rel target = $region115
                $region120: #{tpu_custom_call.1} parent=112 // loop_exit
                  _
              $region113: #{tpu_custom_call.1} parent=97 // pred_fallthru
                _
              // Predicated region
              $region121: #{tpu_custom_call.1} parent=97 // pred_check
                _
              $region122: #{tpu_custom_call.1} parent=97 // pred_check_branch
                %6125 = sbr.rel target = $region124
              $region123: #{tpu_custom_call.1} parent=97 // pred_region
                _
              $region124: #{tpu_custom_call.1} parent=97 // pred_fallthru
                _
            $region98: #{tpu_custom_call.1} parent=93 // pred_fallthru
              _
            // Predicated region
            $region99: #{tpu_custom_call.1} parent=93 // pred_check
              _
            $region100: #{tpu_custom_call.1} parent=93 // pred_check_branch
              %5592 = sbr.rel target = $region102
            $region101: #{tpu_custom_call.1} parent=93 // pred_region
              loop: start=0, step=1, limit=1
              $region103: #{tpu_custom_call.1} parent=101 // loop_pre_header
                _
              $region104: #{tpu_custom_call.1} parent=101 // loop_header
                %s5595 = sphi 0, %s5599
                %p5596 = scmp.ge.s32.totalorder %s5595, 1
                %s5600 = sphi %s5575, %s5575
                %s5601 = sphi %s5586, %s5586
              $region105: #{tpu_custom_call.1} parent=101 // loop_header_branch
                %5598 = sbr.rel (%p5596) target = $region109
              $region106: #{tpu_custom_call.1} parent=101 // loop_body
                %v5602 = vld [vmem:[%s5600] sm:$0xff]
                %5603 = vst [vmem:[%s5601] sm:$0xff] %v5602
                %v5604 = vld [vmem:[%s5600 + $0x8] sm:$0xff]
                %5605 = vst [vmem:[%s5601 + $0x8] sm:$0xff] %v5604
                %v5606 = vld [vmem:[%s5600 + $0x10] sm:$0xff]
                %5607 = vst [vmem:[%s5601 + $0x10] sm:$0xff] %v5606
                %v5608 = vld [vmem:[%s5600 + $0x18] sm:$0xff]
                %5609 = vst [vmem:[%s5601 + $0x18] sm:$0xff] %v5608
                %v5610 = vld [vmem:[%s5600 + $0x20] sm:$0xff]
                %5611 = vst [vmem:[%s5601 + $0x20] sm:$0xff] %v5610
                %v5612 = vld [vmem:[%s5600 + $0x28] sm:$0xff]
                %5613 = vst [vmem:[%s5601 + $0x28] sm:$0xff] %v5612
                %v5614 = vld [vmem:[%s5600 + $0x30] sm:$0xff]
                %5615 = vst [vmem:[%s5601 + $0x30] sm:$0xff] %v5614
                %v5616 = vld [vmem:[%s5600 + $0x38] sm:$0xff]
                %5617 = vst [vmem:[%s5601 + $0x38] sm:$0xff] %v5616
                %v5618 = vld [vmem:[%s5600 + $0x40] sm:$0xff]
                %5619 = vst [vmem:[%s5601 + $0x40] sm:$0xff] %v5618
                %v5620 = vld [vmem:[%s5600 + $0x48] sm:$0xff]
                %5621 = vst [vmem:[%s5601 + $0x48] sm:$0xff] %v5620
                %v5622 = vld [vmem:[%s5600 + $0x50] sm:$0xff]
                %5623 = vst [vmem:[%s5601 + $0x50] sm:$0xff] %v5622
                %v5624 = vld [vmem:[%s5600 + $0x58] sm:$0xff]
                %5625 = vst [vmem:[%s5601 + $0x58] sm:$0xff] %v5624
                %v5626 = vld [vmem:[%s5600 + $0x60] sm:$0xff]
                %5627 = vst [vmem:[%s5601 + $0x60] sm:$0xff] %v5626
                %v5628 = vld [vmem:[%s5600 + $0x68] sm:$0xff]
                %5629 = vst [vmem:[%s5601 + $0x68] sm:$0xff] %v5628
                %v5630 = vld [vmem:[%s5600 + $0x70] sm:$0xff]
                %5631 = vst [vmem:[%s5601 + $0x70] sm:$0xff] %v5630
                %v5632 = vld [vmem:[%s5600 + $0x78] sm:$0xff]
                %5633 = vst [vmem:[%s5601 + $0x78] sm:$0xff] %v5632
                %v5634 = vld [vmem:[%s5600 + $0x80] sm:$0xff]
                %5635 = vst [vmem:[%s5601 + $0x100] sm:$0xff] %v5634
                %v5636 = vld [vmem:[%s5600 + $0x88] sm:$0xff]
                %5637 = vst [vmem:[%s5601 + $0x108] sm:$0xff] %v5636
                %v5638 = vld [vmem:[%s5600 + $0x90] sm:$0xff]
                %5639 = vst [vmem:[%s5601 + $0x110] sm:$0xff] %v5638
                %v5640 = vld [vmem:[%s5600 + $0x98] sm:$0xff]
                %5641 = vst [vmem:[%s5601 + $0x118] sm:$0xff] %v5640
                %v5642 = vld [vmem:[%s5600 + $0xa0] sm:$0xff]
                %5643 = vst [vmem:[%s5601 + $0x120] sm:$0xff] %v5642
                %v5644 = vld [vmem:[%s5600 + $0xa8] sm:$0xff]
                %5645 = vst [vmem:[%s5601 + $0x128] sm:$0xff] %v5644
                %v5646 = vld [vmem:[%s5600 + $0xb0] sm:$0xff]
                %5647 = vst [vmem:[%s5601 + $0x130] sm:$0xff] %v5646
                %v5648 = vld [vmem:[%s5600 + $0xb8] sm:$0xff]
                %5649 = vst [vmem:[%s5601 + $0x138] sm:$0xff] %v5648
                %v5650 = vld [vmem:[%s5600 + $0xc0] sm:$0xff]
                %5651 = vst [vmem:[%s5601 + $0x140] sm:$0xff] %v5650
                %v5652 = vld [vmem:[%s5600 + $0xc8] sm:$0xff]
                %5653 = vst [vmem:[%s5601 + $0x148] sm:$0xff] %v5652
                %v5654 = vld [vmem:[%s5600 + $0xd0] sm:$0xff]
                %5655 = vst [vmem:[%s5601 + $0x150] sm:$0xff] %v5654
                %v5656 = vld [vmem:[%s5600 + $0xd8] sm:$0xff]
                %5657 = vst [vmem:[%s5601 + $0x158] sm:$0xff] %v5656
                %v5658 = vld [vmem:[%s5600 + $0xe0] sm:$0xff]
                %5659 = vst [vmem:[%s5601 + $0x160] sm:$0xff] %v5658
                %v5660 = vld [vmem:[%s5600 + $0xe8] sm:$0xff]
                %5661 = vst [vmem:[%s5601 + $0x168] sm:$0xff] %v5660
                %v5662 = vld [vmem:[%s5600 + $0xf0] sm:$0xff]
                %5663 = vst [vmem:[%s5601 + $0x170] sm:$0xff] %v5662
                %v5664 = vld [vmem:[%s5600 + $0xf8] sm:$0xff]
                %5665 = vst [vmem:[%s5601 + $0x178] sm:$0xff] %v5664
                %v5666 = vld [vmem:[%s5600 + $0x100] sm:$0xff]
                %5667 = vst [vmem:[%s5601 + $0x200] sm:$0xff] %v5666
                %v5668 = vld [vmem:[%s5600 + $0x108] sm:$0xff]
                %5669 = vst [vmem:[%s5601 + $0x208] sm:$0xff] %v5668
                %v5670 = vld [vmem:[%s5600 + $0x110] sm:$0xff]
                %5671 = vst [vmem:[%s5601 + $0x210] sm:$0xff] %v5670
                %v5672 = vld [vmem:[%s5600 + $0x118] sm:$0xff]
                %5673 = vst [vmem:[%s5601 + $0x218] sm:$0xff] %v5672
                %v5674 = vld [vmem:[%s5600 + $0x120] sm:$0xff]
                %5675 = vst [vmem:[%s5601 + $0x220] sm:$0xff] %v5674
                %v5676 = vld [vmem:[%s5600 + $0x128] sm:$0xff]
                %5677 = vst [vmem:[%s5601 + $0x228] sm:$0xff] %v5676
                %v5678 = vld [vmem:[%s5600 + $0x130] sm:$0xff]
                %5679 = vst [vmem:[%s5601 + $0x230] sm:$0xff] %v5678
                %v5680 = vld [vmem:[%s5600 + $0x138] sm:$0xff]
                %5681 = vst [vmem:[%s5601 + $0x238] sm:$0xff] %v5680
                %v5682 = vld [vmem:[%s5600 + $0x140] sm:$0xff]
                %5683 = vst [vmem:[%s5601 + $0x240] sm:$0xff] %v5682
                %v5684 = vld [vmem:[%s5600 + $0x148] sm:$0xff]
                %5685 = vst [vmem:[%s5601 + $0x248] sm:$0xff] %v5684
                %v5686 = vld [vmem:[%s5600 + $0x150] sm:$0xff]
                %5687 = vst [vmem:[%s5601 + $0x250] sm:$0xff] %v5686
                %v5688 = vld [vmem:[%s5600 + $0x158] sm:$0xff]
                %5689 = vst [vmem:[%s5601 + $0x258] sm:$0xff] %v5688
                %v5690 = vld [vmem:[%s5600 + $0x160] sm:$0xff]
                %5691 = vst [vmem:[%s5601 + $0x260] sm:$0xff] %v5690
                %v5692 = vld [vmem:[%s5600 + $0x168] sm:$0xff]
                %5693 = vst [vmem:[%s5601 + $0x268] sm:$0xff] %v5692
                %v5694 = vld [vmem:[%s5600 + $0x170] sm:$0xff]
                %5695 = vst [vmem:[%s5601 + $0x270] sm:$0xff] %v5694
                %v5696 = vld [vmem:[%s5600 + $0x178] sm:$0xff]
                %5697 = vst [vmem:[%s5601 + $0x278] sm:$0xff] %v5696
                %v5698 = vld [vmem:[%s5600 + $0x180] sm:$0xff]
                %5699 = vst [vmem:[%s5601 + $0x300] sm:$0xff] %v5698
                %v5700 = vld [vmem:[%s5600 + $0x188] sm:$0xff]
                %5701 = vst [vmem:[%s5601 + $0x308] sm:$0xff] %v5700
                %v5702 = vld [vmem:[%s5600 + $0x190] sm:$0xff]
                %5703 = vst [vmem:[%s5601 + $0x310] sm:$0xff] %v5702
                %v5704 = vld [vmem:[%s5600 + $0x198] sm:$0xff]
                %5705 = vst [vmem:[%s5601 + $0x318] sm:$0xff] %v5704
                %v5706 = vld [vmem:[%s5600 + $0x1a0] sm:$0xff]
                %5707 = vst [vmem:[%s5601 + $0x320] sm:$0xff] %v5706
                %v5708 = vld [vmem:[%s5600 + $0x1a8] sm:$0xff]
                %5709 = vst [vmem:[%s5601 + $0x328] sm:$0xff] %v5708
                %v5710 = vld [vmem:[%s5600 + $0x1b0] sm:$0xff]
                %5711 = vst [vmem:[%s5601 + $0x330] sm:$0xff] %v5710
                %v5712 = vld [vmem:[%s5600 + $0x1b8] sm:$0xff]
                %5713 = vst [vmem:[%s5601 + $0x338] sm:$0xff] %v5712
                %v5714 = vld [vmem:[%s5600 + $0x1c0] sm:$0xff]
                %5715 = vst [vmem:[%s5601 + $0x340] sm:$0xff] %v5714
                %v5716 = vld [vmem:[%s5600 + $0x1c8] sm:$0xff]
                %5717 = vst [vmem:[%s5601 + $0x348] sm:$0xff] %v5716
                %v5718 = vld [vmem:[%s5600 + $0x1d0] sm:$0xff]
                %5719 = vst [vmem:[%s5601 + $0x350] sm:$0xff] %v5718
                %v5720 = vld [vmem:[%s5600 + $0x1d8] sm:$0xff]
                %5721 = vst [vmem:[%s5601 + $0x358] sm:$0xff] %v5720
                %v5722 = vld [vmem:[%s5600 + $0x1e0] sm:$0xff]
                %5723 = vst [vmem:[%s5601 + $0x360] sm:$0xff] %v5722
                %v5724 = vld [vmem:[%s5600 + $0x1e8] sm:$0xff]
                %5725 = vst [vmem:[%s5601 + $0x368] sm:$0xff] %v5724
                %v5726 = vld [vmem:[%s5600 + $0x1f0] sm:$0xff]
                %5727 = vst [vmem:[%s5601 + $0x370] sm:$0xff] %v5726
                %v5728 = vld [vmem:[%s5600 + $0x1f8] sm:$0xff]
                %5729 = vst [vmem:[%s5601 + $0x378] sm:$0xff] %v5728
                %v5730 = vld [vmem:[%s5600 + $0x200] sm:$0xff]
                %5731 = vst [vmem:[%s5601 + $0x400] sm:$0xff] %v5730
                %v5732 = vld [vmem:[%s5600 + $0x208] sm:$0xff]
                %5733 = vst [vmem:[%s5601 + $0x408] sm:$0xff] %v5732
                %v5734 = vld [vmem:[%s5600 + $0x210] sm:$0xff]
                %5735 = vst [vmem:[%s5601 + $0x410] sm:$0xff] %v5734
                %v5736 = vld [vmem:[%s5600 + $0x218] sm:$0xff]
                %5737 = vst [vmem:[%s5601 + $0x418] sm:$0xff] %v5736
                %v5738 = vld [vmem:[%s5600 + $0x220] sm:$0xff]
                %5739 = vst [vmem:[%s5601 + $0x420] sm:$0xff] %v5738
                %v5740 = vld [vmem:[%s5600 + $0x228] sm:$0xff]
                %5741 = vst [vmem:[%s5601 + $0x428] sm:$0xff] %v5740
                %v5742 = vld [vmem:[%s5600 + $0x230] sm:$0xff]
                %5743 = vst [vmem:[%s5601 + $0x430] sm:$0xff] %v5742
                %v5744 = vld [vmem:[%s5600 + $0x238] sm:$0xff]
                %5745 = vst [vmem:[%s5601 + $0x438] sm:$0xff] %v5744
                %v5746 = vld [vmem:[%s5600 + $0x240] sm:$0xff]
                %5747 = vst [vmem:[%s5601 + $0x440] sm:$0xff] %v5746
                %v5748 = vld [vmem:[%s5600 + $0x248] sm:$0xff]
                %5749 = vst [vmem:[%s5601 + $0x448] sm:$0xff] %v5748
                %v5750 = vld [vmem:[%s5600 + $0x250] sm:$0xff]
                %5751 = vst [vmem:[%s5601 + $0x450] sm:$0xff] %v5750
                %v5752 = vld [vmem:[%s5600 + $0x258] sm:$0xff]
                %5753 = vst [vmem:[%s5601 + $0x458] sm:$0xff] %v5752
                %v5754 = vld [vmem:[%s5600 + $0x260] sm:$0xff]
                %5755 = vst [vmem:[%s5601 + $0x460] sm:$0xff] %v5754
                %v5756 = vld [vmem:[%s5600 + $0x268] sm:$0xff]
                %5757 = vst [vmem:[%s5601 + $0x468] sm:$0xff] %v5756
                %v5758 = vld [vmem:[%s5600 + $0x270] sm:$0xff]
                %5759 = vst [vmem:[%s5601 + $0x470] sm:$0xff] %v5758
                %v5760 = vld [vmem:[%s5600 + $0x278] sm:$0xff]
                %5761 = vst [vmem:[%s5601 + $0x478] sm:$0xff] %v5760
                %v5762 = vld [vmem:[%s5600 + $0x280] sm:$0xff]
                %5763 = vst [vmem:[%s5601 + $0x500] sm:$0xff] %v5762
                %v5764 = vld [vmem:[%s5600 + $0x288] sm:$0xff]
                %5765 = vst [vmem:[%s5601 + $0x508] sm:$0xff] %v5764
                %v5766 = vld [vmem:[%s5600 + $0x290] sm:$0xff]
                %5767 = vst [vmem:[%s5601 + $0x510] sm:$0xff] %v5766
                %v5768 = vld [vmem:[%s5600 + $0x298] sm:$0xff]
                %5769 = vst [vmem:[%s5601 + $0x518] sm:$0xff] %v5768
                %v5770 = vld [vmem:[%s5600 + $0x2a0] sm:$0xff]
                %5771 = vst [vmem:[%s5601 + $0x520] sm:$0xff] %v5770
                %v5772 = vld [vmem:[%s5600 + $0x2a8] sm:$0xff]
                %5773 = vst [vmem:[%s5601 + $0x528] sm:$0xff] %v5772
                %v5774 = vld [vmem:[%s5600 + $0x2b0] sm:$0xff]
                %5775 = vst [vmem:[%s5601 + $0x530] sm:$0xff] %v5774
                %v5776 = vld [vmem:[%s5600 + $0x2b8] sm:$0xff]
                %5777 = vst [vmem:[%s5601 + $0x538] sm:$0xff] %v5776
                %v5778 = vld [vmem:[%s5600 + $0x2c0] sm:$0xff]
                %5779 = vst [vmem:[%s5601 + $0x540] sm:$0xff] %v5778
                %v5780 = vld [vmem:[%s5600 + $0x2c8] sm:$0xff]
                %5781 = vst [vmem:[%s5601 + $0x548] sm:$0xff] %v5780
                %v5782 = vld [vmem:[%s5600 + $0x2d0] sm:$0xff]
                %5783 = vst [vmem:[%s5601 + $0x550] sm:$0xff] %v5782
                %v5784 = vld [vmem:[%s5600 + $0x2d8] sm:$0xff]
                %5785 = vst [vmem:[%s5601 + $0x558] sm:$0xff] %v5784
                %v5786 = vld [vmem:[%s5600 + $0x2e0] sm:$0xff]
                %5787 = vst [vmem:[%s5601 + $0x560] sm:$0xff] %v5786
                %v5788 = vld [vmem:[%s5600 + $0x2e8] sm:$0xff]
                %5789 = vst [vmem:[%s5601 + $0x568] sm:$0xff] %v5788
                %v5790 = vld [vmem:[%s5600 + $0x2f0] sm:$0xff]
                %5791 = vst [vmem:[%s5601 + $0x570] sm:$0xff] %v5790
                %v5792 = vld [vmem:[%s5600 + $0x2f8] sm:$0xff]
                %5793 = vst [vmem:[%s5601 + $0x578] sm:$0xff] %v5792
                %v5794 = vld [vmem:[%s5600 + $0x300] sm:$0xff]
                %5795 = vst [vmem:[%s5601 + $0x600] sm:$0xff] %v5794
                %v5796 = vld [vmem:[%s5600 + $0x308] sm:$0xff]
                %5797 = vst [vmem:[%s5601 + $0x608] sm:$0xff] %v5796
                %v5798 = vld [vmem:[%s5600 + $0x310] sm:$0xff]
                %5799 = vst [vmem:[%s5601 + $0x610] sm:$0xff] %v5798
                %v5800 = vld [vmem:[%s5600 + $0x318] sm:$0xff]
                %5801 = vst [vmem:[%s5601 + $0x618] sm:$0xff] %v5800
                %v5802 = vld [vmem:[%s5600 + $0x320] sm:$0xff]
                %5803 = vst [vmem:[%s5601 + $0x620] sm:$0xff] %v5802
                %v5804 = vld [vmem:[%s5600 + $0x328] sm:$0xff]
                %5805 = vst [vmem:[%s5601 + $0x628] sm:$0xff] %v5804
                %v5806 = vld [vmem:[%s5600 + $0x330] sm:$0xff]
                %5807 = vst [vmem:[%s5601 + $0x630] sm:$0xff] %v5806
                %v5808 = vld [vmem:[%s5600 + $0x338] sm:$0xff]
                %5809 = vst [vmem:[%s5601 + $0x638] sm:$0xff] %v5808
                %v5810 = vld [vmem:[%s5600 + $0x340] sm:$0xff]
                %5811 = vst [vmem:[%s5601 + $0x640] sm:$0xff] %v5810
                %v5812 = vld [vmem:[%s5600 + $0x348] sm:$0xff]
                %5813 = vst [vmem:[%s5601 + $0x648] sm:$0xff] %v5812
                %v5814 = vld [vmem:[%s5600 + $0x350] sm:$0xff]
                %5815 = vst [vmem:[%s5601 + $0x650] sm:$0xff] %v5814
                %v5816 = vld [vmem:[%s5600 + $0x358] sm:$0xff]
                %5817 = vst [vmem:[%s5601 + $0x658] sm:$0xff] %v5816
                %v5818 = vld [vmem:[%s5600 + $0x360] sm:$0xff]
                %5819 = vst [vmem:[%s5601 + $0x660] sm:$0xff] %v5818
                %v5820 = vld [vmem:[%s5600 + $0x368] sm:$0xff]
                %5821 = vst [vmem:[%s5601 + $0x668] sm:$0xff] %v5820
                %v5822 = vld [vmem:[%s5600 + $0x370] sm:$0xff]
                %5823 = vst [vmem:[%s5601 + $0x670] sm:$0xff] %v5822
                %v5824 = vld [vmem:[%s5600 + $0x378] sm:$0xff]
                %5825 = vst [vmem:[%s5601 + $0x678] sm:$0xff] %v5824
                %v5826 = vld [vmem:[%s5600 + $0x380] sm:$0xff]
                %5827 = vst [vmem:[%s5601 + $0x700] sm:$0xff] %v5826
                %v5828 = vld [vmem:[%s5600 + $0x388] sm:$0xff]
                %5829 = vst [vmem:[%s5601 + $0x708] sm:$0xff] %v5828
                %v5830 = vld [vmem:[%s5600 + $0x390] sm:$0xff]
                %5831 = vst [vmem:[%s5601 + $0x710] sm:$0xff] %v5830
                %v5832 = vld [vmem:[%s5600 + $0x398] sm:$0xff]
                %5833 = vst [vmem:[%s5601 + $0x718] sm:$0xff] %v5832
                %v5834 = vld [vmem:[%s5600 + $0x3a0] sm:$0xff]
                %5835 = vst [vmem:[%s5601 + $0x720] sm:$0xff] %v5834
                %v5836 = vld [vmem:[%s5600 + $0x3a8] sm:$0xff]
                %5837 = vst [vmem:[%s5601 + $0x728] sm:$0xff] %v5836
                %v5838 = vld [vmem:[%s5600 + $0x3b0] sm:$0xff]
                %5839 = vst [vmem:[%s5601 + $0x730] sm:$0xff] %v5838
                %v5840 = vld [vmem:[%s5600 + $0x3b8] sm:$0xff]
                %5841 = vst [vmem:[%s5601 + $0x738] sm:$0xff] %v5840
                %v5842 = vld [vmem:[%s5600 + $0x3c0] sm:$0xff]
                %5843 = vst [vmem:[%s5601 + $0x740] sm:$0xff] %v5842
                %v5844 = vld [vmem:[%s5600 + $0x3c8] sm:$0xff]
                %5845 = vst [vmem:[%s5601 + $0x748] sm:$0xff] %v5844
                %v5846 = vld [vmem:[%s5600 + $0x3d0] sm:$0xff]
                %5847 = vst [vmem:[%s5601 + $0x750] sm:$0xff] %v5846
                %v5848 = vld [vmem:[%s5600 + $0x3d8] sm:$0xff]
                %5849 = vst [vmem:[%s5601 + $0x758] sm:$0xff] %v5848
                %v5850 = vld [vmem:[%s5600 + $0x3e0] sm:$0xff]
                %5851 = vst [vmem:[%s5601 + $0x760] sm:$0xff] %v5850
                %v5852 = vld [vmem:[%s5600 + $0x3e8] sm:$0xff]
                %5853 = vst [vmem:[%s5601 + $0x768] sm:$0xff] %v5852
                %v5854 = vld [vmem:[%s5600 + $0x3f0] sm:$0xff]
                %5855 = vst [vmem:[%s5601 + $0x770] sm:$0xff] %v5854
                %v5856 = vld [vmem:[%s5600 + $0x3f8] sm:$0xff]
                %5857 = vst [vmem:[%s5601 + $0x778] sm:$0xff] %v5856
              $region107: #{tpu_custom_call.1} parent=101 // loop_footer
                %s5599 = sadd.s32 1, %s5595
              $region108: #{tpu_custom_call.1} parent=101 // loop_footer_branch
                %5594 = sbr.rel target = $region104
              $region109: #{tpu_custom_call.1} parent=101 // loop_exit
                _
            $region102: #{tpu_custom_call.1} parent=93 // pred_fallthru
              _
          $region94: #{tpu_custom_call.1} parent=89 // pred_fallthru
            _
          %6126 = vnop
        $region90: #{tpu_custom_call.1} parent=81 // pred_fallthru
          _
        // Predicated region
        $region125: #{tpu_custom_call.1} parent=81 // pred_check
          %p6127 = pneg %p221
        $region126: #{tpu_custom_call.1} parent=81 // pred_check_branch
          %6129 = sbr.rel (%p6127) target = $region128
        $region127: #{tpu_custom_call.1} parent=81 // pred_region
          %s6130 = smul.u32 16, %s20
        $region128: #{tpu_custom_call.1} parent=81 // pred_fallthru
          _
      $region82: #{tpu_custom_call.1} parent=5 // pred_fallthru
        _
      %p6131 = scmp.le.s32.totalorder 2, %s15
      // Predicated region
      $region129: #{tpu_custom_call.1} parent=5 // pred_check
        %p6132 = pneg %p6131
      $region130: #{tpu_custom_call.1} parent=5 // pred_check_branch
        %6134 = sbr.rel (%p6132) target = $region132
      $region131: #{tpu_custom_call.1} parent=5 // pred_region
        %s6135 = ssub.s32 %s15, 2
        // Predicated region
        $region133: #{tpu_custom_call.1} parent=131 // pred_check
          %p6136 = pneg %p201
        $region134: #{tpu_custom_call.1} parent=131 // pred_check_branch
          %6138 = sbr.rel (%p6136) target = $region136
        $region135: #{tpu_custom_call.1} parent=131 // pred_region
          %s6139 = sand.u32 %s186, 1
          %s6140 = sand.u32 %s186, 1
          %s6141 = smul.addr %s6140, 1024
          %s6142 = scalar_lea.vmem [#allocation5], %s6141
        $region136: #{tpu_custom_call.1} parent=131 // pred_fallthru
          _
        // Predicated region
        $region137: #{tpu_custom_call.1} parent=131 // pred_check
          %p6143 = pneg %p227
        $region138: #{tpu_custom_call.1} parent=131 // pred_check_branch
          %6145 = sbr.rel (%p6143) target = $region140
        $region139: #{tpu_custom_call.1} parent=131 // pred_region
          %s6146 = smul.u32 16, %s21
          %p6147 = scmp.lt.s32.totalorder %s6146, 31
          %s6148 = scalar_select %p6147, %s6146, 31
          %s6149 = smul.addr %s6148, 8
          %s6150 = scalar_lea.vmem %s8, %s6149
        $region140: #{tpu_custom_call.1} parent=131 // pred_fallthru
          _
      $region132: #{tpu_custom_call.1} parent=5 // pred_fallthru
        _
    $region6: #{tpu_custom_call.1} parent=1 // loop_footer
      %s19 = sadd.s32 1, %s15
    $region7: #{tpu_custom_call.1} parent=1 // loop_footer_branch
      %14 = sbr.rel target = $region3
    $region8: #{tpu_custom_call.1} parent=1 // loop_exit
      _

</llo_original>
